<compile_context>
chip_gen: v7x
topology: tpu7x:2x2x1
jax: 0.10.0
libtpu: 0.0.40
codegen_flags: <defaults>
</compile_context>

<pallas_src>
import jax
import jax.numpy as jnp
from jax.experimental import pallas as pl
from jax.experimental.pallas import tpu as pltpu


_VMEM_LIMIT = 48 * 1024 * 1024     # scoped VMEM cap (< v7x physical 64 MiB)
_VMEM_BUDGET = 28 * 1024 * 1024    # target per-grid-step working set


def _round_up(x, m):
    return (x + m - 1) // m * m


# ------------------------- Pallas kernels -------------------------

def _conv_transpose_2x2_kernel(x_ref, w_ref, b_ref, o_ref):
    """ConvTranspose2d(k=2, s=2) on a tile of (batch-flattened) input rows.

    x_ref: (tr, W, Cin)            input tile (any float dtype, cast in-kernel)
    w_ref: (Cin, 4*Cout)   bf16    column index = ki*2*Cout + kj*Cout + co
    b_ref: (1, 4*Cout)     f32     bias tiled over (ki, kj)
    o_ref: (tr, 2, W, 2*Cout)      sub-pixel layout: o[r, ki, c, kj*Cout+co]
                                   == upsampled[2r+ki, 2c+kj, co]
    """
    tr, W, Cin = x_ref.shape
    C2 = w_ref.shape[1] // 2                       # 2 * Cout
    x2 = x_ref[...].reshape(tr * W, Cin).astype(jnp.bfloat16)
    # Single fused MXU pass over both ki planes (N = 4*Cout), f32 accumulation.
    y = jnp.dot(x2, w_ref[...], preferred_element_type=jnp.float32)
    y = y + b_ref[...]
    o_ref[:, 0, :, :] = y[:, :C2].reshape(tr, W, C2).astype(o_ref.dtype)
    o_ref[:, 1, :, :] = y[:, C2:].reshape(tr, W, C2).astype(o_ref.dtype)


def _make_conv3x3_bn_relu_kernel(c_splits, W, th, Wp):
    """Fused [concat ->] Conv3x3(pad=1) -> BatchNorm(eval) -> ReLU, row-tiled.

    Scratch layout: xp[R, C, ci] holds the zero-padded (virtually concatenated)
    input at padded row (tile_start + R), padded column C, for C in [0, W+2);
    columns [W+2, Wp) are junk and never feed a valid output.  Per ky, one
    (th*Wp, Cin) x (Cin, 3*Cout) MXU matmul computes all three kx taps; the
    column shifts are cheap sublane slices on the f32 result.
    """
    n_in = len(c_splits)
    Cin = sum(c_splits)

    def kernel(*args):
        act_refs = args[:3 * n_in]
        w_ref, scale_ref, shift_ref, o_ref, xp_ref, acc_ref = args[3 * n_in:]
        Cout = o_ref.shape[-1]

        i = pl.program_id(1)
        at_top = i == 0
        at_bot = i == pl.num_programs(1) - 1

        # Zero only the left/right padding columns (plus trailing junk pad);
        # the interior is fully overwritten below, so a full-scratch zero
        # every step would be pure wasted store traffic.
        xp_ref[:, 0:1, :] = jnp.zeros((th + 2, 1, Cin), xp_ref.dtype)
        xp_ref[:, W + 1:, :] = jnp.zeros((th + 2, Wp - (W + 1), Cin),
                                         xp_ref.dtype)

        # Fill interior rows + the two halo rows.  The channel concat of the
        # inputs happens right here in VMEM; inputs are cast to bf16 after the
        # block DMA (no standalone HBM cast pass).
        c0 = 0
        for k in range(n_in):
            c = c_splits[k]
            x_main = act_refs[3 * k]        # (1, th, W, c)
            x_top = act_refs[3 * k + 1]     # (1, 1, W, c): row max(i*th-1, 0)
            x_bot = act_refs[3 * k + 2]     # (1, 1, W, c): row min((i+1)*th, H-1)
            xp_ref[1:1 + th, 1:1 + W, c0:c0 + c] = (
                x_main[0].astype(xp_ref.dtype))
            top = x_top[0, 0].astype(xp_ref.dtype)
            bot = x_bot[0, 0].astype(xp_ref.dtype)
            zero = jnp.zeros_like(top)
            xp_ref[0, 1:1 + W, c0:c0 + c] = jnp.where(at_top, zero, top)
            xp_ref[th + 1, 1:1 + W, c0:c0 + c] = jnp.where(at_bot, zero, bot)
            c0 += c

        # 3x3 conv: 3 fused MXU matmuls (one per ky), f32 accumulation into an
        # explicit VMEM scratch (in-place +=, bounded live ranges).
        for ky in range(3):
            rows = xp_ref[ky:ky + th, :, :]               # (th, Wp, Cin) bf16
            p = jnp.dot(rows.reshape(th * Wp, Cin), w_ref[ky],
                        preferred_element_type=jnp.float32)
            p = p.reshape(th, Wp, 3 * Cout)
            contrib = (p[:, 0:W, 0:Cout]
                       + p[:, 1:1 + W, Cout:2 * Cout]
                       + p[:, 2:2 + W, 2 * Cout:3 * Cout])
            if ky == 0:
                acc_ref[...] = contrib
            else:
                acc_ref[...] += contrib

        # BatchNorm (eval, conv bias folded) + ReLU, single batched store.
        y = acc_ref[...] * scale_ref[...] + shift_ref[...]
        o_ref[0] = jnp.maximum(y, 0.0).astype(o_ref.dtype)

    return kernel


# ------------------------- tiling heuristics -------------------------

def _pick_row_tile(H, W, Wp, Cin, Cout, in_item, out_item,
                   budget_bytes=_VMEM_BUDGET, max_rows=256):
    per_row = (Wp * Cin * 2                 # padded bf16 scratch
               + W * Cout * 4               # f32 accumulator scratch
               + Wp * 3 * Cout * 4          # fused per-ky matmul result
               + 2 * W * Cin * in_item      # double-buffered input blocks
               + 2 * W * Cout * out_item)   # double-buffered output block
    th = min(H, max_rows, max(1, budget_bytes // max(per_row, 1)))
    th = max(1, th)
    while H % th:
        th -= 1
    return th


def _pick_ct_tile(R, W, Cin, Cout, in_item, out_item,
                  budget_bytes=_VMEM_BUDGET, target_rows=2048):
    per_row = (2 * W * Cin * in_item            # double-buffered input
               + 2 * W * 2 * Cout * out_item    # double-buffered output
               + W * 4 * Cout * 4)              # f32 matmul result
    tr = min(R, max(1, target_rows // max(W, 1)),
             max(1, budget_bytes // max(per_row, 1)))
    tr = max(1, tr)
    while R % tr:
        tr -= 1
    return tr


# ------------------------- wrappers -------------------------

def conv_transpose_2x2_s2(x_nhwc, w, b, *, out_dtype=jnp.bfloat16):
    """ConvTranspose2d(kernel_size=2, stride=2).

    w: (Cin, Cout, 2, 2) PyTorch ConvTranspose2d layout, b: (Cout,)
    out[n, 2i+ki, 2j+kj, co] = sum_ci x[n,i,j,ci] * w[ci,co,ki,kj] + b[co]
    """
    N, H, W, Cin = x_nhwc.shape
    Cout = w.shape[1]
    # (Cin, Cout, ki, kj) -> (Cin, ki*2*Cout + kj*Cout + co): both ki planes
    # are computed by a single MXU pass of width 4*Cout.
    w4 = jnp.transpose(w, (0, 2, 3, 1)).reshape(Cin, 4 * Cout)
    w4 = w4.astype(jnp.bfloat16)
    b4 = jnp.tile(b, 4).reshape(1, 4 * Cout).astype(jnp.float32)

    R = N * H
    x = x_nhwc.reshape(R, W, Cin)   # free reshape; dtype cast happens in-kernel
    tr = _pick_ct_tile(R, W, Cin, Cout, x.dtype.itemsize,
                       jnp.dtype(out_dtype).itemsize)

    y = pl.pallas_call(
        _conv_transpose_2x2_kernel,
        out_shape=jax.ShapeDtypeStruct((R, 2, W, 2 * Cout), out_dtype),
        grid=(R // tr,),
        in_specs=[pl.BlockSpec((tr, W, Cin), lambda i: (i, 0, 0)),
                  pl.BlockSpec((Cin, 4 * Cout), lambda i: (0, 0)),
                  pl.BlockSpec((1, 4 * Cout), lambda i: (0, 0))],
        out_specs=pl.BlockSpec((tr, 2, W, 2 * Cout), lambda i: (i, 0, 0, 0)),
        compiler_params=pltpu.CompilerParams(
            dimension_semantics=("parallel",),
            vmem_limit_bytes=_VMEM_LIMIT),
    )(x, w4, b4)
    # Sub-pixel layout -> NHWC of the upsampled map: a free (bitcast) reshape.
    return y.reshape(N, 2 * H, 2 * W, Cout)


def conv_block(xs, w, b, gamma, beta, mean, var, *, eps=1e-5,
               out_dtype=jnp.bfloat16):
    """[concat(xs, channel) ->] Conv2d(3x3, pad=1) -> BatchNorm2d(eval) -> ReLU.

    xs: list of NHWC activations whose channels are virtually concatenated (in
        order) inside the kernel -- no HBM concat, no HBM padding pass.
    w:  (Cout, Cin_total, 3, 3) PyTorch Conv2d layout.
    """
    N, H, W = xs[0].shape[:3]
    c_splits = tuple(int(x.shape[3]) for x in xs)
    Cin = sum(c_splits)
    Cout = w.shape[0]
    Wp = _round_up(W + 2, 16)   # row pitch: mult of 16 -> bf16 reshape is free

    # (Cout, Cin, ky, kx) -> (ky, Cin, kx*Cout + co): the 3 kx taps of each ky
    # are fused into one MXU matmul of width 3*Cout.
    w_k = jnp.transpose(w, (2, 1, 3, 0)).reshape(3, Cin, 3 * Cout)
    w_k = w_k.astype(jnp.bfloat16)
    inv_std = 1.0 / jnp.sqrt(var + eps)
    scale = (gamma * inv_std).reshape(1, Cout).astype(jnp.float32)
    shift = (beta + (b - mean) * gamma * inv_std).reshape(1, Cout)
    shift = shift.astype(jnp.float32)

    in_item = max(x.dtype.itemsize for x in xs)
    th = _pick_row_tile(H, W, Wp, Cin, Cout, in_item,
                        jnp.dtype(out_dtype).itemsize)

    in_specs = []
    args = []
    for x, c in zip(xs, c_splits):
        # Main row tile + two 1-row halo blocks (index clamped at the edges;
        # the kernel zeroes them when the tile touches the image border).
        in_specs.append(pl.BlockSpec((1, th, W, c),
                                     lambda n, i: (n, i, 0, 0)))
        in_specs.append(pl.BlockSpec(
            (1, 1, W, c),
            lambda n, i: (n, jnp.maximum(i * th - 1, 0), 0, 0)))
        in_specs.append(pl.BlockSpec(
            (1, 1, W, c),
            lambda n, i: (n, jnp.minimum((i + 1) * th, H - 1), 0, 0)))
        args += [x, x, x]
    in_specs += [
        pl.BlockSpec((3, Cin, 3 * Cout), lambda n, i: (0, 0, 0)),
        pl.BlockSpec((1, Cout), lambda n, i: (0, 0)),
        pl.BlockSpec((1, Cout), lambda n, i: (0, 0)),
    ]
    args += [w_k, scale, shift]

    return pl.pallas_call(
        _make_conv3x3_bn_relu_kernel(c_splits, W, th, Wp),
        out_shape=jax.ShapeDtypeStruct((N, H, W, Cout), out_dtype),
        grid=(N, H // th),
        in_specs=in_specs,
        out_specs=pl.BlockSpec((1, th, W, Cout), lambda n, i: (n, i, 0, 0)),
        scratch_shapes=[pltpu.VMEM((th + 2, Wp, Cin), jnp.bfloat16),
                        pltpu.VMEM((th, W, Cout), jnp.float32)],
        compiler_params=pltpu.CompilerParams(
            dimension_semantics=("parallel", "parallel"),
            vmem_limit_bytes=_VMEM_LIMIT),
    )(*args)


def up_block_forward_nhwc(up_x, down_x, p, *, out_dtype=jnp.float32):
    """UpBlockForUNetWithResNet50.forward with NHWC inputs/outputs.

    Pass out_dtype=jnp.bfloat16 if the consumer tolerates bf16 to halve the
    final HBM write.
    """
    x = conv_transpose_2x2_s2(up_x, p["up_w"], p["up_b"])  # bf16 (N,2H,2W,C1)
    # torch.cat([x, down_x], dim=channel) is fused into conv block 1.
    x = conv_block([x, down_x], p["c1_w"], p["c1_b"], p["c1_gamma"],
                   p["c1_beta"], p["c1_mean"], p["c1_var"],
                   out_dtype=jnp.bfloat16)
    x = conv_block([x], p["c2_w"], p["c2_b"], p["c2_gamma"],
                   p["c2_beta"], p["c2_mean"], p["c2_var"],
                   out_dtype=out_dtype)
    return x


def up_block_forward(up_x_nchw, down_x_nchw, p):
    """NCHW entry point (PyTorch layout).  Production callers should prefer
    `up_block_forward_nhwc` to skip the boundary HBM relayouts."""
    up_x = jnp.transpose(up_x_nchw, (0, 2, 3, 1))      # -> NHWC
    down_x = jnp.transpose(down_x_nchw, (0, 2, 3, 1))  # -> NHWC
    out = up_block_forward_nhwc(up_x, down_x, p)
    return jnp.transpose(out, (0, 3, 1, 2))            # -> NCHW


# ------------------------- deterministic params -------------------------

def init_params(key, in_channels, out_channels,
                up_conv_in_channels, up_conv_out_channels):
    ks = jax.random.split(key, 16)

    def normal(k, shape, std=0.1):
        return (std * jax.random.normal(k, shape)).astype(jnp.float32)

    return {
        # ConvTranspose2d(up_in, up_out, k=2, s=2): weight (Cin, Cout, 2, 2)
        "up_w": normal(ks[0], (up_conv_in_channels, up_conv_out_channels, 2, 2)),
        "up_b": normal(ks[1], (up_conv_out_channels,)),
        # ConvBlock 1: Conv2d(in_channels, out_channels, 3, pad=1) + BN
        "c1_w": normal(ks[2], (out_channels, in_channels, 3, 3)),
        "c1_b": normal(ks[3], (out_channels,)),
        "c1_gamma": (1.0 + normal(ks[4], (out_channels,))).astype(jnp.float32),
        "c1_beta": normal(ks[5], (out_channels,)),
        "c1_mean": normal(ks[6], (out_channels,)),
        "c1_var": (1.0 + 0.1 * jnp.abs(jax.random.normal(
            ks[7], (out_channels,)))).astype(jnp.float32),
        # ConvBlock 2: Conv2d(out_channels, out_channels, 3, pad=1) + BN
        "c2_w": normal(ks[8], (out_channels, out_channels, 3, 3)),
        "c2_b": normal(ks[9], (out_channels,)),
        "c2_gamma": (1.0 + normal(ks[10], (out_channels,))).astype(jnp.float32),
        "c2_beta": normal(ks[11], (out_channels,)),
        "c2_mean": normal(ks[12], (out_channels,)),
        "c2_var": (1.0 + 0.1 * jnp.abs(jax.random.normal(
            ks[13], (out_channels,)))).astype(jnp.float32),
    }


# ------------------- pure-JAX reference (sanity check) -------------------

def _ref_conv_block(x, w, b, gamma, beta, mean, var, eps=1e-5):
    N, H, W, Cin = x.shape
    xp = jnp.pad(x, ((0, 0), (1, 1), (1, 1), (0, 0)))
    acc = 0.0
    for ky in range(3):
        for kx in range(3):
            acc = acc + jnp.einsum("nhwc,oc->nhwo",
                                   xp[:, ky:ky + H, kx:kx + W, :],
                                   w[:, :, ky, kx])
    y = acc + b
    y = (y - mean) / jnp.sqrt(var + eps) * gamma + beta
    return jnp.maximum(y, 0.0)


def _ref_forward(up_x_nchw, down_x_nchw, p):
    up_x = jnp.transpose(up_x_nchw, (0, 2, 3, 1))
    down_x = jnp.transpose(down_x_nchw, (0, 2, 3, 1))
    N, H, W, _ = up_x.shape
    Cout = p["up_w"].shape[1]
    y = jnp.einsum("nijc,cokl->nikjlo", up_x, p["up_w"])
    y = y.reshape(N, 2 * H, 2 * W, Cout) + p["up_b"]
    x = jnp.concatenate([y, down_x], axis=-1)
    x = _ref_conv_block(x, p["c1_w"], p["c1_b"], p["c1_gamma"], p["c1_beta"],
                        p["c1_mean"], p["c1_var"])
    x = _ref_conv_block(x, p["c2_w"], p["c2_b"], p["c2_gamma"], p["c2_beta"],
                        p["c2_mean"], p["c2_var"])
    return jnp.transpose(x, (0, 3, 1, 2))


# ------------------------- main -------------------------

if __name__ == "__main__":
    key = jax.random.PRNGKey(0)
    # Lane-friendly channel counts (multiples of 128) at small spatial sizes.
    in_channels, out_channels = 256, 128       # skip connection: 128 channels
    N, H_up, W_up = 2, 8, 8                    # up_x spatial; output is 16x16

    k_up, k_down, k_params = jax.random.split(key, 3)
    up_x = jax.random.normal(k_up, (N, in_channels, H_up, W_up), jnp.float32)
    down_x = jax.random.normal(
        k_down, (N, in_channels - out_channels, 2 * H_up, 2 * W_up),
        jnp.float32)
    params = init_params(k_params, in_channels, out_channels,
                         in_channels, out_channels)

    fwd = jax.jit(up_block_forward)
    out = jax.block_until_ready(fwd(up_x, down_x, params))
    assert out.shape == (N, out_channels, 2 * H_up, 2 * W_up), out.shape

    ref = _ref_forward(up_x, down_x, params)
    denom = float(jnp.max(jnp.abs(ref)))
    err = float(jnp.max(jnp.abs(out.astype(jnp.float32) - ref)))
    # bf16 MXU operands / bf16 inter-kernel activations -> relative tolerance.
    assert err <= 5e-2 * denom + 1e-3, f"max abs err {err} (ref scale {denom})"

    print("KERNEL_OK")
</pallas_src>

<mosaic_0001>
module attributes {stable_mosaic.version = 11 : i64} {
  func.func @_conv_transpose_2x2_kernel(%arg0: i32, %arg1: memref<16x8x256xf32, #tpu.memory_space<vmem>>, %arg2: memref<256x512xbf16, #tpu.memory_space<vmem>>, %arg3: memref<1x512xf32, #tpu.memory_space<vmem>>, %arg4: memref<16x2x8x256xbf16, #tpu.memory_space<vmem>>) attributes {dimension_semantics = [#tpu.dimension_semantics<parallel>], iteration_bounds = array<i64: 1>, scalar_prefetch = 0 : i64, scratch_operands = 0 : i64, tpu.core_type = #tpu.core_type<tc>, window_params = [{transform_indices = @transform_0, window_bounds = array<i64: 16, 8, 256>}, {pipeline_mode = #tpu.pipeline_mode<synchronous>, transform_indices = @transform_1, window_bounds = array<i64: 256, 512>}, {pipeline_mode = #tpu.pipeline_mode<synchronous>, transform_indices = @transform_2, window_bounds = array<i64: 1, 512>}, {transform_indices = @transform_3, window_bounds = array<i64: 16, 2, 8, 256>}]} {
    %c0 = arith.constant 0 : index
    %c0_0 = arith.constant 0 : index
    %c0_1 = arith.constant 0 : index
    %0 = vector.load %arg1[%c0, %c0_0, %c0_1] : memref<16x8x256xf32, #tpu.memory_space<vmem>>, vector<16x8x256xf32>
    %1 = vector.shape_cast %0 : vector<16x8x256xf32> to vector<128x256xf32>
    %2 = arith.truncf %1 : vector<128x256xf32> to vector<128x256xbf16>
    %c0_2 = arith.constant 0 : index
    %c0_3 = arith.constant 0 : index
    %3 = vector.load %arg2[%c0_2, %c0_3] : memref<256x512xbf16, #tpu.memory_space<vmem>>, vector<256x512xbf16>
    %cst = arith.constant dense<0.000000e+00> : vector<128x512xf32>
    %4 = tpu.matmul %2, %3, %cst {dimension_numbers = #tpu.dot_dimension_numbers<[1], [0], [0], [1], [0, 0, 1, 1], [], []>} : vector<128x256xbf16>, vector<256x512xbf16>, vector<128x512xf32> -> vector<128x512xf32>
    %c0_4 = arith.constant 0 : index
    %c0_5 = arith.constant 0 : index
    %5 = vector.load %arg3[%c0_4, %c0_5] : memref<1x512xf32, #tpu.memory_space<vmem>>, vector<1x512xf32>
    %6 = vector.broadcast %5 : vector<1x512xf32> to vector<128x512xf32>
    %7 = arith.addf %4, %6 : vector<128x512xf32>
    %8 = vector.extract_strided_slice %7 {offsets = [0, 0], sizes = [128, 256], strides = [1, 1]} : vector<128x512xf32> to vector<128x256xf32>
    %9 = vector.shape_cast %8 : vector<128x256xf32> to vector<16x8x256xf32>
    %10 = arith.truncf %9 : vector<16x8x256xf32> to vector<16x8x256xbf16>
    %c0_6 = arith.constant 0 : index
    %c0_7 = arith.constant 0 : index
    %c0_8 = arith.constant 0 : index
    %c0_9 = arith.constant 0 : index
    %11 = vector.load %arg4[%c0_6, %c0_7, %c0_8, %c0_9] : memref<16x2x8x256xbf16, #tpu.memory_space<vmem>>, vector<16x1x8x256xbf16>
    %12 = vector.shape_cast %11 : vector<16x1x8x256xbf16> to vector<16x8x256xbf16>
    %13 = vector.shape_cast %10 : vector<16x8x256xbf16> to vector<16x1x8x256xbf16>
    tpu.vector_store %arg4[%c0_6, %c0_7, %c0_8, %c0_9], %13 {strides = array<i32>} : memref<16x2x8x256xbf16, #tpu.memory_space<vmem>>, vector<16x1x8x256xbf16>,
    %14 = vector.extract_strided_slice %7 {offsets = [0, 256], sizes = [128, 256], strides = [1, 1]} : vector<128x512xf32> to vector<128x256xf32>
    %15 = vector.shape_cast %14 : vector<128x256xf32> to vector<16x8x256xf32>
    %16 = arith.truncf %15 : vector<16x8x256xf32> to vector<16x8x256xbf16>
    %c0_10 = arith.constant 0 : index
    %c1 = arith.constant 1 : index
    %c0_11 = arith.constant 0 : index
    %c0_12 = arith.constant 0 : index
    %17 = vector.load %arg4[%c0_10, %c1, %c0_11, %c0_12] : memref<16x2x8x256xbf16, #tpu.memory_space<vmem>>, vector<16x1x8x256xbf16>
    %18 = vector.shape_cast %17 : vector<16x1x8x256xbf16> to vector<16x8x256xbf16>
    %19 = vector.shape_cast %16 : vector<16x8x256xbf16> to vector<16x1x8x256xbf16>
    tpu.vector_store %arg4[%c0_10, %c1, %c0_11, %c0_12], %19 {strides = array<i32>} : memref<16x2x8x256xbf16, #tpu.memory_space<vmem>>, vector<16x1x8x256xbf16>,
    return
  }
  func.func @transform_0(%arg0: i32) -> (i32, i32, i32) {
    %c0_i32 = arith.constant 0 : i32
    %c0_i32_0 = arith.constant 0 : i32
    %c0_i32_1 = arith.constant 0 : i32
    return %arg0, %c0_i32, %c0_i32_0 : i32, i32, i32
  }
  func.func @transform_1(%arg0: i32) -> (i32, i32) {
    %c0_i32 = arith.constant 0 : i32
    %c0_i32_0 = arith.constant 0 : i32
    %c0_i32_1 = arith.constant 0 : i32
    return %c0_i32, %c0_i32_0 : i32, i32
  }
  func.func @transform_2(%arg0: i32) -> (i32, i32) {
    %c0_i32 = arith.constant 0 : i32
    %c0_i32_0 = arith.constant 0 : i32
    %c0_i32_1 = arith.constant 0 : i32
    return %c0_i32, %c0_i32_0 : i32, i32
  }
  func.func @transform_3(%arg0: i32) -> (i32, i32, i32, i32) {
    %c0_i32 = arith.constant 0 : i32
    %c0_i32_0 = arith.constant 0 : i32
    %c0_i32_1 = arith.constant 0 : i32
    %c0_i32_2 = arith.constant 0 : i32
    return %arg0, %c0_i32, %c0_i32_0, %c0_i32_1 : i32, i32, i32, i32
  }
}

module attributes {stable_mosaic.version = 11 : i64} {
  func.func @kernel(%arg0: i32, %arg1: i32, %arg2: memref<1x16x16x128xbf16, #tpu.memory_space<vmem>>, %arg3: memref<1x1x16x128xbf16, #tpu.memory_space<vmem>>, %arg4: memref<1x1x16x128xbf16, #tpu.memory_space<vmem>>, %arg5: memref<1x16x16x128xf32, #tpu.memory_space<vmem>>, %arg6: memref<1x1x16x128xf32, #tpu.memory_space<vmem>>, %arg7: memref<1x1x16x128xf32, #tpu.memory_space<vmem>>, %arg8: memref<3x256x384xbf16, #tpu.memory_space<vmem>>, %arg9: memref<1x128xf32, #tpu.memory_space<vmem>>, %arg10: memref<1x128xf32, #tpu.memory_space<vmem>>, %arg11: memref<1x16x16x128xbf16, #tpu.memory_space<vmem>>, %arg12: memref<18x32x256xbf16, #tpu.memory_space<vmem>>, %arg13: memref<16x16x128xf32, #tpu.memory_space<vmem>>) attributes {dimension_semantics = [#tpu.dimension_semantics<parallel>, #tpu.dimension_semantics<parallel>], iteration_bounds = array<i64: 2, 1>, scalar_prefetch = 0 : i64, scratch_operands = 2 : i64, tpu.core_type = #tpu.core_type<tc>, window_params = [{transform_indices = @transform_0, window_bounds = array<i64: 1, 16, 16, 128>}, {transform_indices = @transform_1, window_bounds = array<i64: 1, 1, 16, 128>}, {transform_indices = @transform_2, window_bounds = array<i64: 1, 1, 16, 128>}, {transform_indices = @transform_3, window_bounds = array<i64: 1, 16, 16, 128>}, {transform_indices = @transform_4, window_bounds = array<i64: 1, 1, 16, 128>}, {transform_indices = @transform_5, window_bounds = array<i64: 1, 1, 16, 128>}, {pipeline_mode = #tpu.pipeline_mode<synchronous>, transform_indices = @transform_6, window_bounds = array<i64: 3, 256, 384>}, {pipeline_mode = #tpu.pipeline_mode<synchronous>, transform_indices = @transform_7, window_bounds = array<i64: 1, 128>}, {pipeline_mode = #tpu.pipeline_mode<synchronous>, transform_indices = @transform_8, window_bounds = array<i64: 1, 128>}, {transform_indices = @transform_9, window_bounds = array<i64: 1, 16, 16, 128>}]} {
    %c0_i32 = arith.constant 0 : i32
    %0 = arith.cmpi eq, %arg1, %c0_i32 : i32
    %c0_i32_0 = arith.constant 0 : i32
    %1 = arith.cmpi eq, %arg1, %c0_i32_0 : i32
    %cst = arith.constant 0.000000e+00 : bf16
    %2 = vector.broadcast %cst : bf16 to vector<18x1x256xbf16>
    %c0 = arith.constant 0 : index
    %c0_1 = arith.constant 0 : index
    %c0_2 = arith.constant 0 : index
    %3 = vector.load %arg12[%c0, %c0_1, %c0_2] : memref<18x32x256xbf16, #tpu.memory_space<vmem>>, vector<18x1x256xbf16>
    tpu.vector_store %arg12[%c0, %c0_1, %c0_2], %2 {strides = array<i32>} : memref<18x32x256xbf16, #tpu.memory_space<vmem>>, vector<18x1x256xbf16>,
    %cst_3 = arith.constant 0.000000e+00 : bf16
    %4 = vector.broadcast %cst_3 : bf16 to vector<18x15x256xbf16>
    %c0_4 = arith.constant 0 : index
    %c17 = arith.constant 17 : index
    %c0_5 = arith.constant 0 : index
    %5 = vector.load %arg12[%c0_4, %c17, %c0_5] : memref<18x32x256xbf16, #tpu.memory_space<vmem>>, vector<18x15x256xbf16>
    tpu.vector_store %arg12[%c0_4, %c17, %c0_5], %4 {strides = array<i32>} : memref<18x32x256xbf16, #tpu.memory_space<vmem>>, vector<18x15x256xbf16>,
    %c0_6 = arith.constant 0 : index
    %c0_7 = arith.constant 0 : index
    %c0_8 = arith.constant 0 : index
    %c0_9 = arith.constant 0 : index
    %6 = vector.load %arg2[%c0_6, %c0_7, %c0_8, %c0_9] : memref<1x16x16x128xbf16, #tpu.memory_space<vmem>>, vector<1x16x16x128xbf16>
    %7 = vector.shape_cast %6 : vector<1x16x16x128xbf16> to vector<16x16x128xbf16>
    %c1 = arith.constant 1 : index
    %c1_10 = arith.constant 1 : index
    %c0_11 = arith.constant 0 : index
    %8 = vector.load %arg12[%c1, %c1_10, %c0_11] : memref<18x32x256xbf16, #tpu.memory_space<vmem>>, vector<16x16x128xbf16>
    tpu.vector_store %arg12[%c1, %c1_10, %c0_11], %7 {strides = array<i32>} : memref<18x32x256xbf16, #tpu.memory_space<vmem>>, vector<16x16x128xbf16>,
    %c0_12 = arith.constant 0 : index
    %c0_13 = arith.constant 0 : index
    %c0_14 = arith.constant 0 : index
    %c0_15 = arith.constant 0 : index
    %9 = vector.load %arg3[%c0_12, %c0_13, %c0_14, %c0_15] : memref<1x1x16x128xbf16, #tpu.memory_space<vmem>>, vector<1x1x16x128xbf16>
    %10 = vector.shape_cast %9 : vector<1x1x16x128xbf16> to vector<16x128xbf16>
    %c0_16 = arith.constant 0 : index
    %c0_17 = arith.constant 0 : index
    %c0_18 = arith.constant 0 : index
    %c0_19 = arith.constant 0 : index
    %11 = vector.load %arg4[%c0_16, %c0_17, %c0_18, %c0_19] : memref<1x1x16x128xbf16, #tpu.memory_space<vmem>>, vector<1x1x16x128xbf16>
    %12 = vector.shape_cast %11 : vector<1x1x16x128xbf16> to vector<16x128xbf16>
    %cst_20 = arith.constant 0.000000e+00 : bf16
    %13 = vector.broadcast %cst_20 : bf16 to vector<16x128xbf16>
    %14 = arith.select %0, %13, %10 : vector<16x128xbf16>
    %c0_21 = arith.constant 0 : index
    %c1_22 = arith.constant 1 : index
    %c0_23 = arith.constant 0 : index
    %15 = vector.load %arg12[%c0_21, %c1_22, %c0_23] : memref<18x32x256xbf16, #tpu.memory_space<vmem>>, vector<1x16x128xbf16>
    %16 = vector.shape_cast %15 : vector<1x16x128xbf16> to vector<16x128xbf16>
    %17 = vector.shape_cast %14 : vector<16x128xbf16> to vector<1x16x128xbf16>
    tpu.vector_store %arg12[%c0_21, %c1_22, %c0_23], %17 {strides = array<i32>} : memref<18x32x256xbf16, #tpu.memory_space<vmem>>, vector<1x16x128xbf16>,
    %18 = arith.select %1, %13, %12 : vector<16x128xbf16>
    %c17_24 = arith.constant 17 : index
    %c1_25 = arith.constant 1 : index
    %c0_26 = arith.constant 0 : index
    %19 = vector.load %arg12[%c17_24, %c1_25, %c0_26] : memref<18x32x256xbf16, #tpu.memory_space<vmem>>, vector<1x16x128xbf16>
    %20 = vector.shape_cast %19 : vector<1x16x128xbf16> to vector<16x128xbf16>
    %21 = vector.shape_cast %18 : vector<16x128xbf16> to vector<1x16x128xbf16>
    tpu.vector_store %arg12[%c17_24, %c1_25, %c0_26], %21 {strides = array<i32>} : memref<18x32x256xbf16, #tpu.memory_space<vmem>>, vector<1x16x128xbf16>,
    %c0_27 = arith.constant 0 : index
    %c0_28 = arith.constant 0 : index
    %c0_29 = arith.constant 0 : index
    %c0_30 = arith.constant 0 : index
    %22 = vector.load %arg5[%c0_27, %c0_28, %c0_29, %c0_30] : memref<1x16x16x128xf32, #tpu.memory_space<vmem>>, vector<1x16x16x128xf32>
    %23 = vector.shape_cast %22 : vector<1x16x16x128xf32> to vector<16x16x128xf32>
    %24 = arith.truncf %23 : vector<16x16x128xf32> to vector<16x16x128xbf16>
    %c1_31 = arith.constant 1 : index
    %c1_32 = arith.constant 1 : index
    %c128 = arith.constant 128 : index
    %25 = vector.load %arg12[%c1_31, %c1_32, %c128] : memref<18x32x256xbf16, #tpu.memory_space<vmem>>, vector<16x16x128xbf16>
    tpu.vector_store %arg12[%c1_31, %c1_32, %c128], %24 {strides = array<i32>} : memref<18x32x256xbf16, #tpu.memory_space<vmem>>, vector<16x16x128xbf16>,
    %c0_33 = arith.constant 0 : index
    %c0_34 = arith.constant 0 : index
    %c0_35 = arith.constant 0 : index
    %c0_36 = arith.constant 0 : index
    %26 = vector.load %arg6[%c0_33, %c0_34, %c0_35, %c0_36] : memref<1x1x16x128xf32, #tpu.memory_space<vmem>>, vector<1x1x16x128xf32>
    %27 = vector.shape_cast %26 : vector<1x1x16x128xf32> to vector<16x128xf32>
    %28 = arith.truncf %27 : vector<16x128xf32> to vector<16x128xbf16>
    %c0_37 = arith.constant 0 : index
    %c0_38 = arith.constant 0 : index
    %c0_39 = arith.constant 0 : index
    %c0_40 = arith.constant 0 : index
    %29 = vector.load %arg7[%c0_37, %c0_38, %c0_39, %c0_40] : memref<1x1x16x128xf32, #tpu.memory_space<vmem>>, vector<1x1x16x128xf32>
    %30 = vector.shape_cast %29 : vector<1x1x16x128xf32> to vector<16x128xf32>
    %31 = arith.truncf %30 : vector<16x128xf32> to vector<16x128xbf16>
    %cst_41 = arith.constant 0.000000e+00 : bf16
    %32 = vector.broadcast %cst_41 : bf16 to vector<16x128xbf16>
    %33 = arith.select %0, %32, %28 : vector<16x128xbf16>
    %c0_42 = arith.constant 0 : index
    %c1_43 = arith.constant 1 : index
    %c128_44 = arith.constant 128 : index
    %34 = vector.load %arg12[%c0_42, %c1_43, %c128_44] : memref<18x32x256xbf16, #tpu.memory_space<vmem>>, vector<1x16x128xbf16>
    %35 = vector.shape_cast %34 : vector<1x16x128xbf16> to vector<16x128xbf16>
    %36 = vector.shape_cast %33 : vector<16x128xbf16> to vector<1x16x128xbf16>
    tpu.vector_store %arg12[%c0_42, %c1_43, %c128_44], %36 {strides = array<i32>} : memref<18x32x256xbf16, #tpu.memory_space<vmem>>, vector<1x16x128xbf16>,
    %37 = arith.select %1, %32, %31 : vector<16x128xbf16>
    %c17_45 = arith.constant 17 : index
    %c1_46 = arith.constant 1 : index
    %c128_47 = arith.constant 128 : index
    %38 = vector.load %arg12[%c17_45, %c1_46, %c128_47] : memref<18x32x256xbf16, #tpu.memory_space<vmem>>, vector<1x16x128xbf16>
    %39 = vector.shape_cast %38 : vector<1x16x128xbf16> to vector<16x128xbf16>
    %40 = vector.shape_cast %37 : vector<16x128xbf16> to vector<1x16x128xbf16>
    tpu.vector_store %arg12[%c17_45, %c1_46, %c128_47], %40 {strides = array<i32>} : memref<18x32x256xbf16, #tpu.memory_space<vmem>>, vector<1x16x128xbf16>,
    %c0_48 = arith.constant 0 : index
    %c0_49 = arith.constant 0 : index
    %c0_50 = arith.constant 0 : index
    %41 = vector.load %arg12[%c0_48, %c0_49, %c0_50] : memref<18x32x256xbf16, #tpu.memory_space<vmem>>, vector<16x32x256xbf16>
    %42 = vector.shape_cast %41 : vector<16x32x256xbf16> to vector<512x256xbf16>
    %c0_51 = arith.constant 0 : index
    %c0_52 = arith.constant 0 : index
    %c0_53 = arith.constant 0 : index
    %43 = vector.load %arg8[%c0_51, %c0_52, %c0_53] : memref<3x256x384xbf16, #tpu.memory_space<vmem>>, vector<1x256x384xbf16>
    %44 = vector.shape_cast %43 : vector<1x256x384xbf16> to vector<256x384xbf16>
    %cst_54 = arith.constant dense<0.000000e+00> : vector<512x384xf32>
    %45 = tpu.matmul %42, %44, %cst_54 {dimension_numbers = #tpu.dot_dimension_numbers<[1], [0], [0], [1], [0, 0, 1, 1], [], []>} : vector<512x256xbf16>, vector<256x384xbf16>, vector<512x384xf32> -> vector<512x384xf32>
    %46 = vector.shape_cast %45 : vector<512x384xf32> to vector<16x32x384xf32>
    %47 = vector.extract_strided_slice %46 {offsets = [0, 0, 0], sizes = [16, 16, 128], strides = [1, 1, 1]} : vector<16x32x384xf32> to vector<16x16x128xf32>
    %48 = vector.extract_strided_slice %46 {offsets = [0, 1, 128], sizes = [16, 16, 128], strides = [1, 1, 1]} : vector<16x32x384xf32> to vector<16x16x128xf32>
    %49 = arith.addf %47, %48 : vector<16x16x128xf32>
    %50 = vector.extract_strided_slice %46 {offsets = [0, 2, 256], sizes = [16, 16, 128], strides = [1, 1, 1]} : vector<16x32x384xf32> to vector<16x16x128xf32>
    %51 = arith.addf %49, %50 : vector<16x16x128xf32>
    %c0_55 = arith.constant 0 : index
    %c0_56 = arith.constant 0 : index
    %c0_57 = arith.constant 0 : index
    %52 = vector.load %arg13[%c0_55, %c0_56, %c0_57] : memref<16x16x128xf32, #tpu.memory_space<vmem>>, vector<16x16x128xf32>
    tpu.vector_store %arg13[%c0_55, %c0_56, %c0_57], %51 {strides = array<i32>} : memref<16x16x128xf32, #tpu.memory_space<vmem>>, vector<16x16x128xf32>,
    %c1_58 = arith.constant 1 : index
    %c0_59 = arith.constant 0 : index
    %c0_60 = arith.constant 0 : index
    %53 = vector.load %arg12[%c1_58, %c0_59, %c0_60] : memref<18x32x256xbf16, #tpu.memory_space<vmem>>, vector<16x32x256xbf16>
    %54 = vector.shape_cast %53 : vector<16x32x256xbf16> to vector<512x256xbf16>
    %c1_61 = arith.constant 1 : index
    %c0_62 = arith.constant 0 : index
    %c0_63 = arith.constant 0 : index
    %55 = vector.load %arg8[%c1_61, %c0_62, %c0_63] : memref<3x256x384xbf16, #tpu.memory_space<vmem>>, vector<1x256x384xbf16>
    %56 = vector.shape_cast %55 : vector<1x256x384xbf16> to vector<256x384xbf16>
    %cst_64 = arith.constant dense<0.000000e+00> : vector<512x384xf32>
    %57 = tpu.matmul %54, %56, %cst_64 {dimension_numbers = #tpu.dot_dimension_numbers<[1], [0], [0], [1], [0, 0, 1, 1], [], []>} : vector<512x256xbf16>, vector<256x384xbf16>, vector<512x384xf32> -> vector<512x384xf32>
    %58 = vector.shape_cast %57 : vector<512x384xf32> to vector<16x32x384xf32>
    %59 = vector.extract_strided_slice %58 {offsets = [0, 0, 0], sizes = [16, 16, 128], strides = [1, 1, 1]} : vector<16x32x384xf32> to vector<16x16x128xf32>
    %60 = vector.extract_strided_slice %58 {offsets = [0, 1, 128], sizes = [16, 16, 128], strides = [1, 1, 1]} : vector<16x32x384xf32> to vector<16x16x128xf32>
    %61 = arith.addf %59, %60 : vector<16x16x128xf32>
    %62 = vector.extract_strided_slice %58 {offsets = [0, 2, 256], sizes = [16, 16, 128], strides = [1, 1, 1]} : vector<16x32x384xf32> to vector<16x16x128xf32>
    %63 = arith.addf %61, %62 : vector<16x16x128xf32>
    %c0_65 = arith.constant 0 : index
    %c0_66 = arith.constant 0 : index
    %c0_67 = arith.constant 0 : index
    %64 = vector.load %arg13[%c0_65, %c0_66, %c0_67] : memref<16x16x128xf32, #tpu.memory_space<vmem>>, vector<16x16x128xf32>
    %65 = arith.addf %64, %63 : vector<16x16x128xf32>
    %c0_68 = arith.constant 0 : index
    %c0_69 = arith.constant 0 : index
    %c0_70 = arith.constant 0 : index
    %66 = vector.load %arg13[%c0_68, %c0_69, %c0_70] : memref<16x16x128xf32, #tpu.memory_space<vmem>>, vector<16x16x128xf32>
    tpu.vector_store %arg13[%c0_68, %c0_69, %c0_70], %65 {strides = array<i32>} : memref<16x16x128xf32, #tpu.memory_space<vmem>>, vector<16x16x128xf32>,
    %c2 = arith.constant 2 : index
    %c0_71 = arith.constant 0 : index
    %c0_72 = arith.constant 0 : index
    %67 = vector.load %arg12[%c2, %c0_71, %c0_72] : memref<18x32x256xbf16, #tpu.memory_space<vmem>>, vector<16x32x256xbf16>
    %68 = vector.shape_cast %67 : vector<16x32x256xbf16> to vector<512x256xbf16>
    %c2_73 = arith.constant 2 : index
    %c0_74 = arith.constant 0 : index
    %c0_75 = arith.constant 0 : index
    %69 = vector.load %arg8[%c2_73, %c0_74, %c0_75] : memref<3x256x384xbf16, #tpu.memory_space<vmem>>, vector<1x256x384xbf16>
    %70 = vector.shape_cast %69 : vector<1x256x384xbf16> to vector<256x384xbf16>
    %cst_76 = arith.constant dense<0.000000e+00> : vector<512x384xf32>
    %71 = tpu.matmul %68, %70, %cst_76 {dimension_numbers = #tpu.dot_dimension_numbers<[1], [0], [0], [1], [0, 0, 1, 1], [], []>} : vector<512x256xbf16>, vector<256x384xbf16>, vector<512x384xf32> -> vector<512x384xf32>
    %72 = vector.shape_cast %71 : vector<512x384xf32> to vector<16x32x384xf32>
    %73 = vector.extract_strided_slice %72 {offsets = [0, 0, 0], sizes = [16, 16, 128], strides = [1, 1, 1]} : vector<16x32x384xf32> to vector<16x16x128xf32>
    %74 = vector.extract_strided_slice %72 {offsets = [0, 1, 128], sizes = [16, 16, 128], strides = [1, 1, 1]} : vector<16x32x384xf32> to vector<16x16x128xf32>
    %75 = arith.addf %73, %74 : vector<16x16x128xf32>
    %76 = vector.extract_strided_slice %72 {offsets = [0, 2, 256], sizes = [16, 16, 128], strides = [1, 1, 1]} : vector<16x32x384xf32> to vector<16x16x128xf32>
    %77 = arith.addf %75, %76 : vector<16x16x128xf32>
    %c0_77 = arith.constant 0 : index
    %c0_78 = arith.constant 0 : index
    %c0_79 = arith.constant 0 : index
    %78 = vector.load %arg13[%c0_77, %c0_78, %c0_79] : memref<16x16x128xf32, #tpu.memory_space<vmem>>, vector<16x16x128xf32>
    %79 = arith.addf %78, %77 : vector<16x16x128xf32>
    %c0_80 = arith.constant 0 : index
    %c0_81 = arith.constant 0 : index
    %c0_82 = arith.constant 0 : index
    %80 = vector.load %arg13[%c0_80, %c0_81, %c0_82] : memref<16x16x128xf32, #tpu.memory_space<vmem>>, vector<16x16x128xf32>
    tpu.vector_store %arg13[%c0_80, %c0_81, %c0_82], %79 {strides = array<i32>} : memref<16x16x128xf32, #tpu.memory_space<vmem>>, vector<16x16x128xf32>,
    %c0_83 = arith.constant 0 : index
    %c0_84 = arith.constant 0 : index
    %c0_85 = arith.constant 0 : index
    %81 = vector.load %arg13[%c0_83, %c0_84, %c0_85] : memref<16x16x128xf32, #tpu.memory_space<vmem>>, vector<16x16x128xf32>
    %c0_86 = arith.constant 0 : index
    %c0_87 = arith.constant 0 : index
    %82 = vector.load %arg9[%c0_86, %c0_87] : memref<1x128xf32, #tpu.memory_space<vmem>>, vector<1x128xf32>
    %83 = vector.shape_cast %82 : vector<1x128xf32> to vector<1x1x128xf32>
    %84 = vector.broadcast %83 : vector<1x1x128xf32> to vector<16x16x128xf32>
    %85 = arith.mulf %81, %84 : vector<16x16x128xf32>
    %c0_88 = arith.constant 0 : index
    %c0_89 = arith.constant 0 : index
    %86 = vector.load %arg10[%c0_88, %c0_89] : memref<1x128xf32, #tpu.memory_space<vmem>>, vector<1x128xf32>
    %87 = vector.shape_cast %86 : vector<1x128xf32> to vector<1x1x128xf32>
    %88 = vector.broadcast %87 : vector<1x1x128xf32> to vector<16x16x128xf32>
    %89 = arith.addf %85, %88 : vector<16x16x128xf32>
    %cst_90 = arith.constant 0.000000e+00 : f32
    %90 = vector.broadcast %cst_90 : f32 to vector<16x16x128xf32>
    %91 = arith.maximumf %89, %90 : vector<16x16x128xf32>
    %92 = arith.truncf %91 : vector<16x16x128xf32> to vector<16x16x128xbf16>
    %c0_91 = arith.constant 0 : index
    %c0_92 = arith.constant 0 : index
    %c0_93 = arith.constant 0 : index
    %c0_94 = arith.constant 0 : index
    %93 = vector.load %arg11[%c0_91, %c0_92, %c0_93, %c0_94] : memref<1x16x16x128xbf16, #tpu.memory_space<vmem>>, vector<1x16x16x128xbf16>
    %94 = vector.shape_cast %93 : vector<1x16x16x128xbf16> to vector<16x16x128xbf16>
    %95 = vector.shape_cast %92 : vector<16x16x128xbf16> to vector<1x16x16x128xbf16>
    tpu.vector_store %arg11[%c0_91, %c0_92, %c0_93, %c0_94], %95 {strides = array<i32>} : memref<1x16x16x128xbf16, #tpu.memory_space<vmem>>, vector<1x16x16x128xbf16>,
    return
  }
  func.func @transform_0(%arg0: i32, %arg1: i32) -> (i32, i32, i32, i32) {
    %c0_i32 = arith.constant 0 : i32
    %c0_i32_0 = arith.constant 0 : i32
    %c0_i32_1 = arith.constant 0 : i32
    return %arg0, %arg1, %c0_i32, %c0_i32_0 : i32, i32, i32, i32
  }
  func.func @transform_1(%arg0: i32, %arg1: i32) -> (i32, i32, i32, i32) {
    %c16_i32 = arith.constant 16 : i32
    %0 = arith.muli %arg1, %c16_i32 : i32
    %c1_i32 = arith.constant 1 : i32
    %1 = arith.subi %0, %c1_i32 : i32
    %c0_i32 = arith.constant 0 : i32
    %2 = arith.maxsi %1, %c0_i32 : i32
    %c0_i32_0 = arith.constant 0 : i32
    %c0_i32_1 = arith.constant 0 : i32
    %c0_i32_2 = arith.constant 0 : i32
    return %arg0, %2, %c0_i32_0, %c0_i32_1 : i32, i32, i32, i32
  }
  func.func @transform_2(%arg0: i32, %arg1: i32) -> (i32, i32, i32, i32) {
    %c1_i32 = arith.constant 1 : i32
    %0 = arith.addi %arg1, %c1_i32 : i32
    %c16_i32 = arith.constant 16 : i32
    %1 = arith.muli %0, %c16_i32 : i32
    %c15_i32 = arith.constant 15 : i32
    %2 = arith.minsi %1, %c15_i32 : i32
    %c0_i32 = arith.constant 0 : i32
    %c0_i32_0 = arith.constant 0 : i32
    %c0_i32_1 = arith.constant 0 : i32
    return %arg0, %2, %c0_i32, %c0_i32_0 : i32, i32, i32, i32
  }
  func.func @transform_3(%arg0: i32, %arg1: i32) -> (i32, i32, i32, i32) {
    %c0_i32 = arith.constant 0 : i32
    %c0_i32_0 = arith.constant 0 : i32
    %c0_i32_1 = arith.constant 0 : i32
    return %arg0, %arg1, %c0_i32, %c0_i32_0 : i32, i32, i32, i32
  }
  func.func @transform_4(%arg0: i32, %arg1: i32) -> (i32, i32, i32, i32) {
    %c16_i32 = arith.constant 16 : i32
    %0 = arith.muli %arg1, %c16_i32 : i32
    %c1_i32 = arith.constant 1 : i32
    %1 = arith.subi %0, %c1_i32 : i32
    %c0_i32 = arith.constant 0 : i32
    %2 = arith.maxsi %1, %c0_i32 : i32
    %c0_i32_0 = arith.constant 0 : i32
    %c0_i32_1 = arith.constant 0 : i32
    %c0_i32_2 = arith.constant 0 : i32
    return %arg0, %2, %c0_i32_0, %c0_i32_1 : i32, i32, i32, i32
  }
  func.func @transform_5(%arg0: i32, %arg1: i32) -> (i32, i32, i32, i32) {
    %c1_i32 = arith.constant 1 : i32
    %0 = arith.addi %arg1, %c1_i32 : i32
    %c16_i32 = arith.constant 16 : i32
    %1 = arith.muli %0, %c16_i32 : i32
    %c15_i32 = arith.constant 15 : i32
    %2 = arith.minsi %1, %c15_i32 : i32
    %c0_i32 = arith.constant 0 : i32
    %c0_i32_0 = arith.constant 0 : i32
    %c0_i32_1 = arith.constant 0 : i32
    return %arg0, %2, %c0_i32, %c0_i32_0 : i32, i32, i32, i32
  }
  func.func @transform_6(%arg0: i32, %arg1: i32) -> (i32, i32, i32) {
    %c0_i32 = arith.constant 0 : i32
    %c0_i32_0 = arith.constant 0 : i32
    %c0_i32_1 = arith.constant 0 : i32
    %c0_i32_2 = arith.constant 0 : i32
    return %c0_i32, %c0_i32_0, %c0_i32_1 : i32, i32, i32
  }
  func.func @transform_7(%arg0: i32, %arg1: i32) -> (i32, i32) {
    %c0_i32 = arith.constant 0 : i32
    %c0_i32_0 = arith.constant 0 : i32
    %c0_i32_1 = arith.constant 0 : i32
    return %c0_i32, %c0_i32_0 : i32, i32
  }
  func.func @transform_8(%arg0: i32, %arg1: i32) -> (i32, i32) {
    %c0_i32 = arith.constant 0 : i32
    %c0_i32_0 = arith.constant 0 : i32
    %c0_i32_1 = arith.constant 0 : i32
    return %c0_i32, %c0_i32_0 : i32, i32
  }
  func.func @transform_9(%arg0: i32, %arg1: i32) -> (i32, i32, i32, i32) {
    %c0_i32 = arith.constant 0 : i32
    %c0_i32_0 = arith.constant 0 : i32
    %c0_i32_1 = arith.constant 0 : i32
    return %arg0, %arg1, %c0_i32, %c0_i32_0 : i32, i32, i32, i32
  }
}

module attributes {stable_mosaic.version = 11 : i64} {
  func.func @kernel(%arg0: i32, %arg1: i32, %arg2: memref<1x16x16x128xbf16, #tpu.memory_space<vmem>>, %arg3: memref<1x1x16x128xbf16, #tpu.memory_space<vmem>>, %arg4: memref<1x1x16x128xbf16, #tpu.memory_space<vmem>>, %arg5: memref<3x128x384xbf16, #tpu.memory_space<vmem>>, %arg6: memref<1x128xf32, #tpu.memory_space<vmem>>, %arg7: memref<1x128xf32, #tpu.memory_space<vmem>>, %arg8: memref<1x16x16x128xf32, #tpu.memory_space<vmem>>, %arg9: memref<18x32x128xbf16, #tpu.memory_space<vmem>>, %arg10: memref<16x16x128xf32, #tpu.memory_space<vmem>>) attributes {dimension_semantics = [#tpu.dimension_semantics<parallel>, #tpu.dimension_semantics<parallel>], iteration_bounds = array<i64: 2, 1>, scalar_prefetch = 0 : i64, scratch_operands = 2 : i64, tpu.core_type = #tpu.core_type<tc>, window_params = [{transform_indices = @transform_0, window_bounds = array<i64: 1, 16, 16, 128>}, {transform_indices = @transform_1, window_bounds = array<i64: 1, 1, 16, 128>}, {transform_indices = @transform_2, window_bounds = array<i64: 1, 1, 16, 128>}, {pipeline_mode = #tpu.pipeline_mode<synchronous>, transform_indices = @transform_3, window_bounds = array<i64: 3, 128, 384>}, {pipeline_mode = #tpu.pipeline_mode<synchronous>, transform_indices = @transform_4, window_bounds = array<i64: 1, 128>}, {pipeline_mode = #tpu.pipeline_mode<synchronous>, transform_indices = @transform_5, window_bounds = array<i64: 1, 128>}, {transform_indices = @transform_6, window_bounds = array<i64: 1, 16, 16, 128>}]} {
    %c0_i32 = arith.constant 0 : i32
    %0 = arith.cmpi eq, %arg1, %c0_i32 : i32
    %c0_i32_0 = arith.constant 0 : i32
    %1 = arith.cmpi eq, %arg1, %c0_i32_0 : i32
    %cst = arith.constant 0.000000e+00 : bf16
    %2 = vector.broadcast %cst : bf16 to vector<18x1x128xbf16>
    %c0 = arith.constant 0 : index
    %c0_1 = arith.constant 0 : index
    %c0_2 = arith.constant 0 : index
    %3 = vector.load %arg9[%c0, %c0_1, %c0_2] : memref<18x32x128xbf16, #tpu.memory_space<vmem>>, vector<18x1x128xbf16>
    tpu.vector_store %arg9[%c0, %c0_1, %c0_2], %2 {strides = array<i32>} : memref<18x32x128xbf16, #tpu.memory_space<vmem>>, vector<18x1x128xbf16>,
    %cst_3 = arith.constant 0.000000e+00 : bf16
    %4 = vector.broadcast %cst_3 : bf16 to vector<18x15x128xbf16>
    %c0_4 = arith.constant 0 : index
    %c17 = arith.constant 17 : index
    %c0_5 = arith.constant 0 : index
    %5 = vector.load %arg9[%c0_4, %c17, %c0_5] : memref<18x32x128xbf16, #tpu.memory_space<vmem>>, vector<18x15x128xbf16>
    tpu.vector_store %arg9[%c0_4, %c17, %c0_5], %4 {strides = array<i32>} : memref<18x32x128xbf16, #tpu.memory_space<vmem>>, vector<18x15x128xbf16>,
    %c0_6 = arith.constant 0 : index
    %c0_7 = arith.constant 0 : index
    %c0_8 = arith.constant 0 : index
    %c0_9 = arith.constant 0 : index
    %6 = vector.load %arg2[%c0_6, %c0_7, %c0_8, %c0_9] : memref<1x16x16x128xbf16, #tpu.memory_space<vmem>>, vector<1x16x16x128xbf16>
    %7 = vector.shape_cast %6 : vector<1x16x16x128xbf16> to vector<16x16x128xbf16>
    %c1 = arith.constant 1 : index
    %c1_10 = arith.constant 1 : index
    %c0_11 = arith.constant 0 : index
    %8 = vector.load %arg9[%c1, %c1_10, %c0_11] : memref<18x32x128xbf16, #tpu.memory_space<vmem>>, vector<16x16x128xbf16>
    tpu.vector_store %arg9[%c1, %c1_10, %c0_11], %7 {strides = array<i32>} : memref<18x32x128xbf16, #tpu.memory_space<vmem>>, vector<16x16x128xbf16>,
    %c0_12 = arith.constant 0 : index
    %c0_13 = arith.constant 0 : index
    %c0_14 = arith.constant 0 : index
    %c0_15 = arith.constant 0 : index
    %9 = vector.load %arg3[%c0_12, %c0_13, %c0_14, %c0_15] : memref<1x1x16x128xbf16, #tpu.memory_space<vmem>>, vector<1x1x16x128xbf16>
    %10 = vector.shape_cast %9 : vector<1x1x16x128xbf16> to vector<16x128xbf16>
    %c0_16 = arith.constant 0 : index
    %c0_17 = arith.constant 0 : index
    %c0_18 = arith.constant 0 : index
    %c0_19 = arith.constant 0 : index
    %11 = vector.load %arg4[%c0_16, %c0_17, %c0_18, %c0_19] : memref<1x1x16x128xbf16, #tpu.memory_space<vmem>>, vector<1x1x16x128xbf16>
    %12 = vector.shape_cast %11 : vector<1x1x16x128xbf16> to vector<16x128xbf16>
    %cst_20 = arith.constant 0.000000e+00 : bf16
    %13 = vector.broadcast %cst_20 : bf16 to vector<16x128xbf16>
    %14 = arith.select %0, %13, %10 : vector<16x128xbf16>
    %c0_21 = arith.constant 0 : index
    %c1_22 = arith.constant 1 : index
    %c0_23 = arith.constant 0 : index
    %15 = vector.load %arg9[%c0_21, %c1_22, %c0_23] : memref<18x32x128xbf16, #tpu.memory_space<vmem>>, vector<1x16x128xbf16>
    %16 = vector.shape_cast %15 : vector<1x16x128xbf16> to vector<16x128xbf16>
    %17 = vector.shape_cast %14 : vector<16x128xbf16> to vector<1x16x128xbf16>
    tpu.vector_store %arg9[%c0_21, %c1_22, %c0_23], %17 {strides = array<i32>} : memref<18x32x128xbf16, #tpu.memory_space<vmem>>, vector<1x16x128xbf16>,
    %18 = arith.select %1, %13, %12 : vector<16x128xbf16>
    %c17_24 = arith.constant 17 : index
    %c1_25 = arith.constant 1 : index
    %c0_26 = arith.constant 0 : index
    %19 = vector.load %arg9[%c17_24, %c1_25, %c0_26] : memref<18x32x128xbf16, #tpu.memory_space<vmem>>, vector<1x16x128xbf16>
    %20 = vector.shape_cast %19 : vector<1x16x128xbf16> to vector<16x128xbf16>
    %21 = vector.shape_cast %18 : vector<16x128xbf16> to vector<1x16x128xbf16>
    tpu.vector_store %arg9[%c17_24, %c1_25, %c0_26], %21 {strides = array<i32>} : memref<18x32x128xbf16, #tpu.memory_space<vmem>>, vector<1x16x128xbf16>,
    %c0_27 = arith.constant 0 : index
    %c0_28 = arith.constant 0 : index
    %c0_29 = arith.constant 0 : index
    %22 = vector.load %arg9[%c0_27, %c0_28, %c0_29] : memref<18x32x128xbf16, #tpu.memory_space<vmem>>, vector<16x32x128xbf16>
    %23 = vector.shape_cast %22 : vector<16x32x128xbf16> to vector<512x128xbf16>
    %c0_30 = arith.constant 0 : index
    %c0_31 = arith.constant 0 : index
    %c0_32 = arith.constant 0 : index
    %24 = vector.load %arg5[%c0_30, %c0_31, %c0_32] : memref<3x128x384xbf16, #tpu.memory_space<vmem>>, vector<1x128x384xbf16>
    %25 = vector.shape_cast %24 : vector<1x128x384xbf16> to vector<128x384xbf16>
    %cst_33 = arith.constant dense<0.000000e+00> : vector<512x384xf32>
    %26 = tpu.matmul %23, %25, %cst_33 {dimension_numbers = #tpu.dot_dimension_numbers<[1], [0], [0], [1], [0, 0, 1, 1], [], []>} : vector<512x128xbf16>, vector<128x384xbf16>, vector<512x384xf32> -> vector<512x384xf32>
    %27 = vector.shape_cast %26 : vector<512x384xf32> to vector<16x32x384xf32>
    %28 = vector.extract_strided_slice %27 {offsets = [0, 0, 0], sizes = [16, 16, 128], strides = [1, 1, 1]} : vector<16x32x384xf32> to vector<16x16x128xf32>
    %29 = vector.extract_strided_slice %27 {offsets = [0, 1, 128], sizes = [16, 16, 128], strides = [1, 1, 1]} : vector<16x32x384xf32> to vector<16x16x128xf32>
    %30 = arith.addf %28, %29 : vector<16x16x128xf32>
    %31 = vector.extract_strided_slice %27 {offsets = [0, 2, 256], sizes = [16, 16, 128], strides = [1, 1, 1]} : vector<16x32x384xf32> to vector<16x16x128xf32>
    %32 = arith.addf %30, %31 : vector<16x16x128xf32>
    %c0_34 = arith.constant 0 : index
    %c0_35 = arith.constant 0 : index
    %c0_36 = arith.constant 0 : index
    %33 = vector.load %arg10[%c0_34, %c0_35, %c0_36] : memref<16x16x128xf32, #tpu.memory_space<vmem>>, vector<16x16x128xf32>
    tpu.vector_store %arg10[%c0_34, %c0_35, %c0_36], %32 {strides = array<i32>} : memref<16x16x128xf32, #tpu.memory_space<vmem>>, vector<16x16x128xf32>,
    %c1_37 = arith.constant 1 : index
    %c0_38 = arith.constant 0 : index
    %c0_39 = arith.constant 0 : index
    %34 = vector.load %arg9[%c1_37, %c0_38, %c0_39] : memref<18x32x128xbf16, #tpu.memory_space<vmem>>, vector<16x32x128xbf16>
    %35 = vector.shape_cast %34 : vector<16x32x128xbf16> to vector<512x128xbf16>
    %c1_40 = arith.constant 1 : index
    %c0_41 = arith.constant 0 : index
    %c0_42 = arith.constant 0 : index
    %36 = vector.load %arg5[%c1_40, %c0_41, %c0_42] : memref<3x128x384xbf16, #tpu.memory_space<vmem>>, vector<1x128x384xbf16>
    %37 = vector.shape_cast %36 : vector<1x128x384xbf16> to vector<128x384xbf16>
    %cst_43 = arith.constant dense<0.000000e+00> : vector<512x384xf32>
    %38 = tpu.matmul %35, %37, %cst_43 {dimension_numbers = #tpu.dot_dimension_numbers<[1], [0], [0], [1], [0, 0, 1, 1], [], []>} : vector<512x128xbf16>, vector<128x384xbf16>, vector<512x384xf32> -> vector<512x384xf32>
    %39 = vector.shape_cast %38 : vector<512x384xf32> to vector<16x32x384xf32>
    %40 = vector.extract_strided_slice %39 {offsets = [0, 0, 0], sizes = [16, 16, 128], strides = [1, 1, 1]} : vector<16x32x384xf32> to vector<16x16x128xf32>
    %41 = vector.extract_strided_slice %39 {offsets = [0, 1, 128], sizes = [16, 16, 128], strides = [1, 1, 1]} : vector<16x32x384xf32> to vector<16x16x128xf32>
    %42 = arith.addf %40, %41 : vector<16x16x128xf32>
    %43 = vector.extract_strided_slice %39 {offsets = [0, 2, 256], sizes = [16, 16, 128], strides = [1, 1, 1]} : vector<16x32x384xf32> to vector<16x16x128xf32>
    %44 = arith.addf %42, %43 : vector<16x16x128xf32>
    %c0_44 = arith.constant 0 : index
    %c0_45 = arith.constant 0 : index
    %c0_46 = arith.constant 0 : index
    %45 = vector.load %arg10[%c0_44, %c0_45, %c0_46] : memref<16x16x128xf32, #tpu.memory_space<vmem>>, vector<16x16x128xf32>
    %46 = arith.addf %45, %44 : vector<16x16x128xf32>
    %c0_47 = arith.constant 0 : index
    %c0_48 = arith.constant 0 : index
    %c0_49 = arith.constant 0 : index
    %47 = vector.load %arg10[%c0_47, %c0_48, %c0_49] : memref<16x16x128xf32, #tpu.memory_space<vmem>>, vector<16x16x128xf32>
    tpu.vector_store %arg10[%c0_47, %c0_48, %c0_49], %46 {strides = array<i32>} : memref<16x16x128xf32, #tpu.memory_space<vmem>>, vector<16x16x128xf32>,
    %c2 = arith.constant 2 : index
    %c0_50 = arith.constant 0 : index
    %c0_51 = arith.constant 0 : index
    %48 = vector.load %arg9[%c2, %c0_50, %c0_51] : memref<18x32x128xbf16, #tpu.memory_space<vmem>>, vector<16x32x128xbf16>
    %49 = vector.shape_cast %48 : vector<16x32x128xbf16> to vector<512x128xbf16>
    %c2_52 = arith.constant 2 : index
    %c0_53 = arith.constant 0 : index
    %c0_54 = arith.constant 0 : index
    %50 = vector.load %arg5[%c2_52, %c0_53, %c0_54] : memref<3x128x384xbf16, #tpu.memory_space<vmem>>, vector<1x128x384xbf16>
    %51 = vector.shape_cast %50 : vector<1x128x384xbf16> to vector<128x384xbf16>
    %cst_55 = arith.constant dense<0.000000e+00> : vector<512x384xf32>
    %52 = tpu.matmul %49, %51, %cst_55 {dimension_numbers = #tpu.dot_dimension_numbers<[1], [0], [0], [1], [0, 0, 1, 1], [], []>} : vector<512x128xbf16>, vector<128x384xbf16>, vector<512x384xf32> -> vector<512x384xf32>
    %53 = vector.shape_cast %52 : vector<512x384xf32> to vector<16x32x384xf32>
    %54 = vector.extract_strided_slice %53 {offsets = [0, 0, 0], sizes = [16, 16, 128], strides = [1, 1, 1]} : vector<16x32x384xf32> to vector<16x16x128xf32>
    %55 = vector.extract_strided_slice %53 {offsets = [0, 1, 128], sizes = [16, 16, 128], strides = [1, 1, 1]} : vector<16x32x384xf32> to vector<16x16x128xf32>
    %56 = arith.addf %54, %55 : vector<16x16x128xf32>
    %57 = vector.extract_strided_slice %53 {offsets = [0, 2, 256], sizes = [16, 16, 128], strides = [1, 1, 1]} : vector<16x32x384xf32> to vector<16x16x128xf32>
    %58 = arith.addf %56, %57 : vector<16x16x128xf32>
    %c0_56 = arith.constant 0 : index
    %c0_57 = arith.constant 0 : index
    %c0_58 = arith.constant 0 : index
    %59 = vector.load %arg10[%c0_56, %c0_57, %c0_58] : memref<16x16x128xf32, #tpu.memory_space<vmem>>, vector<16x16x128xf32>
    %60 = arith.addf %59, %58 : vector<16x16x128xf32>
    %c0_59 = arith.constant 0 : index
    %c0_60 = arith.constant 0 : index
    %c0_61 = arith.constant 0 : index
    %61 = vector.load %arg10[%c0_59, %c0_60, %c0_61] : memref<16x16x128xf32, #tpu.memory_space<vmem>>, vector<16x16x128xf32>
    tpu.vector_store %arg10[%c0_59, %c0_60, %c0_61], %60 {strides = array<i32>} : memref<16x16x128xf32, #tpu.memory_space<vmem>>, vector<16x16x128xf32>,
    %c0_62 = arith.constant 0 : index
    %c0_63 = arith.constant 0 : index
    %c0_64 = arith.constant 0 : index
    %62 = vector.load %arg10[%c0_62, %c0_63, %c0_64] : memref<16x16x128xf32, #tpu.memory_space<vmem>>, vector<16x16x128xf32>
    %c0_65 = arith.constant 0 : index
    %c0_66 = arith.constant 0 : index
    %63 = vector.load %arg6[%c0_65, %c0_66] : memref<1x128xf32, #tpu.memory_space<vmem>>, vector<1x128xf32>
    %64 = vector.shape_cast %63 : vector<1x128xf32> to vector<1x1x128xf32>
    %65 = vector.broadcast %64 : vector<1x1x128xf32> to vector<16x16x128xf32>
    %66 = arith.mulf %62, %65 : vector<16x16x128xf32>
    %c0_67 = arith.constant 0 : index
    %c0_68 = arith.constant 0 : index
    %67 = vector.load %arg7[%c0_67, %c0_68] : memref<1x128xf32, #tpu.memory_space<vmem>>, vector<1x128xf32>
    %68 = vector.shape_cast %67 : vector<1x128xf32> to vector<1x1x128xf32>
    %69 = vector.broadcast %68 : vector<1x1x128xf32> to vector<16x16x128xf32>
    %70 = arith.addf %66, %69 : vector<16x16x128xf32>
    %cst_69 = arith.constant 0.000000e+00 : f32
    %71 = vector.broadcast %cst_69 : f32 to vector<16x16x128xf32>
    %72 = arith.maximumf %70, %71 : vector<16x16x128xf32>
    %c0_70 = arith.constant 0 : index
    %c0_71 = arith.constant 0 : index
    %c0_72 = arith.constant 0 : index
    %c0_73 = arith.constant 0 : index
    %73 = vector.load %arg8[%c0_70, %c0_71, %c0_72, %c0_73] : memref<1x16x16x128xf32, #tpu.memory_space<vmem>>, vector<1x16x16x128xf32>
    %74 = vector.shape_cast %73 : vector<1x16x16x128xf32> to vector<16x16x128xf32>
    %75 = vector.shape_cast %72 : vector<16x16x128xf32> to vector<1x16x16x128xf32>
    tpu.vector_store %arg8[%c0_70, %c0_71, %c0_72, %c0_73], %75 {strides = array<i32>} : memref<1x16x16x128xf32, #tpu.memory_space<vmem>>, vector<1x16x16x128xf32>,
    return
  }
  func.func @transform_0(%arg0: i32, %arg1: i32) -> (i32, i32, i32, i32) {
    %c0_i32 = arith.constant 0 : i32
    %c0_i32_0 = arith.constant 0 : i32
    %c0_i32_1 = arith.constant 0 : i32
    return %arg0, %arg1, %c0_i32, %c0_i32_0 : i32, i32, i32, i32
  }
  func.func @transform_1(%arg0: i32, %arg1: i32) -> (i32, i32, i32, i32) {
    %c16_i32 = arith.constant 16 : i32
    %0 = arith.muli %arg1, %c16_i32 : i32
    %c1_i32 = arith.constant 1 : i32
    %1 = arith.subi %0, %c1_i32 : i32
    %c0_i32 = arith.constant 0 : i32
    %2 = arith.maxsi %1, %c0_i32 : i32
    %c0_i32_0 = arith.constant 0 : i32
    %c0_i32_1 = arith.constant 0 : i32
    %c0_i32_2 = arith.constant 0 : i32
    return %arg0, %2, %c0_i32_0, %c0_i32_1 : i32, i32, i32, i32
  }
  func.func @transform_2(%arg0: i32, %arg1: i32) -> (i32, i32, i32, i32) {
    %c1_i32 = arith.constant 1 : i32
    %0 = arith.addi %arg1, %c1_i32 : i32
    %c16_i32 = arith.constant 16 : i32
    %1 = arith.muli %0, %c16_i32 : i32
    %c15_i32 = arith.constant 15 : i32
    %2 = arith.minsi %1, %c15_i32 : i32
    %c0_i32 = arith.constant 0 : i32
    %c0_i32_0 = arith.constant 0 : i32
    %c0_i32_1 = arith.constant 0 : i32
    return %arg0, %2, %c0_i32, %c0_i32_0 : i32, i32, i32, i32
  }
  func.func @transform_3(%arg0: i32, %arg1: i32) -> (i32, i32, i32) {
    %c0_i32 = arith.constant 0 : i32
    %c0_i32_0 = arith.constant 0 : i32
    %c0_i32_1 = arith.constant 0 : i32
    %c0_i32_2 = arith.constant 0 : i32
    return %c0_i32, %c0_i32_0, %c0_i32_1 : i32, i32, i32
  }
  func.func @transform_4(%arg0: i32, %arg1: i32) -> (i32, i32) {
    %c0_i32 = arith.constant 0 : i32
    %c0_i32_0 = arith.constant 0 : i32
    %c0_i32_1 = arith.constant 0 : i32
    return %c0_i32, %c0_i32_0 : i32, i32
  }
  func.func @transform_5(%arg0: i32, %arg1: i32) -> (i32, i32) {
    %c0_i32 = arith.constant 0 : i32
    %c0_i32_0 = arith.constant 0 : i32
    %c0_i32_1 = arith.constant 0 : i32
    return %c0_i32, %c0_i32_0 : i32, i32
  }
  func.func @transform_6(%arg0: i32, %arg1: i32) -> (i32, i32, i32, i32) {
    %c0_i32 = arith.constant 0 : i32
    %c0_i32_0 = arith.constant 0 : i32
    %c0_i32_1 = arith.constant 0 : i32
    return %arg0, %arg1, %c0_i32, %c0_i32_0 : i32, i32, i32, i32
  }
}

</mosaic_0001>

<llo_original>
// kernel: tile.8
$region0: #{tile.8}
  #allocation0 [shape = 's32[1]{0}', space=sflag, size = 0x4, scoped, tag = 'scoped memory for tile.8']
  %s0 = inlined_call_operand.vmem [shape: f32[128], index: 0, kind: input, shape index: {}]
  %s1 = inlined_call_operand.vmem [shape: f32[4,128], index: 1, kind: output, shape index: {}]
  // Predicated region
  $region2: #{tile.8} parent=0 // pred_check
    _
  $region3: #{tile.8} parent=0 // pred_check_branch
    %3 = sbr.rel (0) target = $region5
  $region4: #{tile.8} parent=0 // pred_region
    _
  $region5: #{tile.8} parent=0 // pred_fallthru
    _
  %v4 = vld [vmem:[%s0] ss:$0 sm:$0xff]
  %5 = vst [vmem:[%s1] sm:$0xf] %v4

// kernel: up_block_forward.3
$region0: #{up_block_forward.3}
  #allocation0 [shape = 'u32[]', space=smem, size = 0x4, offset = 0x4, fixed_abs, tag = 'smem constant byte address 0x4 - core index']
  #allocation1 [shape = 'u32[144,128]{1,0:T(1,128)}', space=vmem, size = 0x12000, scoped, tag = 'internal scratch']
  %s0 = inlined_call_operand.vmem [shape: f32[16,8,256], index: 0, kind: input, shape index: {}]
  %s1 = inlined_call_operand.vmem [shape: bf16[256,512], index: 1, kind: input, shape index: {}]
  %s2 = inlined_call_operand.vmem [shape: f32[1,512], index: 2, kind: input, shape index: {}]
  %s3 = inlined_call_operand.vmem [shape: bf16[16,2,8,256], index: 3, kind: output, shape index: {}]
  %s4 = sld [smem:[#allocation0]]
  $region22: #{up_block_forward.3} parent=0
    _
  %s6 = ssub.s32 1, %s4
  %s7 = scalar_select 0, %s6, %s4
  // Predicated region
  $region2: #{up_block_forward.3} parent=0 // pred_check
    _
  $region3: #{up_block_forward.3} parent=0 // pred_check_branch
    %9 = sbr.rel (0) target = $region5
  $region4: #{up_block_forward.3} parent=0 // pred_region
    _
  $region5: #{up_block_forward.3} parent=0 // pred_fallthru
    _
  // Predicated region
  $region6: #{up_block_forward.3} parent=0 // pred_check
    _
  $region7: #{up_block_forward.3} parent=0 // pred_check_branch
    %11 = sbr.rel (0) target = $region9
  $region8: #{up_block_forward.3} parent=0 // pred_region
    _
  $region9: #{up_block_forward.3} parent=0 // pred_fallthru
    _
  // Predicated region
  $region10: #{up_block_forward.3} parent=0 // pred_check
    _
  $region11: #{up_block_forward.3} parent=0 // pred_check_branch
    %13 = sbr.rel (0) target = $region13
  $region12: #{up_block_forward.3} parent=0 // pred_region
    _
  $region13: #{up_block_forward.3} parent=0 // pred_fallthru
    _
  %v14 = vld [vmem:[%s0] sm:$0xff]
  %v15 = vld [vmem:[%s0 + $0x8] sm:$0xff]
  %v16 = vld [vmem:[%s0 + $0x10] sm:$0xff]
  %v17 = vld [vmem:[%s0 + $0x18] sm:$0xff]
  %v18 = vld [vmem:[%s0 + $0x20] sm:$0xff]
  %v19 = vld [vmem:[%s0 + $0x28] sm:$0xff]
  %v20 = vld [vmem:[%s0 + $0x30] sm:$0xff]
  %v21 = vld [vmem:[%s0 + $0x38] sm:$0xff]
  %v22 = vld [vmem:[%s0 + $0x40] sm:$0xff]
  %v23 = vld [vmem:[%s0 + $0x48] sm:$0xff]
  %v24 = vld [vmem:[%s0 + $0x50] sm:$0xff]
  %v25 = vld [vmem:[%s0 + $0x58] sm:$0xff]
  %v26 = vld [vmem:[%s0 + $0x60] sm:$0xff]
  %v27 = vld [vmem:[%s0 + $0x68] sm:$0xff]
  %v28 = vld [vmem:[%s0 + $0x70] sm:$0xff]
  %v29 = vld [vmem:[%s0 + $0x78] sm:$0xff]
  %v30 = vld [vmem:[%s0 + $0x80] sm:$0xff]
  %v31 = vld [vmem:[%s0 + $0x88] sm:$0xff]
  %v32 = vld [vmem:[%s0 + $0x90] sm:$0xff]
  %v33 = vld [vmem:[%s0 + $0x98] sm:$0xff]
  %v34 = vld [vmem:[%s0 + $0xa0] sm:$0xff]
  %v35 = vld [vmem:[%s0 + $0xa8] sm:$0xff]
  %v36 = vld [vmem:[%s0 + $0xb0] sm:$0xff]
  %v37 = vld [vmem:[%s0 + $0xb8] sm:$0xff]
  %v38 = vld [vmem:[%s0 + $0xc0] sm:$0xff]
  %v39 = vld [vmem:[%s0 + $0xc8] sm:$0xff]
  %v40 = vld [vmem:[%s0 + $0xd0] sm:$0xff]
  %v41 = vld [vmem:[%s0 + $0xd8] sm:$0xff]
  %v42 = vld [vmem:[%s0 + $0xe0] sm:$0xff]
  %v43 = vld [vmem:[%s0 + $0xe8] sm:$0xff]
  %v44 = vld [vmem:[%s0 + $0xf0] sm:$0xff]
  %v45 = vld [vmem:[%s0 + $0xf8] sm:$0xff]
  %v46 = vpack.c.bf16 %v16, %v14
  %v47 = vpack.c.bf16 %v17, %v15
  %v48 = vpack.c.bf16 %v20, %v18
  %v49 = vpack.c.bf16 %v21, %v19
  %v50 = vpack.c.bf16 %v24, %v22
  %v51 = vpack.c.bf16 %v25, %v23
  %v52 = vpack.c.bf16 %v28, %v26
  %v53 = vpack.c.bf16 %v29, %v27
  %v54 = vpack.c.bf16 %v32, %v30
  %v55 = vpack.c.bf16 %v33, %v31
  %v56 = vpack.c.bf16 %v36, %v34
  %v57 = vpack.c.bf16 %v37, %v35
  %v58 = vpack.c.bf16 %v40, %v38
  %v59 = vpack.c.bf16 %v41, %v39
  %v60 = vpack.c.bf16 %v44, %v42
  %v61 = vpack.c.bf16 %v45, %v43
  %v62 = vld [vmem:[%s1] sm:$0xff]
  %v63 = vld [vmem:[%s1 + $0x8] sm:$0xff]
  %v64 = vld [vmem:[%s1 + $0x10] sm:$0xff]
  %v65 = vld [vmem:[%s1 + $0x18] sm:$0xff]
  %v66 = vld [vmem:[%s1 + $0x20] sm:$0xff]
  %v67 = vld [vmem:[%s1 + $0x28] sm:$0xff]
  %v68 = vld [vmem:[%s1 + $0x30] sm:$0xff]
  %v69 = vld [vmem:[%s1 + $0x38] sm:$0xff]
  %v70 = vld [vmem:[%s1 + $0x40] sm:$0xff]
  %v71 = vld [vmem:[%s1 + $0x48] sm:$0xff]
  %v72 = vld [vmem:[%s1 + $0x50] sm:$0xff]
  %v73 = vld [vmem:[%s1 + $0x58] sm:$0xff]
  %v74 = vld [vmem:[%s1 + $0x60] sm:$0xff]
  %v75 = vld [vmem:[%s1 + $0x68] sm:$0xff]
  %v76 = vld [vmem:[%s1 + $0x70] sm:$0xff]
  %v77 = vld [vmem:[%s1 + $0x78] sm:$0xff]
  %v78 = vld [vmem:[%s1 + $0x80] sm:$0xff]
  %v79 = vld [vmem:[%s1 + $0x88] sm:$0xff]
  %v80 = vld [vmem:[%s1 + $0x90] sm:$0xff]
  %v81 = vld [vmem:[%s1 + $0x98] sm:$0xff]
  %v82 = vld [vmem:[%s1 + $0xa0] sm:$0xff]
  %v83 = vld [vmem:[%s1 + $0xa8] sm:$0xff]
  %v84 = vld [vmem:[%s1 + $0xb0] sm:$0xff]
  %v85 = vld [vmem:[%s1 + $0xb8] sm:$0xff]
  %v86 = vld [vmem:[%s1 + $0xc0] sm:$0xff]
  %v87 = vld [vmem:[%s1 + $0xc8] sm:$0xff]
  %v88 = vld [vmem:[%s1 + $0xd0] sm:$0xff]
  %v89 = vld [vmem:[%s1 + $0xd8] sm:$0xff]
  %v90 = vld [vmem:[%s1 + $0xe0] sm:$0xff]
  %v91 = vld [vmem:[%s1 + $0xe8] sm:$0xff]
  %v92 = vld [vmem:[%s1 + $0xf0] sm:$0xff]
  %v93 = vld [vmem:[%s1 + $0xf8] sm:$0xff]
  %v94 = vld [vmem:[%s1 + $0x100] sm:$0xff]
  %v95 = vld [vmem:[%s1 + $0x108] sm:$0xff]
  %v96 = vld [vmem:[%s1 + $0x110] sm:$0xff]
  %v97 = vld [vmem:[%s1 + $0x118] sm:$0xff]
  %v98 = vld [vmem:[%s1 + $0x120] sm:$0xff]
  %v99 = vld [vmem:[%s1 + $0x128] sm:$0xff]
  %v100 = vld [vmem:[%s1 + $0x130] sm:$0xff]
  %v101 = vld [vmem:[%s1 + $0x138] sm:$0xff]
  %v102 = vld [vmem:[%s1 + $0x140] sm:$0xff]
  %v103 = vld [vmem:[%s1 + $0x148] sm:$0xff]
  %v104 = vld [vmem:[%s1 + $0x150] sm:$0xff]
  %v105 = vld [vmem:[%s1 + $0x158] sm:$0xff]
  %v106 = vld [vmem:[%s1 + $0x160] sm:$0xff]
  %v107 = vld [vmem:[%s1 + $0x168] sm:$0xff]
  %v108 = vld [vmem:[%s1 + $0x170] sm:$0xff]
  %v109 = vld [vmem:[%s1 + $0x178] sm:$0xff]
  %v110 = vld [vmem:[%s1 + $0x180] sm:$0xff]
  %v111 = vld [vmem:[%s1 + $0x188] sm:$0xff]
  %v112 = vld [vmem:[%s1 + $0x190] sm:$0xff]
  %v113 = vld [vmem:[%s1 + $0x198] sm:$0xff]
  %v114 = vld [vmem:[%s1 + $0x1a0] sm:$0xff]
  %v115 = vld [vmem:[%s1 + $0x1a8] sm:$0xff]
  %v116 = vld [vmem:[%s1 + $0x1b0] sm:$0xff]
  %v117 = vld [vmem:[%s1 + $0x1b8] sm:$0xff]
  %v118 = vld [vmem:[%s1 + $0x1c0] sm:$0xff]
  %v119 = vld [vmem:[%s1 + $0x1c8] sm:$0xff]
  %v120 = vld [vmem:[%s1 + $0x1d0] sm:$0xff]
  %v121 = vld [vmem:[%s1 + $0x1d8] sm:$0xff]
  %v122 = vld [vmem:[%s1 + $0x1e0] sm:$0xff]
  %v123 = vld [vmem:[%s1 + $0x1e8] sm:$0xff]
  %v124 = vld [vmem:[%s1 + $0x1f0] sm:$0xff]
  %v125 = vld [vmem:[%s1 + $0x1f8] sm:$0xff]
  %v126 = vld [vmem:[%s2] sm:$0xf]
  %v128 = vlaneseq
  %v129 = vshrl.u32 %v128, 7
  %v130 = vsub.s32 0, %v129
  %v131 = vrot.slane %v126, %v130
  %v132 = vlaneseq
  %v133 = vshrl.u32 %v132, 7
  %v134 = vsub.s32 1, %v133
  %v135 = vrot.slane %v126, %v134
  %v136 = vlaneseq
  %v137 = vshrl.u32 %v136, 7
  %v138 = vsub.s32 2, %v137
  %v139 = vrot.slane %v126, %v138
  %v140 = vlaneseq
  %v141 = vshrl.u32 %v140, 7
  %v142 = vsub.s32 3, %v141
  %v143 = vrot.slane %v126, %v142
  %v212 = vunpack.c.l.b16 %v62
  %v213 = vunpack.c.h.b16 %v62
  %v214 = vunpack.c.l.b16 %v63
  %v215 = vunpack.c.h.b16 %v63
  %v216 = vunpack.c.l.b16 %v64
  %v217 = vunpack.c.h.b16 %v64
  %v218 = vunpack.c.l.b16 %v65
  %v219 = vunpack.c.h.b16 %v65
  %v220 = vunpack.c.l.b16 %v66
  %v221 = vunpack.c.h.b16 %v66
  %v222 = vunpack.c.l.b16 %v67
  %v223 = vunpack.c.h.b16 %v67
  %v224 = vunpack.c.l.b16 %v68
  %v225 = vunpack.c.h.b16 %v68
  %v226 = vunpack.c.l.b16 %v69
  %v227 = vunpack.c.h.b16 %v69
  %v228 = vunpack.c.l.b16 %v70
  %v229 = vunpack.c.h.b16 %v70
  %v230 = vunpack.c.l.b16 %v71
  %v231 = vunpack.c.h.b16 %v71
  %v232 = vunpack.c.l.b16 %v72
  %v233 = vunpack.c.h.b16 %v72
  %v234 = vunpack.c.l.b16 %v73
  %v235 = vunpack.c.h.b16 %v73
  %v236 = vunpack.c.l.b16 %v74
  %v237 = vunpack.c.h.b16 %v74
  %v238 = vunpack.c.l.b16 %v75
  %v239 = vunpack.c.h.b16 %v75
  %v240 = vunpack.c.l.b16 %v76
  %v241 = vunpack.c.h.b16 %v76
  %v242 = vunpack.c.l.b16 %v77
  %v243 = vunpack.c.h.b16 %v77
  %v244 = vunpack.c.l.b16 %v78
  %v245 = vunpack.c.h.b16 %v78
  %v246 = vunpack.c.l.b16 %v79
  %v247 = vunpack.c.h.b16 %v79
  %v248 = vunpack.c.l.b16 %v80
  %v249 = vunpack.c.h.b16 %v80
  %v250 = vunpack.c.l.b16 %v81
  %v251 = vunpack.c.h.b16 %v81
  %v252 = vunpack.c.l.b16 %v82
  %v253 = vunpack.c.h.b16 %v82
  %v254 = vunpack.c.l.b16 %v83
  %v255 = vunpack.c.h.b16 %v83
  %v256 = vunpack.c.l.b16 %v84
  %v257 = vunpack.c.h.b16 %v84
  %v258 = vunpack.c.l.b16 %v85
  %v259 = vunpack.c.h.b16 %v85
  %v260 = vunpack.c.l.b16 %v86
  %v261 = vunpack.c.h.b16 %v86
  %v262 = vunpack.c.l.b16 %v87
  %v263 = vunpack.c.h.b16 %v87
  %v264 = vunpack.c.l.b16 %v88
  %v265 = vunpack.c.h.b16 %v88
  %v266 = vunpack.c.l.b16 %v89
  %v267 = vunpack.c.h.b16 %v89
  %v268 = vunpack.c.l.b16 %v90
  %v269 = vunpack.c.h.b16 %v90
  %v270 = vunpack.c.l.b16 %v91
  %v271 = vunpack.c.h.b16 %v91
  %v272 = vunpack.c.l.b16 %v92
  %v273 = vunpack.c.h.b16 %v92
  %v274 = vunpack.c.l.b16 %v93
  %v275 = vunpack.c.h.b16 %v93
  %v276 = vunpack.c.l.b16 %v94
  %v277 = vunpack.c.h.b16 %v94
  %v278 = vunpack.c.l.b16 %v95
  %v279 = vunpack.c.h.b16 %v95
  %v280 = vunpack.c.l.b16 %v96
  %v281 = vunpack.c.h.b16 %v96
  %v282 = vunpack.c.l.b16 %v97
  %v283 = vunpack.c.h.b16 %v97
  %v284 = vunpack.c.l.b16 %v98
  %v285 = vunpack.c.h.b16 %v98
  %v286 = vunpack.c.l.b16 %v99
  %v287 = vunpack.c.h.b16 %v99
  %v288 = vunpack.c.l.b16 %v100
  %v289 = vunpack.c.h.b16 %v100
  %v290 = vunpack.c.l.b16 %v101
  %v291 = vunpack.c.h.b16 %v101
  %v292 = vunpack.c.l.b16 %v102
  %v293 = vunpack.c.h.b16 %v102
  %v294 = vunpack.c.l.b16 %v103
  %v295 = vunpack.c.h.b16 %v103
  %v296 = vunpack.c.l.b16 %v104
  %v297 = vunpack.c.h.b16 %v104
  %v298 = vunpack.c.l.b16 %v105
  %v299 = vunpack.c.h.b16 %v105
  %v300 = vunpack.c.l.b16 %v106
  %v301 = vunpack.c.h.b16 %v106
  %v302 = vunpack.c.l.b16 %v107
  %v303 = vunpack.c.h.b16 %v107
  %v304 = vunpack.c.l.b16 %v108
  %v305 = vunpack.c.h.b16 %v108
  %v306 = vunpack.c.l.b16 %v109
  %v307 = vunpack.c.h.b16 %v109
  %v308 = vunpack.c.l.b16 %v110
  %v309 = vunpack.c.h.b16 %v110
  %v310 = vunpack.c.l.b16 %v111
  %v311 = vunpack.c.h.b16 %v111
  %v312 = vunpack.c.l.b16 %v112
  %v313 = vunpack.c.h.b16 %v112
  %v314 = vunpack.c.l.b16 %v113
  %v315 = vunpack.c.h.b16 %v113
  %v316 = vunpack.c.l.b16 %v114
  %v317 = vunpack.c.h.b16 %v114
  %v318 = vunpack.c.l.b16 %v115
  %v319 = vunpack.c.h.b16 %v115
  %v320 = vunpack.c.l.b16 %v116
  %v321 = vunpack.c.h.b16 %v116
  %v322 = vunpack.c.l.b16 %v117
  %v323 = vunpack.c.h.b16 %v117
  %v324 = vunpack.c.l.b16 %v118
  %v325 = vunpack.c.h.b16 %v118
  %v326 = vunpack.c.l.b16 %v119
  %v327 = vunpack.c.h.b16 %v119
  %v328 = vunpack.c.l.b16 %v120
  %v329 = vunpack.c.h.b16 %v120
  %v330 = vunpack.c.l.b16 %v121
  %v331 = vunpack.c.h.b16 %v121
  %v332 = vunpack.c.l.b16 %v122
  %v333 = vunpack.c.h.b16 %v122
  %v334 = vunpack.c.l.b16 %v123
  %v335 = vunpack.c.h.b16 %v123
  %v336 = vunpack.c.l.b16 %v124
  %v337 = vunpack.c.h.b16 %v124
  %v338 = vunpack.c.l.b16 %v125
  %v339 = vunpack.c.h.b16 %v125
  %v340 = vpack.c.b16 %v216, %v212
  %v341 = vpack.c.b16 %v217, %v213
  %v342 = vpack.c.b16 %v218, %v214
  %v343 = vpack.c.b16 %v219, %v215
  %v344 = vpack.c.b16 %v224, %v220
  %v345 = vpack.c.b16 %v225, %v221
  %v346 = vpack.c.b16 %v226, %v222
  %v347 = vpack.c.b16 %v227, %v223
  %v348 = vpack.c.b16 %v232, %v228
  %v349 = vpack.c.b16 %v233, %v229
  %v350 = vpack.c.b16 %v234, %v230
  %v351 = vpack.c.b16 %v235, %v231
  %v352 = vpack.c.b16 %v240, %v236
  %v353 = vpack.c.b16 %v241, %v237
  %v354 = vpack.c.b16 %v242, %v238
  %v355 = vpack.c.b16 %v243, %v239
  %v356 = vpack.c.b16 %v248, %v244
  %v357 = vpack.c.b16 %v249, %v245
  %v358 = vpack.c.b16 %v250, %v246
  %v359 = vpack.c.b16 %v251, %v247
  %v360 = vpack.c.b16 %v256, %v252
  %v361 = vpack.c.b16 %v257, %v253
  %v362 = vpack.c.b16 %v258, %v254
  %v363 = vpack.c.b16 %v259, %v255
  %v364 = vpack.c.b16 %v264, %v260
  %v365 = vpack.c.b16 %v265, %v261
  %v366 = vpack.c.b16 %v266, %v262
  %v367 = vpack.c.b16 %v267, %v263
  %v368 = vpack.c.b16 %v272, %v268
  %v369 = vpack.c.b16 %v273, %v269
  %v370 = vpack.c.b16 %v274, %v270
  %v371 = vpack.c.b16 %v275, %v271
  %v372 = vpack.c.b16 %v280, %v276
  %v373 = vpack.c.b16 %v281, %v277
  %v374 = vpack.c.b16 %v282, %v278
  %v375 = vpack.c.b16 %v283, %v279
  %v376 = vpack.c.b16 %v288, %v284
  %v377 = vpack.c.b16 %v289, %v285
  %v378 = vpack.c.b16 %v290, %v286
  %v379 = vpack.c.b16 %v291, %v287
  %v380 = vpack.c.b16 %v296, %v292
  %v381 = vpack.c.b16 %v297, %v293
  %v382 = vpack.c.b16 %v298, %v294
  %v383 = vpack.c.b16 %v299, %v295
  %v384 = vpack.c.b16 %v304, %v300
  %v385 = vpack.c.b16 %v305, %v301
  %v386 = vpack.c.b16 %v306, %v302
  %v387 = vpack.c.b16 %v307, %v303
  %v388 = vpack.c.b16 %v312, %v308
  %v389 = vpack.c.b16 %v313, %v309
  %v390 = vpack.c.b16 %v314, %v310
  %v391 = vpack.c.b16 %v315, %v311
  %v392 = vpack.c.b16 %v320, %v316
  %v393 = vpack.c.b16 %v321, %v317
  %v394 = vpack.c.b16 %v322, %v318
  %v395 = vpack.c.b16 %v323, %v319
  %v396 = vpack.c.b16 %v328, %v324
  %v397 = vpack.c.b16 %v329, %v325
  %v398 = vpack.c.b16 %v330, %v326
  %v399 = vpack.c.b16 %v331, %v327
  %v400 = vpack.c.b16 %v336, %v332
  %v401 = vpack.c.b16 %v337, %v333
  %v402 = vpack.c.b16 %v338, %v334
  %v403 = vpack.c.b16 %v339, %v335
  %468 = vmatprep.subr.bf16.mxu0 %v341
  %469 = vmatpush1.bf16.msra.mxu0 %v340
  %470 = vmatprep.subr.bf16.mxu0 %v345
  %471 = vmatpush1.bf16.msra.mxu0 %v344
  %472 = vmatprep.subr.bf16.mxu0 %v349
  %473 = vmatpush1.bf16.msra.mxu0 %v348
  %474 = vmatprep.subr.bf16.mxu0 %v353
  %475 = vmatpush1.bf16.msra.mxu0 %v352
  %476 = vmatprep.subr.bf16.mxu0 %v357
  %477 = vmatpush1.bf16.msra.mxu0 %v356
  %478 = vmatprep.subr.bf16.mxu0 %v361
  %479 = vmatpush1.bf16.msra.mxu0 %v360
  %480 = vmatprep.subr.bf16.mxu0 %v365
  %481 = vmatpush1.bf16.msra.mxu0 %v364
  %482 = vmatprep.subr.bf16.mxu0 %v369
  %483 = vmatpush1.bf16.msra.mxu0 %v368
  %484 = vmatprep.subr.bf16.mxu0 %v373
  %485 = vmatpush1.bf16.msra.mxu0 %v372
  %486 = vmatprep.subr.bf16.mxu0 %v377
  %487 = vmatpush1.bf16.msra.mxu0 %v376
  %488 = vmatprep.subr.bf16.mxu0 %v381
  %489 = vmatpush1.bf16.msra.mxu0 %v380
  %490 = vmatprep.subr.bf16.mxu0 %v385
  %491 = vmatpush1.bf16.msra.mxu0 %v384
  %492 = vmatprep.subr.bf16.mxu0 %v389
  %493 = vmatpush1.bf16.msra.mxu0 %v388
  %494 = vmatprep.subr.bf16.mxu0 %v393
  %495 = vmatpush1.bf16.msra.mxu0 %v392
  %496 = vmatprep.subr.bf16.mxu0 %v397
  %497 = vmatpush1.bf16.msra.mxu0 %v396
  %498 = vmatprep.subr.bf16.mxu0 %v401
  %499 = vmatpush1.bf16.msra.mxu0 %v400
  %500 = vmatprep.mubr.bf16.mxu0 %v47
  %501 = vmatmul.mubr.bf16.gmra.mrb[0].mxu0 %v46
  %v502 = vpop.f32.mrb[0].mxu0
  %v503 = vadd.f32 %v131, %v502
  %v504 = vpop.f32.mrb[0].mxu0
  %v505 = vadd.f32 %v135, %v504
  %v506 = vpop.f32.mrb[0].mxu0
  %v507 = vadd.f32 %v131, %v506
  %v508 = vpop.f32.mrb[0].mxu0
  %v509 = vadd.f32 %v135, %v508
  %510 = vmatprep.mubr.bf16.mxu0 %v49
  %511 = vmatmul.mubr.bf16.gmra.mrb[0].mxu0 %v48
  %v512 = vpop.f32.mrb[0].mxu0
  %v513 = vadd.f32 %v131, %v512
  %v514 = vpop.f32.mrb[0].mxu0
  %v515 = vadd.f32 %v135, %v514
  %v516 = vpop.f32.mrb[0].mxu0
  %v517 = vadd.f32 %v131, %v516
  %v518 = vpop.f32.mrb[0].mxu0
  %v519 = vadd.f32 %v135, %v518
  %520 = vmatprep.mubr.bf16.mxu0 %v51
  %521 = vmatmul.mubr.bf16.gmra.mrb[0].mxu0 %v50
  %v522 = vpop.f32.mrb[0].mxu0
  %v523 = vadd.f32 %v131, %v522
  %v524 = vpop.f32.mrb[0].mxu0
  %v525 = vadd.f32 %v135, %v524
  %v526 = vpop.f32.mrb[0].mxu0
  %v527 = vadd.f32 %v131, %v526
  %v528 = vpop.f32.mrb[0].mxu0
  %v529 = vadd.f32 %v135, %v528
  %530 = vmatprep.mubr.bf16.mxu0 %v53
  %531 = vmatmul.mubr.bf16.gmra.mrb[0].mxu0 %v52
  %v532 = vpop.f32.mrb[0].mxu0
  %v533 = vadd.f32 %v131, %v532
  %v534 = vpop.f32.mrb[0].mxu0
  %v535 = vadd.f32 %v135, %v534
  %v536 = vpop.f32.mrb[0].mxu0
  %v537 = vadd.f32 %v131, %v536
  %v538 = vpop.f32.mrb[0].mxu0
  %v539 = vadd.f32 %v135, %v538
  %540 = vmatprep.mubr.bf16.mxu0 %v55
  %541 = vmatmul.mubr.bf16.gmra.mrb[0].mxu0 %v54
  %v542 = vpop.f32.mrb[0].mxu0
  %v543 = vadd.f32 %v131, %v542
  %v544 = vpop.f32.mrb[0].mxu0
  %v545 = vadd.f32 %v135, %v544
  %v546 = vpop.f32.mrb[0].mxu0
  %v547 = vadd.f32 %v131, %v546
  %v548 = vpop.f32.mrb[0].mxu0
  %v549 = vadd.f32 %v135, %v548
  %550 = vmatprep.mubr.bf16.mxu0 %v57
  %551 = vmatmul.mubr.bf16.gmra.mrb[0].mxu0 %v56
  %v552 = vpop.f32.mrb[0].mxu0
  %v553 = vadd.f32 %v131, %v552
  %v554 = vpop.f32.mrb[0].mxu0
  %v555 = vadd.f32 %v135, %v554
  %v556 = vpop.f32.mrb[0].mxu0
  %v557 = vadd.f32 %v131, %v556
  %v558 = vpop.f32.mrb[0].mxu0
  %v559 = vadd.f32 %v135, %v558
  %560 = vmatprep.mubr.bf16.mxu0 %v59
  %561 = vmatmul.mubr.bf16.gmra.mrb[0].mxu0 %v58
  %v562 = vpop.f32.mrb[0].mxu0
  %v563 = vadd.f32 %v131, %v562
  %v564 = vpop.f32.mrb[0].mxu0
  %v565 = vadd.f32 %v135, %v564
  %v566 = vpop.f32.mrb[0].mxu0
  %v567 = vadd.f32 %v131, %v566
  %v568 = vpop.f32.mrb[0].mxu0
  %v569 = vadd.f32 %v135, %v568
  %570 = vmatprep.mubr.bf16.mxu0 %v61
  %571 = vmatmul.mubr.bf16.gmra.mrb[0].mxu0 %v60
  %v572 = vpop.f32.mrb[0].mxu0
  %v573 = vadd.f32 %v131, %v572
  %v574 = vpop.f32.mrb[0].mxu0
  %v575 = vadd.f32 %v135, %v574
  %v576 = vpop.f32.mrb[0].mxu0
  %v577 = vadd.f32 %v131, %v576
  %v578 = vpop.f32.mrb[0].mxu0
  %v579 = vadd.f32 %v135, %v578
  %580 = vdwg.mxu0
  %581 = vmatprep.subr.bf16.mxu0 %v343
  %582 = vmatpush1.bf16.msra.mxu0 %v342
  %583 = vmatprep.subr.bf16.mxu0 %v347
  %584 = vmatpush1.bf16.msra.mxu0 %v346
  %585 = vmatprep.subr.bf16.mxu0 %v351
  %586 = vmatpush1.bf16.msra.mxu0 %v350
  %587 = vmatprep.subr.bf16.mxu0 %v355
  %588 = vmatpush1.bf16.msra.mxu0 %v354
  %589 = vmatprep.subr.bf16.mxu0 %v359
  %590 = vmatpush1.bf16.msra.mxu0 %v358
  %591 = vmatprep.subr.bf16.mxu0 %v363
  %592 = vmatpush1.bf16.msra.mxu0 %v362
  %593 = vmatprep.subr.bf16.mxu0 %v367
  %594 = vmatpush1.bf16.msra.mxu0 %v366
  %595 = vmatprep.subr.bf16.mxu0 %v371
  %596 = vmatpush1.bf16.msra.mxu0 %v370
  %597 = vmatprep.subr.bf16.mxu0 %v375
  %598 = vmatpush1.bf16.msra.mxu0 %v374
  %599 = vmatprep.subr.bf16.mxu0 %v379
  %600 = vmatpush1.bf16.msra.mxu0 %v378
  %601 = vmatprep.subr.bf16.mxu0 %v383
  %602 = vmatpush1.bf16.msra.mxu0 %v382
  %603 = vmatprep.subr.bf16.mxu0 %v387
  %604 = vmatpush1.bf16.msra.mxu0 %v386
  %605 = vmatprep.subr.bf16.mxu0 %v391
  %606 = vmatpush1.bf16.msra.mxu0 %v390
  %607 = vmatprep.subr.bf16.mxu0 %v395
  %608 = vmatpush1.bf16.msra.mxu0 %v394
  %609 = vmatprep.subr.bf16.mxu0 %v399
  %610 = vmatpush1.bf16.msra.mxu0 %v398
  %611 = vmatprep.subr.bf16.mxu0 %v403
  %612 = vmatpush1.bf16.msra.mxu0 %v402
  %613 = vmatprep.mubr.bf16.mxu0 %v47
  %614 = vmatmul.mubr.bf16.gmra.mrb[0].mxu0 %v46
  %v615 = vpop.f32.mrb[0].mxu0
  %v616 = vadd.f32 %v139, %v615
  %v617 = vpop.f32.mrb[0].mxu0
  %v618 = vadd.f32 %v143, %v617
  %v619 = vpop.f32.mrb[0].mxu0
  %v620 = vadd.f32 %v139, %v619
  %v621 = vpop.f32.mrb[0].mxu0
  %v622 = vadd.f32 %v143, %v621
  %623 = vmatprep.mubr.bf16.mxu0 %v49
  %624 = vmatmul.mubr.bf16.gmra.mrb[0].mxu0 %v48
  %v625 = vpop.f32.mrb[0].mxu0
  %v626 = vadd.f32 %v139, %v625
  %v627 = vpop.f32.mrb[0].mxu0
  %v628 = vadd.f32 %v143, %v627
  %v629 = vpop.f32.mrb[0].mxu0
  %v630 = vadd.f32 %v139, %v629
  %v631 = vpop.f32.mrb[0].mxu0
  %v632 = vadd.f32 %v143, %v631
  %633 = vmatprep.mubr.bf16.mxu0 %v51
  %634 = vmatmul.mubr.bf16.gmra.mrb[0].mxu0 %v50
  %v635 = vpop.f32.mrb[0].mxu0
  %v636 = vadd.f32 %v139, %v635
  %v637 = vpop.f32.mrb[0].mxu0
  %v638 = vadd.f32 %v143, %v637
  %v639 = vpop.f32.mrb[0].mxu0
  %v640 = vadd.f32 %v139, %v639
  %v641 = vpop.f32.mrb[0].mxu0
  %v642 = vadd.f32 %v143, %v641
  %643 = vmatprep.mubr.bf16.mxu0 %v53
  %644 = vmatmul.mubr.bf16.gmra.mrb[0].mxu0 %v52
  %v645 = vpop.f32.mrb[0].mxu0
  %v646 = vadd.f32 %v139, %v645
  %v647 = vpop.f32.mrb[0].mxu0
  %v648 = vadd.f32 %v143, %v647
  %v649 = vpop.f32.mrb[0].mxu0
  %v650 = vadd.f32 %v139, %v649
  %v651 = vpop.f32.mrb[0].mxu0
  %v652 = vadd.f32 %v143, %v651
  %653 = vmatprep.mubr.bf16.mxu0 %v55
  %654 = vmatmul.mubr.bf16.gmra.mrb[0].mxu0 %v54
  %v655 = vpop.f32.mrb[0].mxu0
  %v656 = vadd.f32 %v139, %v655
  %v657 = vpop.f32.mrb[0].mxu0
  %v658 = vadd.f32 %v143, %v657
  %v659 = vpop.f32.mrb[0].mxu0
  %v660 = vadd.f32 %v139, %v659
  %v661 = vpop.f32.mrb[0].mxu0
  %v662 = vadd.f32 %v143, %v661
  %663 = vmatprep.mubr.bf16.mxu0 %v57
  %664 = vmatmul.mubr.bf16.gmra.mrb[0].mxu0 %v56
  %v665 = vpop.f32.mrb[0].mxu0
  %v666 = vadd.f32 %v139, %v665
  %v667 = vpop.f32.mrb[0].mxu0
  %v668 = vadd.f32 %v143, %v667
  %v669 = vpop.f32.mrb[0].mxu0
  %v670 = vadd.f32 %v139, %v669
  %v671 = vpop.f32.mrb[0].mxu0
  %v672 = vadd.f32 %v143, %v671
  %673 = vmatprep.mubr.bf16.mxu0 %v59
  %674 = vmatmul.mubr.bf16.gmra.mrb[0].mxu0 %v58
  %v675 = vpop.f32.mrb[0].mxu0
  %v676 = vadd.f32 %v139, %v675
  %v677 = vpop.f32.mrb[0].mxu0
  %v678 = vadd.f32 %v143, %v677
  %v679 = vpop.f32.mrb[0].mxu0
  %v680 = vadd.f32 %v139, %v679
  %v681 = vpop.f32.mrb[0].mxu0
  %v682 = vadd.f32 %v143, %v681
  %683 = vmatprep.mubr.bf16.mxu0 %v61
  %684 = vmatmul.mubr.bf16.gmra.mrb[0].mxu0 %v60
  %v685 = vpop.f32.mrb[0].mxu0
  %v686 = vadd.f32 %v139, %v685
  %v687 = vpop.f32.mrb[0].mxu0
  %v688 = vadd.f32 %v143, %v687
  %v689 = vpop.f32.mrb[0].mxu0
  %v690 = vadd.f32 %v139, %v689
  %v691 = vpop.f32.mrb[0].mxu0
  %v692 = vadd.f32 %v143, %v691
  %693 = vdwg.mxu0
  %v694 = vpack.c.bf16 %v503, %v503
  %v695 = vpack.c.bf16 %v505, %v505
  %v696 = vpack.c.bf16 %v507, %v507
  %v697 = vpack.c.bf16 %v509, %v509
  %v698 = vpack.c.bf16 %v513, %v513
  %v699 = vpack.c.bf16 %v515, %v515
  %v700 = vpack.c.bf16 %v517, %v517
  %v701 = vpack.c.bf16 %v519, %v519
  %v702 = vpack.c.bf16 %v523, %v523
  %v703 = vpack.c.bf16 %v525, %v525
  %v704 = vpack.c.bf16 %v527, %v527
  %v705 = vpack.c.bf16 %v529, %v529
  %v706 = vpack.c.bf16 %v533, %v533
  %v707 = vpack.c.bf16 %v535, %v535
  %v708 = vpack.c.bf16 %v537, %v537
  %v709 = vpack.c.bf16 %v539, %v539
  %v710 = vpack.c.bf16 %v543, %v543
  %v711 = vpack.c.bf16 %v545, %v545
  %v712 = vpack.c.bf16 %v547, %v547
  %v713 = vpack.c.bf16 %v549, %v549
  %v714 = vpack.c.bf16 %v553, %v553
  %v715 = vpack.c.bf16 %v555, %v555
  %v716 = vpack.c.bf16 %v557, %v557
  %v717 = vpack.c.bf16 %v559, %v559
  %v718 = vpack.c.bf16 %v563, %v563
  %v719 = vpack.c.bf16 %v565, %v565
  %v720 = vpack.c.bf16 %v567, %v567
  %v721 = vpack.c.bf16 %v569, %v569
  %v722 = vpack.c.bf16 %v573, %v573
  %v723 = vpack.c.bf16 %v575, %v575
  %v724 = vpack.c.bf16 %v577, %v577
  %v725 = vpack.c.bf16 %v579, %v579
  %v758 = vunpack.c.l.b16 %v694
  %v759 = vunpack.c.l.b16 %v695
  %v760 = vunpack.c.l.b16 %v696
  %v761 = vunpack.c.l.b16 %v697
  %v762 = vunpack.c.l.b16 %v698
  %v763 = vunpack.c.l.b16 %v699
  %v764 = vunpack.c.l.b16 %v700
  %v765 = vunpack.c.l.b16 %v701
  %v766 = vunpack.c.l.b16 %v702
  %v767 = vunpack.c.l.b16 %v703
  %v768 = vunpack.c.l.b16 %v704
  %v769 = vunpack.c.l.b16 %v705
  %v770 = vunpack.c.l.b16 %v706
  %v771 = vunpack.c.l.b16 %v707
  %v772 = vunpack.c.l.b16 %v708
  %v773 = vunpack.c.l.b16 %v709
  %v774 = vunpack.c.l.b16 %v710
  %v775 = vunpack.c.l.b16 %v711
  %v776 = vunpack.c.l.b16 %v712
  %v777 = vunpack.c.l.b16 %v713
  %v778 = vunpack.c.l.b16 %v714
  %v779 = vunpack.c.l.b16 %v715
  %v780 = vunpack.c.l.b16 %v716
  %v781 = vunpack.c.l.b16 %v717
  %v782 = vunpack.c.l.b16 %v718
  %v783 = vunpack.c.l.b16 %v719
  %v784 = vunpack.c.l.b16 %v720
  %v785 = vunpack.c.l.b16 %v721
  %v786 = vunpack.c.l.b16 %v722
  %v787 = vunpack.c.l.b16 %v723
  %v788 = vunpack.c.l.b16 %v724
  %v789 = vunpack.c.l.b16 %v725
  %v790 = vpack.c.b16 %v759, %v758
  %v791 = vpack.c.b16 %v761, %v760
  %v792 = vpack.c.b16 %v763, %v762
  %v793 = vpack.c.b16 %v765, %v764
  %v794 = vpack.c.b16 %v767, %v766
  %v795 = vpack.c.b16 %v769, %v768
  %v796 = vpack.c.b16 %v771, %v770
  %v797 = vpack.c.b16 %v773, %v772
  %v798 = vpack.c.b16 %v775, %v774
  %v799 = vpack.c.b16 %v777, %v776
  %v800 = vpack.c.b16 %v779, %v778
  %v801 = vpack.c.b16 %v781, %v780
  %v802 = vpack.c.b16 %v783, %v782
  %v803 = vpack.c.b16 %v785, %v784
  %v804 = vpack.c.b16 %v787, %v786
  %v805 = vpack.c.b16 %v789, %v788
  %822 = vst [vmem:[%s3] sm:$0xff] %v790
  %823 = vst [vmem:[%s3 + $0x10] sm:$0xff] %v791
  %824 = vst [vmem:[%s3 + $0x20] sm:$0xff] %v792
  %825 = vst [vmem:[%s3 + $0x30] sm:$0xff] %v793
  %826 = vst [vmem:[%s3 + $0x40] sm:$0xff] %v794
  %827 = vst [vmem:[%s3 + $0x50] sm:$0xff] %v795
  %828 = vst [vmem:[%s3 + $0x60] sm:$0xff] %v796
  %829 = vst [vmem:[%s3 + $0x70] sm:$0xff] %v797
  %830 = vst [vmem:[%s3 + $0x80] sm:$0xff] %v798
  %831 = vst [vmem:[%s3 + $0x90] sm:$0xff] %v799
  %832 = vst [vmem:[%s3 + $0xa0] sm:$0xff] %v800
  %833 = vst [vmem:[%s3 + $0xb0] sm:$0xff] %v801
  %834 = vst [vmem:[%s3 + $0xc0] sm:$0xff] %v802
  %835 = vst [vmem:[%s3 + $0xd0] sm:$0xff] %v803
  %836 = vst [vmem:[%s3 + $0xe0] sm:$0xff] %v804
  %837 = vst [vmem:[%s3 + $0xf0] sm:$0xff] %v805
  %v838 = vpack.c.bf16 %v616, %v616
  %v839 = vpack.c.bf16 %v618, %v618
  %v840 = vpack.c.bf16 %v620, %v620
  %v841 = vpack.c.bf16 %v622, %v622
  %v842 = vpack.c.bf16 %v626, %v626
  %v843 = vpack.c.bf16 %v628, %v628
  %v844 = vpack.c.bf16 %v630, %v630
  %v845 = vpack.c.bf16 %v632, %v632
  %v846 = vpack.c.bf16 %v636, %v636
  %v847 = vpack.c.bf16 %v638, %v638
  %v848 = vpack.c.bf16 %v640, %v640
  %v849 = vpack.c.bf16 %v642, %v642
  %v850 = vpack.c.bf16 %v646, %v646
  %v851 = vpack.c.bf16 %v648, %v648
  %v852 = vpack.c.bf16 %v650, %v650
  %v853 = vpack.c.bf16 %v652, %v652
  %v854 = vpack.c.bf16 %v656, %v656
  %v855 = vpack.c.bf16 %v658, %v658
  %v856 = vpack.c.bf16 %v660, %v660
  %v857 = vpack.c.bf16 %v662, %v662
  %v858 = vpack.c.bf16 %v666, %v666
  %v859 = vpack.c.bf16 %v668, %v668
  %v860 = vpack.c.bf16 %v670, %v670
  %v861 = vpack.c.bf16 %v672, %v672
  %v862 = vpack.c.bf16 %v676, %v676
  %v863 = vpack.c.bf16 %v678, %v678
  %v864 = vpack.c.bf16 %v680, %v680
  %v865 = vpack.c.bf16 %v682, %v682
  %v866 = vpack.c.bf16 %v686, %v686
  %v867 = vpack.c.bf16 %v688, %v688
  %v868 = vpack.c.bf16 %v690, %v690
  %v869 = vpack.c.bf16 %v692, %v692
  %v902 = vunpack.c.l.b16 %v838
  %v903 = vunpack.c.l.b16 %v839
  %v904 = vunpack.c.l.b16 %v840
  %v905 = vunpack.c.l.b16 %v841
  %v906 = vunpack.c.l.b16 %v842
  %v907 = vunpack.c.l.b16 %v843
  %v908 = vunpack.c.l.b16 %v844
  %v909 = vunpack.c.l.b16 %v845
  %v910 = vunpack.c.l.b16 %v846
  %v911 = vunpack.c.l.b16 %v847
  %v912 = vunpack.c.l.b16 %v848
  %v913 = vunpack.c.l.b16 %v849
  %v914 = vunpack.c.l.b16 %v850
  %v915 = vunpack.c.l.b16 %v851
  %v916 = vunpack.c.l.b16 %v852
  %v917 = vunpack.c.l.b16 %v853
  %v918 = vunpack.c.l.b16 %v854
  %v919 = vunpack.c.l.b16 %v855
  %v920 = vunpack.c.l.b16 %v856
  %v921 = vunpack.c.l.b16 %v857
  %v922 = vunpack.c.l.b16 %v858
  %v923 = vunpack.c.l.b16 %v859
  %v924 = vunpack.c.l.b16 %v860
  %v925 = vunpack.c.l.b16 %v861
  %v926 = vunpack.c.l.b16 %v862
  %v927 = vunpack.c.l.b16 %v863
  %v928 = vunpack.c.l.b16 %v864
  %v929 = vunpack.c.l.b16 %v865
  %v930 = vunpack.c.l.b16 %v866
  %v931 = vunpack.c.l.b16 %v867
  %v932 = vunpack.c.l.b16 %v868
  %v933 = vunpack.c.l.b16 %v869
  %v934 = vpack.c.b16 %v903, %v902
  %v935 = vpack.c.b16 %v905, %v904
  %v936 = vpack.c.b16 %v907, %v906
  %v937 = vpack.c.b16 %v909, %v908
  %v938 = vpack.c.b16 %v911, %v910
  %v939 = vpack.c.b16 %v913, %v912
  %v940 = vpack.c.b16 %v915, %v914
  %v941 = vpack.c.b16 %v917, %v916
  %v942 = vpack.c.b16 %v919, %v918
  %v943 = vpack.c.b16 %v921, %v920
  %v944 = vpack.c.b16 %v923, %v922
  %v945 = vpack.c.b16 %v925, %v924
  %v946 = vpack.c.b16 %v927, %v926
  %v947 = vpack.c.b16 %v929, %v928
  %v948 = vpack.c.b16 %v931, %v930
  %v949 = vpack.c.b16 %v933, %v932
  %s966 = scalar_lea.vmem %s3, 8
  %967 = vst [vmem:[%s966] sm:$0xff] %v934
  %968 = vst [vmem:[%s966 + $0x10] sm:$0xff] %v935
  %969 = vst [vmem:[%s966 + $0x20] sm:$0xff] %v936
  %970 = vst [vmem:[%s966 + $0x30] sm:$0xff] %v937
  %971 = vst [vmem:[%s966 + $0x40] sm:$0xff] %v938
  %972 = vst [vmem:[%s966 + $0x50] sm:$0xff] %v939
  %973 = vst [vmem:[%s966 + $0x60] sm:$0xff] %v940
  %974 = vst [vmem:[%s966 + $0x70] sm:$0xff] %v941
  %975 = vst [vmem:[%s966 + $0x80] sm:$0xff] %v942
  %976 = vst [vmem:[%s966 + $0x90] sm:$0xff] %v943
  %977 = vst [vmem:[%s966 + $0xa0] sm:$0xff] %v944
  %978 = vst [vmem:[%s966 + $0xb0] sm:$0xff] %v945
  %979 = vst [vmem:[%s966 + $0xc0] sm:$0xff] %v946
  %980 = vst [vmem:[%s966 + $0xd0] sm:$0xff] %v947
  %981 = vst [vmem:[%s966 + $0xe0] sm:$0xff] %v948
  %982 = vst [vmem:[%s966 + $0xf0] sm:$0xff] %v949
  // Predicated region
  $region14: #{up_block_forward.3} parent=0 // pred_check
    _
  $region15: #{up_block_forward.3} parent=0 // pred_check_branch
    %984 = sbr.rel (0) target = $region17
  $region16: #{up_block_forward.3} parent=0 // pred_region
    _
  $region17: #{up_block_forward.3} parent=0 // pred_fallthru
    _
  // Predicated region
  $region18: #{up_block_forward.3} parent=0 // pred_check
    _
  $region19: #{up_block_forward.3} parent=0 // pred_check_branch
    %986 = sbr.rel (0) target = $region21
  $region20: #{up_block_forward.3} parent=0 // pred_region
    _
  $region21: #{up_block_forward.3} parent=0 // pred_fallthru
    _

// kernel: up_block_forward.5
$region0: #{up_block_forward.5}
  #allocation0 [shape = 'u32[]', space=smem, size = 0x4, offset = 0x4, fixed_abs, tag = 'smem constant byte address 0x4 - core index']
  #allocation1 [shape = 'u32[144,128]{1,0:T(1,128)}', space=vmem, size = 0x12000, scoped, tag = 'internal scratch']
  #allocation2 [shape = 'bf16[18,32,128]{2,1,0:T(16,128)(2,1)}', space=vmem, size = 0x24000, scoped, tag = 'scratch operand']
  #allocation3 [shape = 'f32[16,16,128]{2,1,0:T(8,128)}', space=vmem, size = 0x20000, scoped, tag = 'scratch operand']
  %s0 = inlined_call_operand.vmem [shape: bf16[2,16,16,128], index: 0, kind: input, shape index: {}, may-alias: {0,1,2}]
  %s1 = inlined_call_operand.vmem [shape: bf16[2,16,16,128], index: 1, kind: input, shape index: {}, may-alias: {0,1,2}]
  %s2 = inlined_call_operand.vmem [shape: bf16[2,16,16,128], index: 2, kind: input, shape index: {}, may-alias: {0,1,2}]
  %s3 = inlined_call_operand.vmem [shape: bf16[3,128,384], index: 3, kind: input, shape index: {}]
  %s4 = inlined_call_operand.vmem [shape: f32[1,128], index: 4, kind: input, shape index: {}]
  %s5 = inlined_call_operand.vmem [shape: f32[1,128], index: 5, kind: input, shape index: {}]
  %s6 = inlined_call_operand.hbm [shape: f32[2,16,16,128], index: 6, kind: output, shape index: {}]
  %s7 = sld [smem:[#allocation0]]
  $region57: #{up_block_forward.5} parent=0
    _
  %s9 = ssub.s32 1, %s7
  %s10 = scalar_select 0, %s9, %s7
  $region1: #{up_block_forward.5} parent=0
    #allocation4 [shape = 'u8[262144]{0}', space=vmem, size = 0x40000, scoped, tag = 'output window, operand 0']
    #allocation5 [shape = 's32[2]{0}', space=sflag, size = 0x8, scoped, tag = 'scoped memory for up_block_forward.5']
    %11 = vsyncpa [#allocation5], 0
    %s12 = scalar_lea.sflag [#allocation5], 1
    %13 = vsyncpa %s12, 0
    loop: start=0, step=1, limit=4
    $region2: #{up_block_forward.5} parent=1 // loop_pre_header
      _
    $region3: #{up_block_forward.5} parent=1 // loop_header
      %s15 = sphi 0, %s19
      %p16 = scmp.ge.s32.totalorder %s15, 4
      %s22 = sphi 0, %s34
      %s23 = sphi 0, %s30
      %s24 = sphi 0, %s22
      %s25 = sphi 0, %s23
      %s26 = sphi 0, %s24
      %s27 = sphi 0, %s25
      %s39 = sphi 0, %s41
      %s42 = sphi 0, %s39
      %s43 = sphi 0, %s42
      %s59 = sphi 0, %s43
      %s75 = sphi 0, %s77
      %s78 = sphi 0, %s75
      %s79 = sphi 0, %s78
      %s95 = sphi 0, %s79
      %s111 = sphi 0, %s113
      %s114 = sphi 0, %s111
      %s115 = sphi 0, %s114
      %s131 = sphi 0, %s115
      %s135 = sphi 0, %s135
      %s137 = sphi 0, %s135
      %s138 = sphi 0, %s137
      %s152 = sphi 0, %s138
      %s156 = sphi 0, %s156
      %s158 = sphi 0, %s156
      %s159 = sphi 0, %s158
      %s173 = sphi 0, %s159
      %s177 = sphi 0, %s177
      %s179 = sphi 0, %s177
      %s180 = sphi 0, %s179
      %s194 = sphi 0, %s180
      %s202 = sphi 0, %s204
      %s205 = sphi 0, %s202
      %s206 = sphi 0, %s205
      %s222 = sphi 0, %s206
    $region4: #{up_block_forward.5} parent=1 // loop_header_branch
      %18 = sbr.rel (%p16) target = $region8
    $region5: #{up_block_forward.5} parent=1 // loop_body
      %s20 = ssub.s32 %s15, 1
      %s21 = ssub.s32 %s15, 2
      %s28 = sadd.s32 1, %s23
      %p29 = scmp.ge.s32.totalorder %s28, 1
      %s30 = scalar_select %p29, 0, %s28
      %s31 = sadd.s32 1, %s22
      %s32 = scalar_select %p29, %s31, %s22
      %p33 = scmp.ge.s32.totalorder %s32, 2
      %s34 = scalar_select %p33, 0, %s32
      %s35 = ssub.s32 %s22, %s34
      %s36 = ssub.s32 %s23, %s30
      %s37 = sor.u32 %s35, %s36
      %p38 = scmp.eq.s32.totalorder %s37, 0
      %s40 = sadd.s32 %s39, 1
      %s41 = scalar_select %p38, %s39, %s40
      %p44 = pneg %p38
      %p45 = scmp.eq.s32.totalorder %s15, 1
      %p46 = por %p44, %p45
      %p47 = scmp.ne.s32.totalorder %s39, %s42
      %p48 = scmp.eq.s32.totalorder %s15, 0
      %p49 = por %p47, %p48
      %p50 = scmp.ne.s32.totalorder %s39, %s42
      %p51 = scmp.eq.s32.totalorder %s20, 1
      %p52 = por %p50, %p51
      %p53 = scmp.ne.s32.totalorder %s42, %s43
      %p54 = scmp.eq.s32.totalorder %s20, 0
      %p55 = por %p53, %p54
      %p56 = scmp.ne.s32.totalorder %s42, %s43
      %p57 = scmp.eq.s32.totalorder %s21, 1
      %p58 = por %p56, %p57
      %p60 = scmp.ne.s32.totalorder %s43, %s59
      %p61 = scmp.eq.s32.totalorder %s21, 0
      %p62 = por %p60, %p61
      %s63 = smul.u32 %s23, 16
      %s64 = ssub.s32 %s63, 1
      %p65 = scmp.gt.s32.totalorder %s64, 0
      %s66 = scalar_select %p65, %s64, 0
      %s67 = smul.u32 %s30, 16
      %s68 = ssub.s32 %s67, 1
      %p69 = scmp.gt.s32.totalorder %s68, 0
      %s70 = scalar_select %p69, %s68, 0
      %s71 = ssub.s32 %s22, %s34
      %s72 = ssub.s32 %s66, %s70
      %s73 = sor.u32 %s71, %s72
      %p74 = scmp.eq.s32.totalorder %s73, 0
      %s76 = sadd.s32 %s75, 1
      %s77 = scalar_select %p74, %s75, %s76
      %p80 = pneg %p74
      %p81 = scmp.eq.s32.totalorder %s15, 1
      %p82 = por %p80, %p81
      %p83 = scmp.ne.s32.totalorder %s75, %s78
      %p84 = scmp.eq.s32.totalorder %s15, 0
      %p85 = por %p83, %p84
      %p86 = scmp.ne.s32.totalorder %s75, %s78
      %p87 = scmp.eq.s32.totalorder %s20, 1
      %p88 = por %p86, %p87
      %p89 = scmp.ne.s32.totalorder %s78, %s79
      %p90 = scmp.eq.s32.totalorder %s20, 0
      %p91 = por %p89, %p90
      %p92 = scmp.ne.s32.totalorder %s78, %s79
      %p93 = scmp.eq.s32.totalorder %s21, 1
      %p94 = por %p92, %p93
      %p96 = scmp.ne.s32.totalorder %s79, %s95
      %p97 = scmp.eq.s32.totalorder %s21, 0
      %p98 = por %p96, %p97
      %s99 = sadd.s32 %s23, 1
      %s100 = smul.u32 %s99, 16
      %p101 = scmp.lt.s32.totalorder %s100, 15
      %s102 = scalar_select %p101, %s100, 15
      %s103 = sadd.s32 %s30, 1
      %s104 = smul.u32 %s103, 16
      %p105 = scmp.lt.s32.totalorder %s104, 15
      %s106 = scalar_select %p105, %s104, 15
      %s107 = ssub.s32 %s22, %s34
      %s108 = ssub.s32 %s102, %s106
      %s109 = sor.u32 %s107, %s108
      %p110 = scmp.eq.s32.totalorder %s109, 0
      %s112 = sadd.s32 %s111, 1
      %s113 = scalar_select %p110, %s111, %s112
      %p116 = pneg %p110
      %p117 = scmp.eq.s32.totalorder %s15, 1
      %p118 = por %p116, %p117
      %p119 = scmp.ne.s32.totalorder %s111, %s114
      %p120 = scmp.eq.s32.totalorder %s15, 0
      %p121 = por %p119, %p120
      %p122 = scmp.ne.s32.totalorder %s111, %s114
      %p123 = scmp.eq.s32.totalorder %s20, 1
      %p124 = por %p122, %p123
      %p125 = scmp.ne.s32.totalorder %s114, %s115
      %p126 = scmp.eq.s32.totalorder %s20, 0
      %p127 = por %p125, %p126
      %p128 = scmp.ne.s32.totalorder %s114, %s115
      %p129 = scmp.eq.s32.totalorder %s21, 1
      %p130 = por %p128, %p129
      %p132 = scmp.ne.s32.totalorder %s115, %s131
      %p133 = scmp.eq.s32.totalorder %s21, 0
      %p134 = por %p132, %p133
      %s136 = sadd.s32 %s135, 1
      %p139 = scmp.eq.s32.totalorder %s15, 1
      %p140 = scmp.ne.s32.totalorder %s135, %s137
      %p141 = scmp.eq.s32.totalorder %s15, 0
      %p142 = por %p140, %p141
      %p143 = scmp.ne.s32.totalorder %s135, %s137
      %p144 = scmp.eq.s32.totalorder %s20, 1
      %p145 = por %p143, %p144
      %p146 = scmp.ne.s32.totalorder %s137, %s138
      %p147 = scmp.eq.s32.totalorder %s20, 0
      %p148 = por %p146, %p147
      %p149 = scmp.ne.s32.totalorder %s137, %s138
      %p150 = scmp.eq.s32.totalorder %s21, 1
      %p151 = por %p149, %p150
      %p153 = scmp.ne.s32.totalorder %s138, %s152
      %p154 = scmp.eq.s32.totalorder %s21, 0
      %p155 = por %p153, %p154
      %s157 = sadd.s32 %s156, 1
      %p160 = scmp.eq.s32.totalorder %s15, 1
      %p161 = scmp.ne.s32.totalorder %s156, %s158
      %p162 = scmp.eq.s32.totalorder %s15, 0
      %p163 = por %p161, %p162
      %p164 = scmp.ne.s32.totalorder %s156, %s158
      %p165 = scmp.eq.s32.totalorder %s20, 1
      %p166 = por %p164, %p165
      %p167 = scmp.ne.s32.totalorder %s158, %s159
      %p168 = scmp.eq.s32.totalorder %s20, 0
      %p169 = por %p167, %p168
      %p170 = scmp.ne.s32.totalorder %s158, %s159
      %p171 = scmp.eq.s32.totalorder %s21, 1
      %p172 = por %p170, %p171
      %p174 = scmp.ne.s32.totalorder %s159, %s173
      %p175 = scmp.eq.s32.totalorder %s21, 0
      %p176 = por %p174, %p175
      %s178 = sadd.s32 %s177, 1
      %p181 = scmp.eq.s32.totalorder %s15, 1
      %p182 = scmp.ne.s32.totalorder %s177, %s179
      %p183 = scmp.eq.s32.totalorder %s15, 0
      %p184 = por %p182, %p183
      %p185 = scmp.ne.s32.totalorder %s177, %s179
      %p186 = scmp.eq.s32.totalorder %s20, 1
      %p187 = por %p185, %p186
      %p188 = scmp.ne.s32.totalorder %s179, %s180
      %p189 = scmp.eq.s32.totalorder %s20, 0
      %p190 = por %p188, %p189
      %p191 = scmp.ne.s32.totalorder %s179, %s180
      %p192 = scmp.eq.s32.totalorder %s21, 1
      %p193 = por %p191, %p192
      %p195 = scmp.ne.s32.totalorder %s180, %s194
      %p196 = scmp.eq.s32.totalorder %s21, 0
      %p197 = por %p195, %p196
      %s198 = ssub.s32 %s22, %s34
      %s199 = ssub.s32 %s23, %s30
      %s200 = sor.u32 %s198, %s199
      %p201 = scmp.eq.s32.totalorder %s200, 0
      %s203 = sadd.s32 %s202, 1
      %s204 = scalar_select %p201, %s202, %s203
      %p207 = pneg %p201
      %p208 = scmp.eq.s32.totalorder %s15, 1
      %p209 = por %p207, %p208
      %p210 = scmp.ne.s32.totalorder %s202, %s205
      %p211 = scmp.eq.s32.totalorder %s15, 0
      %p212 = por %p210, %p211
      %p213 = scmp.ne.s32.totalorder %s202, %s205
      %p214 = scmp.eq.s32.totalorder %s20, 1
      %p215 = por %p213, %p214
      %p216 = scmp.ne.s32.totalorder %s205, %s206
      %p217 = scmp.eq.s32.totalorder %s20, 0
      %p218 = por %p216, %p217
      %p219 = scmp.ne.s32.totalorder %s205, %s206
      %p220 = scmp.eq.s32.totalorder %s21, 1
      %p221 = por %p219, %p220
      %p223 = scmp.ne.s32.totalorder %s206, %s222
      %p224 = scmp.eq.s32.totalorder %s21, 0
      %p225 = por %p223, %p224
      %p226 = scmp.le.s32.totalorder 1, %s15
      %p227 = scmp.lt.s32.totalorder %s15, 3
      %p228 = pnand %p226, %p227
      %p229 = pneg %p228
      // Predicated region
      $region9: #{up_block_forward.5} parent=5 // pred_check
        _
      $region10: #{up_block_forward.5} parent=5 // pred_check_branch
        %231 = sbr.rel (%p228) target = $region12
      $region11: #{up_block_forward.5} parent=5 // pred_region
        %s232 = ssub.s32 %s15, 1
        // Predicated region
        $region13: #{up_block_forward.5} parent=11 // pred_check
          %p233 = pneg %p148
        $region14: #{up_block_forward.5} parent=11 // pred_check_branch
          %235 = sbr.rel (%p233) target = $region16
        $region15: #{up_block_forward.5} parent=11 // pred_region
          _
        $region16: #{up_block_forward.5} parent=11 // pred_fallthru
          _
        // Predicated region
        $region17: #{up_block_forward.5} parent=11 // pred_check
          %p236 = pneg %p169
        $region18: #{up_block_forward.5} parent=11 // pred_check_branch
          %238 = sbr.rel (%p236) target = $region20
        $region19: #{up_block_forward.5} parent=11 // pred_region
          _
        $region20: #{up_block_forward.5} parent=11 // pred_fallthru
          _
        // Predicated region
        $region21: #{up_block_forward.5} parent=11 // pred_check
          %p239 = pneg %p190
        $region22: #{up_block_forward.5} parent=11 // pred_check_branch
          %241 = sbr.rel (%p239) target = $region24
        $region23: #{up_block_forward.5} parent=11 // pred_region
          _
        $region24: #{up_block_forward.5} parent=11 // pred_fallthru
          _
      $region12: #{up_block_forward.5} parent=5 // pred_fallthru
        _
      %p242 = scmp.lt.s32.totalorder %s15, 2
      // Predicated region
      $region25: #{up_block_forward.5} parent=5 // pred_check
        %p243 = pneg %p242
      $region26: #{up_block_forward.5} parent=5 // pred_check_branch
        %245 = sbr.rel (%p243) target = $region28
      $region27: #{up_block_forward.5} parent=5 // pred_region
        // Predicated region
        $region29: #{up_block_forward.5} parent=27 // pred_check
          %p246 = pneg %p49
        $region30: #{up_block_forward.5} parent=27 // pred_check_branch
          %248 = sbr.rel (%p246) target = $region32
        $region31: #{up_block_forward.5} parent=27 // pred_region
          %s249 = smul.u32 16, %s23
          %p250 = scmp.lt.s32.totalorder %s22, 1
          %s251 = scalar_select %p250, %s22, 1
          %p252 = scmp.lt.s32.totalorder %s249, 15
          %s253 = scalar_select %p252, %s249, 15
          %s254 = smul.addr %s253, 2
          %s255 = smul.addr %s251, 32
          %s256 = sadd.s32 %s254, %s255
          %s257 = smul.addr %s256, 4
          %s258 = scalar_lea.vmem %s0, %s257
          %s259 = smul.u32 16, %s23
        $region32: #{up_block_forward.5} parent=27 // pred_fallthru
          _
        // Predicated region
        $region33: #{up_block_forward.5} parent=27 // pred_check
          %p260 = pneg %p85
        $region34: #{up_block_forward.5} parent=27 // pred_check_branch
          %262 = sbr.rel (%p260) target = $region36
        $region35: #{up_block_forward.5} parent=27 // pred_region
          %s263 = smul.u32 %s23, 16
          %s264 = ssub.s32 %s263, 1
          %p265 = scmp.gt.s32.totalorder %s264, 0
          %s266 = scalar_select %p265, %s264, 0
          %p267 = scmp.lt.s32.totalorder %s22, 1
          %s268 = scalar_select %p267, %s22, 1
          %p269 = scmp.lt.s32.totalorder %s266, 15
          %s270 = scalar_select %p269, %s266, 15
          %s271 = smul.addr %s270, 2
          %s272 = smul.addr %s268, 32
          %s273 = sadd.s32 %s271, %s272
          %s274 = smul.addr %s273, 4
          %s275 = scalar_lea.vmem %s1, %s274
          %s276 = smul.u32 %s23, 16
          %s277 = ssub.s32 %s276, 1
          %p278 = scmp.gt.s32.totalorder %s277, 0
          %s279 = scalar_select %p278, %s277, 0
        $region36: #{up_block_forward.5} parent=27 // pred_fallthru
          _
        // Predicated region
        $region37: #{up_block_forward.5} parent=27 // pred_check
          %p280 = pneg %p121
        $region38: #{up_block_forward.5} parent=27 // pred_check_branch
          %282 = sbr.rel (%p280) target = $region40
        $region39: #{up_block_forward.5} parent=27 // pred_region
          %s283 = sadd.s32 %s23, 1
          %s284 = smul.u32 %s283, 16
          %p285 = scmp.lt.s32.totalorder %s284, 15
          %s286 = scalar_select %p285, %s284, 15
          %p287 = scmp.lt.s32.totalorder %s22, 1
          %s288 = scalar_select %p287, %s22, 1
          %p289 = scmp.lt.s32.totalorder %s286, 15
          %s290 = scalar_select %p289, %s286, 15
          %s291 = smul.addr %s290, 2
          %s292 = smul.addr %s288, 32
          %s293 = sadd.s32 %s291, %s292
          %s294 = smul.addr %s293, 4
          %s295 = scalar_lea.vmem %s2, %s294
          %s296 = sadd.s32 %s23, 1
          %s297 = smul.u32 %s296, 16
          %p298 = scmp.lt.s32.totalorder %s297, 15
          %s299 = scalar_select %p298, %s297, 15
        $region40: #{up_block_forward.5} parent=27 // pred_fallthru
          _
      $region28: #{up_block_forward.5} parent=5 // pred_fallthru
        _
      %p300 = scmp.le.s32.totalorder 1, %s15
      %p301 = scmp.lt.s32.totalorder %s15, 3
      %p302 = pnand %p300, %p301
      %p303 = pneg %p302
      // Predicated region
      $region41: #{up_block_forward.5} parent=5 // pred_check
        _
      $region42: #{up_block_forward.5} parent=5 // pred_check_branch
        %305 = sbr.rel (%p302) target = $region44
      $region43: #{up_block_forward.5} parent=5 // pred_region
        %s306 = ssub.s32 %s15, 1
        %s307 = smul.u32 16, %s25
        %p308 = scmp.lt.s32.totalorder %s24, 1
        %s309 = scalar_select %p308, %s24, 1
        %p310 = scmp.lt.s32.totalorder %s307, 15
        %s311 = scalar_select %p310, %s307, 15
        %s312 = smul.addr %s311, 2
        %s313 = smul.addr %s309, 32
        %s314 = sadd.s32 %s312, %s313
        %s315 = smul.addr %s314, 4
        %s316 = scalar_lea.vmem %s0, %s315
        %p317 = pneg %p55
        %p318 = pneg %p52
        %s319 = smul.u32 %s25, 16
        %s320 = ssub.s32 %s319, 1
        %p321 = scmp.gt.s32.totalorder %s320, 0
        %s322 = scalar_select %p321, %s320, 0
        %p323 = scmp.lt.s32.totalorder %s24, 1
        %s324 = scalar_select %p323, %s24, 1
        %p325 = scmp.lt.s32.totalorder %s322, 15
        %s326 = scalar_select %p325, %s322, 15
        %s327 = smul.addr %s326, 2
        %s328 = smul.addr %s324, 32
        %s329 = sadd.s32 %s327, %s328
        %s330 = smul.addr %s329, 4
        %s331 = scalar_lea.vmem %s1, %s330
        %p332 = pneg %p91
        %p333 = pneg %p88
        %s334 = sadd.s32 %s25, 1
        %s335 = smul.u32 %s334, 16
        %p336 = scmp.lt.s32.totalorder %s335, 15
        %s337 = scalar_select %p336, %s335, 15
        %p338 = scmp.lt.s32.totalorder %s24, 1
        %s339 = scalar_select %p338, %s24, 1
        %p340 = scmp.lt.s32.totalorder %s337, 15
        %s341 = scalar_select %p340, %s337, 15
        %s342 = smul.addr %s341, 2
        %s343 = smul.addr %s339, 32
        %s344 = sadd.s32 %s342, %s343
        %s345 = smul.addr %s344, 4
        %s346 = scalar_lea.vmem %s2, %s345
        %p347 = pneg %p127
        %p348 = pneg %p124
        %p349 = pneg %p148
        %p350 = pneg %p145
        %p351 = pneg %p169
        %p352 = pneg %p166
        %p353 = pneg %p190
        %p354 = pneg %p187
        %p355 = pneg %p218
        %p356 = pneg %p215
        %s357 = sand.u32 %s205, 1
        %s358 = scalar_lea.sflag [#allocation5], %s357
        %s359 = sand.u32 %s205, 1
        %s360 = smul.addr %s359, 256
        %s361 = scalar_lea.vmem [#allocation4], %s360
        %s362 = smul.u32 16, %s25
        %p363 = scmp.lt.s32.totalorder %s24, 1
        %s364 = scalar_select %p363, %s24, 1
        %p365 = scmp.lt.s32.totalorder %s362, 15
        %s366 = scalar_select %p365, %s362, 15
        %s367 = smul.addr %s366, 2
        %s368 = smul.addr %s364, 32
        %s369 = sadd.s32 %s367, %s368
        %s370 = smul.addr %s369, 4
        %s371 = scalar_lea.vmem %s0, %s370
        %s372 = smul.u32 16, %s25
        %s373 = smul.u32 %s25, 16
        %s374 = ssub.s32 %s373, 1
        %p375 = scmp.gt.s32.totalorder %s374, 0
        %s376 = scalar_select %p375, %s374, 0
        %p377 = scmp.lt.s32.totalorder %s24, 1
        %s378 = scalar_select %p377, %s24, 1
        %p379 = scmp.lt.s32.totalorder %s376, 15
        %s380 = scalar_select %p379, %s376, 15
        %s381 = smul.addr %s380, 2
        %s382 = smul.addr %s378, 32
        %s383 = sadd.s32 %s381, %s382
        %s384 = smul.addr %s383, 4
        %s385 = scalar_lea.vmem %s1, %s384
        %s386 = smul.u32 %s25, 16
        %s387 = ssub.s32 %s386, 1
        %p388 = scmp.gt.s32.totalorder %s387, 0
        %s389 = scalar_select %p388, %s387, 0
        %s390 = sadd.s32 %s25, 1
        %s391 = smul.u32 %s390, 16
        %p392 = scmp.lt.s32.totalorder %s391, 15
        %s393 = scalar_select %p392, %s391, 15
        %p394 = scmp.lt.s32.totalorder %s24, 1
        %s395 = scalar_select %p394, %s24, 1
        %p396 = scmp.lt.s32.totalorder %s393, 15
        %s397 = scalar_select %p396, %s393, 15
        %s398 = smul.addr %s397, 2
        %s399 = smul.addr %s395, 32
        %s400 = sadd.s32 %s398, %s399
        %s401 = smul.addr %s400, 4
        %s402 = scalar_lea.vmem %s2, %s401
        %s403 = sadd.s32 %s25, 1
        %s404 = smul.u32 %s403, 16
        %p405 = scmp.lt.s32.totalorder %s404, 15
        %s406 = scalar_select %p405, %s404, 15
        %s407 = smul.u32 16, %s25
        %p409 = scmp.eq.s32.totalorder %s25, 0
        %vm410 = vcmask 1040384
        %vm411 = vsmask.f32 256
        %vm412 = vmand %vm410, %vm411
        %v413 = vld [vmem:[#allocation2] sm:$0x1]
        %v414 = vsel %vm412, 0, %v413
        %415 = vst [vmem:[#allocation2] sm:$0x1] %v414
        %v416 = vld [vmem:[#allocation2 + $0x10] sm:$0x1]
        %v417 = vsel %vm412, 0, %v416
        %418 = vst [vmem:[#allocation2 + $0x10] sm:$0x1] %v417
        %v419 = vld [vmem:[#allocation2 + $0x20] sm:$0x1]
        %v420 = vsel %vm412, 0, %v419
        %421 = vst [vmem:[#allocation2 + $0x20] sm:$0x1] %v420
        %v422 = vld [vmem:[#allocation2 + $0x30] sm:$0x1]
        %v423 = vsel %vm412, 0, %v422
        %424 = vst [vmem:[#allocation2 + $0x30] sm:$0x1] %v423
        %v425 = vld [vmem:[#allocation2 + $0x40] sm:$0x1]
        %v426 = vsel %vm412, 0, %v425
        %427 = vst [vmem:[#allocation2 + $0x40] sm:$0x1] %v426
        %v428 = vld [vmem:[#allocation2 + $0x50] sm:$0x1]
        %v429 = vsel %vm412, 0, %v428
        %430 = vst [vmem:[#allocation2 + $0x50] sm:$0x1] %v429
        %v431 = vld [vmem:[#allocation2 + $0x60] sm:$0x1]
        %v432 = vsel %vm412, 0, %v431
        %433 = vst [vmem:[#allocation2 + $0x60] sm:$0x1] %v432
        %v434 = vld [vmem:[#allocation2 + $0x70] sm:$0x1]
        %v435 = vsel %vm412, 0, %v434
        %436 = vst [vmem:[#allocation2 + $0x70] sm:$0x1] %v435
        %v437 = vld [vmem:[#allocation2 + $0x80] sm:$0x1]
        %v438 = vsel %vm412, 0, %v437
        %439 = vst [vmem:[#allocation2 + $0x80] sm:$0x1] %v438
        %v440 = vld [vmem:[#allocation2 + $0x90] sm:$0x1]
        %v441 = vsel %vm412, 0, %v440
        %442 = vst [vmem:[#allocation2 + $0x90] sm:$0x1] %v441
        %v443 = vld [vmem:[#allocation2 + $0xa0] sm:$0x1]
        %v444 = vsel %vm412, 0, %v443
        %445 = vst [vmem:[#allocation2 + $0xa0] sm:$0x1] %v444
        %v446 = vld [vmem:[#allocation2 + $0xb0] sm:$0x1]
        %v447 = vsel %vm412, 0, %v446
        %448 = vst [vmem:[#allocation2 + $0xb0] sm:$0x1] %v447
        %v449 = vld [vmem:[#allocation2 + $0xc0] sm:$0x1]
        %v450 = vsel %vm412, 0, %v449
        %451 = vst [vmem:[#allocation2 + $0xc0] sm:$0x1] %v450
        %v452 = vld [vmem:[#allocation2 + $0xd0] sm:$0x1]
        %v453 = vsel %vm412, 0, %v452
        %454 = vst [vmem:[#allocation2 + $0xd0] sm:$0x1] %v453
        %v455 = vld [vmem:[#allocation2 + $0xe0] sm:$0x1]
        %v456 = vsel %vm412, 0, %v455
        %457 = vst [vmem:[#allocation2 + $0xe0] sm:$0x1] %v456
        %v458 = vld [vmem:[#allocation2 + $0xf0] sm:$0x1]
        %v459 = vsel %vm412, 0, %v458
        %460 = vst [vmem:[#allocation2 + $0xf0] sm:$0x1] %v459
        %v461 = vld [vmem:[#allocation2 + $0x100] sm:$0x1]
        %v462 = vsel %vm412, 0, %v461
        %463 = vst [vmem:[#allocation2 + $0x100] sm:$0x1] %v462
        %v464 = vld [vmem:[#allocation2 + $0x110] sm:$0x1]
        %v465 = vsel %vm412, 0, %v464
        %466 = vst [vmem:[#allocation2 + $0x110] sm:$0x1] %v465
        %vm467 = vcmask 1047552
        %vm468 = vsmask.f32 7938
        %vm469 = vmand %vm467, %vm468
        %v470 = vld [vmem:[#allocation2 + $0x8] sm:$0xff]
        %v471 = vsel %vm469, 0, %v470
        %472 = vst [vmem:[#allocation2 + $0x8] sm:$0xff] %v471
        %v473 = vld [vmem:[#allocation2 + $0x18] sm:$0xff]
        %v474 = vsel %vm469, 0, %v473
        %475 = vst [vmem:[#allocation2 + $0x18] sm:$0xff] %v474
        %v476 = vld [vmem:[#allocation2 + $0x28] sm:$0xff]
        %v477 = vsel %vm469, 0, %v476
        %478 = vst [vmem:[#allocation2 + $0x28] sm:$0xff] %v477
        %v479 = vld [vmem:[#allocation2 + $0x38] sm:$0xff]
        %v480 = vsel %vm469, 0, %v479
        %481 = vst [vmem:[#allocation2 + $0x38] sm:$0xff] %v480
        %v482 = vld [vmem:[#allocation2 + $0x48] sm:$0xff]
        %v483 = vsel %vm469, 0, %v482
        %484 = vst [vmem:[#allocation2 + $0x48] sm:$0xff] %v483
        %v485 = vld [vmem:[#allocation2 + $0x58] sm:$0xff]
        %v486 = vsel %vm469, 0, %v485
        %487 = vst [vmem:[#allocation2 + $0x58] sm:$0xff] %v486
        %v488 = vld [vmem:[#allocation2 + $0x68] sm:$0xff]
        %v489 = vsel %vm469, 0, %v488
        %490 = vst [vmem:[#allocation2 + $0x68] sm:$0xff] %v489
        %v491 = vld [vmem:[#allocation2 + $0x78] sm:$0xff]
        %v492 = vsel %vm469, 0, %v491
        %493 = vst [vmem:[#allocation2 + $0x78] sm:$0xff] %v492
        %v494 = vld [vmem:[#allocation2 + $0x88] sm:$0xff]
        %v495 = vsel %vm469, 0, %v494
        %496 = vst [vmem:[#allocation2 + $0x88] sm:$0xff] %v495
        %v497 = vld [vmem:[#allocation2 + $0x98] sm:$0xff]
        %v498 = vsel %vm469, 0, %v497
        %499 = vst [vmem:[#allocation2 + $0x98] sm:$0xff] %v498
        %v500 = vld [vmem:[#allocation2 + $0xa8] sm:$0xff]
        %v501 = vsel %vm469, 0, %v500
        %502 = vst [vmem:[#allocation2 + $0xa8] sm:$0xff] %v501
        %v503 = vld [vmem:[#allocation2 + $0xb8] sm:$0xff]
        %v504 = vsel %vm469, 0, %v503
        %505 = vst [vmem:[#allocation2 + $0xb8] sm:$0xff] %v504
        %v506 = vld [vmem:[#allocation2 + $0xc8] sm:$0xff]
        %v507 = vsel %vm469, 0, %v506
        %508 = vst [vmem:[#allocation2 + $0xc8] sm:$0xff] %v507
        %v509 = vld [vmem:[#allocation2 + $0xd8] sm:$0xff]
        %v510 = vsel %vm469, 0, %v509
        %511 = vst [vmem:[#allocation2 + $0xd8] sm:$0xff] %v510
        %v512 = vld [vmem:[#allocation2 + $0xe8] sm:$0xff]
        %v513 = vsel %vm469, 0, %v512
        %514 = vst [vmem:[#allocation2 + $0xe8] sm:$0xff] %v513
        %v515 = vld [vmem:[#allocation2 + $0xf8] sm:$0xff]
        %v516 = vsel %vm469, 0, %v515
        %517 = vst [vmem:[#allocation2 + $0xf8] sm:$0xff] %v516
        %v518 = vld [vmem:[#allocation2 + $0x108] sm:$0xff]
        %v519 = vsel %vm469, 0, %v518
        %520 = vst [vmem:[#allocation2 + $0x108] sm:$0xff] %v519
        %v521 = vld [vmem:[#allocation2 + $0x118] sm:$0xff]
        %v522 = vsel %vm469, 0, %v521
        %523 = vst [vmem:[#allocation2 + $0x118] sm:$0xff] %v522
        %v524 = vld [vmem:[%s371] sm:$0xf]
        %v525 = vld [vmem:[%s371 + $0x4] sm:$0xf]
        %v526 = vld [vmem:[%s371 + $0x8] sm:$0xf]
        %v527 = vld [vmem:[%s371 + $0xc] sm:$0xf]
        %v528 = vld [vmem:[%s371 + $0x10] sm:$0xf]
        %v529 = vld [vmem:[%s371 + $0x14] sm:$0xf]
        %v530 = vld [vmem:[%s371 + $0x18] sm:$0xf]
        %v531 = vld [vmem:[%s371 + $0x1c] sm:$0xf]
        %v532 = vld [vmem:[%s371 + $0x20] sm:$0xf]
        %v533 = vld [vmem:[%s371 + $0x24] sm:$0xf]
        %v534 = vld [vmem:[%s371 + $0x28] sm:$0xf]
        %v535 = vld [vmem:[%s371 + $0x2c] sm:$0xf]
        %v536 = vld [vmem:[%s371 + $0x30] sm:$0xf]
        %v537 = vld [vmem:[%s371 + $0x34] sm:$0xf]
        %v538 = vld [vmem:[%s371 + $0x38] sm:$0xf]
        %v539 = vld [vmem:[%s371 + $0x3c] sm:$0xf]
        %v540 = vld [vmem:[%s371 + $0x40] sm:$0xf]
        %v541 = vld [vmem:[%s371 + $0x44] sm:$0xf]
        %v542 = vld [vmem:[%s371 + $0x48] sm:$0xf]
        %v543 = vld [vmem:[%s371 + $0x4c] sm:$0xf]
        %v544 = vld [vmem:[%s371 + $0x50] sm:$0xf]
        %v545 = vld [vmem:[%s371 + $0x54] sm:$0xf]
        %v546 = vld [vmem:[%s371 + $0x58] sm:$0xf]
        %v547 = vld [vmem:[%s371 + $0x5c] sm:$0xf]
        %v548 = vld [vmem:[%s371 + $0x60] sm:$0xf]
        %v549 = vld [vmem:[%s371 + $0x64] sm:$0xf]
        %v550 = vld [vmem:[%s371 + $0x68] sm:$0xf]
        %v551 = vld [vmem:[%s371 + $0x6c] sm:$0xf]
        %v552 = vld [vmem:[%s371 + $0x70] sm:$0xf]
        %v553 = vld [vmem:[%s371 + $0x74] sm:$0xf]
        %v554 = vld [vmem:[%s371 + $0x78] sm:$0xf]
        %v555 = vld [vmem:[%s371 + $0x7c] sm:$0xf]
        %v588 = vunpack.c.l.b16 %v524
        %v589 = vunpack.c.l.b16 %v525
        %v590 = vunpack.c.l.b16 %v526
        %v591 = vunpack.c.l.b16 %v527
        %v592 = vunpack.c.l.b16 %v528
        %v593 = vunpack.c.l.b16 %v529
        %v594 = vunpack.c.l.b16 %v530
        %v595 = vunpack.c.l.b16 %v531
        %v596 = vunpack.c.l.b16 %v532
        %v597 = vunpack.c.l.b16 %v533
        %v598 = vunpack.c.l.b16 %v534
        %v599 = vunpack.c.l.b16 %v535
        %v600 = vunpack.c.l.b16 %v536
        %v601 = vunpack.c.l.b16 %v537
        %v602 = vunpack.c.l.b16 %v538
        %v603 = vunpack.c.l.b16 %v539
        %v604 = vunpack.c.l.b16 %v540
        %v605 = vunpack.c.l.b16 %v541
        %v606 = vunpack.c.l.b16 %v542
        %v607 = vunpack.c.l.b16 %v543
        %v608 = vunpack.c.l.b16 %v544
        %v609 = vunpack.c.l.b16 %v545
        %v610 = vunpack.c.l.b16 %v546
        %v611 = vunpack.c.l.b16 %v547
        %v612 = vunpack.c.l.b16 %v548
        %v613 = vunpack.c.l.b16 %v549
        %v614 = vunpack.c.l.b16 %v550
        %v615 = vunpack.c.l.b16 %v551
        %v616 = vunpack.c.l.b16 %v552
        %v617 = vunpack.c.l.b16 %v553
        %v618 = vunpack.c.l.b16 %v554
        %v619 = vunpack.c.l.b16 %v555
        %v620 = vpack.c.b16 %v589, %v588
        %v621 = vpack.c.b16 %v591, %v590
        %v622 = vpack.c.b16 %v593, %v592
        %v623 = vpack.c.b16 %v595, %v594
        %v624 = vpack.c.b16 %v597, %v596
        %v625 = vpack.c.b16 %v599, %v598
        %v626 = vpack.c.b16 %v601, %v600
        %v627 = vpack.c.b16 %v603, %v602
        %v628 = vpack.c.b16 %v605, %v604
        %v629 = vpack.c.b16 %v607, %v606
        %v630 = vpack.c.b16 %v609, %v608
        %v631 = vpack.c.b16 %v611, %v610
        %v632 = vpack.c.b16 %v613, %v612
        %v633 = vpack.c.b16 %v615, %v614
        %v634 = vpack.c.b16 %v617, %v616
        %v635 = vpack.c.b16 %v619, %v618
        %v637 = vshrl.u32 %v620, 16
        %v639 = vrot.slane %v637, 7
        %v640 = vshll.u32 %v620, 16
        %v642 = vor.u32 %v639, %v640
        %v644 = vshrl.u32 %v621, 16
        %v646 = vrot.slane %v644, 7
        %v647 = vshll.u32 %v621, 16
        %v649 = vor.u32 %v646, %v647
        %v651 = vshrl.u32 %v622, 16
        %v653 = vrot.slane %v651, 7
        %v654 = vshll.u32 %v622, 16
        %v656 = vor.u32 %v653, %v654
        %v658 = vshrl.u32 %v623, 16
        %v660 = vrot.slane %v658, 7
        %v661 = vshll.u32 %v623, 16
        %v663 = vor.u32 %v660, %v661
        %v665 = vshrl.u32 %v624, 16
        %v667 = vrot.slane %v665, 7
        %v668 = vshll.u32 %v624, 16
        %v670 = vor.u32 %v667, %v668
        %v672 = vshrl.u32 %v625, 16
        %v674 = vrot.slane %v672, 7
        %v675 = vshll.u32 %v625, 16
        %v677 = vor.u32 %v674, %v675
        %v679 = vshrl.u32 %v626, 16
        %v681 = vrot.slane %v679, 7
        %v682 = vshll.u32 %v626, 16
        %v684 = vor.u32 %v681, %v682
        %v686 = vshrl.u32 %v627, 16
        %v688 = vrot.slane %v686, 7
        %v689 = vshll.u32 %v627, 16
        %v691 = vor.u32 %v688, %v689
        %v693 = vshrl.u32 %v628, 16
        %v695 = vrot.slane %v693, 7
        %v696 = vshll.u32 %v628, 16
        %v698 = vor.u32 %v695, %v696
        %v700 = vshrl.u32 %v629, 16
        %v702 = vrot.slane %v700, 7
        %v703 = vshll.u32 %v629, 16
        %v705 = vor.u32 %v702, %v703
        %v707 = vshrl.u32 %v630, 16
        %v709 = vrot.slane %v707, 7
        %v710 = vshll.u32 %v630, 16
        %v712 = vor.u32 %v709, %v710
        %v714 = vshrl.u32 %v631, 16
        %v716 = vrot.slane %v714, 7
        %v717 = vshll.u32 %v631, 16
        %v719 = vor.u32 %v716, %v717
        %v721 = vshrl.u32 %v632, 16
        %v723 = vrot.slane %v721, 7
        %v724 = vshll.u32 %v632, 16
        %v726 = vor.u32 %v723, %v724
        %v728 = vshrl.u32 %v633, 16
        %v730 = vrot.slane %v728, 7
        %v731 = vshll.u32 %v633, 16
        %v733 = vor.u32 %v730, %v731
        %v735 = vshrl.u32 %v634, 16
        %v737 = vrot.slane %v735, 7
        %v738 = vshll.u32 %v634, 16
        %v740 = vor.u32 %v737, %v738
        %v742 = vshrl.u32 %v635, 16
        %v744 = vrot.slane %v742, 7
        %v745 = vshll.u32 %v635, 16
        %v747 = vor.u32 %v744, %v745
        %s780 = scalar_lea.vmem [#allocation2], 16
        %v781 = vld [vmem:[%s780] sm:$0xff]
        %v782 = vsel %vm469, %v642, %v781
        %783 = vst [vmem:[%s780] sm:$0xff] %v782
        %v784 = vld [vmem:[%s780 + $0x8] sm:$0x1]
        %v785 = vsel %vm412, %v639, %v784
        %786 = vst [vmem:[%s780 + $0x8] sm:$0x1] %v785
        %v787 = vld [vmem:[%s780 + $0x10] sm:$0xff]
        %v788 = vsel %vm469, %v649, %v787
        %789 = vst [vmem:[%s780 + $0x10] sm:$0xff] %v788
        %v790 = vld [vmem:[%s780 + $0x18] sm:$0x1]
        %v791 = vsel %vm412, %v646, %v790
        %792 = vst [vmem:[%s780 + $0x18] sm:$0x1] %v791
        %v793 = vld [vmem:[%s780 + $0x20] sm:$0xff]
        %v794 = vsel %vm469, %v656, %v793
        %795 = vst [vmem:[%s780 + $0x20] sm:$0xff] %v794
        %v796 = vld [vmem:[%s780 + $0x28] sm:$0x1]
        %v797 = vsel %vm412, %v653, %v796
        %798 = vst [vmem:[%s780 + $0x28] sm:$0x1] %v797
        %v799 = vld [vmem:[%s780 + $0x30] sm:$0xff]
        %v800 = vsel %vm469, %v663, %v799
        %801 = vst [vmem:[%s780 + $0x30] sm:$0xff] %v800
        %v802 = vld [vmem:[%s780 + $0x38] sm:$0x1]
        %v803 = vsel %vm412, %v660, %v802
        %804 = vst [vmem:[%s780 + $0x38] sm:$0x1] %v803
        %v805 = vld [vmem:[%s780 + $0x40] sm:$0xff]
        %v806 = vsel %vm469, %v670, %v805
        %807 = vst [vmem:[%s780 + $0x40] sm:$0xff] %v806
        %v808 = vld [vmem:[%s780 + $0x48] sm:$0x1]
        %v809 = vsel %vm412, %v667, %v808
        %810 = vst [vmem:[%s780 + $0x48] sm:$0x1] %v809
        %v811 = vld [vmem:[%s780 + $0x50] sm:$0xff]
        %v812 = vsel %vm469, %v677, %v811
        %813 = vst [vmem:[%s780 + $0x50] sm:$0xff] %v812
        %v814 = vld [vmem:[%s780 + $0x58] sm:$0x1]
        %v815 = vsel %vm412, %v674, %v814
        %816 = vst [vmem:[%s780 + $0x58] sm:$0x1] %v815
        %v817 = vld [vmem:[%s780 + $0x60] sm:$0xff]
        %v818 = vsel %vm469, %v684, %v817
        %819 = vst [vmem:[%s780 + $0x60] sm:$0xff] %v818
        %v820 = vld [vmem:[%s780 + $0x68] sm:$0x1]
        %v821 = vsel %vm412, %v681, %v820
        %822 = vst [vmem:[%s780 + $0x68] sm:$0x1] %v821
        %v823 = vld [vmem:[%s780 + $0x70] sm:$0xff]
        %v824 = vsel %vm469, %v691, %v823
        %825 = vst [vmem:[%s780 + $0x70] sm:$0xff] %v824
        %v826 = vld [vmem:[%s780 + $0x78] sm:$0x1]
        %v827 = vsel %vm412, %v688, %v826
        %828 = vst [vmem:[%s780 + $0x78] sm:$0x1] %v827
        %v829 = vld [vmem:[%s780 + $0x80] sm:$0xff]
        %v830 = vsel %vm469, %v698, %v829
        %831 = vst [vmem:[%s780 + $0x80] sm:$0xff] %v830
        %v832 = vld [vmem:[%s780 + $0x88] sm:$0x1]
        %v833 = vsel %vm412, %v695, %v832
        %834 = vst [vmem:[%s780 + $0x88] sm:$0x1] %v833
        %v835 = vld [vmem:[%s780 + $0x90] sm:$0xff]
        %v836 = vsel %vm469, %v705, %v835
        %837 = vst [vmem:[%s780 + $0x90] sm:$0xff] %v836
        %v838 = vld [vmem:[%s780 + $0x98] sm:$0x1]
        %v839 = vsel %vm412, %v702, %v838
        %840 = vst [vmem:[%s780 + $0x98] sm:$0x1] %v839
        %v841 = vld [vmem:[%s780 + $0xa0] sm:$0xff]
        %v842 = vsel %vm469, %v712, %v841
        %843 = vst [vmem:[%s780 + $0xa0] sm:$0xff] %v842
        %v844 = vld [vmem:[%s780 + $0xa8] sm:$0x1]
        %v845 = vsel %vm412, %v709, %v844
        %846 = vst [vmem:[%s780 + $0xa8] sm:$0x1] %v845
        %v847 = vld [vmem:[%s780 + $0xb0] sm:$0xff]
        %v848 = vsel %vm469, %v719, %v847
        %849 = vst [vmem:[%s780 + $0xb0] sm:$0xff] %v848
        %v850 = vld [vmem:[%s780 + $0xb8] sm:$0x1]
        %v851 = vsel %vm412, %v716, %v850
        %852 = vst [vmem:[%s780 + $0xb8] sm:$0x1] %v851
        %v853 = vld [vmem:[%s780 + $0xc0] sm:$0xff]
        %v854 = vsel %vm469, %v726, %v853
        %855 = vst [vmem:[%s780 + $0xc0] sm:$0xff] %v854
        %v856 = vld [vmem:[%s780 + $0xc8] sm:$0x1]
        %v857 = vsel %vm412, %v723, %v856
        %858 = vst [vmem:[%s780 + $0xc8] sm:$0x1] %v857
        %v859 = vld [vmem:[%s780 + $0xd0] sm:$0xff]
        %v860 = vsel %vm469, %v733, %v859
        %861 = vst [vmem:[%s780 + $0xd0] sm:$0xff] %v860
        %v862 = vld [vmem:[%s780 + $0xd8] sm:$0x1]
        %v863 = vsel %vm412, %v730, %v862
        %864 = vst [vmem:[%s780 + $0xd8] sm:$0x1] %v863
        %v865 = vld [vmem:[%s780 + $0xe0] sm:$0xff]
        %v866 = vsel %vm469, %v740, %v865
        %867 = vst [vmem:[%s780 + $0xe0] sm:$0xff] %v866
        %v868 = vld [vmem:[%s780 + $0xe8] sm:$0x1]
        %v869 = vsel %vm412, %v737, %v868
        %870 = vst [vmem:[%s780 + $0xe8] sm:$0x1] %v869
        %v871 = vld [vmem:[%s780 + $0xf0] sm:$0xff]
        %v872 = vsel %vm469, %v747, %v871
        %873 = vst [vmem:[%s780 + $0xf0] sm:$0xff] %v872
        %v874 = vld [vmem:[%s780 + $0xf8] sm:$0x1]
        %v875 = vsel %vm412, %v744, %v874
        %876 = vst [vmem:[%s780 + $0xf8] sm:$0x1] %v875
        %v877 = vld [vmem:[%s385] sm:$0xf]
        %v878 = vld [vmem:[%s385 + $0x4] sm:$0xf]
        %v879 = vld [vmem:[%s402] sm:$0xf]
        %v880 = vld [vmem:[%s402 + $0x4] sm:$0xf]
        %s881 = scalar_select %p409, 1, 0
        %v882 = vstv %s881
        %vm883 = vcmp.eq.s32.totalorder %v882, 1
        %v884 = vsel %vm883, 0, %v877
        %v885 = vsel %vm883, 0, %v878
        %v888 = vunpack.c.l.b16 %v884
        %v889 = vunpack.c.l.b16 %v885
        %v890 = vpack.c.b16 %v889, %v888
        %v892 = vshrl.u32 %v890, 16
        %v894 = vrot.slane %v892, 7
        %v895 = vshll.u32 %v890, 16
        %v897 = vor.u32 %v894, %v895
        %v900 = vld [vmem:[#allocation2] sm:$0xff]
        %v901 = vsel %vm469, %v897, %v900
        %902 = vst [vmem:[#allocation2] sm:$0xff] %v901
        %v903 = vld [vmem:[#allocation2 + $0x8] sm:$0x1]
        %v904 = vsel %vm412, %v894, %v903
        %905 = vst [vmem:[#allocation2 + $0x8] sm:$0x1] %v904
        %v906 = vsel %vm883, 0, %v879
        %v907 = vsel %vm883, 0, %v880
        %v910 = vunpack.c.l.b16 %v906
        %v911 = vunpack.c.l.b16 %v907
        %v912 = vpack.c.b16 %v911, %v910
        %v914 = vshrl.u32 %v912, 16
        %v916 = vrot.slane %v914, 7
        %v917 = vshll.u32 %v912, 16
        %v919 = vor.u32 %v916, %v917
        %s922 = scalar_lea.vmem [#allocation2], 272
        %v923 = vld [vmem:[%s922] sm:$0xff]
        %v924 = vsel %vm469, %v919, %v923
        %925 = vst [vmem:[%s922] sm:$0xff] %v924
        %v926 = vld [vmem:[%s922 + $0x8] sm:$0x1]
        %v927 = vsel %vm412, %v916, %v926
        %928 = vst [vmem:[%s922 + $0x8] sm:$0x1] %v927
        %v929 = vld [vmem:[#allocation2] sm:$0xff]
        %v930 = vld [vmem:[#allocation2 + $0x8] sm:$0xff]
        %v931 = vld [vmem:[#allocation2 + $0x10] sm:$0xff]
        %v932 = vld [vmem:[#allocation2 + $0x18] sm:$0xff]
        %v933 = vld [vmem:[#allocation2 + $0x20] sm:$0xff]
        %v934 = vld [vmem:[#allocation2 + $0x28] sm:$0xff]
        %v935 = vld [vmem:[#allocation2 + $0x30] sm:$0xff]
        %v936 = vld [vmem:[#allocation2 + $0x38] sm:$0xff]
        %v937 = vld [vmem:[#allocation2 + $0x40] sm:$0xff]
        %v938 = vld [vmem:[#allocation2 + $0x48] sm:$0xff]
        %v939 = vld [vmem:[#allocation2 + $0x50] sm:$0xff]
        %v940 = vld [vmem:[#allocation2 + $0x58] sm:$0xff]
        %v941 = vld [vmem:[#allocation2 + $0x60] sm:$0xff]
        %v942 = vld [vmem:[#allocation2 + $0x68] sm:$0xff]
        %v943 = vld [vmem:[#allocation2 + $0x70] sm:$0xff]
        %v944 = vld [vmem:[#allocation2 + $0x78] sm:$0xff]
        %v945 = vld [vmem:[#allocation2 + $0x80] sm:$0xff]
        %v946 = vld [vmem:[#allocation2 + $0x88] sm:$0xff]
        %v947 = vld [vmem:[#allocation2 + $0x90] sm:$0xff]
        %v948 = vld [vmem:[#allocation2 + $0x98] sm:$0xff]
        %v949 = vld [vmem:[#allocation2 + $0xa0] sm:$0xff]
        %v950 = vld [vmem:[#allocation2 + $0xa8] sm:$0xff]
        %v951 = vld [vmem:[#allocation2 + $0xb0] sm:$0xff]
        %v952 = vld [vmem:[#allocation2 + $0xb8] sm:$0xff]
        %v953 = vld [vmem:[#allocation2 + $0xc0] sm:$0xff]
        %v954 = vld [vmem:[#allocation2 + $0xc8] sm:$0xff]
        %v955 = vld [vmem:[#allocation2 + $0xd0] sm:$0xff]
        %v956 = vld [vmem:[#allocation2 + $0xd8] sm:$0xff]
        %v957 = vld [vmem:[#allocation2 + $0xe0] sm:$0xff]
        %v958 = vld [vmem:[#allocation2 + $0xe8] sm:$0xff]
        %v959 = vld [vmem:[#allocation2 + $0xf0] sm:$0xff]
        %v960 = vld [vmem:[#allocation2 + $0xf8] sm:$0xff]
        %v961 = vld [vmem:[%s3] sm:$0xff]
        %v962 = vld [vmem:[%s3 + $0x8] sm:$0xf]
        %v963 = vld [vmem:[%s3 + $0xc] sm:$0xff]
        %v964 = vld [vmem:[%s3 + $0x14] sm:$0xf]
        %v965 = vld [vmem:[%s3 + $0x18] sm:$0xff]
        %v966 = vld [vmem:[%s3 + $0x20] sm:$0xf]
        %v967 = vld [vmem:[%s3 + $0x24] sm:$0xff]
        %v968 = vld [vmem:[%s3 + $0x2c] sm:$0xf]
        %v969 = vld [vmem:[%s3 + $0x30] sm:$0xff]
        %v970 = vld [vmem:[%s3 + $0x38] sm:$0xf]
        %v971 = vld [vmem:[%s3 + $0x3c] sm:$0xff]
        %v972 = vld [vmem:[%s3 + $0x44] sm:$0xf]
        %v973 = vld [vmem:[%s3 + $0x48] sm:$0xff]
        %v974 = vld [vmem:[%s3 + $0x50] sm:$0xf]
        %v975 = vld [vmem:[%s3 + $0x54] sm:$0xff]
        %v976 = vld [vmem:[%s3 + $0x5c] sm:$0xf]
        %v977 = vld [vmem:[%s3 + $0x60] sm:$0xff]
        %v978 = vld [vmem:[%s3 + $0x68] sm:$0xf]
        %v979 = vld [vmem:[%s3 + $0x6c] sm:$0xff]
        %v980 = vld [vmem:[%s3 + $0x74] sm:$0xf]
        %v981 = vld [vmem:[%s3 + $0x78] sm:$0xff]
        %v982 = vld [vmem:[%s3 + $0x80] sm:$0xf]
        %v983 = vld [vmem:[%s3 + $0x84] sm:$0xff]
        %v984 = vld [vmem:[%s3 + $0x8c] sm:$0xf]
        %v985 = vld [vmem:[%s3 + $0x90] sm:$0xff]
        %v986 = vld [vmem:[%s3 + $0x98] sm:$0xf]
        %v987 = vld [vmem:[%s3 + $0x9c] sm:$0xff]
        %v988 = vld [vmem:[%s3 + $0xa4] sm:$0xf]
        %v989 = vld [vmem:[%s3 + $0xa8] sm:$0xff]
        %v990 = vld [vmem:[%s3 + $0xb0] sm:$0xf]
        %v991 = vld [vmem:[%s3 + $0xb4] sm:$0xff]
        %v992 = vld [vmem:[%s3 + $0xbc] sm:$0xf]
        %v1025 = vunpack.c.l.b16 %v961
        %v1026 = vunpack.c.h.b16 %v961
        %v1027 = vunpack.c.l.b16 %v962
        %v1028 = vunpack.c.l.b16 %v963
        %v1029 = vunpack.c.h.b16 %v963
        %v1030 = vunpack.c.l.b16 %v964
        %v1031 = vunpack.c.l.b16 %v965
        %v1032 = vunpack.c.h.b16 %v965
        %v1033 = vunpack.c.l.b16 %v966
        %v1034 = vunpack.c.l.b16 %v967
        %v1035 = vunpack.c.h.b16 %v967
        %v1036 = vunpack.c.l.b16 %v968
        %v1037 = vunpack.c.l.b16 %v969
        %v1038 = vunpack.c.h.b16 %v969
        %v1039 = vunpack.c.l.b16 %v970
        %v1040 = vunpack.c.l.b16 %v971
        %v1041 = vunpack.c.h.b16 %v971
        %v1042 = vunpack.c.l.b16 %v972
        %v1043 = vunpack.c.l.b16 %v973
        %v1044 = vunpack.c.h.b16 %v973
        %v1045 = vunpack.c.l.b16 %v974
        %v1046 = vunpack.c.l.b16 %v975
        %v1047 = vunpack.c.h.b16 %v975
        %v1048 = vunpack.c.l.b16 %v976
        %v1049 = vunpack.c.l.b16 %v977
        %v1050 = vunpack.c.h.b16 %v977
        %v1051 = vunpack.c.l.b16 %v978
        %v1052 = vunpack.c.l.b16 %v979
        %v1053 = vunpack.c.h.b16 %v979
        %v1054 = vunpack.c.l.b16 %v980
        %v1055 = vunpack.c.l.b16 %v981
        %v1056 = vunpack.c.h.b16 %v981
        %v1057 = vunpack.c.l.b16 %v982
        %v1058 = vunpack.c.l.b16 %v983
        %v1059 = vunpack.c.h.b16 %v983
        %v1060 = vunpack.c.l.b16 %v984
        %v1061 = vunpack.c.l.b16 %v985
        %v1062 = vunpack.c.h.b16 %v985
        %v1063 = vunpack.c.l.b16 %v986
        %v1064 = vunpack.c.l.b16 %v987
        %v1065 = vunpack.c.h.b16 %v987
        %v1066 = vunpack.c.l.b16 %v988
        %v1067 = vunpack.c.l.b16 %v989
        %v1068 = vunpack.c.h.b16 %v989
        %v1069 = vunpack.c.l.b16 %v990
        %v1070 = vunpack.c.l.b16 %v991
        %v1071 = vunpack.c.h.b16 %v991
        %v1072 = vunpack.c.l.b16 %v992
        %v1073 = vpack.c.b16 %v1028, %v1025
        %v1074 = vpack.c.b16 %v1029, %v1026
        %v1075 = vpack.c.b16 %v1030, %v1027
        %v1076 = vpack.c.b16 %v1034, %v1031
        %v1077 = vpack.c.b16 %v1035, %v1032
        %v1078 = vpack.c.b16 %v1036, %v1033
        %v1079 = vpack.c.b16 %v1040, %v1037
        %v1080 = vpack.c.b16 %v1041, %v1038
        %v1081 = vpack.c.b16 %v1042, %v1039
        %v1082 = vpack.c.b16 %v1046, %v1043
        %v1083 = vpack.c.b16 %v1047, %v1044
        %v1084 = vpack.c.b16 %v1048, %v1045
        %v1085 = vpack.c.b16 %v1052, %v1049
        %v1086 = vpack.c.b16 %v1053, %v1050
        %v1087 = vpack.c.b16 %v1054, %v1051
        %v1088 = vpack.c.b16 %v1058, %v1055
        %v1089 = vpack.c.b16 %v1059, %v1056
        %v1090 = vpack.c.b16 %v1060, %v1057
        %v1091 = vpack.c.b16 %v1064, %v1061
        %v1092 = vpack.c.b16 %v1065, %v1062
        %v1093 = vpack.c.b16 %v1066, %v1063
        %v1094 = vpack.c.b16 %v1070, %v1067
        %v1095 = vpack.c.b16 %v1071, %v1068
        %v1096 = vpack.c.b16 %v1072, %v1069
        %1121 = vmatprep.subr.bf16.mxu0 %v1074
        %1122 = vmatpush1.bf16.msra.mxu0 %v1073
        %1123 = vmatprep.subr.bf16.mxu0 %v1077
        %1124 = vmatpush1.bf16.msra.mxu0 %v1076
        %1125 = vmatprep.subr.bf16.mxu0 %v1080
        %1126 = vmatpush1.bf16.msra.mxu0 %v1079
        %1127 = vmatprep.subr.bf16.mxu0 %v1083
        %1128 = vmatpush1.bf16.msra.mxu0 %v1082
        %1129 = vmatprep.subr.bf16.mxu0 %v1086
        %1130 = vmatpush1.bf16.msra.mxu0 %v1085
        %1131 = vmatprep.subr.bf16.mxu0 %v1089
        %1132 = vmatpush1.bf16.msra.mxu0 %v1088
        %1133 = vmatprep.subr.bf16.mxu0 %v1092
        %1134 = vmatpush1.bf16.msra.mxu0 %v1091
        %1135 = vmatprep.subr.bf16.mxu0 %v1095
        %1136 = vmatpush1.bf16.msra.mxu0 %v1094
        %1137 = vmatprep.subr.bf16.mxu0 0
        %1138 = vmatpush1.bf16.msra.mxu0 0
        %1139 = vmatprep.subr.bf16.mxu0 0
        %1140 = vmatpush1.bf16.msra.mxu0 0
        %1141 = vmatprep.subr.bf16.mxu0 0
        %1142 = vmatpush1.bf16.msra.mxu0 0
        %1143 = vmatprep.subr.bf16.mxu0 0
        %1144 = vmatpush1.bf16.msra.mxu0 0
        %1145 = vmatprep.subr.bf16.mxu0 0
        %1146 = vmatpush1.bf16.msra.mxu0 0
        %1147 = vmatprep.subr.bf16.mxu0 0
        %1148 = vmatpush1.bf16.msra.mxu0 0
        %1149 = vmatprep.subr.bf16.mxu0 0
        %1150 = vmatpush1.bf16.msra.mxu0 0
        %1151 = vmatprep.subr.bf16.mxu0 0
        %1152 = vmatpush1.bf16.msra.mxu0 0
        %1153 = vmatprep.mubr.bf16.mxu0 0
        %1154 = vmatmul.mubr.bf16.gmra.mrb[0].mxu0 %v929
        %v1155 = vpop.f32.mrb[0].mxu0
        %v1156 = vadd.f32 0.0, %v1155
        %v1157 = vpop.f32.mrb[0].mxu0
        %v1158 = vadd.f32 0.0, %v1157
        %v1159 = vpop.f32.mrb[0].mxu0
        %v1160 = vadd.f32 0.0, %v1159
        %v1161 = vpop.f32.mrb[0].mxu0
        %v1162 = vadd.f32 0.0, %v1161
        %1163 = vmatprep.mubr.bf16.mxu0 0
        %1164 = vmatmul.mubr.bf16.gmra.mrb[0].mxu0 %v930
        %v1165 = vpop.f32.mrb[0].mxu0
        %v1166 = vpop.f32.mrb[0].mxu0
        %v1167 = vadd.f32 0.0, %v1166
        %v1168 = vpop.f32.mrb[0].mxu0
        %v1169 = vpop.f32.mrb[0].mxu0
        %1170 = vmatprep.mubr.bf16.mxu0 0
        %1171 = vmatmul.mubr.bf16.gmra.mrb[0].mxu0 %v931
        %v1172 = vpop.f32.mrb[0].mxu0
        %v1173 = vadd.f32 0.0, %v1172
        %v1174 = vpop.f32.mrb[0].mxu0
        %v1175 = vadd.f32 0.0, %v1174
        %v1176 = vpop.f32.mrb[0].mxu0
        %v1177 = vadd.f32 0.0, %v1176
        %v1178 = vpop.f32.mrb[0].mxu0
        %v1179 = vadd.f32 0.0, %v1178
        %1180 = vmatprep.mubr.bf16.mxu0 0
        %1181 = vmatmul.mubr.bf16.gmra.mrb[0].mxu0 %v932
        %v1182 = vpop.f32.mrb[0].mxu0
        %v1183 = vpop.f32.mrb[0].mxu0
        %v1184 = vadd.f32 0.0, %v1183
        %v1185 = vpop.f32.mrb[0].mxu0
        %v1186 = vpop.f32.mrb[0].mxu0
        %1187 = vmatprep.mubr.bf16.mxu0 0
        %1188 = vmatmul.mubr.bf16.gmra.mrb[0].mxu0 %v933
        %v1189 = vpop.f32.mrb[0].mxu0
        %v1190 = vadd.f32 0.0, %v1189
        %v1191 = vpop.f32.mrb[0].mxu0
        %v1192 = vadd.f32 0.0, %v1191
        %v1193 = vpop.f32.mrb[0].mxu0
        %v1194 = vadd.f32 0.0, %v1193
        %v1195 = vpop.f32.mrb[0].mxu0
        %v1196 = vadd.f32 0.0, %v1195
        %1197 = vmatprep.mubr.bf16.mxu0 0
        %1198 = vmatmul.mubr.bf16.gmra.mrb[0].mxu0 %v934
        %v1199 = vpop.f32.mrb[0].mxu0
        %v1200 = vpop.f32.mrb[0].mxu0
        %v1201 = vadd.f32 0.0, %v1200
        %v1202 = vpop.f32.mrb[0].mxu0
        %v1203 = vpop.f32.mrb[0].mxu0
        %1204 = vmatprep.mubr.bf16.mxu0 0
        %1205 = vmatmul.mubr.bf16.gmra.mrb[0].mxu0 %v935
        %v1206 = vpop.f32.mrb[0].mxu0
        %v1207 = vadd.f32 0.0, %v1206
        %v1208 = vpop.f32.mrb[0].mxu0
        %v1209 = vadd.f32 0.0, %v1208
        %v1210 = vpop.f32.mrb[0].mxu0
        %v1211 = vadd.f32 0.0, %v1210
        %v1212 = vpop.f32.mrb[0].mxu0
        %v1213 = vadd.f32 0.0, %v1212
        %1214 = vmatprep.mubr.bf16.mxu0 0
        %1215 = vmatmul.mubr.bf16.gmra.mrb[0].mxu0 %v936
        %v1216 = vpop.f32.mrb[0].mxu0
        %v1217 = vpop.f32.mrb[0].mxu0
        %v1218 = vadd.f32 0.0, %v1217
        %v1219 = vpop.f32.mrb[0].mxu0
        %v1220 = vpop.f32.mrb[0].mxu0
        %1221 = vmatprep.mubr.bf16.mxu0 0
        %1222 = vmatmul.mubr.bf16.gmra.mrb[0].mxu0 %v937
        %v1223 = vpop.f32.mrb[0].mxu0
        %v1224 = vadd.f32 0.0, %v1223
        %v1225 = vpop.f32.mrb[0].mxu0
        %v1226 = vadd.f32 0.0, %v1225
        %v1227 = vpop.f32.mrb[0].mxu0
        %v1228 = vadd.f32 0.0, %v1227
        %v1229 = vpop.f32.mrb[0].mxu0
        %v1230 = vadd.f32 0.0, %v1229
        %1231 = vmatprep.mubr.bf16.mxu0 0
        %1232 = vmatmul.mubr.bf16.gmra.mrb[0].mxu0 %v938
        %v1233 = vpop.f32.mrb[0].mxu0
        %v1234 = vpop.f32.mrb[0].mxu0
        %v1235 = vadd.f32 0.0, %v1234
        %v1236 = vpop.f32.mrb[0].mxu0
        %v1237 = vpop.f32.mrb[0].mxu0
        %1238 = vmatprep.mubr.bf16.mxu0 0
        %1239 = vmatmul.mubr.bf16.gmra.mrb[0].mxu0 %v939
        %v1240 = vpop.f32.mrb[0].mxu0
        %v1241 = vadd.f32 0.0, %v1240
        %v1242 = vpop.f32.mrb[0].mxu0
        %v1243 = vadd.f32 0.0, %v1242
        %v1244 = vpop.f32.mrb[0].mxu0
        %v1245 = vadd.f32 0.0, %v1244
        %v1246 = vpop.f32.mrb[0].mxu0
        %v1247 = vadd.f32 0.0, %v1246
        %1248 = vmatprep.mubr.bf16.mxu0 0
        %1249 = vmatmul.mubr.bf16.gmra.mrb[0].mxu0 %v940
        %v1250 = vpop.f32.mrb[0].mxu0
        %v1251 = vpop.f32.mrb[0].mxu0
        %v1252 = vadd.f32 0.0, %v1251
        %v1253 = vpop.f32.mrb[0].mxu0
        %v1254 = vpop.f32.mrb[0].mxu0
        %1255 = vmatprep.mubr.bf16.mxu0 0
        %1256 = vmatmul.mubr.bf16.gmra.mrb[0].mxu0 %v941
        %v1257 = vpop.f32.mrb[0].mxu0
        %v1258 = vadd.f32 0.0, %v1257
        %v1259 = vpop.f32.mrb[0].mxu0
        %v1260 = vadd.f32 0.0, %v1259
        %v1261 = vpop.f32.mrb[0].mxu0
        %v1262 = vadd.f32 0.0, %v1261
        %v1263 = vpop.f32.mrb[0].mxu0
        %v1264 = vadd.f32 0.0, %v1263
        %1265 = vmatprep.mubr.bf16.mxu0 0
        %1266 = vmatmul.mubr.bf16.gmra.mrb[0].mxu0 %v942
        %v1267 = vpop.f32.mrb[0].mxu0
        %v1268 = vpop.f32.mrb[0].mxu0
        %v1269 = vadd.f32 0.0, %v1268
        %v1270 = vpop.f32.mrb[0].mxu0
        %v1271 = vpop.f32.mrb[0].mxu0
        %1272 = vmatprep.mubr.bf16.mxu0 0
        %1273 = vmatmul.mubr.bf16.gmra.mrb[0].mxu0 %v943
        %v1274 = vpop.f32.mrb[0].mxu0
        %v1275 = vadd.f32 0.0, %v1274
        %v1276 = vpop.f32.mrb[0].mxu0
        %v1277 = vadd.f32 0.0, %v1276
        %v1278 = vpop.f32.mrb[0].mxu0
        %v1279 = vadd.f32 0.0, %v1278
        %v1280 = vpop.f32.mrb[0].mxu0
        %v1281 = vadd.f32 0.0, %v1280
        %1282 = vmatprep.mubr.bf16.mxu0 0
        %1283 = vmatmul.mubr.bf16.gmra.mrb[0].mxu0 %v944
        %v1284 = vpop.f32.mrb[0].mxu0
        %v1285 = vpop.f32.mrb[0].mxu0
        %v1286 = vadd.f32 0.0, %v1285
        %v1287 = vpop.f32.mrb[0].mxu0
        %v1288 = vpop.f32.mrb[0].mxu0
        %1289 = vmatprep.mubr.bf16.mxu0 0
        %1290 = vmatmul.mubr.bf16.gmra.mrb[0].mxu0 %v945
        %v1291 = vpop.f32.mrb[0].mxu0
        %v1292 = vadd.f32 0.0, %v1291
        %v1293 = vpop.f32.mrb[0].mxu0
        %v1294 = vadd.f32 0.0, %v1293
        %v1295 = vpop.f32.mrb[0].mxu0
        %v1296 = vadd.f32 0.0, %v1295
        %v1297 = vpop.f32.mrb[0].mxu0
        %v1298 = vadd.f32 0.0, %v1297
        %1299 = vmatprep.mubr.bf16.mxu0 0
        %1300 = vmatmul.mubr.bf16.gmra.mrb[0].mxu0 %v946
        %v1301 = vpop.f32.mrb[0].mxu0
        %v1302 = vpop.f32.mrb[0].mxu0
        %v1303 = vadd.f32 0.0, %v1302
        %v1304 = vpop.f32.mrb[0].mxu0
        %v1305 = vpop.f32.mrb[0].mxu0
        %1306 = vmatprep.mubr.bf16.mxu0 0
        %1307 = vmatmul.mubr.bf16.gmra.mrb[0].mxu0 %v947
        %v1308 = vpop.f32.mrb[0].mxu0
        %v1309 = vadd.f32 0.0, %v1308
        %v1310 = vpop.f32.mrb[0].mxu0
        %v1311 = vadd.f32 0.0, %v1310
        %v1312 = vpop.f32.mrb[0].mxu0
        %v1313 = vadd.f32 0.0, %v1312
        %v1314 = vpop.f32.mrb[0].mxu0
        %v1315 = vadd.f32 0.0, %v1314
        %1316 = vmatprep.mubr.bf16.mxu0 0
        %1317 = vmatmul.mubr.bf16.gmra.mrb[0].mxu0 %v948
        %v1318 = vpop.f32.mrb[0].mxu0
        %v1319 = vpop.f32.mrb[0].mxu0
        %v1320 = vadd.f32 0.0, %v1319
        %v1321 = vpop.f32.mrb[0].mxu0
        %v1322 = vpop.f32.mrb[0].mxu0
        %1323 = vmatprep.mubr.bf16.mxu0 0
        %1324 = vmatmul.mubr.bf16.gmra.mrb[0].mxu0 %v949
        %v1325 = vpop.f32.mrb[0].mxu0
        %v1326 = vadd.f32 0.0, %v1325
        %v1327 = vpop.f32.mrb[0].mxu0
        %v1328 = vadd.f32 0.0, %v1327
        %v1329 = vpop.f32.mrb[0].mxu0
        %v1330 = vadd.f32 0.0, %v1329
        %v1331 = vpop.f32.mrb[0].mxu0
        %v1332 = vadd.f32 0.0, %v1331
        %1333 = vmatprep.mubr.bf16.mxu0 0
        %1334 = vmatmul.mubr.bf16.gmra.mrb[0].mxu0 %v950
        %v1335 = vpop.f32.mrb[0].mxu0
        %v1336 = vpop.f32.mrb[0].mxu0
        %v1337 = vadd.f32 0.0, %v1336
        %v1338 = vpop.f32.mrb[0].mxu0
        %v1339 = vpop.f32.mrb[0].mxu0
        %1340 = vmatprep.mubr.bf16.mxu0 0
        %1341 = vmatmul.mubr.bf16.gmra.mrb[0].mxu0 %v951
        %v1342 = vpop.f32.mrb[0].mxu0
        %v1343 = vadd.f32 0.0, %v1342
        %v1344 = vpop.f32.mrb[0].mxu0
        %v1345 = vadd.f32 0.0, %v1344
        %v1346 = vpop.f32.mrb[0].mxu0
        %v1347 = vadd.f32 0.0, %v1346
        %v1348 = vpop.f32.mrb[0].mxu0
        %v1349 = vadd.f32 0.0, %v1348
        %1350 = vmatprep.mubr.bf16.mxu0 0
        %1351 = vmatmul.mubr.bf16.gmra.mrb[0].mxu0 %v952
        %v1352 = vpop.f32.mrb[0].mxu0
        %v1353 = vpop.f32.mrb[0].mxu0
        %v1354 = vadd.f32 0.0, %v1353
        %v1355 = vpop.f32.mrb[0].mxu0
        %v1356 = vpop.f32.mrb[0].mxu0
        %1357 = vmatprep.mubr.bf16.mxu0 0
        %1358 = vmatmul.mubr.bf16.gmra.mrb[0].mxu0 %v953
        %v1359 = vpop.f32.mrb[0].mxu0
        %v1360 = vadd.f32 0.0, %v1359
        %v1361 = vpop.f32.mrb[0].mxu0
        %v1362 = vadd.f32 0.0, %v1361
        %v1363 = vpop.f32.mrb[0].mxu0
        %v1364 = vadd.f32 0.0, %v1363
        %v1365 = vpop.f32.mrb[0].mxu0
        %v1366 = vadd.f32 0.0, %v1365
        %1367 = vmatprep.mubr.bf16.mxu0 0
        %1368 = vmatmul.mubr.bf16.gmra.mrb[0].mxu0 %v954
        %v1369 = vpop.f32.mrb[0].mxu0
        %v1370 = vpop.f32.mrb[0].mxu0
        %v1371 = vadd.f32 0.0, %v1370
        %v1372 = vpop.f32.mrb[0].mxu0
        %v1373 = vpop.f32.mrb[0].mxu0
        %1374 = vmatprep.mubr.bf16.mxu0 0
        %1375 = vmatmul.mubr.bf16.gmra.mrb[0].mxu0 %v955
        %v1376 = vpop.f32.mrb[0].mxu0
        %v1377 = vadd.f32 0.0, %v1376
        %v1378 = vpop.f32.mrb[0].mxu0
        %v1379 = vadd.f32 0.0, %v1378
        %v1380 = vpop.f32.mrb[0].mxu0
        %v1381 = vadd.f32 0.0, %v1380
        %v1382 = vpop.f32.mrb[0].mxu0
        %v1383 = vadd.f32 0.0, %v1382
        %1384 = vmatprep.mubr.bf16.mxu0 0
        %1385 = vmatmul.mubr.bf16.gmra.mrb[0].mxu0 %v956
        %v1386 = vpop.f32.mrb[0].mxu0
        %v1387 = vpop.f32.mrb[0].mxu0
        %v1388 = vadd.f32 0.0, %v1387
        %v1389 = vpop.f32.mrb[0].mxu0
        %v1390 = vpop.f32.mrb[0].mxu0
        %1391 = vmatprep.mubr.bf16.mxu0 0
        %1392 = vmatmul.mubr.bf16.gmra.mrb[0].mxu0 %v957
        %v1393 = vpop.f32.mrb[0].mxu0
        %v1394 = vadd.f32 0.0, %v1393
        %v1395 = vpop.f32.mrb[0].mxu0
        %v1396 = vadd.f32 0.0, %v1395
        %v1397 = vpop.f32.mrb[0].mxu0
        %v1398 = vadd.f32 0.0, %v1397
        %v1399 = vpop.f32.mrb[0].mxu0
        %v1400 = vadd.f32 0.0, %v1399
        %1401 = vmatprep.mubr.bf16.mxu0 0
        %1402 = vmatmul.mubr.bf16.gmra.mrb[0].mxu0 %v958
        %v1403 = vpop.f32.mrb[0].mxu0
        %v1404 = vpop.f32.mrb[0].mxu0
        %v1405 = vadd.f32 0.0, %v1404
        %v1406 = vpop.f32.mrb[0].mxu0
        %v1407 = vpop.f32.mrb[0].mxu0
        %1408 = vmatprep.mubr.bf16.mxu0 0
        %1409 = vmatmul.mubr.bf16.gmra.mrb[0].mxu0 %v959
        %v1410 = vpop.f32.mrb[0].mxu0
        %v1411 = vadd.f32 0.0, %v1410
        %v1412 = vpop.f32.mrb[0].mxu0
        %v1413 = vadd.f32 0.0, %v1412
        %v1414 = vpop.f32.mrb[0].mxu0
        %v1415 = vadd.f32 0.0, %v1414
        %v1416 = vpop.f32.mrb[0].mxu0
        %v1417 = vadd.f32 0.0, %v1416
        %1418 = vmatprep.mubr.bf16.mxu0 0
        %1419 = vmatmul.mubr.bf16.gmra.mrb[0].mxu0 %v960
        %v1420 = vpop.f32.mrb[0].mxu0
        %v1421 = vpop.f32.mrb[0].mxu0
        %v1422 = vadd.f32 0.0, %v1421
        %v1423 = vpop.f32.mrb[0].mxu0
        %v1424 = vpop.f32.mrb[0].mxu0
        %1425 = vdwg.mxu0
        %1426 = vmatprep.subr.bf16.mxu0 0
        %1427 = vmatpush1.bf16.msra.mxu0 %v1075
        %1428 = vmatprep.subr.bf16.mxu0 0
        %1429 = vmatpush1.bf16.msra.mxu0 %v1078
        %1430 = vmatprep.subr.bf16.mxu0 0
        %1431 = vmatpush1.bf16.msra.mxu0 %v1081
        %1432 = vmatprep.subr.bf16.mxu0 0
        %1433 = vmatpush1.bf16.msra.mxu0 %v1084
        %1434 = vmatprep.subr.bf16.mxu0 0
        %1435 = vmatpush1.bf16.msra.mxu0 %v1087
        %1436 = vmatprep.subr.bf16.mxu0 0
        %1437 = vmatpush1.bf16.msra.mxu0 %v1090
        %1438 = vmatprep.subr.bf16.mxu0 0
        %1439 = vmatpush1.bf16.msra.mxu0 %v1093
        %1440 = vmatprep.subr.bf16.mxu0 0
        %1441 = vmatpush1.bf16.msra.mxu0 %v1096
        %1442 = vmatprep.subr.bf16.mxu0 0
        %1443 = vmatpush1.bf16.msra.mxu0 0
        %1444 = vmatprep.subr.bf16.mxu0 0
        %1445 = vmatpush1.bf16.msra.mxu0 0
        %1446 = vmatprep.subr.bf16.mxu0 0
        %1447 = vmatpush1.bf16.msra.mxu0 0
        %1448 = vmatprep.subr.bf16.mxu0 0
        %1449 = vmatpush1.bf16.msra.mxu0 0
        %1450 = vmatprep.subr.bf16.mxu0 0
        %1451 = vmatpush1.bf16.msra.mxu0 0
        %1452 = vmatprep.subr.bf16.mxu0 0
        %1453 = vmatpush1.bf16.msra.mxu0 0
        %1454 = vmatprep.subr.bf16.mxu0 0
        %1455 = vmatpush1.bf16.msra.mxu0 0
        %1456 = vmatprep.subr.bf16.mxu0 0
        %1457 = vmatpush1.bf16.msra.mxu0 0
        %1458 = vmatprep.mubr.bf16.mxu0 0
        %1459 = vmatmul.mubr.bf16.gmra.mrb[0].mxu0 %v929
        %v1460 = vpop.f32.mrb[0].mxu0
        %v1461 = vadd.f32 0.0, %v1460
        %v1462 = vpop.f32.mrb[0].mxu0
        %v1463 = vpop.f32.mrb[0].mxu0
        %v1464 = vadd.f32 0.0, %v1463
        %v1465 = vpop.f32.mrb[0].mxu0
        %1466 = vmatprep.mubr.bf16.mxu0 0
        %1467 = vmatmul.mubr.bf16.gmra.mrb[0].mxu0 %v930
        %v1468 = vpop.f32.mrb[0].mxu0
        %v1469 = vadd.f32 0.0, %v1468
        %v1470 = vpop.f32.mrb[0].mxu0
        %v1471 = vpop.f32.mrb[0].mxu0
        %v1472 = vpop.f32.mrb[0].mxu0
        %1473 = vmatprep.mubr.bf16.mxu0 0
        %1474 = vmatmul.mubr.bf16.gmra.mrb[0].mxu0 %v931
        %v1475 = vpop.f32.mrb[0].mxu0
        %v1476 = vadd.f32 0.0, %v1475
        %v1477 = vpop.f32.mrb[0].mxu0
        %v1478 = vpop.f32.mrb[0].mxu0
        %v1479 = vadd.f32 0.0, %v1478
        %v1480 = vpop.f32.mrb[0].mxu0
        %1481 = vmatprep.mubr.bf16.mxu0 0
        %1482 = vmatmul.mubr.bf16.gmra.mrb[0].mxu0 %v932
        %v1483 = vpop.f32.mrb[0].mxu0
        %v1484 = vadd.f32 0.0, %v1483
        %v1485 = vpop.f32.mrb[0].mxu0
        %v1486 = vpop.f32.mrb[0].mxu0
        %v1487 = vpop.f32.mrb[0].mxu0
        %1488 = vmatprep.mubr.bf16.mxu0 0
        %1489 = vmatmul.mubr.bf16.gmra.mrb[0].mxu0 %v933
        %v1490 = vpop.f32.mrb[0].mxu0
        %v1491 = vadd.f32 0.0, %v1490
        %v1492 = vpop.f32.mrb[0].mxu0
        %v1493 = vpop.f32.mrb[0].mxu0
        %v1494 = vadd.f32 0.0, %v1493
        %v1495 = vpop.f32.mrb[0].mxu0
        %1496 = vmatprep.mubr.bf16.mxu0 0
        %1497 = vmatmul.mubr.bf16.gmra.mrb[0].mxu0 %v934
        %v1498 = vpop.f32.mrb[0].mxu0
        %v1499 = vadd.f32 0.0, %v1498
        %v1500 = vpop.f32.mrb[0].mxu0
        %v1501 = vpop.f32.mrb[0].mxu0
        %v1502 = vpop.f32.mrb[0].mxu0
        %1503 = vmatprep.mubr.bf16.mxu0 0
        %1504 = vmatmul.mubr.bf16.gmra.mrb[0].mxu0 %v935
        %v1505 = vpop.f32.mrb[0].mxu0
        %v1506 = vadd.f32 0.0, %v1505
        %v1507 = vpop.f32.mrb[0].mxu0
        %v1508 = vpop.f32.mrb[0].mxu0
        %v1509 = vadd.f32 0.0, %v1508
        %v1510 = vpop.f32.mrb[0].mxu0
        %1511 = vmatprep.mubr.bf16.mxu0 0
        %1512 = vmatmul.mubr.bf16.gmra.mrb[0].mxu0 %v936
        %v1513 = vpop.f32.mrb[0].mxu0
        %v1514 = vadd.f32 0.0, %v1513
        %v1515 = vpop.f32.mrb[0].mxu0
        %v1516 = vpop.f32.mrb[0].mxu0
        %v1517 = vpop.f32.mrb[0].mxu0
        %1518 = vmatprep.mubr.bf16.mxu0 0
        %1519 = vmatmul.mubr.bf16.gmra.mrb[0].mxu0 %v937
        %v1520 = vpop.f32.mrb[0].mxu0
        %v1521 = vadd.f32 0.0, %v1520
        %v1522 = vpop.f32.mrb[0].mxu0
        %v1523 = vpop.f32.mrb[0].mxu0
        %v1524 = vadd.f32 0.0, %v1523
        %v1525 = vpop.f32.mrb[0].mxu0
        %1526 = vmatprep.mubr.bf16.mxu0 0
        %1527 = vmatmul.mubr.bf16.gmra.mrb[0].mxu0 %v938
        %v1528 = vpop.f32.mrb[0].mxu0
        %v1529 = vadd.f32 0.0, %v1528
        %v1530 = vpop.f32.mrb[0].mxu0
        %v1531 = vpop.f32.mrb[0].mxu0
        %v1532 = vpop.f32.mrb[0].mxu0
        %1533 = vmatprep.mubr.bf16.mxu0 0
        %1534 = vmatmul.mubr.bf16.gmra.mrb[0].mxu0 %v939
        %v1535 = vpop.f32.mrb[0].mxu0
        %v1536 = vadd.f32 0.0, %v1535
        %v1537 = vpop.f32.mrb[0].mxu0
        %v1538 = vpop.f32.mrb[0].mxu0
        %v1539 = vadd.f32 0.0, %v1538
        %v1540 = vpop.f32.mrb[0].mxu0
        %1541 = vmatprep.mubr.bf16.mxu0 0
        %1542 = vmatmul.mubr.bf16.gmra.mrb[0].mxu0 %v940
        %v1543 = vpop.f32.mrb[0].mxu0
        %v1544 = vadd.f32 0.0, %v1543
        %v1545 = vpop.f32.mrb[0].mxu0
        %v1546 = vpop.f32.mrb[0].mxu0
        %v1547 = vpop.f32.mrb[0].mxu0
        %1548 = vmatprep.mubr.bf16.mxu0 0
        %1549 = vmatmul.mubr.bf16.gmra.mrb[0].mxu0 %v941
        %v1550 = vpop.f32.mrb[0].mxu0
        %v1551 = vadd.f32 0.0, %v1550
        %v1552 = vpop.f32.mrb[0].mxu0
        %v1553 = vpop.f32.mrb[0].mxu0
        %v1554 = vadd.f32 0.0, %v1553
        %v1555 = vpop.f32.mrb[0].mxu0
        %1556 = vmatprep.mubr.bf16.mxu0 0
        %1557 = vmatmul.mubr.bf16.gmra.mrb[0].mxu0 %v942
        %v1558 = vpop.f32.mrb[0].mxu0
        %v1559 = vadd.f32 0.0, %v1558
        %v1560 = vpop.f32.mrb[0].mxu0
        %v1561 = vpop.f32.mrb[0].mxu0
        %v1562 = vpop.f32.mrb[0].mxu0
        %1563 = vmatprep.mubr.bf16.mxu0 0
        %1564 = vmatmul.mubr.bf16.gmra.mrb[0].mxu0 %v943
        %v1565 = vpop.f32.mrb[0].mxu0
        %v1566 = vadd.f32 0.0, %v1565
        %v1567 = vpop.f32.mrb[0].mxu0
        %v1568 = vpop.f32.mrb[0].mxu0
        %v1569 = vadd.f32 0.0, %v1568
        %v1570 = vpop.f32.mrb[0].mxu0
        %1571 = vmatprep.mubr.bf16.mxu0 0
        %1572 = vmatmul.mubr.bf16.gmra.mrb[0].mxu0 %v944
        %v1573 = vpop.f32.mrb[0].mxu0
        %v1574 = vadd.f32 0.0, %v1573
        %v1575 = vpop.f32.mrb[0].mxu0
        %v1576 = vpop.f32.mrb[0].mxu0
        %v1577 = vpop.f32.mrb[0].mxu0
        %1578 = vmatprep.mubr.bf16.mxu0 0
        %1579 = vmatmul.mubr.bf16.gmra.mrb[0].mxu0 %v945
        %v1580 = vpop.f32.mrb[0].mxu0
        %v1581 = vadd.f32 0.0, %v1580
        %v1582 = vpop.f32.mrb[0].mxu0
        %v1583 = vpop.f32.mrb[0].mxu0
        %v1584 = vadd.f32 0.0, %v1583
        %v1585 = vpop.f32.mrb[0].mxu0
        %1586 = vmatprep.mubr.bf16.mxu0 0
        %1587 = vmatmul.mubr.bf16.gmra.mrb[0].mxu0 %v946
        %v1588 = vpop.f32.mrb[0].mxu0
        %v1589 = vadd.f32 0.0, %v1588
        %v1590 = vpop.f32.mrb[0].mxu0
        %v1591 = vpop.f32.mrb[0].mxu0
        %v1592 = vpop.f32.mrb[0].mxu0
        %1593 = vmatprep.mubr.bf16.mxu0 0
        %1594 = vmatmul.mubr.bf16.gmra.mrb[0].mxu0 %v947
        %v1595 = vpop.f32.mrb[0].mxu0
        %v1596 = vadd.f32 0.0, %v1595
        %v1597 = vpop.f32.mrb[0].mxu0
        %v1598 = vpop.f32.mrb[0].mxu0
        %v1599 = vadd.f32 0.0, %v1598
        %v1600 = vpop.f32.mrb[0].mxu0
        %1601 = vmatprep.mubr.bf16.mxu0 0
        %1602 = vmatmul.mubr.bf16.gmra.mrb[0].mxu0 %v948
        %v1603 = vpop.f32.mrb[0].mxu0
        %v1604 = vadd.f32 0.0, %v1603
        %v1605 = vpop.f32.mrb[0].mxu0
        %v1606 = vpop.f32.mrb[0].mxu0
        %v1607 = vpop.f32.mrb[0].mxu0
        %1608 = vmatprep.mubr.bf16.mxu0 0
        %1609 = vmatmul.mubr.bf16.gmra.mrb[0].mxu0 %v949
        %v1610 = vpop.f32.mrb[0].mxu0
        %v1611 = vadd.f32 0.0, %v1610
        %v1612 = vpop.f32.mrb[0].mxu0
        %v1613 = vpop.f32.mrb[0].mxu0
        %v1614 = vadd.f32 0.0, %v1613
        %v1615 = vpop.f32.mrb[0].mxu0
        %1616 = vmatprep.mubr.bf16.mxu0 0
        %1617 = vmatmul.mubr.bf16.gmra.mrb[0].mxu0 %v950
        %v1618 = vpop.f32.mrb[0].mxu0
        %v1619 = vadd.f32 0.0, %v1618
        %v1620 = vpop.f32.mrb[0].mxu0
        %v1621 = vpop.f32.mrb[0].mxu0
        %v1622 = vpop.f32.mrb[0].mxu0
        %1623 = vmatprep.mubr.bf16.mxu0 0
        %1624 = vmatmul.mubr.bf16.gmra.mrb[0].mxu0 %v951
        %v1625 = vpop.f32.mrb[0].mxu0
        %v1626 = vadd.f32 0.0, %v1625
        %v1627 = vpop.f32.mrb[0].mxu0
        %v1628 = vpop.f32.mrb[0].mxu0
        %v1629 = vadd.f32 0.0, %v1628
        %v1630 = vpop.f32.mrb[0].mxu0
        %1631 = vmatprep.mubr.bf16.mxu0 0
        %1632 = vmatmul.mubr.bf16.gmra.mrb[0].mxu0 %v952
        %v1633 = vpop.f32.mrb[0].mxu0
        %v1634 = vadd.f32 0.0, %v1633
        %v1635 = vpop.f32.mrb[0].mxu0
        %v1636 = vpop.f32.mrb[0].mxu0
        %v1637 = vpop.f32.mrb[0].mxu0
        %1638 = vmatprep.mubr.bf16.mxu0 0
        %1639 = vmatmul.mubr.bf16.gmra.mrb[0].mxu0 %v953
        %v1640 = vpop.f32.mrb[0].mxu0
        %v1641 = vadd.f32 0.0, %v1640
        %v1642 = vpop.f32.mrb[0].mxu0
        %v1643 = vpop.f32.mrb[0].mxu0
        %v1644 = vadd.f32 0.0, %v1643
        %v1645 = vpop.f32.mrb[0].mxu0
        %1646 = vmatprep.mubr.bf16.mxu0 0
        %1647 = vmatmul.mubr.bf16.gmra.mrb[0].mxu0 %v954
        %v1648 = vpop.f32.mrb[0].mxu0
        %v1649 = vadd.f32 0.0, %v1648
        %v1650 = vpop.f32.mrb[0].mxu0
        %v1651 = vpop.f32.mrb[0].mxu0
        %v1652 = vpop.f32.mrb[0].mxu0
        %1653 = vmatprep.mubr.bf16.mxu0 0
        %1654 = vmatmul.mubr.bf16.gmra.mrb[0].mxu0 %v955
        %v1655 = vpop.f32.mrb[0].mxu0
        %v1656 = vadd.f32 0.0, %v1655
        %v1657 = vpop.f32.mrb[0].mxu0
        %v1658 = vpop.f32.mrb[0].mxu0
        %v1659 = vadd.f32 0.0, %v1658
        %v1660 = vpop.f32.mrb[0].mxu0
        %1661 = vmatprep.mubr.bf16.mxu0 0
        %1662 = vmatmul.mubr.bf16.gmra.mrb[0].mxu0 %v956
        %v1663 = vpop.f32.mrb[0].mxu0
        %v1664 = vadd.f32 0.0, %v1663
        %v1665 = vpop.f32.mrb[0].mxu0
        %v1666 = vpop.f32.mrb[0].mxu0
        %v1667 = vpop.f32.mrb[0].mxu0
        %1668 = vmatprep.mubr.bf16.mxu0 0
        %1669 = vmatmul.mubr.bf16.gmra.mrb[0].mxu0 %v957
        %v1670 = vpop.f32.mrb[0].mxu0
        %v1671 = vadd.f32 0.0, %v1670
        %v1672 = vpop.f32.mrb[0].mxu0
        %v1673 = vpop.f32.mrb[0].mxu0
        %v1674 = vadd.f32 0.0, %v1673
        %v1675 = vpop.f32.mrb[0].mxu0
        %1676 = vmatprep.mubr.bf16.mxu0 0
        %1677 = vmatmul.mubr.bf16.gmra.mrb[0].mxu0 %v958
        %v1678 = vpop.f32.mrb[0].mxu0
        %v1679 = vadd.f32 0.0, %v1678
        %v1680 = vpop.f32.mrb[0].mxu0
        %v1681 = vpop.f32.mrb[0].mxu0
        %v1682 = vpop.f32.mrb[0].mxu0
        %1683 = vmatprep.mubr.bf16.mxu0 0
        %1684 = vmatmul.mubr.bf16.gmra.mrb[0].mxu0 %v959
        %v1685 = vpop.f32.mrb[0].mxu0
        %v1686 = vadd.f32 0.0, %v1685
        %v1687 = vpop.f32.mrb[0].mxu0
        %v1688 = vpop.f32.mrb[0].mxu0
        %v1689 = vadd.f32 0.0, %v1688
        %v1690 = vpop.f32.mrb[0].mxu0
        %1691 = vmatprep.mubr.bf16.mxu0 0
        %1692 = vmatmul.mubr.bf16.gmra.mrb[0].mxu0 %v960
        %v1693 = vpop.f32.mrb[0].mxu0
        %v1694 = vadd.f32 0.0, %v1693
        %v1695 = vpop.f32.mrb[0].mxu0
        %v1696 = vpop.f32.mrb[0].mxu0
        %v1697 = vpop.f32.mrb[0].mxu0
        %1698 = vdwg.mxu0
        %vm1747 = vcmask 1046528
        %v1748 = vrot.slane %v1158, 1
        %v1749 = vrot.slane %v1162, 1
        %v1750 = vsel %vm1747, %v1748, %v1749
        %v1751 = vrot.slane %v1167, 1
        %v1752 = vsel %vm1747, %v1749, %v1751
        %v1753 = vrot.slane %v1175, 1
        %v1754 = vrot.slane %v1179, 1
        %v1755 = vsel %vm1747, %v1753, %v1754
        %v1756 = vrot.slane %v1184, 1
        %v1757 = vsel %vm1747, %v1754, %v1756
        %v1758 = vrot.slane %v1192, 1
        %v1759 = vrot.slane %v1196, 1
        %v1760 = vsel %vm1747, %v1758, %v1759
        %v1761 = vrot.slane %v1201, 1
        %v1762 = vsel %vm1747, %v1759, %v1761
        %v1763 = vrot.slane %v1209, 1
        %v1764 = vrot.slane %v1213, 1
        %v1765 = vsel %vm1747, %v1763, %v1764
        %v1766 = vrot.slane %v1218, 1
        %v1767 = vsel %vm1747, %v1764, %v1766
        %v1768 = vrot.slane %v1226, 1
        %v1769 = vrot.slane %v1230, 1
        %v1770 = vsel %vm1747, %v1768, %v1769
        %v1771 = vrot.slane %v1235, 1
        %v1772 = vsel %vm1747, %v1769, %v1771
        %v1773 = vrot.slane %v1243, 1
        %v1774 = vrot.slane %v1247, 1
        %v1775 = vsel %vm1747, %v1773, %v1774
        %v1776 = vrot.slane %v1252, 1
        %v1777 = vsel %vm1747, %v1774, %v1776
        %v1778 = vrot.slane %v1260, 1
        %v1779 = vrot.slane %v1264, 1
        %v1780 = vsel %vm1747, %v1778, %v1779
        %v1781 = vrot.slane %v1269, 1
        %v1782 = vsel %vm1747, %v1779, %v1781
        %v1783 = vrot.slane %v1277, 1
        %v1784 = vrot.slane %v1281, 1
        %v1785 = vsel %vm1747, %v1783, %v1784
        %v1786 = vrot.slane %v1286, 1
        %v1787 = vsel %vm1747, %v1784, %v1786
        %v1788 = vrot.slane %v1294, 1
        %v1789 = vrot.slane %v1298, 1
        %v1790 = vsel %vm1747, %v1788, %v1789
        %v1791 = vrot.slane %v1303, 1
        %v1792 = vsel %vm1747, %v1789, %v1791
        %v1793 = vrot.slane %v1311, 1
        %v1794 = vrot.slane %v1315, 1
        %v1795 = vsel %vm1747, %v1793, %v1794
        %v1796 = vrot.slane %v1320, 1
        %v1797 = vsel %vm1747, %v1794, %v1796
        %v1798 = vrot.slane %v1328, 1
        %v1799 = vrot.slane %v1332, 1
        %v1800 = vsel %vm1747, %v1798, %v1799
        %v1801 = vrot.slane %v1337, 1
        %v1802 = vsel %vm1747, %v1799, %v1801
        %v1803 = vrot.slane %v1345, 1
        %v1804 = vrot.slane %v1349, 1
        %v1805 = vsel %vm1747, %v1803, %v1804
        %v1806 = vrot.slane %v1354, 1
        %v1807 = vsel %vm1747, %v1804, %v1806
        %v1808 = vrot.slane %v1362, 1
        %v1809 = vrot.slane %v1366, 1
        %v1810 = vsel %vm1747, %v1808, %v1809
        %v1811 = vrot.slane %v1371, 1
        %v1812 = vsel %vm1747, %v1809, %v1811
        %v1813 = vrot.slane %v1379, 1
        %v1814 = vrot.slane %v1383, 1
        %v1815 = vsel %vm1747, %v1813, %v1814
        %v1816 = vrot.slane %v1388, 1
        %v1817 = vsel %vm1747, %v1814, %v1816
        %v1818 = vrot.slane %v1396, 1
        %v1819 = vrot.slane %v1400, 1
        %v1820 = vsel %vm1747, %v1818, %v1819
        %v1821 = vrot.slane %v1405, 1
        %v1822 = vsel %vm1747, %v1819, %v1821
        %v1823 = vrot.slane %v1413, 1
        %v1824 = vrot.slane %v1417, 1
        %v1825 = vsel %vm1747, %v1823, %v1824
        %v1826 = vrot.slane %v1422, 1
        %v1827 = vsel %vm1747, %v1824, %v1826
        %v1860 = vadd.f32 %v1156, %v1750
        %v1861 = vadd.f32 %v1160, %v1752
        %v1862 = vadd.f32 %v1173, %v1755
        %v1863 = vadd.f32 %v1177, %v1757
        %v1864 = vadd.f32 %v1190, %v1760
        %v1865 = vadd.f32 %v1194, %v1762
        %v1866 = vadd.f32 %v1207, %v1765
        %v1867 = vadd.f32 %v1211, %v1767
        %v1868 = vadd.f32 %v1224, %v1770
        %v1869 = vadd.f32 %v1228, %v1772
        %v1870 = vadd.f32 %v1241, %v1775
        %v1871 = vadd.f32 %v1245, %v1777
        %v1872 = vadd.f32 %v1258, %v1780
        %v1873 = vadd.f32 %v1262, %v1782
        %v1874 = vadd.f32 %v1275, %v1785
        %v1875 = vadd.f32 %v1279, %v1787
        %v1876 = vadd.f32 %v1292, %v1790
        %v1877 = vadd.f32 %v1296, %v1792
        %v1878 = vadd.f32 %v1309, %v1795
        %v1879 = vadd.f32 %v1313, %v1797
        %v1880 = vadd.f32 %v1326, %v1800
        %v1881 = vadd.f32 %v1330, %v1802
        %v1882 = vadd.f32 %v1343, %v1805
        %v1883 = vadd.f32 %v1347, %v1807
        %v1884 = vadd.f32 %v1360, %v1810
        %v1885 = vadd.f32 %v1364, %v1812
        %v1886 = vadd.f32 %v1377, %v1815
        %v1887 = vadd.f32 %v1381, %v1817
        %v1888 = vadd.f32 %v1394, %v1820
        %v1889 = vadd.f32 %v1398, %v1822
        %v1890 = vadd.f32 %v1411, %v1825
        %v1891 = vadd.f32 %v1415, %v1827
        %vm1940 = vcmask 1045504
        %v1941 = vrot.slane %v1461, 2
        %v1942 = vrot.slane %v1464, 2
        %v1943 = vsel %vm1940, %v1941, %v1942
        %v1944 = vrot.slane %v1469, 2
        %v1945 = vsel %vm1940, %v1942, %v1944
        %v1946 = vrot.slane %v1476, 2
        %v1947 = vrot.slane %v1479, 2
        %v1948 = vsel %vm1940, %v1946, %v1947
        %v1949 = vrot.slane %v1484, 2
        %v1950 = vsel %vm1940, %v1947, %v1949
        %v1951 = vrot.slane %v1491, 2
        %v1952 = vrot.slane %v1494, 2
        %v1953 = vsel %vm1940, %v1951, %v1952
        %v1954 = vrot.slane %v1499, 2
        %v1955 = vsel %vm1940, %v1952, %v1954
        %v1956 = vrot.slane %v1506, 2
        %v1957 = vrot.slane %v1509, 2
        %v1958 = vsel %vm1940, %v1956, %v1957
        %v1959 = vrot.slane %v1514, 2
        %v1960 = vsel %vm1940, %v1957, %v1959
        %v1961 = vrot.slane %v1521, 2
        %v1962 = vrot.slane %v1524, 2
        %v1963 = vsel %vm1940, %v1961, %v1962
        %v1964 = vrot.slane %v1529, 2
        %v1965 = vsel %vm1940, %v1962, %v1964
        %v1966 = vrot.slane %v1536, 2
        %v1967 = vrot.slane %v1539, 2
        %v1968 = vsel %vm1940, %v1966, %v1967
        %v1969 = vrot.slane %v1544, 2
        %v1970 = vsel %vm1940, %v1967, %v1969
        %v1971 = vrot.slane %v1551, 2
        %v1972 = vrot.slane %v1554, 2
        %v1973 = vsel %vm1940, %v1971, %v1972
        %v1974 = vrot.slane %v1559, 2
        %v1975 = vsel %vm1940, %v1972, %v1974
        %v1976 = vrot.slane %v1566, 2
        %v1977 = vrot.slane %v1569, 2
        %v1978 = vsel %vm1940, %v1976, %v1977
        %v1979 = vrot.slane %v1574, 2
        %v1980 = vsel %vm1940, %v1977, %v1979
        %v1981 = vrot.slane %v1581, 2
        %v1982 = vrot.slane %v1584, 2
        %v1983 = vsel %vm1940, %v1981, %v1982
        %v1984 = vrot.slane %v1589, 2
        %v1985 = vsel %vm1940, %v1982, %v1984
        %v1986 = vrot.slane %v1596, 2
        %v1987 = vrot.slane %v1599, 2
        %v1988 = vsel %vm1940, %v1986, %v1987
        %v1989 = vrot.slane %v1604, 2
        %v1990 = vsel %vm1940, %v1987, %v1989
        %v1991 = vrot.slane %v1611, 2
        %v1992 = vrot.slane %v1614, 2
        %v1993 = vsel %vm1940, %v1991, %v1992
        %v1994 = vrot.slane %v1619, 2
        %v1995 = vsel %vm1940, %v1992, %v1994
        %v1996 = vrot.slane %v1626, 2
        %v1997 = vrot.slane %v1629, 2
        %v1998 = vsel %vm1940, %v1996, %v1997
        %v1999 = vrot.slane %v1634, 2
        %v2000 = vsel %vm1940, %v1997, %v1999
        %v2001 = vrot.slane %v1641, 2
        %v2002 = vrot.slane %v1644, 2
        %v2003 = vsel %vm1940, %v2001, %v2002
        %v2004 = vrot.slane %v1649, 2
        %v2005 = vsel %vm1940, %v2002, %v2004
        %v2006 = vrot.slane %v1656, 2
        %v2007 = vrot.slane %v1659, 2
        %v2008 = vsel %vm1940, %v2006, %v2007
        %v2009 = vrot.slane %v1664, 2
        %v2010 = vsel %vm1940, %v2007, %v2009
        %v2011 = vrot.slane %v1671, 2
        %v2012 = vrot.slane %v1674, 2
        %v2013 = vsel %vm1940, %v2011, %v2012
        %v2014 = vrot.slane %v1679, 2
        %v2015 = vsel %vm1940, %v2012, %v2014
        %v2016 = vrot.slane %v1686, 2
        %v2017 = vrot.slane %v1689, 2
        %v2018 = vsel %vm1940, %v2016, %v2017
        %v2019 = vrot.slane %v1694, 2
        %v2020 = vsel %vm1940, %v2017, %v2019
        %v2053 = vadd.f32 %v1860, %v1943
        %v2054 = vadd.f32 %v1861, %v1945
        %v2055 = vadd.f32 %v1862, %v1948
        %v2056 = vadd.f32 %v1863, %v1950
        %v2057 = vadd.f32 %v1864, %v1953
        %v2058 = vadd.f32 %v1865, %v1955
        %v2059 = vadd.f32 %v1866, %v1958
        %v2060 = vadd.f32 %v1867, %v1960
        %v2061 = vadd.f32 %v1868, %v1963
        %v2062 = vadd.f32 %v1869, %v1965
        %v2063 = vadd.f32 %v1870, %v1968
        %v2064 = vadd.f32 %v1871, %v1970
        %v2065 = vadd.f32 %v1872, %v1973
        %v2066 = vadd.f32 %v1873, %v1975
        %v2067 = vadd.f32 %v1874, %v1978
        %v2068 = vadd.f32 %v1875, %v1980
        %v2069 = vadd.f32 %v1876, %v1983
        %v2070 = vadd.f32 %v1877, %v1985
        %v2071 = vadd.f32 %v1878, %v1988
        %v2072 = vadd.f32 %v1879, %v1990
        %v2073 = vadd.f32 %v1880, %v1993
        %v2074 = vadd.f32 %v1881, %v1995
        %v2075 = vadd.f32 %v1882, %v1998
        %v2076 = vadd.f32 %v1883, %v2000
        %v2077 = vadd.f32 %v1884, %v2003
        %v2078 = vadd.f32 %v1885, %v2005
        %v2079 = vadd.f32 %v1886, %v2008
        %v2080 = vadd.f32 %v1887, %v2010
        %v2081 = vadd.f32 %v1888, %v2013
        %v2082 = vadd.f32 %v1889, %v2015
        %v2083 = vadd.f32 %v1890, %v2018
        %v2084 = vadd.f32 %v1891, %v2020
        %2085 = vst [vmem:[#allocation3] sm:$0xff] %v2053
        %2086 = vst [vmem:[#allocation3 + $0x8] sm:$0xff] %v2054
        %2087 = vst [vmem:[#allocation3 + $0x10] sm:$0xff] %v2055
        %2088 = vst [vmem:[#allocation3 + $0x18] sm:$0xff] %v2056
        %2089 = vst [vmem:[#allocation3 + $0x20] sm:$0xff] %v2057
        %2090 = vst [vmem:[#allocation3 + $0x28] sm:$0xff] %v2058
        %2091 = vst [vmem:[#allocation3 + $0x30] sm:$0xff] %v2059
        %2092 = vst [vmem:[#allocation3 + $0x38] sm:$0xff] %v2060
        %2093 = vst [vmem:[#allocation3 + $0x40] sm:$0xff] %v2061
        %2094 = vst [vmem:[#allocation3 + $0x48] sm:$0xff] %v2062
        %2095 = vst [vmem:[#allocation3 + $0x50] sm:$0xff] %v2063
        %2096 = vst [vmem:[#allocation3 + $0x58] sm:$0xff] %v2064
        %2097 = vst [vmem:[#allocation3 + $0x60] sm:$0xff] %v2065
        %2098 = vst [vmem:[#allocation3 + $0x68] sm:$0xff] %v2066
        %2099 = vst [vmem:[#allocation3 + $0x70] sm:$0xff] %v2067
        %2100 = vst [vmem:[#allocation3 + $0x78] sm:$0xff] %v2068
        %2101 = vst [vmem:[#allocation3 + $0x80] sm:$0xff] %v2069
        %2102 = vst [vmem:[#allocation3 + $0x88] sm:$0xff] %v2070
        %2103 = vst [vmem:[#allocation3 + $0x90] sm:$0xff] %v2071
        %2104 = vst [vmem:[#allocation3 + $0x98] sm:$0xff] %v2072
        %2105 = vst [vmem:[#allocation3 + $0xa0] sm:$0xff] %v2073
        %2106 = vst [vmem:[#allocation3 + $0xa8] sm:$0xff] %v2074
        %2107 = vst [vmem:[#allocation3 + $0xb0] sm:$0xff] %v2075
        %2108 = vst [vmem:[#allocation3 + $0xb8] sm:$0xff] %v2076
        %2109 = vst [vmem:[#allocation3 + $0xc0] sm:$0xff] %v2077
        %2110 = vst [vmem:[#allocation3 + $0xc8] sm:$0xff] %v2078
        %2111 = vst [vmem:[#allocation3 + $0xd0] sm:$0xff] %v2079
        %2112 = vst [vmem:[#allocation3 + $0xd8] sm:$0xff] %v2080
        %2113 = vst [vmem:[#allocation3 + $0xe0] sm:$0xff] %v2081
        %2114 = vst [vmem:[#allocation3 + $0xe8] sm:$0xff] %v2082
        %2115 = vst [vmem:[#allocation3 + $0xf0] sm:$0xff] %v2083
        %2116 = vst [vmem:[#allocation3 + $0xf8] sm:$0xff] %v2084
        %v2117 = vld [vmem:[%s780] sm:$0xff]
        %v2118 = vld [vmem:[%s780 + $0x8] sm:$0xff]
        %v2119 = vld [vmem:[%s780 + $0x10] sm:$0xff]
        %v2120 = vld [vmem:[%s780 + $0x18] sm:$0xff]
        %v2121 = vld [vmem:[%s780 + $0x20] sm:$0xff]
        %v2122 = vld [vmem:[%s780 + $0x28] sm:$0xff]
        %v2123 = vld [vmem:[%s780 + $0x30] sm:$0xff]
        %v2124 = vld [vmem:[%s780 + $0x38] sm:$0xff]
        %v2125 = vld [vmem:[%s780 + $0x40] sm:$0xff]
        %v2126 = vld [vmem:[%s780 + $0x48] sm:$0xff]
        %v2127 = vld [vmem:[%s780 + $0x50] sm:$0xff]
        %v2128 = vld [vmem:[%s780 + $0x58] sm:$0xff]
        %v2129 = vld [vmem:[%s780 + $0x60] sm:$0xff]
        %v2130 = vld [vmem:[%s780 + $0x68] sm:$0xff]
        %v2131 = vld [vmem:[%s780 + $0x70] sm:$0xff]
        %v2132 = vld [vmem:[%s780 + $0x78] sm:$0xff]
        %v2133 = vld [vmem:[%s780 + $0x80] sm:$0xff]
        %v2134 = vld [vmem:[%s780 + $0x88] sm:$0xff]
        %v2135 = vld [vmem:[%s780 + $0x90] sm:$0xff]
        %v2136 = vld [vmem:[%s780 + $0x98] sm:$0xff]
        %v2137 = vld [vmem:[%s780 + $0xa0] sm:$0xff]
        %v2138 = vld [vmem:[%s780 + $0xa8] sm:$0xff]
        %v2139 = vld [vmem:[%s780 + $0xb0] sm:$0xff]
        %v2140 = vld [vmem:[%s780 + $0xb8] sm:$0xff]
        %v2141 = vld [vmem:[%s780 + $0xc0] sm:$0xff]
        %v2142 = vld [vmem:[%s780 + $0xc8] sm:$0xff]
        %v2143 = vld [vmem:[%s780 + $0xd0] sm:$0xff]
        %v2144 = vld [vmem:[%s780 + $0xd8] sm:$0xff]
        %v2145 = vld [vmem:[%s780 + $0xe0] sm:$0xff]
        %v2146 = vld [vmem:[%s780 + $0xe8] sm:$0xff]
        %v2147 = vld [vmem:[%s780 + $0xf0] sm:$0xff]
        %v2148 = vld [vmem:[%s780 + $0xf8] sm:$0xff]
        %s2149 = scalar_lea.vmem %s3, 192
        %v2150 = vld [vmem:[%s2149] sm:$0xff]
        %v2151 = vld [vmem:[%s2149 + $0x8] sm:$0xf]
        %v2152 = vld [vmem:[%s2149 + $0xc] sm:$0xff]
        %v2153 = vld [vmem:[%s2149 + $0x14] sm:$0xf]
        %v2154 = vld [vmem:[%s2149 + $0x18] sm:$0xff]
        %v2155 = vld [vmem:[%s2149 + $0x20] sm:$0xf]
        %v2156 = vld [vmem:[%s2149 + $0x24] sm:$0xff]
        %v2157 = vld [vmem:[%s2149 + $0x2c] sm:$0xf]
        %v2158 = vld [vmem:[%s2149 + $0x30] sm:$0xff]
        %v2159 = vld [vmem:[%s2149 + $0x38] sm:$0xf]
        %v2160 = vld [vmem:[%s2149 + $0x3c] sm:$0xff]
        %v2161 = vld [vmem:[%s2149 + $0x44] sm:$0xf]
        %v2162 = vld [vmem:[%s2149 + $0x48] sm:$0xff]
        %v2163 = vld [vmem:[%s2149 + $0x50] sm:$0xf]
        %v2164 = vld [vmem:[%s2149 + $0x54] sm:$0xff]
        %v2165 = vld [vmem:[%s2149 + $0x5c] sm:$0xf]
        %v2166 = vld [vmem:[%s2149 + $0x60] sm:$0xff]
        %v2167 = vld [vmem:[%s2149 + $0x68] sm:$0xf]
        %v2168 = vld [vmem:[%s2149 + $0x6c] sm:$0xff]
        %v2169 = vld [vmem:[%s2149 + $0x74] sm:$0xf]
        %v2170 = vld [vmem:[%s2149 + $0x78] sm:$0xff]
        %v2171 = vld [vmem:[%s2149 + $0x80] sm:$0xf]
        %v2172 = vld [vmem:[%s2149 + $0x84] sm:$0xff]
        %v2173 = vld [vmem:[%s2149 + $0x8c] sm:$0xf]
        %v2174 = vld [vmem:[%s2149 + $0x90] sm:$0xff]
        %v2175 = vld [vmem:[%s2149 + $0x98] sm:$0xf]
        %v2176 = vld [vmem:[%s2149 + $0x9c] sm:$0xff]
        %v2177 = vld [vmem:[%s2149 + $0xa4] sm:$0xf]
        %v2178 = vld [vmem:[%s2149 + $0xa8] sm:$0xff]
        %v2179 = vld [vmem:[%s2149 + $0xb0] sm:$0xf]
        %v2180 = vld [vmem:[%s2149 + $0xb4] sm:$0xff]
        %v2181 = vld [vmem:[%s2149 + $0xbc] sm:$0xf]
        %v2214 = vunpack.c.l.b16 %v2150
        %v2215 = vunpack.c.h.b16 %v2150
        %v2216 = vunpack.c.l.b16 %v2151
        %v2217 = vunpack.c.l.b16 %v2152
        %v2218 = vunpack.c.h.b16 %v2152
        %v2219 = vunpack.c.l.b16 %v2153
        %v2220 = vunpack.c.l.b16 %v2154
        %v2221 = vunpack.c.h.b16 %v2154
        %v2222 = vunpack.c.l.b16 %v2155
        %v2223 = vunpack.c.l.b16 %v2156
        %v2224 = vunpack.c.h.b16 %v2156
        %v2225 = vunpack.c.l.b16 %v2157
        %v2226 = vunpack.c.l.b16 %v2158
        %v2227 = vunpack.c.h.b16 %v2158
        %v2228 = vunpack.c.l.b16 %v2159
        %v2229 = vunpack.c.l.b16 %v2160
        %v2230 = vunpack.c.h.b16 %v2160
        %v2231 = vunpack.c.l.b16 %v2161
        %v2232 = vunpack.c.l.b16 %v2162
        %v2233 = vunpack.c.h.b16 %v2162
        %v2234 = vunpack.c.l.b16 %v2163
        %v2235 = vunpack.c.l.b16 %v2164
        %v2236 = vunpack.c.h.b16 %v2164
        %v2237 = vunpack.c.l.b16 %v2165
        %v2238 = vunpack.c.l.b16 %v2166
        %v2239 = vunpack.c.h.b16 %v2166
        %v2240 = vunpack.c.l.b16 %v2167
        %v2241 = vunpack.c.l.b16 %v2168
        %v2242 = vunpack.c.h.b16 %v2168
        %v2243 = vunpack.c.l.b16 %v2169
        %v2244 = vunpack.c.l.b16 %v2170
        %v2245 = vunpack.c.h.b16 %v2170
        %v2246 = vunpack.c.l.b16 %v2171
        %v2247 = vunpack.c.l.b16 %v2172
        %v2248 = vunpack.c.h.b16 %v2172
        %v2249 = vunpack.c.l.b16 %v2173
        %v2250 = vunpack.c.l.b16 %v2174
        %v2251 = vunpack.c.h.b16 %v2174
        %v2252 = vunpack.c.l.b16 %v2175
        %v2253 = vunpack.c.l.b16 %v2176
        %v2254 = vunpack.c.h.b16 %v2176
        %v2255 = vunpack.c.l.b16 %v2177
        %v2256 = vunpack.c.l.b16 %v2178
        %v2257 = vunpack.c.h.b16 %v2178
        %v2258 = vunpack.c.l.b16 %v2179
        %v2259 = vunpack.c.l.b16 %v2180
        %v2260 = vunpack.c.h.b16 %v2180
        %v2261 = vunpack.c.l.b16 %v2181
        %v2262 = vpack.c.b16 %v2217, %v2214
        %v2263 = vpack.c.b16 %v2218, %v2215
        %v2264 = vpack.c.b16 %v2219, %v2216
        %v2265 = vpack.c.b16 %v2223, %v2220
        %v2266 = vpack.c.b16 %v2224, %v2221
        %v2267 = vpack.c.b16 %v2225, %v2222
        %v2268 = vpack.c.b16 %v2229, %v2226
        %v2269 = vpack.c.b16 %v2230, %v2227
        %v2270 = vpack.c.b16 %v2231, %v2228
        %v2271 = vpack.c.b16 %v2235, %v2232
        %v2272 = vpack.c.b16 %v2236, %v2233
        %v2273 = vpack.c.b16 %v2237, %v2234
        %v2274 = vpack.c.b16 %v2241, %v2238
        %v2275 = vpack.c.b16 %v2242, %v2239
        %v2276 = vpack.c.b16 %v2243, %v2240
        %v2277 = vpack.c.b16 %v2247, %v2244
        %v2278 = vpack.c.b16 %v2248, %v2245
        %v2279 = vpack.c.b16 %v2249, %v2246
        %v2280 = vpack.c.b16 %v2253, %v2250
        %v2281 = vpack.c.b16 %v2254, %v2251
        %v2282 = vpack.c.b16 %v2255, %v2252
        %v2283 = vpack.c.b16 %v2259, %v2256
        %v2284 = vpack.c.b16 %v2260, %v2257
        %v2285 = vpack.c.b16 %v2261, %v2258
        %2310 = vmatprep.subr.bf16.mxu0 %v2263
        %2311 = vmatpush1.bf16.msra.mxu0 %v2262
        %2312 = vmatprep.subr.bf16.mxu0 %v2266
        %2313 = vmatpush1.bf16.msra.mxu0 %v2265
        %2314 = vmatprep.subr.bf16.mxu0 %v2269
        %2315 = vmatpush1.bf16.msra.mxu0 %v2268
        %2316 = vmatprep.subr.bf16.mxu0 %v2272
        %2317 = vmatpush1.bf16.msra.mxu0 %v2271
        %2318 = vmatprep.subr.bf16.mxu0 %v2275
        %2319 = vmatpush1.bf16.msra.mxu0 %v2274
        %2320 = vmatprep.subr.bf16.mxu0 %v2278
        %2321 = vmatpush1.bf16.msra.mxu0 %v2277
        %2322 = vmatprep.subr.bf16.mxu0 %v2281
        %2323 = vmatpush1.bf16.msra.mxu0 %v2280
        %2324 = vmatprep.subr.bf16.mxu0 %v2284
        %2325 = vmatpush1.bf16.msra.mxu0 %v2283
        %2326 = vmatprep.subr.bf16.mxu0 0
        %2327 = vmatpush1.bf16.msra.mxu0 0
        %2328 = vmatprep.subr.bf16.mxu0 0
        %2329 = vmatpush1.bf16.msra.mxu0 0
        %2330 = vmatprep.subr.bf16.mxu0 0
        %2331 = vmatpush1.bf16.msra.mxu0 0
        %2332 = vmatprep.subr.bf16.mxu0 0
        %2333 = vmatpush1.bf16.msra.mxu0 0
        %2334 = vmatprep.subr.bf16.mxu0 0
        %2335 = vmatpush1.bf16.msra.mxu0 0
        %2336 = vmatprep.subr.bf16.mxu0 0
        %2337 = vmatpush1.bf16.msra.mxu0 0
        %2338 = vmatprep.subr.bf16.mxu0 0
        %2339 = vmatpush1.bf16.msra.mxu0 0
        %2340 = vmatprep.subr.bf16.mxu0 0
        %2341 = vmatpush1.bf16.msra.mxu0 0
        %2342 = vmatprep.mubr.bf16.mxu0 0
        %2343 = vmatmul.mubr.bf16.gmra.mrb[0].mxu0 %v2117
        %v2344 = vpop.f32.mrb[0].mxu0
        %v2345 = vadd.f32 0.0, %v2344
        %v2346 = vpop.f32.mrb[0].mxu0
        %v2347 = vadd.f32 0.0, %v2346
        %v2348 = vpop.f32.mrb[0].mxu0
        %v2349 = vadd.f32 0.0, %v2348
        %v2350 = vpop.f32.mrb[0].mxu0
        %v2351 = vadd.f32 0.0, %v2350
        %2352 = vmatprep.mubr.bf16.mxu0 0
        %2353 = vmatmul.mubr.bf16.gmra.mrb[0].mxu0 %v2118
        %v2354 = vpop.f32.mrb[0].mxu0
        %v2355 = vpop.f32.mrb[0].mxu0
        %v2356 = vadd.f32 0.0, %v2355
        %v2357 = vpop.f32.mrb[0].mxu0
        %v2358 = vpop.f32.mrb[0].mxu0
        %2359 = vmatprep.mubr.bf16.mxu0 0
        %2360 = vmatmul.mubr.bf16.gmra.mrb[0].mxu0 %v2119
        %v2361 = vpop.f32.mrb[0].mxu0
        %v2362 = vadd.f32 0.0, %v2361
        %v2363 = vpop.f32.mrb[0].mxu0
        %v2364 = vadd.f32 0.0, %v2363
        %v2365 = vpop.f32.mrb[0].mxu0
        %v2366 = vadd.f32 0.0, %v2365
        %v2367 = vpop.f32.mrb[0].mxu0
        %v2368 = vadd.f32 0.0, %v2367
        %2369 = vmatprep.mubr.bf16.mxu0 0
        %2370 = vmatmul.mubr.bf16.gmra.mrb[0].mxu0 %v2120
        %v2371 = vpop.f32.mrb[0].mxu0
        %v2372 = vpop.f32.mrb[0].mxu0
        %v2373 = vadd.f32 0.0, %v2372
        %v2374 = vpop.f32.mrb[0].mxu0
        %v2375 = vpop.f32.mrb[0].mxu0
        %2376 = vmatprep.mubr.bf16.mxu0 0
        %2377 = vmatmul.mubr.bf16.gmra.mrb[0].mxu0 %v2121
        %v2378 = vpop.f32.mrb[0].mxu0
        %v2379 = vadd.f32 0.0, %v2378
        %v2380 = vpop.f32.mrb[0].mxu0
        %v2381 = vadd.f32 0.0, %v2380
        %v2382 = vpop.f32.mrb[0].mxu0
        %v2383 = vadd.f32 0.0, %v2382
        %v2384 = vpop.f32.mrb[0].mxu0
        %v2385 = vadd.f32 0.0, %v2384
        %2386 = vmatprep.mubr.bf16.mxu0 0
        %2387 = vmatmul.mubr.bf16.gmra.mrb[0].mxu0 %v2122
        %v2388 = vpop.f32.mrb[0].mxu0
        %v2389 = vpop.f32.mrb[0].mxu0
        %v2390 = vadd.f32 0.0, %v2389
        %v2391 = vpop.f32.mrb[0].mxu0
        %v2392 = vpop.f32.mrb[0].mxu0
        %2393 = vmatprep.mubr.bf16.mxu0 0
        %2394 = vmatmul.mubr.bf16.gmra.mrb[0].mxu0 %v2123
        %v2395 = vpop.f32.mrb[0].mxu0
        %v2396 = vadd.f32 0.0, %v2395
        %v2397 = vpop.f32.mrb[0].mxu0
        %v2398 = vadd.f32 0.0, %v2397
        %v2399 = vpop.f32.mrb[0].mxu0
        %v2400 = vadd.f32 0.0, %v2399
        %v2401 = vpop.f32.mrb[0].mxu0
        %v2402 = vadd.f32 0.0, %v2401
        %2403 = vmatprep.mubr.bf16.mxu0 0
        %2404 = vmatmul.mubr.bf16.gmra.mrb[0].mxu0 %v2124
        %v2405 = vpop.f32.mrb[0].mxu0
        %v2406 = vpop.f32.mrb[0].mxu0
        %v2407 = vadd.f32 0.0, %v2406
        %v2408 = vpop.f32.mrb[0].mxu0
        %v2409 = vpop.f32.mrb[0].mxu0
        %2410 = vmatprep.mubr.bf16.mxu0 0
        %2411 = vmatmul.mubr.bf16.gmra.mrb[0].mxu0 %v2125
        %v2412 = vpop.f32.mrb[0].mxu0
        %v2413 = vadd.f32 0.0, %v2412
        %v2414 = vpop.f32.mrb[0].mxu0
        %v2415 = vadd.f32 0.0, %v2414
        %v2416 = vpop.f32.mrb[0].mxu0
        %v2417 = vadd.f32 0.0, %v2416
        %v2418 = vpop.f32.mrb[0].mxu0
        %v2419 = vadd.f32 0.0, %v2418
        %2420 = vmatprep.mubr.bf16.mxu0 0
        %2421 = vmatmul.mubr.bf16.gmra.mrb[0].mxu0 %v2126
        %v2422 = vpop.f32.mrb[0].mxu0
        %v2423 = vpop.f32.mrb[0].mxu0
        %v2424 = vadd.f32 0.0, %v2423
        %v2425 = vpop.f32.mrb[0].mxu0
        %v2426 = vpop.f32.mrb[0].mxu0
        %2427 = vmatprep.mubr.bf16.mxu0 0
        %2428 = vmatmul.mubr.bf16.gmra.mrb[0].mxu0 %v2127
        %v2429 = vpop.f32.mrb[0].mxu0
        %v2430 = vadd.f32 0.0, %v2429
        %v2431 = vpop.f32.mrb[0].mxu0
        %v2432 = vadd.f32 0.0, %v2431
        %v2433 = vpop.f32.mrb[0].mxu0
        %v2434 = vadd.f32 0.0, %v2433
        %v2435 = vpop.f32.mrb[0].mxu0
        %v2436 = vadd.f32 0.0, %v2435
        %2437 = vmatprep.mubr.bf16.mxu0 0
        %2438 = vmatmul.mubr.bf16.gmra.mrb[0].mxu0 %v2128
        %v2439 = vpop.f32.mrb[0].mxu0
        %v2440 = vpop.f32.mrb[0].mxu0
        %v2441 = vadd.f32 0.0, %v2440
        %v2442 = vpop.f32.mrb[0].mxu0
        %v2443 = vpop.f32.mrb[0].mxu0
        %2444 = vmatprep.mubr.bf16.mxu0 0
        %2445 = vmatmul.mubr.bf16.gmra.mrb[0].mxu0 %v2129
        %v2446 = vpop.f32.mrb[0].mxu0
        %v2447 = vadd.f32 0.0, %v2446
        %v2448 = vpop.f32.mrb[0].mxu0
        %v2449 = vadd.f32 0.0, %v2448
        %v2450 = vpop.f32.mrb[0].mxu0
        %v2451 = vadd.f32 0.0, %v2450
        %v2452 = vpop.f32.mrb[0].mxu0
        %v2453 = vadd.f32 0.0, %v2452
        %2454 = vmatprep.mubr.bf16.mxu0 0
        %2455 = vmatmul.mubr.bf16.gmra.mrb[0].mxu0 %v2130
        %v2456 = vpop.f32.mrb[0].mxu0
        %v2457 = vpop.f32.mrb[0].mxu0
        %v2458 = vadd.f32 0.0, %v2457
        %v2459 = vpop.f32.mrb[0].mxu0
        %v2460 = vpop.f32.mrb[0].mxu0
        %2461 = vmatprep.mubr.bf16.mxu0 0
        %2462 = vmatmul.mubr.bf16.gmra.mrb[0].mxu0 %v2131
        %v2463 = vpop.f32.mrb[0].mxu0
        %v2464 = vadd.f32 0.0, %v2463
        %v2465 = vpop.f32.mrb[0].mxu0
        %v2466 = vadd.f32 0.0, %v2465
        %v2467 = vpop.f32.mrb[0].mxu0
        %v2468 = vadd.f32 0.0, %v2467
        %v2469 = vpop.f32.mrb[0].mxu0
        %v2470 = vadd.f32 0.0, %v2469
        %2471 = vmatprep.mubr.bf16.mxu0 0
        %2472 = vmatmul.mubr.bf16.gmra.mrb[0].mxu0 %v2132
        %v2473 = vpop.f32.mrb[0].mxu0
        %v2474 = vpop.f32.mrb[0].mxu0
        %v2475 = vadd.f32 0.0, %v2474
        %v2476 = vpop.f32.mrb[0].mxu0
        %v2477 = vpop.f32.mrb[0].mxu0
        %2478 = vmatprep.mubr.bf16.mxu0 0
        %2479 = vmatmul.mubr.bf16.gmra.mrb[0].mxu0 %v2133
        %v2480 = vpop.f32.mrb[0].mxu0
        %v2481 = vadd.f32 0.0, %v2480
        %v2482 = vpop.f32.mrb[0].mxu0
        %v2483 = vadd.f32 0.0, %v2482
        %v2484 = vpop.f32.mrb[0].mxu0
        %v2485 = vadd.f32 0.0, %v2484
        %v2486 = vpop.f32.mrb[0].mxu0
        %v2487 = vadd.f32 0.0, %v2486
        %2488 = vmatprep.mubr.bf16.mxu0 0
        %2489 = vmatmul.mubr.bf16.gmra.mrb[0].mxu0 %v2134
        %v2490 = vpop.f32.mrb[0].mxu0
        %v2491 = vpop.f32.mrb[0].mxu0
        %v2492 = vadd.f32 0.0, %v2491
        %v2493 = vpop.f32.mrb[0].mxu0
        %v2494 = vpop.f32.mrb[0].mxu0
        %2495 = vmatprep.mubr.bf16.mxu0 0
        %2496 = vmatmul.mubr.bf16.gmra.mrb[0].mxu0 %v2135
        %v2497 = vpop.f32.mrb[0].mxu0
        %v2498 = vadd.f32 0.0, %v2497
        %v2499 = vpop.f32.mrb[0].mxu0
        %v2500 = vadd.f32 0.0, %v2499
        %v2501 = vpop.f32.mrb[0].mxu0
        %v2502 = vadd.f32 0.0, %v2501
        %v2503 = vpop.f32.mrb[0].mxu0
        %v2504 = vadd.f32 0.0, %v2503
        %2505 = vmatprep.mubr.bf16.mxu0 0
        %2506 = vmatmul.mubr.bf16.gmra.mrb[0].mxu0 %v2136
        %v2507 = vpop.f32.mrb[0].mxu0
        %v2508 = vpop.f32.mrb[0].mxu0
        %v2509 = vadd.f32 0.0, %v2508
        %v2510 = vpop.f32.mrb[0].mxu0
        %v2511 = vpop.f32.mrb[0].mxu0
        %2512 = vmatprep.mubr.bf16.mxu0 0
        %2513 = vmatmul.mubr.bf16.gmra.mrb[0].mxu0 %v2137
        %v2514 = vpop.f32.mrb[0].mxu0
        %v2515 = vadd.f32 0.0, %v2514
        %v2516 = vpop.f32.mrb[0].mxu0
        %v2517 = vadd.f32 0.0, %v2516
        %v2518 = vpop.f32.mrb[0].mxu0
        %v2519 = vadd.f32 0.0, %v2518
        %v2520 = vpop.f32.mrb[0].mxu0
        %v2521 = vadd.f32 0.0, %v2520
        %2522 = vmatprep.mubr.bf16.mxu0 0
        %2523 = vmatmul.mubr.bf16.gmra.mrb[0].mxu0 %v2138
        %v2524 = vpop.f32.mrb[0].mxu0
        %v2525 = vpop.f32.mrb[0].mxu0
        %v2526 = vadd.f32 0.0, %v2525
        %v2527 = vpop.f32.mrb[0].mxu0
        %v2528 = vpop.f32.mrb[0].mxu0
        %2529 = vmatprep.mubr.bf16.mxu0 0
        %2530 = vmatmul.mubr.bf16.gmra.mrb[0].mxu0 %v2139
        %v2531 = vpop.f32.mrb[0].mxu0
        %v2532 = vadd.f32 0.0, %v2531
        %v2533 = vpop.f32.mrb[0].mxu0
        %v2534 = vadd.f32 0.0, %v2533
        %v2535 = vpop.f32.mrb[0].mxu0
        %v2536 = vadd.f32 0.0, %v2535
        %v2537 = vpop.f32.mrb[0].mxu0
        %v2538 = vadd.f32 0.0, %v2537
        %2539 = vmatprep.mubr.bf16.mxu0 0
        %2540 = vmatmul.mubr.bf16.gmra.mrb[0].mxu0 %v2140
        %v2541 = vpop.f32.mrb[0].mxu0
        %v2542 = vpop.f32.mrb[0].mxu0
        %v2543 = vadd.f32 0.0, %v2542
        %v2544 = vpop.f32.mrb[0].mxu0
        %v2545 = vpop.f32.mrb[0].mxu0
        %2546 = vmatprep.mubr.bf16.mxu0 0
        %2547 = vmatmul.mubr.bf16.gmra.mrb[0].mxu0 %v2141
        %v2548 = vpop.f32.mrb[0].mxu0
        %v2549 = vadd.f32 0.0, %v2548
        %v2550 = vpop.f32.mrb[0].mxu0
        %v2551 = vadd.f32 0.0, %v2550
        %v2552 = vpop.f32.mrb[0].mxu0
        %v2553 = vadd.f32 0.0, %v2552
        %v2554 = vpop.f32.mrb[0].mxu0
        %v2555 = vadd.f32 0.0, %v2554
        %2556 = vmatprep.mubr.bf16.mxu0 0
        %2557 = vmatmul.mubr.bf16.gmra.mrb[0].mxu0 %v2142
        %v2558 = vpop.f32.mrb[0].mxu0
        %v2559 = vpop.f32.mrb[0].mxu0
        %v2560 = vadd.f32 0.0, %v2559
        %v2561 = vpop.f32.mrb[0].mxu0
        %v2562 = vpop.f32.mrb[0].mxu0
        %2563 = vmatprep.mubr.bf16.mxu0 0
        %2564 = vmatmul.mubr.bf16.gmra.mrb[0].mxu0 %v2143
        %v2565 = vpop.f32.mrb[0].mxu0
        %v2566 = vadd.f32 0.0, %v2565
        %v2567 = vpop.f32.mrb[0].mxu0
        %v2568 = vadd.f32 0.0, %v2567
        %v2569 = vpop.f32.mrb[0].mxu0
        %v2570 = vadd.f32 0.0, %v2569
        %v2571 = vpop.f32.mrb[0].mxu0
        %v2572 = vadd.f32 0.0, %v2571
        %2573 = vmatprep.mubr.bf16.mxu0 0
        %2574 = vmatmul.mubr.bf16.gmra.mrb[0].mxu0 %v2144
        %v2575 = vpop.f32.mrb[0].mxu0
        %v2576 = vpop.f32.mrb[0].mxu0
        %v2577 = vadd.f32 0.0, %v2576
        %v2578 = vpop.f32.mrb[0].mxu0
        %v2579 = vpop.f32.mrb[0].mxu0
        %2580 = vmatprep.mubr.bf16.mxu0 0
        %2581 = vmatmul.mubr.bf16.gmra.mrb[0].mxu0 %v2145
        %v2582 = vpop.f32.mrb[0].mxu0
        %v2583 = vadd.f32 0.0, %v2582
        %v2584 = vpop.f32.mrb[0].mxu0
        %v2585 = vadd.f32 0.0, %v2584
        %v2586 = vpop.f32.mrb[0].mxu0
        %v2587 = vadd.f32 0.0, %v2586
        %v2588 = vpop.f32.mrb[0].mxu0
        %v2589 = vadd.f32 0.0, %v2588
        %2590 = vmatprep.mubr.bf16.mxu0 0
        %2591 = vmatmul.mubr.bf16.gmra.mrb[0].mxu0 %v2146
        %v2592 = vpop.f32.mrb[0].mxu0
        %v2593 = vpop.f32.mrb[0].mxu0
        %v2594 = vadd.f32 0.0, %v2593
        %v2595 = vpop.f32.mrb[0].mxu0
        %v2596 = vpop.f32.mrb[0].mxu0
        %2597 = vmatprep.mubr.bf16.mxu0 0
        %2598 = vmatmul.mubr.bf16.gmra.mrb[0].mxu0 %v2147
        %v2599 = vpop.f32.mrb[0].mxu0
        %v2600 = vadd.f32 0.0, %v2599
        %v2601 = vpop.f32.mrb[0].mxu0
        %v2602 = vadd.f32 0.0, %v2601
        %v2603 = vpop.f32.mrb[0].mxu0
        %v2604 = vadd.f32 0.0, %v2603
        %v2605 = vpop.f32.mrb[0].mxu0
        %v2606 = vadd.f32 0.0, %v2605
        %2607 = vmatprep.mubr.bf16.mxu0 0
        %2608 = vmatmul.mubr.bf16.gmra.mrb[0].mxu0 %v2148
        %v2609 = vpop.f32.mrb[0].mxu0
        %v2610 = vpop.f32.mrb[0].mxu0
        %v2611 = vadd.f32 0.0, %v2610
        %v2612 = vpop.f32.mrb[0].mxu0
        %v2613 = vpop.f32.mrb[0].mxu0
        %2614 = vdwg.mxu0
        %2615 = vmatprep.subr.bf16.mxu0 0
        %2616 = vmatpush1.bf16.msra.mxu0 %v2264
        %2617 = vmatprep.subr.bf16.mxu0 0
        %2618 = vmatpush1.bf16.msra.mxu0 %v2267
        %2619 = vmatprep.subr.bf16.mxu0 0
        %2620 = vmatpush1.bf16.msra.mxu0 %v2270
        %2621 = vmatprep.subr.bf16.mxu0 0
        %2622 = vmatpush1.bf16.msra.mxu0 %v2273
        %2623 = vmatprep.subr.bf16.mxu0 0
        %2624 = vmatpush1.bf16.msra.mxu0 %v2276
        %2625 = vmatprep.subr.bf16.mxu0 0
        %2626 = vmatpush1.bf16.msra.mxu0 %v2279
        %2627 = vmatprep.subr.bf16.mxu0 0
        %2628 = vmatpush1.bf16.msra.mxu0 %v2282
        %2629 = vmatprep.subr.bf16.mxu0 0
        %2630 = vmatpush1.bf16.msra.mxu0 %v2285
        %2631 = vmatprep.subr.bf16.mxu0 0
        %2632 = vmatpush1.bf16.msra.mxu0 0
        %2633 = vmatprep.subr.bf16.mxu0 0
        %2634 = vmatpush1.bf16.msra.mxu0 0
        %2635 = vmatprep.subr.bf16.mxu0 0
        %2636 = vmatpush1.bf16.msra.mxu0 0
        %2637 = vmatprep.subr.bf16.mxu0 0
        %2638 = vmatpush1.bf16.msra.mxu0 0
        %2639 = vmatprep.subr.bf16.mxu0 0
        %2640 = vmatpush1.bf16.msra.mxu0 0
        %2641 = vmatprep.subr.bf16.mxu0 0
        %2642 = vmatpush1.bf16.msra.mxu0 0
        %2643 = vmatprep.subr.bf16.mxu0 0
        %2644 = vmatpush1.bf16.msra.mxu0 0
        %2645 = vmatprep.subr.bf16.mxu0 0
        %2646 = vmatpush1.bf16.msra.mxu0 0
        %2647 = vmatprep.mubr.bf16.mxu0 0
        %2648 = vmatmul.mubr.bf16.gmra.mrb[0].mxu0 %v2117
        %v2649 = vpop.f32.mrb[0].mxu0
        %v2650 = vadd.f32 0.0, %v2649
        %v2651 = vpop.f32.mrb[0].mxu0
        %v2652 = vpop.f32.mrb[0].mxu0
        %v2653 = vadd.f32 0.0, %v2652
        %v2654 = vpop.f32.mrb[0].mxu0
        %2655 = vmatprep.mubr.bf16.mxu0 0
        %2656 = vmatmul.mubr.bf16.gmra.mrb[0].mxu0 %v2118
        %v2657 = vpop.f32.mrb[0].mxu0
        %v2658 = vadd.f32 0.0, %v2657
        %v2659 = vpop.f32.mrb[0].mxu0
        %v2660 = vpop.f32.mrb[0].mxu0
        %v2661 = vpop.f32.mrb[0].mxu0
        %2662 = vmatprep.mubr.bf16.mxu0 0
        %2663 = vmatmul.mubr.bf16.gmra.mrb[0].mxu0 %v2119
        %v2664 = vpop.f32.mrb[0].mxu0
        %v2665 = vadd.f32 0.0, %v2664
        %v2666 = vpop.f32.mrb[0].mxu0
        %v2667 = vpop.f32.mrb[0].mxu0
        %v2668 = vadd.f32 0.0, %v2667
        %v2669 = vpop.f32.mrb[0].mxu0
        %2670 = vmatprep.mubr.bf16.mxu0 0
        %2671 = vmatmul.mubr.bf16.gmra.mrb[0].mxu0 %v2120
        %v2672 = vpop.f32.mrb[0].mxu0
        %v2673 = vadd.f32 0.0, %v2672
        %v2674 = vpop.f32.mrb[0].mxu0
        %v2675 = vpop.f32.mrb[0].mxu0
        %v2676 = vpop.f32.mrb[0].mxu0
        %2677 = vmatprep.mubr.bf16.mxu0 0
        %2678 = vmatmul.mubr.bf16.gmra.mrb[0].mxu0 %v2121
        %v2679 = vpop.f32.mrb[0].mxu0
        %v2680 = vadd.f32 0.0, %v2679
        %v2681 = vpop.f32.mrb[0].mxu0
        %v2682 = vpop.f32.mrb[0].mxu0
        %v2683 = vadd.f32 0.0, %v2682
        %v2684 = vpop.f32.mrb[0].mxu0
        %2685 = vmatprep.mubr.bf16.mxu0 0
        %2686 = vmatmul.mubr.bf16.gmra.mrb[0].mxu0 %v2122
        %v2687 = vpop.f32.mrb[0].mxu0
        %v2688 = vadd.f32 0.0, %v2687
        %v2689 = vpop.f32.mrb[0].mxu0
        %v2690 = vpop.f32.mrb[0].mxu0
        %v2691 = vpop.f32.mrb[0].mxu0
        %2692 = vmatprep.mubr.bf16.mxu0 0
        %2693 = vmatmul.mubr.bf16.gmra.mrb[0].mxu0 %v2123
        %v2694 = vpop.f32.mrb[0].mxu0
        %v2695 = vadd.f32 0.0, %v2694
        %v2696 = vpop.f32.mrb[0].mxu0
        %v2697 = vpop.f32.mrb[0].mxu0
        %v2698 = vadd.f32 0.0, %v2697
        %v2699 = vpop.f32.mrb[0].mxu0
        %2700 = vmatprep.mubr.bf16.mxu0 0
        %2701 = vmatmul.mubr.bf16.gmra.mrb[0].mxu0 %v2124
        %v2702 = vpop.f32.mrb[0].mxu0
        %v2703 = vadd.f32 0.0, %v2702
        %v2704 = vpop.f32.mrb[0].mxu0
        %v2705 = vpop.f32.mrb[0].mxu0
        %v2706 = vpop.f32.mrb[0].mxu0
        %2707 = vmatprep.mubr.bf16.mxu0 0
        %2708 = vmatmul.mubr.bf16.gmra.mrb[0].mxu0 %v2125
        %v2709 = vpop.f32.mrb[0].mxu0
        %v2710 = vadd.f32 0.0, %v2709
        %v2711 = vpop.f32.mrb[0].mxu0
        %v2712 = vpop.f32.mrb[0].mxu0
        %v2713 = vadd.f32 0.0, %v2712
        %v2714 = vpop.f32.mrb[0].mxu0
        %2715 = vmatprep.mubr.bf16.mxu0 0
        %2716 = vmatmul.mubr.bf16.gmra.mrb[0].mxu0 %v2126
        %v2717 = vpop.f32.mrb[0].mxu0
        %v2718 = vadd.f32 0.0, %v2717
        %v2719 = vpop.f32.mrb[0].mxu0
        %v2720 = vpop.f32.mrb[0].mxu0
        %v2721 = vpop.f32.mrb[0].mxu0
        %2722 = vmatprep.mubr.bf16.mxu0 0
        %2723 = vmatmul.mubr.bf16.gmra.mrb[0].mxu0 %v2127
        %v2724 = vpop.f32.mrb[0].mxu0
        %v2725 = vadd.f32 0.0, %v2724
        %v2726 = vpop.f32.mrb[0].mxu0
        %v2727 = vpop.f32.mrb[0].mxu0
        %v2728 = vadd.f32 0.0, %v2727
        %v2729 = vpop.f32.mrb[0].mxu0
        %2730 = vmatprep.mubr.bf16.mxu0 0
        %2731 = vmatmul.mubr.bf16.gmra.mrb[0].mxu0 %v2128
        %v2732 = vpop.f32.mrb[0].mxu0
        %v2733 = vadd.f32 0.0, %v2732
        %v2734 = vpop.f32.mrb[0].mxu0
        %v2735 = vpop.f32.mrb[0].mxu0
        %v2736 = vpop.f32.mrb[0].mxu0
        %2737 = vmatprep.mubr.bf16.mxu0 0
        %2738 = vmatmul.mubr.bf16.gmra.mrb[0].mxu0 %v2129
        %v2739 = vpop.f32.mrb[0].mxu0
        %v2740 = vadd.f32 0.0, %v2739
        %v2741 = vpop.f32.mrb[0].mxu0
        %v2742 = vpop.f32.mrb[0].mxu0
        %v2743 = vadd.f32 0.0, %v2742
        %v2744 = vpop.f32.mrb[0].mxu0
        %2745 = vmatprep.mubr.bf16.mxu0 0
        %2746 = vmatmul.mubr.bf16.gmra.mrb[0].mxu0 %v2130
        %v2747 = vpop.f32.mrb[0].mxu0
        %v2748 = vadd.f32 0.0, %v2747
        %v2749 = vpop.f32.mrb[0].mxu0
        %v2750 = vpop.f32.mrb[0].mxu0
        %v2751 = vpop.f32.mrb[0].mxu0
        %2752 = vmatprep.mubr.bf16.mxu0 0
        %2753 = vmatmul.mubr.bf16.gmra.mrb[0].mxu0 %v2131
        %v2754 = vpop.f32.mrb[0].mxu0
        %v2755 = vadd.f32 0.0, %v2754
        %v2756 = vpop.f32.mrb[0].mxu0
        %v2757 = vpop.f32.mrb[0].mxu0
        %v2758 = vadd.f32 0.0, %v2757
        %v2759 = vpop.f32.mrb[0].mxu0
        %2760 = vmatprep.mubr.bf16.mxu0 0
        %2761 = vmatmul.mubr.bf16.gmra.mrb[0].mxu0 %v2132
        %v2762 = vpop.f32.mrb[0].mxu0
        %v2763 = vadd.f32 0.0, %v2762
        %v2764 = vpop.f32.mrb[0].mxu0
        %v2765 = vpop.f32.mrb[0].mxu0
        %v2766 = vpop.f32.mrb[0].mxu0
        %2767 = vmatprep.mubr.bf16.mxu0 0
        %2768 = vmatmul.mubr.bf16.gmra.mrb[0].mxu0 %v2133
        %v2769 = vpop.f32.mrb[0].mxu0
        %v2770 = vadd.f32 0.0, %v2769
        %v2771 = vpop.f32.mrb[0].mxu0
        %v2772 = vpop.f32.mrb[0].mxu0
        %v2773 = vadd.f32 0.0, %v2772
        %v2774 = vpop.f32.mrb[0].mxu0
        %2775 = vmatprep.mubr.bf16.mxu0 0
        %2776 = vmatmul.mubr.bf16.gmra.mrb[0].mxu0 %v2134
        %v2777 = vpop.f32.mrb[0].mxu0
        %v2778 = vadd.f32 0.0, %v2777
        %v2779 = vpop.f32.mrb[0].mxu0
        %v2780 = vpop.f32.mrb[0].mxu0
        %v2781 = vpop.f32.mrb[0].mxu0
        %2782 = vmatprep.mubr.bf16.mxu0 0
        %2783 = vmatmul.mubr.bf16.gmra.mrb[0].mxu0 %v2135
        %v2784 = vpop.f32.mrb[0].mxu0
        %v2785 = vadd.f32 0.0, %v2784
        %v2786 = vpop.f32.mrb[0].mxu0
        %v2787 = vpop.f32.mrb[0].mxu0
        %v2788 = vadd.f32 0.0, %v2787
        %v2789 = vpop.f32.mrb[0].mxu0
        %2790 = vmatprep.mubr.bf16.mxu0 0
        %2791 = vmatmul.mubr.bf16.gmra.mrb[0].mxu0 %v2136
        %v2792 = vpop.f32.mrb[0].mxu0
        %v2793 = vadd.f32 0.0, %v2792
        %v2794 = vpop.f32.mrb[0].mxu0
        %v2795 = vpop.f32.mrb[0].mxu0
        %v2796 = vpop.f32.mrb[0].mxu0
        %2797 = vmatprep.mubr.bf16.mxu0 0
        %2798 = vmatmul.mubr.bf16.gmra.mrb[0].mxu0 %v2137
        %v2799 = vpop.f32.mrb[0].mxu0
        %v2800 = vadd.f32 0.0, %v2799
        %v2801 = vpop.f32.mrb[0].mxu0
        %v2802 = vpop.f32.mrb[0].mxu0
        %v2803 = vadd.f32 0.0, %v2802
        %v2804 = vpop.f32.mrb[0].mxu0
        %2805 = vmatprep.mubr.bf16.mxu0 0
        %2806 = vmatmul.mubr.bf16.gmra.mrb[0].mxu0 %v2138
        %v2807 = vpop.f32.mrb[0].mxu0
        %v2808 = vadd.f32 0.0, %v2807
        %v2809 = vpop.f32.mrb[0].mxu0
        %v2810 = vpop.f32.mrb[0].mxu0
        %v2811 = vpop.f32.mrb[0].mxu0
        %2812 = vmatprep.mubr.bf16.mxu0 0
        %2813 = vmatmul.mubr.bf16.gmra.mrb[0].mxu0 %v2139
        %v2814 = vpop.f32.mrb[0].mxu0
        %v2815 = vadd.f32 0.0, %v2814
        %v2816 = vpop.f32.mrb[0].mxu0
        %v2817 = vpop.f32.mrb[0].mxu0
        %v2818 = vadd.f32 0.0, %v2817
        %v2819 = vpop.f32.mrb[0].mxu0
        %2820 = vmatprep.mubr.bf16.mxu0 0
        %2821 = vmatmul.mubr.bf16.gmra.mrb[0].mxu0 %v2140
        %v2822 = vpop.f32.mrb[0].mxu0
        %v2823 = vadd.f32 0.0, %v2822
        %v2824 = vpop.f32.mrb[0].mxu0
        %v2825 = vpop.f32.mrb[0].mxu0
        %v2826 = vpop.f32.mrb[0].mxu0
        %2827 = vmatprep.mubr.bf16.mxu0 0
        %2828 = vmatmul.mubr.bf16.gmra.mrb[0].mxu0 %v2141
        %v2829 = vpop.f32.mrb[0].mxu0
        %v2830 = vadd.f32 0.0, %v2829
        %v2831 = vpop.f32.mrb[0].mxu0
        %v2832 = vpop.f32.mrb[0].mxu0
        %v2833 = vadd.f32 0.0, %v2832
        %v2834 = vpop.f32.mrb[0].mxu0
        %2835 = vmatprep.mubr.bf16.mxu0 0
        %2836 = vmatmul.mubr.bf16.gmra.mrb[0].mxu0 %v2142
        %v2837 = vpop.f32.mrb[0].mxu0
        %v2838 = vadd.f32 0.0, %v2837
        %v2839 = vpop.f32.mrb[0].mxu0
        %v2840 = vpop.f32.mrb[0].mxu0
        %v2841 = vpop.f32.mrb[0].mxu0
        %2842 = vmatprep.mubr.bf16.mxu0 0
        %2843 = vmatmul.mubr.bf16.gmra.mrb[0].mxu0 %v2143
        %v2844 = vpop.f32.mrb[0].mxu0
        %v2845 = vadd.f32 0.0, %v2844
        %v2846 = vpop.f32.mrb[0].mxu0
        %v2847 = vpop.f32.mrb[0].mxu0
        %v2848 = vadd.f32 0.0, %v2847
        %v2849 = vpop.f32.mrb[0].mxu0
        %2850 = vmatprep.mubr.bf16.mxu0 0
        %2851 = vmatmul.mubr.bf16.gmra.mrb[0].mxu0 %v2144
        %v2852 = vpop.f32.mrb[0].mxu0
        %v2853 = vadd.f32 0.0, %v2852
        %v2854 = vpop.f32.mrb[0].mxu0
        %v2855 = vpop.f32.mrb[0].mxu0
        %v2856 = vpop.f32.mrb[0].mxu0
        %2857 = vmatprep.mubr.bf16.mxu0 0
        %2858 = vmatmul.mubr.bf16.gmra.mrb[0].mxu0 %v2145
        %v2859 = vpop.f32.mrb[0].mxu0
        %v2860 = vadd.f32 0.0, %v2859
        %v2861 = vpop.f32.mrb[0].mxu0
        %v2862 = vpop.f32.mrb[0].mxu0
        %v2863 = vadd.f32 0.0, %v2862
        %v2864 = vpop.f32.mrb[0].mxu0
        %2865 = vmatprep.mubr.bf16.mxu0 0
        %2866 = vmatmul.mubr.bf16.gmra.mrb[0].mxu0 %v2146
        %v2867 = vpop.f32.mrb[0].mxu0
        %v2868 = vadd.f32 0.0, %v2867
        %v2869 = vpop.f32.mrb[0].mxu0
        %v2870 = vpop.f32.mrb[0].mxu0
        %v2871 = vpop.f32.mrb[0].mxu0
        %2872 = vmatprep.mubr.bf16.mxu0 0
        %2873 = vmatmul.mubr.bf16.gmra.mrb[0].mxu0 %v2147
        %v2874 = vpop.f32.mrb[0].mxu0
        %v2875 = vadd.f32 0.0, %v2874
        %v2876 = vpop.f32.mrb[0].mxu0
        %v2877 = vpop.f32.mrb[0].mxu0
        %v2878 = vadd.f32 0.0, %v2877
        %v2879 = vpop.f32.mrb[0].mxu0
        %2880 = vmatprep.mubr.bf16.mxu0 0
        %2881 = vmatmul.mubr.bf16.gmra.mrb[0].mxu0 %v2148
        %v2882 = vpop.f32.mrb[0].mxu0
        %v2883 = vadd.f32 0.0, %v2882
        %v2884 = vpop.f32.mrb[0].mxu0
        %v2885 = vpop.f32.mrb[0].mxu0
        %v2886 = vpop.f32.mrb[0].mxu0
        %2887 = vdwg.mxu0
        %v2936 = vrot.slane %v2347, 1
        %v2937 = vrot.slane %v2351, 1
        %v2938 = vsel %vm1747, %v2936, %v2937
        %v2939 = vrot.slane %v2356, 1
        %v2940 = vsel %vm1747, %v2937, %v2939
        %v2941 = vrot.slane %v2364, 1
        %v2942 = vrot.slane %v2368, 1
        %v2943 = vsel %vm1747, %v2941, %v2942
        %v2944 = vrot.slane %v2373, 1
        %v2945 = vsel %vm1747, %v2942, %v2944
        %v2946 = vrot.slane %v2381, 1
        %v2947 = vrot.slane %v2385, 1
        %v2948 = vsel %vm1747, %v2946, %v2947
        %v2949 = vrot.slane %v2390, 1
        %v2950 = vsel %vm1747, %v2947, %v2949
        %v2951 = vrot.slane %v2398, 1
        %v2952 = vrot.slane %v2402, 1
        %v2953 = vsel %vm1747, %v2951, %v2952
        %v2954 = vrot.slane %v2407, 1
        %v2955 = vsel %vm1747, %v2952, %v2954
        %v2956 = vrot.slane %v2415, 1
        %v2957 = vrot.slane %v2419, 1
        %v2958 = vsel %vm1747, %v2956, %v2957
        %v2959 = vrot.slane %v2424, 1
        %v2960 = vsel %vm1747, %v2957, %v2959
        %v2961 = vrot.slane %v2432, 1
        %v2962 = vrot.slane %v2436, 1
        %v2963 = vsel %vm1747, %v2961, %v2962
        %v2964 = vrot.slane %v2441, 1
        %v2965 = vsel %vm1747, %v2962, %v2964
        %v2966 = vrot.slane %v2449, 1
        %v2967 = vrot.slane %v2453, 1
        %v2968 = vsel %vm1747, %v2966, %v2967
        %v2969 = vrot.slane %v2458, 1
        %v2970 = vsel %vm1747, %v2967, %v2969
        %v2971 = vrot.slane %v2466, 1
        %v2972 = vrot.slane %v2470, 1
        %v2973 = vsel %vm1747, %v2971, %v2972
        %v2974 = vrot.slane %v2475, 1
        %v2975 = vsel %vm1747, %v2972, %v2974
        %v2976 = vrot.slane %v2483, 1
        %v2977 = vrot.slane %v2487, 1
        %v2978 = vsel %vm1747, %v2976, %v2977
        %v2979 = vrot.slane %v2492, 1
        %v2980 = vsel %vm1747, %v2977, %v2979
        %v2981 = vrot.slane %v2500, 1
        %v2982 = vrot.slane %v2504, 1
        %v2983 = vsel %vm1747, %v2981, %v2982
        %v2984 = vrot.slane %v2509, 1
        %v2985 = vsel %vm1747, %v2982, %v2984
        %v2986 = vrot.slane %v2517, 1
        %v2987 = vrot.slane %v2521, 1
        %v2988 = vsel %vm1747, %v2986, %v2987
        %v2989 = vrot.slane %v2526, 1
        %v2990 = vsel %vm1747, %v2987, %v2989
        %v2991 = vrot.slane %v2534, 1
        %v2992 = vrot.slane %v2538, 1
        %v2993 = vsel %vm1747, %v2991, %v2992
        %v2994 = vrot.slane %v2543, 1
        %v2995 = vsel %vm1747, %v2992, %v2994
        %v2996 = vrot.slane %v2551, 1
        %v2997 = vrot.slane %v2555, 1
        %v2998 = vsel %vm1747, %v2996, %v2997
        %v2999 = vrot.slane %v2560, 1
        %v3000 = vsel %vm1747, %v2997, %v2999
        %v3001 = vrot.slane %v2568, 1
        %v3002 = vrot.slane %v2572, 1
        %v3003 = vsel %vm1747, %v3001, %v3002
        %v3004 = vrot.slane %v2577, 1
        %v3005 = vsel %vm1747, %v3002, %v3004
        %v3006 = vrot.slane %v2585, 1
        %v3007 = vrot.slane %v2589, 1
        %v3008 = vsel %vm1747, %v3006, %v3007
        %v3009 = vrot.slane %v2594, 1
        %v3010 = vsel %vm1747, %v3007, %v3009
        %v3011 = vrot.slane %v2602, 1
        %v3012 = vrot.slane %v2606, 1
        %v3013 = vsel %vm1747, %v3011, %v3012
        %v3014 = vrot.slane %v2611, 1
        %v3015 = vsel %vm1747, %v3012, %v3014
        %v3048 = vadd.f32 %v2345, %v2938
        %v3049 = vadd.f32 %v2349, %v2940
        %v3050 = vadd.f32 %v2362, %v2943
        %v3051 = vadd.f32 %v2366, %v2945
        %v3052 = vadd.f32 %v2379, %v2948
        %v3053 = vadd.f32 %v2383, %v2950
        %v3054 = vadd.f32 %v2396, %v2953
        %v3055 = vadd.f32 %v2400, %v2955
        %v3056 = vadd.f32 %v2413, %v2958
        %v3057 = vadd.f32 %v2417, %v2960
        %v3058 = vadd.f32 %v2430, %v2963
        %v3059 = vadd.f32 %v2434, %v2965
        %v3060 = vadd.f32 %v2447, %v2968
        %v3061 = vadd.f32 %v2451, %v2970
        %v3062 = vadd.f32 %v2464, %v2973
        %v3063 = vadd.f32 %v2468, %v2975
        %v3064 = vadd.f32 %v2481, %v2978
        %v3065 = vadd.f32 %v2485, %v2980
        %v3066 = vadd.f32 %v2498, %v2983
        %v3067 = vadd.f32 %v2502, %v2985
        %v3068 = vadd.f32 %v2515, %v2988
        %v3069 = vadd.f32 %v2519, %v2990
        %v3070 = vadd.f32 %v2532, %v2993
        %v3071 = vadd.f32 %v2536, %v2995
        %v3072 = vadd.f32 %v2549, %v2998
        %v3073 = vadd.f32 %v2553, %v3000
        %v3074 = vadd.f32 %v2566, %v3003
        %v3075 = vadd.f32 %v2570, %v3005
        %v3076 = vadd.f32 %v2583, %v3008
        %v3077 = vadd.f32 %v2587, %v3010
        %v3078 = vadd.f32 %v2600, %v3013
        %v3079 = vadd.f32 %v2604, %v3015
        %v3128 = vrot.slane %v2650, 2
        %v3129 = vrot.slane %v2653, 2
        %v3130 = vsel %vm1940, %v3128, %v3129
        %v3131 = vrot.slane %v2658, 2
        %v3132 = vsel %vm1940, %v3129, %v3131
        %v3133 = vrot.slane %v2665, 2
        %v3134 = vrot.slane %v2668, 2
        %v3135 = vsel %vm1940, %v3133, %v3134
        %v3136 = vrot.slane %v2673, 2
        %v3137 = vsel %vm1940, %v3134, %v3136
        %v3138 = vrot.slane %v2680, 2
        %v3139 = vrot.slane %v2683, 2
        %v3140 = vsel %vm1940, %v3138, %v3139
        %v3141 = vrot.slane %v2688, 2
        %v3142 = vsel %vm1940, %v3139, %v3141
        %v3143 = vrot.slane %v2695, 2
        %v3144 = vrot.slane %v2698, 2
        %v3145 = vsel %vm1940, %v3143, %v3144
        %v3146 = vrot.slane %v2703, 2
        %v3147 = vsel %vm1940, %v3144, %v3146
        %v3148 = vrot.slane %v2710, 2
        %v3149 = vrot.slane %v2713, 2
        %v3150 = vsel %vm1940, %v3148, %v3149
        %v3151 = vrot.slane %v2718, 2
        %v3152 = vsel %vm1940, %v3149, %v3151
        %v3153 = vrot.slane %v2725, 2
        %v3154 = vrot.slane %v2728, 2
        %v3155 = vsel %vm1940, %v3153, %v3154
        %v3156 = vrot.slane %v2733, 2
        %v3157 = vsel %vm1940, %v3154, %v3156
        %v3158 = vrot.slane %v2740, 2
        %v3159 = vrot.slane %v2743, 2
        %v3160 = vsel %vm1940, %v3158, %v3159
        %v3161 = vrot.slane %v2748, 2
        %v3162 = vsel %vm1940, %v3159, %v3161
        %v3163 = vrot.slane %v2755, 2
        %v3164 = vrot.slane %v2758, 2
        %v3165 = vsel %vm1940, %v3163, %v3164
        %v3166 = vrot.slane %v2763, 2
        %v3167 = vsel %vm1940, %v3164, %v3166
        %v3168 = vrot.slane %v2770, 2
        %v3169 = vrot.slane %v2773, 2
        %v3170 = vsel %vm1940, %v3168, %v3169
        %v3171 = vrot.slane %v2778, 2
        %v3172 = vsel %vm1940, %v3169, %v3171
        %v3173 = vrot.slane %v2785, 2
        %v3174 = vrot.slane %v2788, 2
        %v3175 = vsel %vm1940, %v3173, %v3174
        %v3176 = vrot.slane %v2793, 2
        %v3177 = vsel %vm1940, %v3174, %v3176
        %v3178 = vrot.slane %v2800, 2
        %v3179 = vrot.slane %v2803, 2
        %v3180 = vsel %vm1940, %v3178, %v3179
        %v3181 = vrot.slane %v2808, 2
        %v3182 = vsel %vm1940, %v3179, %v3181
        %v3183 = vrot.slane %v2815, 2
        %v3184 = vrot.slane %v2818, 2
        %v3185 = vsel %vm1940, %v3183, %v3184
        %v3186 = vrot.slane %v2823, 2
        %v3187 = vsel %vm1940, %v3184, %v3186
        %v3188 = vrot.slane %v2830, 2
        %v3189 = vrot.slane %v2833, 2
        %v3190 = vsel %vm1940, %v3188, %v3189
        %v3191 = vrot.slane %v2838, 2
        %v3192 = vsel %vm1940, %v3189, %v3191
        %v3193 = vrot.slane %v2845, 2
        %v3194 = vrot.slane %v2848, 2
        %v3195 = vsel %vm1940, %v3193, %v3194
        %v3196 = vrot.slane %v2853, 2
        %v3197 = vsel %vm1940, %v3194, %v3196
        %v3198 = vrot.slane %v2860, 2
        %v3199 = vrot.slane %v2863, 2
        %v3200 = vsel %vm1940, %v3198, %v3199
        %v3201 = vrot.slane %v2868, 2
        %v3202 = vsel %vm1940, %v3199, %v3201
        %v3203 = vrot.slane %v2875, 2
        %v3204 = vrot.slane %v2878, 2
        %v3205 = vsel %vm1940, %v3203, %v3204
        %v3206 = vrot.slane %v2883, 2
        %v3207 = vsel %vm1940, %v3204, %v3206
        %v3240 = vadd.f32 %v3048, %v3130
        %v3241 = vadd.f32 %v3049, %v3132
        %v3242 = vadd.f32 %v3050, %v3135
        %v3243 = vadd.f32 %v3051, %v3137
        %v3244 = vadd.f32 %v3052, %v3140
        %v3245 = vadd.f32 %v3053, %v3142
        %v3246 = vadd.f32 %v3054, %v3145
        %v3247 = vadd.f32 %v3055, %v3147
        %v3248 = vadd.f32 %v3056, %v3150
        %v3249 = vadd.f32 %v3057, %v3152
        %v3250 = vadd.f32 %v3058, %v3155
        %v3251 = vadd.f32 %v3059, %v3157
        %v3252 = vadd.f32 %v3060, %v3160
        %v3253 = vadd.f32 %v3061, %v3162
        %v3254 = vadd.f32 %v3062, %v3165
        %v3255 = vadd.f32 %v3063, %v3167
        %v3256 = vadd.f32 %v3064, %v3170
        %v3257 = vadd.f32 %v3065, %v3172
        %v3258 = vadd.f32 %v3066, %v3175
        %v3259 = vadd.f32 %v3067, %v3177
        %v3260 = vadd.f32 %v3068, %v3180
        %v3261 = vadd.f32 %v3069, %v3182
        %v3262 = vadd.f32 %v3070, %v3185
        %v3263 = vadd.f32 %v3071, %v3187
        %v3264 = vadd.f32 %v3072, %v3190
        %v3265 = vadd.f32 %v3073, %v3192
        %v3266 = vadd.f32 %v3074, %v3195
        %v3267 = vadd.f32 %v3075, %v3197
        %v3268 = vadd.f32 %v3076, %v3200
        %v3269 = vadd.f32 %v3077, %v3202
        %v3270 = vadd.f32 %v3078, %v3205
        %v3271 = vadd.f32 %v3079, %v3207
        %v3272 = vld [vmem:[#allocation3] sm:$0xff]
        %v3273 = vld [vmem:[#allocation3 + $0x8] sm:$0xff]
        %v3274 = vld [vmem:[#allocation3 + $0x10] sm:$0xff]
        %v3275 = vld [vmem:[#allocation3 + $0x18] sm:$0xff]
        %v3276 = vld [vmem:[#allocation3 + $0x20] sm:$0xff]
        %v3277 = vld [vmem:[#allocation3 + $0x28] sm:$0xff]
        %v3278 = vld [vmem:[#allocation3 + $0x30] sm:$0xff]
        %v3279 = vld [vmem:[#allocation3 + $0x38] sm:$0xff]
        %v3280 = vld [vmem:[#allocation3 + $0x40] sm:$0xff]
        %v3281 = vld [vmem:[#allocation3 + $0x48] sm:$0xff]
        %v3282 = vld [vmem:[#allocation3 + $0x50] sm:$0xff]
        %v3283 = vld [vmem:[#allocation3 + $0x58] sm:$0xff]
        %v3284 = vld [vmem:[#allocation3 + $0x60] sm:$0xff]
        %v3285 = vld [vmem:[#allocation3 + $0x68] sm:$0xff]
        %v3286 = vld [vmem:[#allocation3 + $0x70] sm:$0xff]
        %v3287 = vld [vmem:[#allocation3 + $0x78] sm:$0xff]
        %v3288 = vld [vmem:[#allocation3 + $0x80] sm:$0xff]
        %v3289 = vld [vmem:[#allocation3 + $0x88] sm:$0xff]
        %v3290 = vld [vmem:[#allocation3 + $0x90] sm:$0xff]
        %v3291 = vld [vmem:[#allocation3 + $0x98] sm:$0xff]
        %v3292 = vld [vmem:[#allocation3 + $0xa0] sm:$0xff]
        %v3293 = vld [vmem:[#allocation3 + $0xa8] sm:$0xff]
        %v3294 = vld [vmem:[#allocation3 + $0xb0] sm:$0xff]
        %v3295 = vld [vmem:[#allocation3 + $0xb8] sm:$0xff]
        %v3296 = vld [vmem:[#allocation3 + $0xc0] sm:$0xff]
        %v3297 = vld [vmem:[#allocation3 + $0xc8] sm:$0xff]
        %v3298 = vld [vmem:[#allocation3 + $0xd0] sm:$0xff]
        %v3299 = vld [vmem:[#allocation3 + $0xd8] sm:$0xff]
        %v3300 = vld [vmem:[#allocation3 + $0xe0] sm:$0xff]
        %v3301 = vld [vmem:[#allocation3 + $0xe8] sm:$0xff]
        %v3302 = vld [vmem:[#allocation3 + $0xf0] sm:$0xff]
        %v3303 = vld [vmem:[#allocation3 + $0xf8] sm:$0xff]
        %v3304 = vadd.f32 %v3272, %v3240
        %v3305 = vadd.f32 %v3273, %v3241
        %v3306 = vadd.f32 %v3274, %v3242
        %v3307 = vadd.f32 %v3275, %v3243
        %v3308 = vadd.f32 %v3276, %v3244
        %v3309 = vadd.f32 %v3277, %v3245
        %v3310 = vadd.f32 %v3278, %v3246
        %v3311 = vadd.f32 %v3279, %v3247
        %v3312 = vadd.f32 %v3280, %v3248
        %v3313 = vadd.f32 %v3281, %v3249
        %v3314 = vadd.f32 %v3282, %v3250
        %v3315 = vadd.f32 %v3283, %v3251
        %v3316 = vadd.f32 %v3284, %v3252
        %v3317 = vadd.f32 %v3285, %v3253
        %v3318 = vadd.f32 %v3286, %v3254
        %v3319 = vadd.f32 %v3287, %v3255
        %v3320 = vadd.f32 %v3288, %v3256
        %v3321 = vadd.f32 %v3289, %v3257
        %v3322 = vadd.f32 %v3290, %v3258
        %v3323 = vadd.f32 %v3291, %v3259
        %v3324 = vadd.f32 %v3292, %v3260
        %v3325 = vadd.f32 %v3293, %v3261
        %v3326 = vadd.f32 %v3294, %v3262
        %v3327 = vadd.f32 %v3295, %v3263
        %v3328 = vadd.f32 %v3296, %v3264
        %v3329 = vadd.f32 %v3297, %v3265
        %v3330 = vadd.f32 %v3298, %v3266
        %v3331 = vadd.f32 %v3299, %v3267
        %v3332 = vadd.f32 %v3300, %v3268
        %v3333 = vadd.f32 %v3301, %v3269
        %v3334 = vadd.f32 %v3302, %v3270
        %v3335 = vadd.f32 %v3303, %v3271
        %3336 = vst [vmem:[#allocation3] sm:$0xff] %v3304
        %3337 = vst [vmem:[#allocation3 + $0x8] sm:$0xff] %v3305
        %3338 = vst [vmem:[#allocation3 + $0x10] sm:$0xff] %v3306
        %3339 = vst [vmem:[#allocation3 + $0x18] sm:$0xff] %v3307
        %3340 = vst [vmem:[#allocation3 + $0x20] sm:$0xff] %v3308
        %3341 = vst [vmem:[#allocation3 + $0x28] sm:$0xff] %v3309
        %3342 = vst [vmem:[#allocation3 + $0x30] sm:$0xff] %v3310
        %3343 = vst [vmem:[#allocation3 + $0x38] sm:$0xff] %v3311
        %3344 = vst [vmem:[#allocation3 + $0x40] sm:$0xff] %v3312
        %3345 = vst [vmem:[#allocation3 + $0x48] sm:$0xff] %v3313
        %3346 = vst [vmem:[#allocation3 + $0x50] sm:$0xff] %v3314
        %3347 = vst [vmem:[#allocation3 + $0x58] sm:$0xff] %v3315
        %3348 = vst [vmem:[#allocation3 + $0x60] sm:$0xff] %v3316
        %3349 = vst [vmem:[#allocation3 + $0x68] sm:$0xff] %v3317
        %3350 = vst [vmem:[#allocation3 + $0x70] sm:$0xff] %v3318
        %3351 = vst [vmem:[#allocation3 + $0x78] sm:$0xff] %v3319
        %3352 = vst [vmem:[#allocation3 + $0x80] sm:$0xff] %v3320
        %3353 = vst [vmem:[#allocation3 + $0x88] sm:$0xff] %v3321
        %3354 = vst [vmem:[#allocation3 + $0x90] sm:$0xff] %v3322
        %3355 = vst [vmem:[#allocation3 + $0x98] sm:$0xff] %v3323
        %3356 = vst [vmem:[#allocation3 + $0xa0] sm:$0xff] %v3324
        %3357 = vst [vmem:[#allocation3 + $0xa8] sm:$0xff] %v3325
        %3358 = vst [vmem:[#allocation3 + $0xb0] sm:$0xff] %v3326
        %3359 = vst [vmem:[#allocation3 + $0xb8] sm:$0xff] %v3327
        %3360 = vst [vmem:[#allocation3 + $0xc0] sm:$0xff] %v3328
        %3361 = vst [vmem:[#allocation3 + $0xc8] sm:$0xff] %v3329
        %3362 = vst [vmem:[#allocation3 + $0xd0] sm:$0xff] %v3330
        %3363 = vst [vmem:[#allocation3 + $0xd8] sm:$0xff] %v3331
        %3364 = vst [vmem:[#allocation3 + $0xe0] sm:$0xff] %v3332
        %3365 = vst [vmem:[#allocation3 + $0xe8] sm:$0xff] %v3333
        %3366 = vst [vmem:[#allocation3 + $0xf0] sm:$0xff] %v3334
        %3367 = vst [vmem:[#allocation3 + $0xf8] sm:$0xff] %v3335
        %s3368 = scalar_lea.vmem [#allocation2], 32
        %v3369 = vld [vmem:[%s3368] sm:$0xff]
        %v3370 = vld [vmem:[%s3368 + $0x8] sm:$0xff]
        %v3371 = vld [vmem:[%s3368 + $0x10] sm:$0xff]
        %v3372 = vld [vmem:[%s3368 + $0x18] sm:$0xff]
        %v3373 = vld [vmem:[%s3368 + $0x20] sm:$0xff]
        %v3374 = vld [vmem:[%s3368 + $0x28] sm:$0xff]
        %v3375 = vld [vmem:[%s3368 + $0x30] sm:$0xff]
        %v3376 = vld [vmem:[%s3368 + $0x38] sm:$0xff]
        %v3377 = vld [vmem:[%s3368 + $0x40] sm:$0xff]
        %v3378 = vld [vmem:[%s3368 + $0x48] sm:$0xff]
        %v3379 = vld [vmem:[%s3368 + $0x50] sm:$0xff]
        %v3380 = vld [vmem:[%s3368 + $0x58] sm:$0xff]
        %v3381 = vld [vmem:[%s3368 + $0x60] sm:$0xff]
        %v3382 = vld [vmem:[%s3368 + $0x68] sm:$0xff]
        %v3383 = vld [vmem:[%s3368 + $0x70] sm:$0xff]
        %v3384 = vld [vmem:[%s3368 + $0x78] sm:$0xff]
        %v3385 = vld [vmem:[%s3368 + $0x80] sm:$0xff]
        %v3386 = vld [vmem:[%s3368 + $0x88] sm:$0xff]
        %v3387 = vld [vmem:[%s3368 + $0x90] sm:$0xff]
        %v3388 = vld [vmem:[%s3368 + $0x98] sm:$0xff]
        %v3389 = vld [vmem:[%s3368 + $0xa0] sm:$0xff]
        %v3390 = vld [vmem:[%s3368 + $0xa8] sm:$0xff]
        %v3391 = vld [vmem:[%s3368 + $0xb0] sm:$0xff]
        %v3392 = vld [vmem:[%s3368 + $0xb8] sm:$0xff]
        %v3393 = vld [vmem:[%s3368 + $0xc0] sm:$0xff]
        %v3394 = vld [vmem:[%s3368 + $0xc8] sm:$0xff]
        %v3395 = vld [vmem:[%s3368 + $0xd0] sm:$0xff]
        %v3396 = vld [vmem:[%s3368 + $0xd8] sm:$0xff]
        %v3397 = vld [vmem:[%s3368 + $0xe0] sm:$0xff]
        %v3398 = vld [vmem:[%s3368 + $0xe8] sm:$0xff]
        %v3399 = vld [vmem:[%s3368 + $0xf0] sm:$0xff]
        %v3400 = vld [vmem:[%s3368 + $0xf8] sm:$0xff]
        %s3401 = scalar_lea.vmem %s3, 384
        %v3402 = vld [vmem:[%s3401] sm:$0xff]
        %v3403 = vld [vmem:[%s3401 + $0x8] sm:$0xf]
        %v3404 = vld [vmem:[%s3401 + $0xc] sm:$0xff]
        %v3405 = vld [vmem:[%s3401 + $0x14] sm:$0xf]
        %v3406 = vld [vmem:[%s3401 + $0x18] sm:$0xff]
        %v3407 = vld [vmem:[%s3401 + $0x20] sm:$0xf]
        %v3408 = vld [vmem:[%s3401 + $0x24] sm:$0xff]
        %v3409 = vld [vmem:[%s3401 + $0x2c] sm:$0xf]
        %v3410 = vld [vmem:[%s3401 + $0x30] sm:$0xff]
        %v3411 = vld [vmem:[%s3401 + $0x38] sm:$0xf]
        %v3412 = vld [vmem:[%s3401 + $0x3c] sm:$0xff]
        %v3413 = vld [vmem:[%s3401 + $0x44] sm:$0xf]
        %v3414 = vld [vmem:[%s3401 + $0x48] sm:$0xff]
        %v3415 = vld [vmem:[%s3401 + $0x50] sm:$0xf]
        %v3416 = vld [vmem:[%s3401 + $0x54] sm:$0xff]
        %v3417 = vld [vmem:[%s3401 + $0x5c] sm:$0xf]
        %v3418 = vld [vmem:[%s3401 + $0x60] sm:$0xff]
        %v3419 = vld [vmem:[%s3401 + $0x68] sm:$0xf]
        %v3420 = vld [vmem:[%s3401 + $0x6c] sm:$0xff]
        %v3421 = vld [vmem:[%s3401 + $0x74] sm:$0xf]
        %v3422 = vld [vmem:[%s3401 + $0x78] sm:$0xff]
        %v3423 = vld [vmem:[%s3401 + $0x80] sm:$0xf]
        %v3424 = vld [vmem:[%s3401 + $0x84] sm:$0xff]
        %v3425 = vld [vmem:[%s3401 + $0x8c] sm:$0xf]
        %v3426 = vld [vmem:[%s3401 + $0x90] sm:$0xff]
        %v3427 = vld [vmem:[%s3401 + $0x98] sm:$0xf]
        %v3428 = vld [vmem:[%s3401 + $0x9c] sm:$0xff]
        %v3429 = vld [vmem:[%s3401 + $0xa4] sm:$0xf]
        %v3430 = vld [vmem:[%s3401 + $0xa8] sm:$0xff]
        %v3431 = vld [vmem:[%s3401 + $0xb0] sm:$0xf]
        %v3432 = vld [vmem:[%s3401 + $0xb4] sm:$0xff]
        %v3433 = vld [vmem:[%s3401 + $0xbc] sm:$0xf]
        %v3466 = vunpack.c.l.b16 %v3402
        %v3467 = vunpack.c.h.b16 %v3402
        %v3468 = vunpack.c.l.b16 %v3403
        %v3469 = vunpack.c.l.b16 %v3404
        %v3470 = vunpack.c.h.b16 %v3404
        %v3471 = vunpack.c.l.b16 %v3405
        %v3472 = vunpack.c.l.b16 %v3406
        %v3473 = vunpack.c.h.b16 %v3406
        %v3474 = vunpack.c.l.b16 %v3407
        %v3475 = vunpack.c.l.b16 %v3408
        %v3476 = vunpack.c.h.b16 %v3408
        %v3477 = vunpack.c.l.b16 %v3409
        %v3478 = vunpack.c.l.b16 %v3410
        %v3479 = vunpack.c.h.b16 %v3410
        %v3480 = vunpack.c.l.b16 %v3411
        %v3481 = vunpack.c.l.b16 %v3412
        %v3482 = vunpack.c.h.b16 %v3412
        %v3483 = vunpack.c.l.b16 %v3413
        %v3484 = vunpack.c.l.b16 %v3414
        %v3485 = vunpack.c.h.b16 %v3414
        %v3486 = vunpack.c.l.b16 %v3415
        %v3487 = vunpack.c.l.b16 %v3416
        %v3488 = vunpack.c.h.b16 %v3416
        %v3489 = vunpack.c.l.b16 %v3417
        %v3490 = vunpack.c.l.b16 %v3418
        %v3491 = vunpack.c.h.b16 %v3418
        %v3492 = vunpack.c.l.b16 %v3419
        %v3493 = vunpack.c.l.b16 %v3420
        %v3494 = vunpack.c.h.b16 %v3420
        %v3495 = vunpack.c.l.b16 %v3421
        %v3496 = vunpack.c.l.b16 %v3422
        %v3497 = vunpack.c.h.b16 %v3422
        %v3498 = vunpack.c.l.b16 %v3423
        %v3499 = vunpack.c.l.b16 %v3424
        %v3500 = vunpack.c.h.b16 %v3424
        %v3501 = vunpack.c.l.b16 %v3425
        %v3502 = vunpack.c.l.b16 %v3426
        %v3503 = vunpack.c.h.b16 %v3426
        %v3504 = vunpack.c.l.b16 %v3427
        %v3505 = vunpack.c.l.b16 %v3428
        %v3506 = vunpack.c.h.b16 %v3428
        %v3507 = vunpack.c.l.b16 %v3429
        %v3508 = vunpack.c.l.b16 %v3430
        %v3509 = vunpack.c.h.b16 %v3430
        %v3510 = vunpack.c.l.b16 %v3431
        %v3511 = vunpack.c.l.b16 %v3432
        %v3512 = vunpack.c.h.b16 %v3432
        %v3513 = vunpack.c.l.b16 %v3433
        %v3514 = vpack.c.b16 %v3469, %v3466
        %v3515 = vpack.c.b16 %v3470, %v3467
        %v3516 = vpack.c.b16 %v3471, %v3468
        %v3517 = vpack.c.b16 %v3475, %v3472
        %v3518 = vpack.c.b16 %v3476, %v3473
        %v3519 = vpack.c.b16 %v3477, %v3474
        %v3520 = vpack.c.b16 %v3481, %v3478
        %v3521 = vpack.c.b16 %v3482, %v3479
        %v3522 = vpack.c.b16 %v3483, %v3480
        %v3523 = vpack.c.b16 %v3487, %v3484
        %v3524 = vpack.c.b16 %v3488, %v3485
        %v3525 = vpack.c.b16 %v3489, %v3486
        %v3526 = vpack.c.b16 %v3493, %v3490
        %v3527 = vpack.c.b16 %v3494, %v3491
        %v3528 = vpack.c.b16 %v3495, %v3492
        %v3529 = vpack.c.b16 %v3499, %v3496
        %v3530 = vpack.c.b16 %v3500, %v3497
        %v3531 = vpack.c.b16 %v3501, %v3498
        %v3532 = vpack.c.b16 %v3505, %v3502
        %v3533 = vpack.c.b16 %v3506, %v3503
        %v3534 = vpack.c.b16 %v3507, %v3504
        %v3535 = vpack.c.b16 %v3511, %v3508
        %v3536 = vpack.c.b16 %v3512, %v3509
        %v3537 = vpack.c.b16 %v3513, %v3510
        %3562 = vmatprep.subr.bf16.mxu0 %v3515
        %3563 = vmatpush1.bf16.msra.mxu0 %v3514
        %3564 = vmatprep.subr.bf16.mxu0 %v3518
        %3565 = vmatpush1.bf16.msra.mxu0 %v3517
        %3566 = vmatprep.subr.bf16.mxu0 %v3521
        %3567 = vmatpush1.bf16.msra.mxu0 %v3520
        %3568 = vmatprep.subr.bf16.mxu0 %v3524
        %3569 = vmatpush1.bf16.msra.mxu0 %v3523
        %3570 = vmatprep.subr.bf16.mxu0 %v3527
        %3571 = vmatpush1.bf16.msra.mxu0 %v3526
        %3572 = vmatprep.subr.bf16.mxu0 %v3530
        %3573 = vmatpush1.bf16.msra.mxu0 %v3529
        %3574 = vmatprep.subr.bf16.mxu0 %v3533
        %3575 = vmatpush1.bf16.msra.mxu0 %v3532
        %3576 = vmatprep.subr.bf16.mxu0 %v3536
        %3577 = vmatpush1.bf16.msra.mxu0 %v3535
        %3578 = vmatprep.subr.bf16.mxu0 0
        %3579 = vmatpush1.bf16.msra.mxu0 0
        %3580 = vmatprep.subr.bf16.mxu0 0
        %3581 = vmatpush1.bf16.msra.mxu0 0
        %3582 = vmatprep.subr.bf16.mxu0 0
        %3583 = vmatpush1.bf16.msra.mxu0 0
        %3584 = vmatprep.subr.bf16.mxu0 0
        %3585 = vmatpush1.bf16.msra.mxu0 0
        %3586 = vmatprep.subr.bf16.mxu0 0
        %3587 = vmatpush1.bf16.msra.mxu0 0
        %3588 = vmatprep.subr.bf16.mxu0 0
        %3589 = vmatpush1.bf16.msra.mxu0 0
        %3590 = vmatprep.subr.bf16.mxu0 0
        %3591 = vmatpush1.bf16.msra.mxu0 0
        %3592 = vmatprep.subr.bf16.mxu0 0
        %3593 = vmatpush1.bf16.msra.mxu0 0
        %3594 = vmatprep.mubr.bf16.mxu0 0
        %3595 = vmatmul.mubr.bf16.gmra.mrb[0].mxu0 %v3369
        %v3596 = vpop.f32.mrb[0].mxu0
        %v3597 = vadd.f32 0.0, %v3596
        %v3598 = vpop.f32.mrb[0].mxu0
        %v3599 = vadd.f32 0.0, %v3598
        %v3600 = vpop.f32.mrb[0].mxu0
        %v3601 = vadd.f32 0.0, %v3600
        %v3602 = vpop.f32.mrb[0].mxu0
        %v3603 = vadd.f32 0.0, %v3602
        %3604 = vmatprep.mubr.bf16.mxu0 0
        %3605 = vmatmul.mubr.bf16.gmra.mrb[0].mxu0 %v3370
        %v3606 = vpop.f32.mrb[0].mxu0
        %v3607 = vpop.f32.mrb[0].mxu0
        %v3608 = vadd.f32 0.0, %v3607
        %v3609 = vpop.f32.mrb[0].mxu0
        %v3610 = vpop.f32.mrb[0].mxu0
        %3611 = vmatprep.mubr.bf16.mxu0 0
        %3612 = vmatmul.mubr.bf16.gmra.mrb[0].mxu0 %v3371
        %v3613 = vpop.f32.mrb[0].mxu0
        %v3614 = vadd.f32 0.0, %v3613
        %v3615 = vpop.f32.mrb[0].mxu0
        %v3616 = vadd.f32 0.0, %v3615
        %v3617 = vpop.f32.mrb[0].mxu0
        %v3618 = vadd.f32 0.0, %v3617
        %v3619 = vpop.f32.mrb[0].mxu0
        %v3620 = vadd.f32 0.0, %v3619
        %3621 = vmatprep.mubr.bf16.mxu0 0
        %3622 = vmatmul.mubr.bf16.gmra.mrb[0].mxu0 %v3372
        %v3623 = vpop.f32.mrb[0].mxu0
        %v3624 = vpop.f32.mrb[0].mxu0
        %v3625 = vadd.f32 0.0, %v3624
        %v3626 = vpop.f32.mrb[0].mxu0
        %v3627 = vpop.f32.mrb[0].mxu0
        %3628 = vmatprep.mubr.bf16.mxu0 0
        %3629 = vmatmul.mubr.bf16.gmra.mrb[0].mxu0 %v3373
        %v3630 = vpop.f32.mrb[0].mxu0
        %v3631 = vadd.f32 0.0, %v3630
        %v3632 = vpop.f32.mrb[0].mxu0
        %v3633 = vadd.f32 0.0, %v3632
        %v3634 = vpop.f32.mrb[0].mxu0
        %v3635 = vadd.f32 0.0, %v3634
        %v3636 = vpop.f32.mrb[0].mxu0
        %v3637 = vadd.f32 0.0, %v3636
        %3638 = vmatprep.mubr.bf16.mxu0 0
        %3639 = vmatmul.mubr.bf16.gmra.mrb[0].mxu0 %v3374
        %v3640 = vpop.f32.mrb[0].mxu0
        %v3641 = vpop.f32.mrb[0].mxu0
        %v3642 = vadd.f32 0.0, %v3641
        %v3643 = vpop.f32.mrb[0].mxu0
        %v3644 = vpop.f32.mrb[0].mxu0
        %3645 = vmatprep.mubr.bf16.mxu0 0
        %3646 = vmatmul.mubr.bf16.gmra.mrb[0].mxu0 %v3375
        %v3647 = vpop.f32.mrb[0].mxu0
        %v3648 = vadd.f32 0.0, %v3647
        %v3649 = vpop.f32.mrb[0].mxu0
        %v3650 = vadd.f32 0.0, %v3649
        %v3651 = vpop.f32.mrb[0].mxu0
        %v3652 = vadd.f32 0.0, %v3651
        %v3653 = vpop.f32.mrb[0].mxu0
        %v3654 = vadd.f32 0.0, %v3653
        %3655 = vmatprep.mubr.bf16.mxu0 0
        %3656 = vmatmul.mubr.bf16.gmra.mrb[0].mxu0 %v3376
        %v3657 = vpop.f32.mrb[0].mxu0
        %v3658 = vpop.f32.mrb[0].mxu0
        %v3659 = vadd.f32 0.0, %v3658
        %v3660 = vpop.f32.mrb[0].mxu0
        %v3661 = vpop.f32.mrb[0].mxu0
        %3662 = vmatprep.mubr.bf16.mxu0 0
        %3663 = vmatmul.mubr.bf16.gmra.mrb[0].mxu0 %v3377
        %v3664 = vpop.f32.mrb[0].mxu0
        %v3665 = vadd.f32 0.0, %v3664
        %v3666 = vpop.f32.mrb[0].mxu0
        %v3667 = vadd.f32 0.0, %v3666
        %v3668 = vpop.f32.mrb[0].mxu0
        %v3669 = vadd.f32 0.0, %v3668
        %v3670 = vpop.f32.mrb[0].mxu0
        %v3671 = vadd.f32 0.0, %v3670
        %3672 = vmatprep.mubr.bf16.mxu0 0
        %3673 = vmatmul.mubr.bf16.gmra.mrb[0].mxu0 %v3378
        %v3674 = vpop.f32.mrb[0].mxu0
        %v3675 = vpop.f32.mrb[0].mxu0
        %v3676 = vadd.f32 0.0, %v3675
        %v3677 = vpop.f32.mrb[0].mxu0
        %v3678 = vpop.f32.mrb[0].mxu0
        %3679 = vmatprep.mubr.bf16.mxu0 0
        %3680 = vmatmul.mubr.bf16.gmra.mrb[0].mxu0 %v3379
        %v3681 = vpop.f32.mrb[0].mxu0
        %v3682 = vadd.f32 0.0, %v3681
        %v3683 = vpop.f32.mrb[0].mxu0
        %v3684 = vadd.f32 0.0, %v3683
        %v3685 = vpop.f32.mrb[0].mxu0
        %v3686 = vadd.f32 0.0, %v3685
        %v3687 = vpop.f32.mrb[0].mxu0
        %v3688 = vadd.f32 0.0, %v3687
        %3689 = vmatprep.mubr.bf16.mxu0 0
        %3690 = vmatmul.mubr.bf16.gmra.mrb[0].mxu0 %v3380
        %v3691 = vpop.f32.mrb[0].mxu0
        %v3692 = vpop.f32.mrb[0].mxu0
        %v3693 = vadd.f32 0.0, %v3692
        %v3694 = vpop.f32.mrb[0].mxu0
        %v3695 = vpop.f32.mrb[0].mxu0
        %3696 = vmatprep.mubr.bf16.mxu0 0
        %3697 = vmatmul.mubr.bf16.gmra.mrb[0].mxu0 %v3381
        %v3698 = vpop.f32.mrb[0].mxu0
        %v3699 = vadd.f32 0.0, %v3698
        %v3700 = vpop.f32.mrb[0].mxu0
        %v3701 = vadd.f32 0.0, %v3700
        %v3702 = vpop.f32.mrb[0].mxu0
        %v3703 = vadd.f32 0.0, %v3702
        %v3704 = vpop.f32.mrb[0].mxu0
        %v3705 = vadd.f32 0.0, %v3704
        %3706 = vmatprep.mubr.bf16.mxu0 0
        %3707 = vmatmul.mubr.bf16.gmra.mrb[0].mxu0 %v3382
        %v3708 = vpop.f32.mrb[0].mxu0
        %v3709 = vpop.f32.mrb[0].mxu0
        %v3710 = vadd.f32 0.0, %v3709
        %v3711 = vpop.f32.mrb[0].mxu0
        %v3712 = vpop.f32.mrb[0].mxu0
        %3713 = vmatprep.mubr.bf16.mxu0 0
        %3714 = vmatmul.mubr.bf16.gmra.mrb[0].mxu0 %v3383
        %v3715 = vpop.f32.mrb[0].mxu0
        %v3716 = vadd.f32 0.0, %v3715
        %v3717 = vpop.f32.mrb[0].mxu0
        %v3718 = vadd.f32 0.0, %v3717
        %v3719 = vpop.f32.mrb[0].mxu0
        %v3720 = vadd.f32 0.0, %v3719
        %v3721 = vpop.f32.mrb[0].mxu0
        %v3722 = vadd.f32 0.0, %v3721
        %3723 = vmatprep.mubr.bf16.mxu0 0
        %3724 = vmatmul.mubr.bf16.gmra.mrb[0].mxu0 %v3384
        %v3725 = vpop.f32.mrb[0].mxu0
        %v3726 = vpop.f32.mrb[0].mxu0
        %v3727 = vadd.f32 0.0, %v3726
        %v3728 = vpop.f32.mrb[0].mxu0
        %v3729 = vpop.f32.mrb[0].mxu0
        %3730 = vmatprep.mubr.bf16.mxu0 0
        %3731 = vmatmul.mubr.bf16.gmra.mrb[0].mxu0 %v3385
        %v3732 = vpop.f32.mrb[0].mxu0
        %v3733 = vadd.f32 0.0, %v3732
        %v3734 = vpop.f32.mrb[0].mxu0
        %v3735 = vadd.f32 0.0, %v3734
        %v3736 = vpop.f32.mrb[0].mxu0
        %v3737 = vadd.f32 0.0, %v3736
        %v3738 = vpop.f32.mrb[0].mxu0
        %v3739 = vadd.f32 0.0, %v3738
        %3740 = vmatprep.mubr.bf16.mxu0 0
        %3741 = vmatmul.mubr.bf16.gmra.mrb[0].mxu0 %v3386
        %v3742 = vpop.f32.mrb[0].mxu0
        %v3743 = vpop.f32.mrb[0].mxu0
        %v3744 = vadd.f32 0.0, %v3743
        %v3745 = vpop.f32.mrb[0].mxu0
        %v3746 = vpop.f32.mrb[0].mxu0
        %3747 = vmatprep.mubr.bf16.mxu0 0
        %3748 = vmatmul.mubr.bf16.gmra.mrb[0].mxu0 %v3387
        %v3749 = vpop.f32.mrb[0].mxu0
        %v3750 = vadd.f32 0.0, %v3749
        %v3751 = vpop.f32.mrb[0].mxu0
        %v3752 = vadd.f32 0.0, %v3751
        %v3753 = vpop.f32.mrb[0].mxu0
        %v3754 = vadd.f32 0.0, %v3753
        %v3755 = vpop.f32.mrb[0].mxu0
        %v3756 = vadd.f32 0.0, %v3755
        %3757 = vmatprep.mubr.bf16.mxu0 0
        %3758 = vmatmul.mubr.bf16.gmra.mrb[0].mxu0 %v3388
        %v3759 = vpop.f32.mrb[0].mxu0
        %v3760 = vpop.f32.mrb[0].mxu0
        %v3761 = vadd.f32 0.0, %v3760
        %v3762 = vpop.f32.mrb[0].mxu0
        %v3763 = vpop.f32.mrb[0].mxu0
        %3764 = vmatprep.mubr.bf16.mxu0 0
        %3765 = vmatmul.mubr.bf16.gmra.mrb[0].mxu0 %v3389
        %v3766 = vpop.f32.mrb[0].mxu0
        %v3767 = vadd.f32 0.0, %v3766
        %v3768 = vpop.f32.mrb[0].mxu0
        %v3769 = vadd.f32 0.0, %v3768
        %v3770 = vpop.f32.mrb[0].mxu0
        %v3771 = vadd.f32 0.0, %v3770
        %v3772 = vpop.f32.mrb[0].mxu0
        %v3773 = vadd.f32 0.0, %v3772
        %3774 = vmatprep.mubr.bf16.mxu0 0
        %3775 = vmatmul.mubr.bf16.gmra.mrb[0].mxu0 %v3390
        %v3776 = vpop.f32.mrb[0].mxu0
        %v3777 = vpop.f32.mrb[0].mxu0
        %v3778 = vadd.f32 0.0, %v3777
        %v3779 = vpop.f32.mrb[0].mxu0
        %v3780 = vpop.f32.mrb[0].mxu0
        %3781 = vmatprep.mubr.bf16.mxu0 0
        %3782 = vmatmul.mubr.bf16.gmra.mrb[0].mxu0 %v3391
        %v3783 = vpop.f32.mrb[0].mxu0
        %v3784 = vadd.f32 0.0, %v3783
        %v3785 = vpop.f32.mrb[0].mxu0
        %v3786 = vadd.f32 0.0, %v3785
        %v3787 = vpop.f32.mrb[0].mxu0
        %v3788 = vadd.f32 0.0, %v3787
        %v3789 = vpop.f32.mrb[0].mxu0
        %v3790 = vadd.f32 0.0, %v3789
        %3791 = vmatprep.mubr.bf16.mxu0 0
        %3792 = vmatmul.mubr.bf16.gmra.mrb[0].mxu0 %v3392
        %v3793 = vpop.f32.mrb[0].mxu0
        %v3794 = vpop.f32.mrb[0].mxu0
        %v3795 = vadd.f32 0.0, %v3794
        %v3796 = vpop.f32.mrb[0].mxu0
        %v3797 = vpop.f32.mrb[0].mxu0
        %3798 = vmatprep.mubr.bf16.mxu0 0
        %3799 = vmatmul.mubr.bf16.gmra.mrb[0].mxu0 %v3393
        %v3800 = vpop.f32.mrb[0].mxu0
        %v3801 = vadd.f32 0.0, %v3800
        %v3802 = vpop.f32.mrb[0].mxu0
        %v3803 = vadd.f32 0.0, %v3802
        %v3804 = vpop.f32.mrb[0].mxu0
        %v3805 = vadd.f32 0.0, %v3804
        %v3806 = vpop.f32.mrb[0].mxu0
        %v3807 = vadd.f32 0.0, %v3806
        %3808 = vmatprep.mubr.bf16.mxu0 0
        %3809 = vmatmul.mubr.bf16.gmra.mrb[0].mxu0 %v3394
        %v3810 = vpop.f32.mrb[0].mxu0
        %v3811 = vpop.f32.mrb[0].mxu0
        %v3812 = vadd.f32 0.0, %v3811
        %v3813 = vpop.f32.mrb[0].mxu0
        %v3814 = vpop.f32.mrb[0].mxu0
        %3815 = vmatprep.mubr.bf16.mxu0 0
        %3816 = vmatmul.mubr.bf16.gmra.mrb[0].mxu0 %v3395
        %v3817 = vpop.f32.mrb[0].mxu0
        %v3818 = vadd.f32 0.0, %v3817
        %v3819 = vpop.f32.mrb[0].mxu0
        %v3820 = vadd.f32 0.0, %v3819
        %v3821 = vpop.f32.mrb[0].mxu0
        %v3822 = vadd.f32 0.0, %v3821
        %v3823 = vpop.f32.mrb[0].mxu0
        %v3824 = vadd.f32 0.0, %v3823
        %3825 = vmatprep.mubr.bf16.mxu0 0
        %3826 = vmatmul.mubr.bf16.gmra.mrb[0].mxu0 %v3396
        %v3827 = vpop.f32.mrb[0].mxu0
        %v3828 = vpop.f32.mrb[0].mxu0
        %v3829 = vadd.f32 0.0, %v3828
        %v3830 = vpop.f32.mrb[0].mxu0
        %v3831 = vpop.f32.mrb[0].mxu0
        %3832 = vmatprep.mubr.bf16.mxu0 0
        %3833 = vmatmul.mubr.bf16.gmra.mrb[0].mxu0 %v3397
        %v3834 = vpop.f32.mrb[0].mxu0
        %v3835 = vadd.f32 0.0, %v3834
        %v3836 = vpop.f32.mrb[0].mxu0
        %v3837 = vadd.f32 0.0, %v3836
        %v3838 = vpop.f32.mrb[0].mxu0
        %v3839 = vadd.f32 0.0, %v3838
        %v3840 = vpop.f32.mrb[0].mxu0
        %v3841 = vadd.f32 0.0, %v3840
        %3842 = vmatprep.mubr.bf16.mxu0 0
        %3843 = vmatmul.mubr.bf16.gmra.mrb[0].mxu0 %v3398
        %v3844 = vpop.f32.mrb[0].mxu0
        %v3845 = vpop.f32.mrb[0].mxu0
        %v3846 = vadd.f32 0.0, %v3845
        %v3847 = vpop.f32.mrb[0].mxu0
        %v3848 = vpop.f32.mrb[0].mxu0
        %3849 = vmatprep.mubr.bf16.mxu0 0
        %3850 = vmatmul.mubr.bf16.gmra.mrb[0].mxu0 %v3399
        %v3851 = vpop.f32.mrb[0].mxu0
        %v3852 = vadd.f32 0.0, %v3851
        %v3853 = vpop.f32.mrb[0].mxu0
        %v3854 = vadd.f32 0.0, %v3853
        %v3855 = vpop.f32.mrb[0].mxu0
        %v3856 = vadd.f32 0.0, %v3855
        %v3857 = vpop.f32.mrb[0].mxu0
        %v3858 = vadd.f32 0.0, %v3857
        %3859 = vmatprep.mubr.bf16.mxu0 0
        %3860 = vmatmul.mubr.bf16.gmra.mrb[0].mxu0 %v3400
        %v3861 = vpop.f32.mrb[0].mxu0
        %v3862 = vpop.f32.mrb[0].mxu0
        %v3863 = vadd.f32 0.0, %v3862
        %v3864 = vpop.f32.mrb[0].mxu0
        %v3865 = vpop.f32.mrb[0].mxu0
        %3866 = vdwg.mxu0
        %3867 = vmatprep.subr.bf16.mxu0 0
        %3868 = vmatpush1.bf16.msra.mxu0 %v3516
        %3869 = vmatprep.subr.bf16.mxu0 0
        %3870 = vmatpush1.bf16.msra.mxu0 %v3519
        %3871 = vmatprep.subr.bf16.mxu0 0
        %3872 = vmatpush1.bf16.msra.mxu0 %v3522
        %3873 = vmatprep.subr.bf16.mxu0 0
        %3874 = vmatpush1.bf16.msra.mxu0 %v3525
        %3875 = vmatprep.subr.bf16.mxu0 0
        %3876 = vmatpush1.bf16.msra.mxu0 %v3528
        %3877 = vmatprep.subr.bf16.mxu0 0
        %3878 = vmatpush1.bf16.msra.mxu0 %v3531
        %3879 = vmatprep.subr.bf16.mxu0 0
        %3880 = vmatpush1.bf16.msra.mxu0 %v3534
        %3881 = vmatprep.subr.bf16.mxu0 0
        %3882 = vmatpush1.bf16.msra.mxu0 %v3537
        %3883 = vmatprep.subr.bf16.mxu0 0
        %3884 = vmatpush1.bf16.msra.mxu0 0
        %3885 = vmatprep.subr.bf16.mxu0 0
        %3886 = vmatpush1.bf16.msra.mxu0 0
        %3887 = vmatprep.subr.bf16.mxu0 0
        %3888 = vmatpush1.bf16.msra.mxu0 0
        %3889 = vmatprep.subr.bf16.mxu0 0
        %3890 = vmatpush1.bf16.msra.mxu0 0
        %3891 = vmatprep.subr.bf16.mxu0 0
        %3892 = vmatpush1.bf16.msra.mxu0 0
        %3893 = vmatprep.subr.bf16.mxu0 0
        %3894 = vmatpush1.bf16.msra.mxu0 0
        %3895 = vmatprep.subr.bf16.mxu0 0
        %3896 = vmatpush1.bf16.msra.mxu0 0
        %3897 = vmatprep.subr.bf16.mxu0 0
        %3898 = vmatpush1.bf16.msra.mxu0 0
        %3899 = vmatprep.mubr.bf16.mxu0 0
        %3900 = vmatmul.mubr.bf16.gmra.mrb[0].mxu0 %v3369
        %v3901 = vpop.f32.mrb[0].mxu0
        %v3902 = vadd.f32 0.0, %v3901
        %v3903 = vpop.f32.mrb[0].mxu0
        %v3904 = vpop.f32.mrb[0].mxu0
        %v3905 = vadd.f32 0.0, %v3904
        %v3906 = vpop.f32.mrb[0].mxu0
        %3907 = vmatprep.mubr.bf16.mxu0 0
        %3908 = vmatmul.mubr.bf16.gmra.mrb[0].mxu0 %v3370
        %v3909 = vpop.f32.mrb[0].mxu0
        %v3910 = vadd.f32 0.0, %v3909
        %v3911 = vpop.f32.mrb[0].mxu0
        %v3912 = vpop.f32.mrb[0].mxu0
        %v3913 = vpop.f32.mrb[0].mxu0
        %3914 = vmatprep.mubr.bf16.mxu0 0
        %3915 = vmatmul.mubr.bf16.gmra.mrb[0].mxu0 %v3371
        %v3916 = vpop.f32.mrb[0].mxu0
        %v3917 = vadd.f32 0.0, %v3916
        %v3918 = vpop.f32.mrb[0].mxu0
        %v3919 = vpop.f32.mrb[0].mxu0
        %v3920 = vadd.f32 0.0, %v3919
        %v3921 = vpop.f32.mrb[0].mxu0
        %3922 = vmatprep.mubr.bf16.mxu0 0
        %3923 = vmatmul.mubr.bf16.gmra.mrb[0].mxu0 %v3372
        %v3924 = vpop.f32.mrb[0].mxu0
        %v3925 = vadd.f32 0.0, %v3924
        %v3926 = vpop.f32.mrb[0].mxu0
        %v3927 = vpop.f32.mrb[0].mxu0
        %v3928 = vpop.f32.mrb[0].mxu0
        %3929 = vmatprep.mubr.bf16.mxu0 0
        %3930 = vmatmul.mubr.bf16.gmra.mrb[0].mxu0 %v3373
        %v3931 = vpop.f32.mrb[0].mxu0
        %v3932 = vadd.f32 0.0, %v3931
        %v3933 = vpop.f32.mrb[0].mxu0
        %v3934 = vpop.f32.mrb[0].mxu0
        %v3935 = vadd.f32 0.0, %v3934
        %v3936 = vpop.f32.mrb[0].mxu0
        %3937 = vmatprep.mubr.bf16.mxu0 0
        %3938 = vmatmul.mubr.bf16.gmra.mrb[0].mxu0 %v3374
        %v3939 = vpop.f32.mrb[0].mxu0
        %v3940 = vadd.f32 0.0, %v3939
        %v3941 = vpop.f32.mrb[0].mxu0
        %v3942 = vpop.f32.mrb[0].mxu0
        %v3943 = vpop.f32.mrb[0].mxu0
        %3944 = vmatprep.mubr.bf16.mxu0 0
        %3945 = vmatmul.mubr.bf16.gmra.mrb[0].mxu0 %v3375
        %v3946 = vpop.f32.mrb[0].mxu0
        %v3947 = vadd.f32 0.0, %v3946
        %v3948 = vpop.f32.mrb[0].mxu0
        %v3949 = vpop.f32.mrb[0].mxu0
        %v3950 = vadd.f32 0.0, %v3949
        %v3951 = vpop.f32.mrb[0].mxu0
        %3952 = vmatprep.mubr.bf16.mxu0 0
        %3953 = vmatmul.mubr.bf16.gmra.mrb[0].mxu0 %v3376
        %v3954 = vpop.f32.mrb[0].mxu0
        %v3955 = vadd.f32 0.0, %v3954
        %v3956 = vpop.f32.mrb[0].mxu0
        %v3957 = vpop.f32.mrb[0].mxu0
        %v3958 = vpop.f32.mrb[0].mxu0
        %3959 = vmatprep.mubr.bf16.mxu0 0
        %3960 = vmatmul.mubr.bf16.gmra.mrb[0].mxu0 %v3377
        %v3961 = vpop.f32.mrb[0].mxu0
        %v3962 = vadd.f32 0.0, %v3961
        %v3963 = vpop.f32.mrb[0].mxu0
        %v3964 = vpop.f32.mrb[0].mxu0
        %v3965 = vadd.f32 0.0, %v3964
        %v3966 = vpop.f32.mrb[0].mxu0
        %3967 = vmatprep.mubr.bf16.mxu0 0
        %3968 = vmatmul.mubr.bf16.gmra.mrb[0].mxu0 %v3378
        %v3969 = vpop.f32.mrb[0].mxu0
        %v3970 = vadd.f32 0.0, %v3969
        %v3971 = vpop.f32.mrb[0].mxu0
        %v3972 = vpop.f32.mrb[0].mxu0
        %v3973 = vpop.f32.mrb[0].mxu0
        %3974 = vmatprep.mubr.bf16.mxu0 0
        %3975 = vmatmul.mubr.bf16.gmra.mrb[0].mxu0 %v3379
        %v3976 = vpop.f32.mrb[0].mxu0
        %v3977 = vadd.f32 0.0, %v3976
        %v3978 = vpop.f32.mrb[0].mxu0
        %v3979 = vpop.f32.mrb[0].mxu0
        %v3980 = vadd.f32 0.0, %v3979
        %v3981 = vpop.f32.mrb[0].mxu0
        %3982 = vmatprep.mubr.bf16.mxu0 0
        %3983 = vmatmul.mubr.bf16.gmra.mrb[0].mxu0 %v3380
        %v3984 = vpop.f32.mrb[0].mxu0
        %v3985 = vadd.f32 0.0, %v3984
        %v3986 = vpop.f32.mrb[0].mxu0
        %v3987 = vpop.f32.mrb[0].mxu0
        %v3988 = vpop.f32.mrb[0].mxu0
        %3989 = vmatprep.mubr.bf16.mxu0 0
        %3990 = vmatmul.mubr.bf16.gmra.mrb[0].mxu0 %v3381
        %v3991 = vpop.f32.mrb[0].mxu0
        %v3992 = vadd.f32 0.0, %v3991
        %v3993 = vpop.f32.mrb[0].mxu0
        %v3994 = vpop.f32.mrb[0].mxu0
        %v3995 = vadd.f32 0.0, %v3994
        %v3996 = vpop.f32.mrb[0].mxu0
        %3997 = vmatprep.mubr.bf16.mxu0 0
        %3998 = vmatmul.mubr.bf16.gmra.mrb[0].mxu0 %v3382
        %v3999 = vpop.f32.mrb[0].mxu0
        %v4000 = vadd.f32 0.0, %v3999
        %v4001 = vpop.f32.mrb[0].mxu0
        %v4002 = vpop.f32.mrb[0].mxu0
        %v4003 = vpop.f32.mrb[0].mxu0
        %4004 = vmatprep.mubr.bf16.mxu0 0
        %4005 = vmatmul.mubr.bf16.gmra.mrb[0].mxu0 %v3383
        %v4006 = vpop.f32.mrb[0].mxu0
        %v4007 = vadd.f32 0.0, %v4006
        %v4008 = vpop.f32.mrb[0].mxu0
        %v4009 = vpop.f32.mrb[0].mxu0
        %v4010 = vadd.f32 0.0, %v4009
        %v4011 = vpop.f32.mrb[0].mxu0
        %4012 = vmatprep.mubr.bf16.mxu0 0
        %4013 = vmatmul.mubr.bf16.gmra.mrb[0].mxu0 %v3384
        %v4014 = vpop.f32.mrb[0].mxu0
        %v4015 = vadd.f32 0.0, %v4014
        %v4016 = vpop.f32.mrb[0].mxu0
        %v4017 = vpop.f32.mrb[0].mxu0
        %v4018 = vpop.f32.mrb[0].mxu0
        %4019 = vmatprep.mubr.bf16.mxu0 0
        %4020 = vmatmul.mubr.bf16.gmra.mrb[0].mxu0 %v3385
        %v4021 = vpop.f32.mrb[0].mxu0
        %v4022 = vadd.f32 0.0, %v4021
        %v4023 = vpop.f32.mrb[0].mxu0
        %v4024 = vpop.f32.mrb[0].mxu0
        %v4025 = vadd.f32 0.0, %v4024
        %v4026 = vpop.f32.mrb[0].mxu0
        %4027 = vmatprep.mubr.bf16.mxu0 0
        %4028 = vmatmul.mubr.bf16.gmra.mrb[0].mxu0 %v3386
        %v4029 = vpop.f32.mrb[0].mxu0
        %v4030 = vadd.f32 0.0, %v4029
        %v4031 = vpop.f32.mrb[0].mxu0
        %v4032 = vpop.f32.mrb[0].mxu0
        %v4033 = vpop.f32.mrb[0].mxu0
        %4034 = vmatprep.mubr.bf16.mxu0 0
        %4035 = vmatmul.mubr.bf16.gmra.mrb[0].mxu0 %v3387
        %v4036 = vpop.f32.mrb[0].mxu0
        %v4037 = vadd.f32 0.0, %v4036
        %v4038 = vpop.f32.mrb[0].mxu0
        %v4039 = vpop.f32.mrb[0].mxu0
        %v4040 = vadd.f32 0.0, %v4039
        %v4041 = vpop.f32.mrb[0].mxu0
        %4042 = vmatprep.mubr.bf16.mxu0 0
        %4043 = vmatmul.mubr.bf16.gmra.mrb[0].mxu0 %v3388
        %v4044 = vpop.f32.mrb[0].mxu0
        %v4045 = vadd.f32 0.0, %v4044
        %v4046 = vpop.f32.mrb[0].mxu0
        %v4047 = vpop.f32.mrb[0].mxu0
        %v4048 = vpop.f32.mrb[0].mxu0
        %4049 = vmatprep.mubr.bf16.mxu0 0
        %4050 = vmatmul.mubr.bf16.gmra.mrb[0].mxu0 %v3389
        %v4051 = vpop.f32.mrb[0].mxu0
        %v4052 = vadd.f32 0.0, %v4051
        %v4053 = vpop.f32.mrb[0].mxu0
        %v4054 = vpop.f32.mrb[0].mxu0
        %v4055 = vadd.f32 0.0, %v4054
        %v4056 = vpop.f32.mrb[0].mxu0
        %4057 = vmatprep.mubr.bf16.mxu0 0
        %4058 = vmatmul.mubr.bf16.gmra.mrb[0].mxu0 %v3390
        %v4059 = vpop.f32.mrb[0].mxu0
        %v4060 = vadd.f32 0.0, %v4059
        %v4061 = vpop.f32.mrb[0].mxu0
        %v4062 = vpop.f32.mrb[0].mxu0
        %v4063 = vpop.f32.mrb[0].mxu0
        %4064 = vmatprep.mubr.bf16.mxu0 0
        %4065 = vmatmul.mubr.bf16.gmra.mrb[0].mxu0 %v3391
        %v4066 = vpop.f32.mrb[0].mxu0
        %v4067 = vadd.f32 0.0, %v4066
        %v4068 = vpop.f32.mrb[0].mxu0
        %v4069 = vpop.f32.mrb[0].mxu0
        %v4070 = vadd.f32 0.0, %v4069
        %v4071 = vpop.f32.mrb[0].mxu0
        %4072 = vmatprep.mubr.bf16.mxu0 0
        %4073 = vmatmul.mubr.bf16.gmra.mrb[0].mxu0 %v3392
        %v4074 = vpop.f32.mrb[0].mxu0
        %v4075 = vadd.f32 0.0, %v4074
        %v4076 = vpop.f32.mrb[0].mxu0
        %v4077 = vpop.f32.mrb[0].mxu0
        %v4078 = vpop.f32.mrb[0].mxu0
        %4079 = vmatprep.mubr.bf16.mxu0 0
        %4080 = vmatmul.mubr.bf16.gmra.mrb[0].mxu0 %v3393
        %v4081 = vpop.f32.mrb[0].mxu0
        %v4082 = vadd.f32 0.0, %v4081
        %v4083 = vpop.f32.mrb[0].mxu0
        %v4084 = vpop.f32.mrb[0].mxu0
        %v4085 = vadd.f32 0.0, %v4084
        %v4086 = vpop.f32.mrb[0].mxu0
        %4087 = vmatprep.mubr.bf16.mxu0 0
        %4088 = vmatmul.mubr.bf16.gmra.mrb[0].mxu0 %v3394
        %v4089 = vpop.f32.mrb[0].mxu0
        %v4090 = vadd.f32 0.0, %v4089
        %v4091 = vpop.f32.mrb[0].mxu0
        %v4092 = vpop.f32.mrb[0].mxu0
        %v4093 = vpop.f32.mrb[0].mxu0
        %4094 = vmatprep.mubr.bf16.mxu0 0
        %4095 = vmatmul.mubr.bf16.gmra.mrb[0].mxu0 %v3395
        %v4096 = vpop.f32.mrb[0].mxu0
        %v4097 = vadd.f32 0.0, %v4096
        %v4098 = vpop.f32.mrb[0].mxu0
        %v4099 = vpop.f32.mrb[0].mxu0
        %v4100 = vadd.f32 0.0, %v4099
        %v4101 = vpop.f32.mrb[0].mxu0
        %4102 = vmatprep.mubr.bf16.mxu0 0
        %4103 = vmatmul.mubr.bf16.gmra.mrb[0].mxu0 %v3396
        %v4104 = vpop.f32.mrb[0].mxu0
        %v4105 = vadd.f32 0.0, %v4104
        %v4106 = vpop.f32.mrb[0].mxu0
        %v4107 = vpop.f32.mrb[0].mxu0
        %v4108 = vpop.f32.mrb[0].mxu0
        %4109 = vmatprep.mubr.bf16.mxu0 0
        %4110 = vmatmul.mubr.bf16.gmra.mrb[0].mxu0 %v3397
        %v4111 = vpop.f32.mrb[0].mxu0
        %v4112 = vadd.f32 0.0, %v4111
        %v4113 = vpop.f32.mrb[0].mxu0
        %v4114 = vpop.f32.mrb[0].mxu0
        %v4115 = vadd.f32 0.0, %v4114
        %v4116 = vpop.f32.mrb[0].mxu0
        %4117 = vmatprep.mubr.bf16.mxu0 0
        %4118 = vmatmul.mubr.bf16.gmra.mrb[0].mxu0 %v3398
        %v4119 = vpop.f32.mrb[0].mxu0
        %v4120 = vadd.f32 0.0, %v4119
        %v4121 = vpop.f32.mrb[0].mxu0
        %v4122 = vpop.f32.mrb[0].mxu0
        %v4123 = vpop.f32.mrb[0].mxu0
        %4124 = vmatprep.mubr.bf16.mxu0 0
        %4125 = vmatmul.mubr.bf16.gmra.mrb[0].mxu0 %v3399
        %v4126 = vpop.f32.mrb[0].mxu0
        %v4127 = vadd.f32 0.0, %v4126
        %v4128 = vpop.f32.mrb[0].mxu0
        %v4129 = vpop.f32.mrb[0].mxu0
        %v4130 = vadd.f32 0.0, %v4129
        %v4131 = vpop.f32.mrb[0].mxu0
        %4132 = vmatprep.mubr.bf16.mxu0 0
        %4133 = vmatmul.mubr.bf16.gmra.mrb[0].mxu0 %v3400
        %v4134 = vpop.f32.mrb[0].mxu0
        %v4135 = vadd.f32 0.0, %v4134
        %v4136 = vpop.f32.mrb[0].mxu0
        %v4137 = vpop.f32.mrb[0].mxu0
        %v4138 = vpop.f32.mrb[0].mxu0
        %4139 = vdwg.mxu0
        %v4188 = vrot.slane %v3599, 1
        %v4189 = vrot.slane %v3603, 1
        %v4190 = vsel %vm1747, %v4188, %v4189
        %v4191 = vrot.slane %v3608, 1
        %v4192 = vsel %vm1747, %v4189, %v4191
        %v4193 = vrot.slane %v3616, 1
        %v4194 = vrot.slane %v3620, 1
        %v4195 = vsel %vm1747, %v4193, %v4194
        %v4196 = vrot.slane %v3625, 1
        %v4197 = vsel %vm1747, %v4194, %v4196
        %v4198 = vrot.slane %v3633, 1
        %v4199 = vrot.slane %v3637, 1
        %v4200 = vsel %vm1747, %v4198, %v4199
        %v4201 = vrot.slane %v3642, 1
        %v4202 = vsel %vm1747, %v4199, %v4201
        %v4203 = vrot.slane %v3650, 1
        %v4204 = vrot.slane %v3654, 1
        %v4205 = vsel %vm1747, %v4203, %v4204
        %v4206 = vrot.slane %v3659, 1
        %v4207 = vsel %vm1747, %v4204, %v4206
        %v4208 = vrot.slane %v3667, 1
        %v4209 = vrot.slane %v3671, 1
        %v4210 = vsel %vm1747, %v4208, %v4209
        %v4211 = vrot.slane %v3676, 1
        %v4212 = vsel %vm1747, %v4209, %v4211
        %v4213 = vrot.slane %v3684, 1
        %v4214 = vrot.slane %v3688, 1
        %v4215 = vsel %vm1747, %v4213, %v4214
        %v4216 = vrot.slane %v3693, 1
        %v4217 = vsel %vm1747, %v4214, %v4216
        %v4218 = vrot.slane %v3701, 1
        %v4219 = vrot.slane %v3705, 1
        %v4220 = vsel %vm1747, %v4218, %v4219
        %v4221 = vrot.slane %v3710, 1
        %v4222 = vsel %vm1747, %v4219, %v4221
        %v4223 = vrot.slane %v3718, 1
        %v4224 = vrot.slane %v3722, 1
        %v4225 = vsel %vm1747, %v4223, %v4224
        %v4226 = vrot.slane %v3727, 1
        %v4227 = vsel %vm1747, %v4224, %v4226
        %v4228 = vrot.slane %v3735, 1
        %v4229 = vrot.slane %v3739, 1
        %v4230 = vsel %vm1747, %v4228, %v4229
        %v4231 = vrot.slane %v3744, 1
        %v4232 = vsel %vm1747, %v4229, %v4231
        %v4233 = vrot.slane %v3752, 1
        %v4234 = vrot.slane %v3756, 1
        %v4235 = vsel %vm1747, %v4233, %v4234
        %v4236 = vrot.slane %v3761, 1
        %v4237 = vsel %vm1747, %v4234, %v4236
        %v4238 = vrot.slane %v3769, 1
        %v4239 = vrot.slane %v3773, 1
        %v4240 = vsel %vm1747, %v4238, %v4239
        %v4241 = vrot.slane %v3778, 1
        %v4242 = vsel %vm1747, %v4239, %v4241
        %v4243 = vrot.slane %v3786, 1
        %v4244 = vrot.slane %v3790, 1
        %v4245 = vsel %vm1747, %v4243, %v4244
        %v4246 = vrot.slane %v3795, 1
        %v4247 = vsel %vm1747, %v4244, %v4246
        %v4248 = vrot.slane %v3803, 1
        %v4249 = vrot.slane %v3807, 1
        %v4250 = vsel %vm1747, %v4248, %v4249
        %v4251 = vrot.slane %v3812, 1
        %v4252 = vsel %vm1747, %v4249, %v4251
        %v4253 = vrot.slane %v3820, 1
        %v4254 = vrot.slane %v3824, 1
        %v4255 = vsel %vm1747, %v4253, %v4254
        %v4256 = vrot.slane %v3829, 1
        %v4257 = vsel %vm1747, %v4254, %v4256
        %v4258 = vrot.slane %v3837, 1
        %v4259 = vrot.slane %v3841, 1
        %v4260 = vsel %vm1747, %v4258, %v4259
        %v4261 = vrot.slane %v3846, 1
        %v4262 = vsel %vm1747, %v4259, %v4261
        %v4263 = vrot.slane %v3854, 1
        %v4264 = vrot.slane %v3858, 1
        %v4265 = vsel %vm1747, %v4263, %v4264
        %v4266 = vrot.slane %v3863, 1
        %v4267 = vsel %vm1747, %v4264, %v4266
        %v4300 = vadd.f32 %v3597, %v4190
        %v4301 = vadd.f32 %v3601, %v4192
        %v4302 = vadd.f32 %v3614, %v4195
        %v4303 = vadd.f32 %v3618, %v4197
        %v4304 = vadd.f32 %v3631, %v4200
        %v4305 = vadd.f32 %v3635, %v4202
        %v4306 = vadd.f32 %v3648, %v4205
        %v4307 = vadd.f32 %v3652, %v4207
        %v4308 = vadd.f32 %v3665, %v4210
        %v4309 = vadd.f32 %v3669, %v4212
        %v4310 = vadd.f32 %v3682, %v4215
        %v4311 = vadd.f32 %v3686, %v4217
        %v4312 = vadd.f32 %v3699, %v4220
        %v4313 = vadd.f32 %v3703, %v4222
        %v4314 = vadd.f32 %v3716, %v4225
        %v4315 = vadd.f32 %v3720, %v4227
        %v4316 = vadd.f32 %v3733, %v4230
        %v4317 = vadd.f32 %v3737, %v4232
        %v4318 = vadd.f32 %v3750, %v4235
        %v4319 = vadd.f32 %v3754, %v4237
        %v4320 = vadd.f32 %v3767, %v4240
        %v4321 = vadd.f32 %v3771, %v4242
        %v4322 = vadd.f32 %v3784, %v4245
        %v4323 = vadd.f32 %v3788, %v4247
        %v4324 = vadd.f32 %v3801, %v4250
        %v4325 = vadd.f32 %v3805, %v4252
        %v4326 = vadd.f32 %v3818, %v4255
        %v4327 = vadd.f32 %v3822, %v4257
        %v4328 = vadd.f32 %v3835, %v4260
        %v4329 = vadd.f32 %v3839, %v4262
        %v4330 = vadd.f32 %v3852, %v4265
        %v4331 = vadd.f32 %v3856, %v4267
        %v4380 = vrot.slane %v3902, 2
        %v4381 = vrot.slane %v3905, 2
        %v4382 = vsel %vm1940, %v4380, %v4381
        %v4383 = vrot.slane %v3910, 2
        %v4384 = vsel %vm1940, %v4381, %v4383
        %v4385 = vrot.slane %v3917, 2
        %v4386 = vrot.slane %v3920, 2
        %v4387 = vsel %vm1940, %v4385, %v4386
        %v4388 = vrot.slane %v3925, 2
        %v4389 = vsel %vm1940, %v4386, %v4388
        %v4390 = vrot.slane %v3932, 2
        %v4391 = vrot.slane %v3935, 2
        %v4392 = vsel %vm1940, %v4390, %v4391
        %v4393 = vrot.slane %v3940, 2
        %v4394 = vsel %vm1940, %v4391, %v4393
        %v4395 = vrot.slane %v3947, 2
        %v4396 = vrot.slane %v3950, 2
        %v4397 = vsel %vm1940, %v4395, %v4396
        %v4398 = vrot.slane %v3955, 2
        %v4399 = vsel %vm1940, %v4396, %v4398
        %v4400 = vrot.slane %v3962, 2
        %v4401 = vrot.slane %v3965, 2
        %v4402 = vsel %vm1940, %v4400, %v4401
        %v4403 = vrot.slane %v3970, 2
        %v4404 = vsel %vm1940, %v4401, %v4403
        %v4405 = vrot.slane %v3977, 2
        %v4406 = vrot.slane %v3980, 2
        %v4407 = vsel %vm1940, %v4405, %v4406
        %v4408 = vrot.slane %v3985, 2
        %v4409 = vsel %vm1940, %v4406, %v4408
        %v4410 = vrot.slane %v3992, 2
        %v4411 = vrot.slane %v3995, 2
        %v4412 = vsel %vm1940, %v4410, %v4411
        %v4413 = vrot.slane %v4000, 2
        %v4414 = vsel %vm1940, %v4411, %v4413
        %v4415 = vrot.slane %v4007, 2
        %v4416 = vrot.slane %v4010, 2
        %v4417 = vsel %vm1940, %v4415, %v4416
        %v4418 = vrot.slane %v4015, 2
        %v4419 = vsel %vm1940, %v4416, %v4418
        %v4420 = vrot.slane %v4022, 2
        %v4421 = vrot.slane %v4025, 2
        %v4422 = vsel %vm1940, %v4420, %v4421
        %v4423 = vrot.slane %v4030, 2
        %v4424 = vsel %vm1940, %v4421, %v4423
        %v4425 = vrot.slane %v4037, 2
        %v4426 = vrot.slane %v4040, 2
        %v4427 = vsel %vm1940, %v4425, %v4426
        %v4428 = vrot.slane %v4045, 2
        %v4429 = vsel %vm1940, %v4426, %v4428
        %v4430 = vrot.slane %v4052, 2
        %v4431 = vrot.slane %v4055, 2
        %v4432 = vsel %vm1940, %v4430, %v4431
        %v4433 = vrot.slane %v4060, 2
        %v4434 = vsel %vm1940, %v4431, %v4433
        %v4435 = vrot.slane %v4067, 2
        %v4436 = vrot.slane %v4070, 2
        %v4437 = vsel %vm1940, %v4435, %v4436
        %v4438 = vrot.slane %v4075, 2
        %v4439 = vsel %vm1940, %v4436, %v4438
        %v4440 = vrot.slane %v4082, 2
        %v4441 = vrot.slane %v4085, 2
        %v4442 = vsel %vm1940, %v4440, %v4441
        %v4443 = vrot.slane %v4090, 2
        %v4444 = vsel %vm1940, %v4441, %v4443
        %v4445 = vrot.slane %v4097, 2
        %v4446 = vrot.slane %v4100, 2
        %v4447 = vsel %vm1940, %v4445, %v4446
        %v4448 = vrot.slane %v4105, 2
        %v4449 = vsel %vm1940, %v4446, %v4448
        %v4450 = vrot.slane %v4112, 2
        %v4451 = vrot.slane %v4115, 2
        %v4452 = vsel %vm1940, %v4450, %v4451
        %v4453 = vrot.slane %v4120, 2
        %v4454 = vsel %vm1940, %v4451, %v4453
        %v4455 = vrot.slane %v4127, 2
        %v4456 = vrot.slane %v4130, 2
        %v4457 = vsel %vm1940, %v4455, %v4456
        %v4458 = vrot.slane %v4135, 2
        %v4459 = vsel %vm1940, %v4456, %v4458
        %v4492 = vadd.f32 %v4300, %v4382
        %v4493 = vadd.f32 %v4301, %v4384
        %v4494 = vadd.f32 %v4302, %v4387
        %v4495 = vadd.f32 %v4303, %v4389
        %v4496 = vadd.f32 %v4304, %v4392
        %v4497 = vadd.f32 %v4305, %v4394
        %v4498 = vadd.f32 %v4306, %v4397
        %v4499 = vadd.f32 %v4307, %v4399
        %v4500 = vadd.f32 %v4308, %v4402
        %v4501 = vadd.f32 %v4309, %v4404
        %v4502 = vadd.f32 %v4310, %v4407
        %v4503 = vadd.f32 %v4311, %v4409
        %v4504 = vadd.f32 %v4312, %v4412
        %v4505 = vadd.f32 %v4313, %v4414
        %v4506 = vadd.f32 %v4314, %v4417
        %v4507 = vadd.f32 %v4315, %v4419
        %v4508 = vadd.f32 %v4316, %v4422
        %v4509 = vadd.f32 %v4317, %v4424
        %v4510 = vadd.f32 %v4318, %v4427
        %v4511 = vadd.f32 %v4319, %v4429
        %v4512 = vadd.f32 %v4320, %v4432
        %v4513 = vadd.f32 %v4321, %v4434
        %v4514 = vadd.f32 %v4322, %v4437
        %v4515 = vadd.f32 %v4323, %v4439
        %v4516 = vadd.f32 %v4324, %v4442
        %v4517 = vadd.f32 %v4325, %v4444
        %v4518 = vadd.f32 %v4326, %v4447
        %v4519 = vadd.f32 %v4327, %v4449
        %v4520 = vadd.f32 %v4328, %v4452
        %v4521 = vadd.f32 %v4329, %v4454
        %v4522 = vadd.f32 %v4330, %v4457
        %v4523 = vadd.f32 %v4331, %v4459
        %v4524 = vld [vmem:[#allocation3] sm:$0xff]
        %v4525 = vld [vmem:[#allocation3 + $0x8] sm:$0xff]
        %v4526 = vld [vmem:[#allocation3 + $0x10] sm:$0xff]
        %v4527 = vld [vmem:[#allocation3 + $0x18] sm:$0xff]
        %v4528 = vld [vmem:[#allocation3 + $0x20] sm:$0xff]
        %v4529 = vld [vmem:[#allocation3 + $0x28] sm:$0xff]
        %v4530 = vld [vmem:[#allocation3 + $0x30] sm:$0xff]
        %v4531 = vld [vmem:[#allocation3 + $0x38] sm:$0xff]
        %v4532 = vld [vmem:[#allocation3 + $0x40] sm:$0xff]
        %v4533 = vld [vmem:[#allocation3 + $0x48] sm:$0xff]
        %v4534 = vld [vmem:[#allocation3 + $0x50] sm:$0xff]
        %v4535 = vld [vmem:[#allocation3 + $0x58] sm:$0xff]
        %v4536 = vld [vmem:[#allocation3 + $0x60] sm:$0xff]
        %v4537 = vld [vmem:[#allocation3 + $0x68] sm:$0xff]
        %v4538 = vld [vmem:[#allocation3 + $0x70] sm:$0xff]
        %v4539 = vld [vmem:[#allocation3 + $0x78] sm:$0xff]
        %v4540 = vld [vmem:[#allocation3 + $0x80] sm:$0xff]
        %v4541 = vld [vmem:[#allocation3 + $0x88] sm:$0xff]
        %v4542 = vld [vmem:[#allocation3 + $0x90] sm:$0xff]
        %v4543 = vld [vmem:[#allocation3 + $0x98] sm:$0xff]
        %v4544 = vld [vmem:[#allocation3 + $0xa0] sm:$0xff]
        %v4545 = vld [vmem:[#allocation3 + $0xa8] sm:$0xff]
        %v4546 = vld [vmem:[#allocation3 + $0xb0] sm:$0xff]
        %v4547 = vld [vmem:[#allocation3 + $0xb8] sm:$0xff]
        %v4548 = vld [vmem:[#allocation3 + $0xc0] sm:$0xff]
        %v4549 = vld [vmem:[#allocation3 + $0xc8] sm:$0xff]
        %v4550 = vld [vmem:[#allocation3 + $0xd0] sm:$0xff]
        %v4551 = vld [vmem:[#allocation3 + $0xd8] sm:$0xff]
        %v4552 = vld [vmem:[#allocation3 + $0xe0] sm:$0xff]
        %v4553 = vld [vmem:[#allocation3 + $0xe8] sm:$0xff]
        %v4554 = vld [vmem:[#allocation3 + $0xf0] sm:$0xff]
        %v4555 = vld [vmem:[#allocation3 + $0xf8] sm:$0xff]
        %v4556 = vadd.f32 %v4524, %v4492
        %v4557 = vadd.f32 %v4525, %v4493
        %v4558 = vadd.f32 %v4526, %v4494
        %v4559 = vadd.f32 %v4527, %v4495
        %v4560 = vadd.f32 %v4528, %v4496
        %v4561 = vadd.f32 %v4529, %v4497
        %v4562 = vadd.f32 %v4530, %v4498
        %v4563 = vadd.f32 %v4531, %v4499
        %v4564 = vadd.f32 %v4532, %v4500
        %v4565 = vadd.f32 %v4533, %v4501
        %v4566 = vadd.f32 %v4534, %v4502
        %v4567 = vadd.f32 %v4535, %v4503
        %v4568 = vadd.f32 %v4536, %v4504
        %v4569 = vadd.f32 %v4537, %v4505
        %v4570 = vadd.f32 %v4538, %v4506
        %v4571 = vadd.f32 %v4539, %v4507
        %v4572 = vadd.f32 %v4540, %v4508
        %v4573 = vadd.f32 %v4541, %v4509
        %v4574 = vadd.f32 %v4542, %v4510
        %v4575 = vadd.f32 %v4543, %v4511
        %v4576 = vadd.f32 %v4544, %v4512
        %v4577 = vadd.f32 %v4545, %v4513
        %v4578 = vadd.f32 %v4546, %v4514
        %v4579 = vadd.f32 %v4547, %v4515
        %v4580 = vadd.f32 %v4548, %v4516
        %v4581 = vadd.f32 %v4549, %v4517
        %v4582 = vadd.f32 %v4550, %v4518
        %v4583 = vadd.f32 %v4551, %v4519
        %v4584 = vadd.f32 %v4552, %v4520
        %v4585 = vadd.f32 %v4553, %v4521
        %v4586 = vadd.f32 %v4554, %v4522
        %v4587 = vadd.f32 %v4555, %v4523
        %4588 = vst [vmem:[#allocation3] sm:$0xff] %v4556
        %4589 = vst [vmem:[#allocation3 + $0x8] sm:$0xff] %v4557
        %4590 = vst [vmem:[#allocation3 + $0x10] sm:$0xff] %v4558
        %4591 = vst [vmem:[#allocation3 + $0x18] sm:$0xff] %v4559
        %4592 = vst [vmem:[#allocation3 + $0x20] sm:$0xff] %v4560
        %4593 = vst [vmem:[#allocation3 + $0x28] sm:$0xff] %v4561
        %4594 = vst [vmem:[#allocation3 + $0x30] sm:$0xff] %v4562
        %4595 = vst [vmem:[#allocation3 + $0x38] sm:$0xff] %v4563
        %4596 = vst [vmem:[#allocation3 + $0x40] sm:$0xff] %v4564
        %4597 = vst [vmem:[#allocation3 + $0x48] sm:$0xff] %v4565
        %4598 = vst [vmem:[#allocation3 + $0x50] sm:$0xff] %v4566
        %4599 = vst [vmem:[#allocation3 + $0x58] sm:$0xff] %v4567
        %4600 = vst [vmem:[#allocation3 + $0x60] sm:$0xff] %v4568
        %4601 = vst [vmem:[#allocation3 + $0x68] sm:$0xff] %v4569
        %4602 = vst [vmem:[#allocation3 + $0x70] sm:$0xff] %v4570
        %4603 = vst [vmem:[#allocation3 + $0x78] sm:$0xff] %v4571
        %4604 = vst [vmem:[#allocation3 + $0x80] sm:$0xff] %v4572
        %4605 = vst [vmem:[#allocation3 + $0x88] sm:$0xff] %v4573
        %4606 = vst [vmem:[#allocation3 + $0x90] sm:$0xff] %v4574
        %4607 = vst [vmem:[#allocation3 + $0x98] sm:$0xff] %v4575
        %4608 = vst [vmem:[#allocation3 + $0xa0] sm:$0xff] %v4576
        %4609 = vst [vmem:[#allocation3 + $0xa8] sm:$0xff] %v4577
        %4610 = vst [vmem:[#allocation3 + $0xb0] sm:$0xff] %v4578
        %4611 = vst [vmem:[#allocation3 + $0xb8] sm:$0xff] %v4579
        %4612 = vst [vmem:[#allocation3 + $0xc0] sm:$0xff] %v4580
        %4613 = vst [vmem:[#allocation3 + $0xc8] sm:$0xff] %v4581
        %4614 = vst [vmem:[#allocation3 + $0xd0] sm:$0xff] %v4582
        %4615 = vst [vmem:[#allocation3 + $0xd8] sm:$0xff] %v4583
        %4616 = vst [vmem:[#allocation3 + $0xe0] sm:$0xff] %v4584
        %4617 = vst [vmem:[#allocation3 + $0xe8] sm:$0xff] %v4585
        %4618 = vst [vmem:[#allocation3 + $0xf0] sm:$0xff] %v4586
        %4619 = vst [vmem:[#allocation3 + $0xf8] sm:$0xff] %v4587
        %v4620 = vld [vmem:[#allocation3] sm:$0xff]
        %v4621 = vld [vmem:[#allocation3 + $0x8] sm:$0xff]
        %v4622 = vld [vmem:[#allocation3 + $0x10] sm:$0xff]
        %v4623 = vld [vmem:[#allocation3 + $0x18] sm:$0xff]
        %v4624 = vld [vmem:[#allocation3 + $0x20] sm:$0xff]
        %v4625 = vld [vmem:[#allocation3 + $0x28] sm:$0xff]
        %v4626 = vld [vmem:[#allocation3 + $0x30] sm:$0xff]
        %v4627 = vld [vmem:[#allocation3 + $0x38] sm:$0xff]
        %v4628 = vld [vmem:[#allocation3 + $0x40] sm:$0xff]
        %v4629 = vld [vmem:[#allocation3 + $0x48] sm:$0xff]
        %v4630 = vld [vmem:[#allocation3 + $0x50] sm:$0xff]
        %v4631 = vld [vmem:[#allocation3 + $0x58] sm:$0xff]
        %v4632 = vld [vmem:[#allocation3 + $0x60] sm:$0xff]
        %v4633 = vld [vmem:[#allocation3 + $0x68] sm:$0xff]
        %v4634 = vld [vmem:[#allocation3 + $0x70] sm:$0xff]
        %v4635 = vld [vmem:[#allocation3 + $0x78] sm:$0xff]
        %v4636 = vld [vmem:[#allocation3 + $0x80] sm:$0xff]
        %v4637 = vld [vmem:[#allocation3 + $0x88] sm:$0xff]
        %v4638 = vld [vmem:[#allocation3 + $0x90] sm:$0xff]
        %v4639 = vld [vmem:[#allocation3 + $0x98] sm:$0xff]
        %v4640 = vld [vmem:[#allocation3 + $0xa0] sm:$0xff]
        %v4641 = vld [vmem:[#allocation3 + $0xa8] sm:$0xff]
        %v4642 = vld [vmem:[#allocation3 + $0xb0] sm:$0xff]
        %v4643 = vld [vmem:[#allocation3 + $0xb8] sm:$0xff]
        %v4644 = vld [vmem:[#allocation3 + $0xc0] sm:$0xff]
        %v4645 = vld [vmem:[#allocation3 + $0xc8] sm:$0xff]
        %v4646 = vld [vmem:[#allocation3 + $0xd0] sm:$0xff]
        %v4647 = vld [vmem:[#allocation3 + $0xd8] sm:$0xff]
        %v4648 = vld [vmem:[#allocation3 + $0xe0] sm:$0xff]
        %v4649 = vld [vmem:[#allocation3 + $0xe8] sm:$0xff]
        %v4650 = vld [vmem:[#allocation3 + $0xf0] sm:$0xff]
        %v4651 = vld [vmem:[#allocation3 + $0xf8] sm:$0xff]
        %v4652 = vld [vmem:[%s4] sm:$0x1]
        %v4654 = vlaneseq
        %v4655 = vshrl.u32 %v4654, 7
        %v4656 = vsub.s32 0, %v4655
        %v4657 = vrot.slane %v4652, %v4656
        %v4659 = vmul.f32 %v4620, %v4657
        %v4660 = vmul.f32 %v4621, %v4657
        %v4661 = vmul.f32 %v4622, %v4657
        %v4662 = vmul.f32 %v4623, %v4657
        %v4663 = vmul.f32 %v4624, %v4657
        %v4664 = vmul.f32 %v4625, %v4657
        %v4665 = vmul.f32 %v4626, %v4657
        %v4666 = vmul.f32 %v4627, %v4657
        %v4667 = vmul.f32 %v4628, %v4657
        %v4668 = vmul.f32 %v4629, %v4657
        %v4669 = vmul.f32 %v4630, %v4657
        %v4670 = vmul.f32 %v4631, %v4657
        %v4671 = vmul.f32 %v4632, %v4657
        %v4672 = vmul.f32 %v4633, %v4657
        %v4673 = vmul.f32 %v4634, %v4657
        %v4674 = vmul.f32 %v4635, %v4657
        %v4675 = vmul.f32 %v4636, %v4657
        %v4676 = vmul.f32 %v4637, %v4657
        %v4677 = vmul.f32 %v4638, %v4657
        %v4678 = vmul.f32 %v4639, %v4657
        %v4679 = vmul.f32 %v4640, %v4657
        %v4680 = vmul.f32 %v4641, %v4657
        %v4681 = vmul.f32 %v4642, %v4657
        %v4682 = vmul.f32 %v4643, %v4657
        %v4683 = vmul.f32 %v4644, %v4657
        %v4684 = vmul.f32 %v4645, %v4657
        %v4685 = vmul.f32 %v4646, %v4657
        %v4686 = vmul.f32 %v4647, %v4657
        %v4687 = vmul.f32 %v4648, %v4657
        %v4688 = vmul.f32 %v4649, %v4657
        %v4689 = vmul.f32 %v4650, %v4657
        %v4690 = vmul.f32 %v4651, %v4657
        %v4691 = vld [vmem:[%s5] sm:$0x1]
        %v4693 = vlaneseq
        %v4694 = vshrl.u32 %v4693, 7
        %v4695 = vsub.s32 0, %v4694
        %v4696 = vrot.slane %v4691, %v4695
        %v4698 = vadd.f32 %v4659, %v4696
        %v4699 = vadd.f32 %v4660, %v4696
        %v4700 = vadd.f32 %v4661, %v4696
        %v4701 = vadd.f32 %v4662, %v4696
        %v4702 = vadd.f32 %v4663, %v4696
        %v4703 = vadd.f32 %v4664, %v4696
        %v4704 = vadd.f32 %v4665, %v4696
        %v4705 = vadd.f32 %v4666, %v4696
        %v4706 = vadd.f32 %v4667, %v4696
        %v4707 = vadd.f32 %v4668, %v4696
        %v4708 = vadd.f32 %v4669, %v4696
        %v4709 = vadd.f32 %v4670, %v4696
        %v4710 = vadd.f32 %v4671, %v4696
        %v4711 = vadd.f32 %v4672, %v4696
        %v4712 = vadd.f32 %v4673, %v4696
        %v4713 = vadd.f32 %v4674, %v4696
        %v4714 = vadd.f32 %v4675, %v4696
        %v4715 = vadd.f32 %v4676, %v4696
        %v4716 = vadd.f32 %v4677, %v4696
        %v4717 = vadd.f32 %v4678, %v4696
        %v4718 = vadd.f32 %v4679, %v4696
        %v4719 = vadd.f32 %v4680, %v4696
        %v4720 = vadd.f32 %v4681, %v4696
        %v4721 = vadd.f32 %v4682, %v4696
        %v4722 = vadd.f32 %v4683, %v4696
        %v4723 = vadd.f32 %v4684, %v4696
        %v4724 = vadd.f32 %v4685, %v4696
        %v4725 = vadd.f32 %v4686, %v4696
        %v4726 = vadd.f32 %v4687, %v4696
        %v4727 = vadd.f32 %v4688, %v4696
        %v4728 = vadd.f32 %v4689, %v4696
        %v4729 = vadd.f32 %v4690, %v4696
        %v4730 = vmax.f32 %v4698, 0.0
        %v4731 = vmax.f32 %v4699, 0.0
        %v4732 = vmax.f32 %v4700, 0.0
        %v4733 = vmax.f32 %v4701, 0.0
        %v4734 = vmax.f32 %v4702, 0.0
        %v4735 = vmax.f32 %v4703, 0.0
        %v4736 = vmax.f32 %v4704, 0.0
        %v4737 = vmax.f32 %v4705, 0.0
        %v4738 = vmax.f32 %v4706, 0.0
        %v4739 = vmax.f32 %v4707, 0.0
        %v4740 = vmax.f32 %v4708, 0.0
        %v4741 = vmax.f32 %v4709, 0.0
        %v4742 = vmax.f32 %v4710, 0.0
        %v4743 = vmax.f32 %v4711, 0.0
        %v4744 = vmax.f32 %v4712, 0.0
        %v4745 = vmax.f32 %v4713, 0.0
        %v4746 = vmax.f32 %v4714, 0.0
        %v4747 = vmax.f32 %v4715, 0.0
        %v4748 = vmax.f32 %v4716, 0.0
        %v4749 = vmax.f32 %v4717, 0.0
        %v4750 = vmax.f32 %v4718, 0.0
        %v4751 = vmax.f32 %v4719, 0.0
        %v4752 = vmax.f32 %v4720, 0.0
        %v4753 = vmax.f32 %v4721, 0.0
        %v4754 = vmax.f32 %v4722, 0.0
        %v4755 = vmax.f32 %v4723, 0.0
        %v4756 = vmax.f32 %v4724, 0.0
        %v4757 = vmax.f32 %v4725, 0.0
        %v4758 = vmax.f32 %v4726, 0.0
        %v4759 = vmax.f32 %v4727, 0.0
        %v4760 = vmax.f32 %v4728, 0.0
        %v4761 = vmax.f32 %v4729, 0.0
        %4762 = vst [vmem:[%s361] sm:$0xff] %v4730
        %4763 = vst [vmem:[%s361 + $0x8] sm:$0xff] %v4731
        %4764 = vst [vmem:[%s361 + $0x10] sm:$0xff] %v4732
        %4765 = vst [vmem:[%s361 + $0x18] sm:$0xff] %v4733
        %4766 = vst [vmem:[%s361 + $0x20] sm:$0xff] %v4734
        %4767 = vst [vmem:[%s361 + $0x28] sm:$0xff] %v4735
        %4768 = vst [vmem:[%s361 + $0x30] sm:$0xff] %v4736
        %4769 = vst [vmem:[%s361 + $0x38] sm:$0xff] %v4737
        %4770 = vst [vmem:[%s361 + $0x40] sm:$0xff] %v4738
        %4771 = vst [vmem:[%s361 + $0x48] sm:$0xff] %v4739
        %4772 = vst [vmem:[%s361 + $0x50] sm:$0xff] %v4740
        %4773 = vst [vmem:[%s361 + $0x58] sm:$0xff] %v4741
        %4774 = vst [vmem:[%s361 + $0x60] sm:$0xff] %v4742
        %4775 = vst [vmem:[%s361 + $0x68] sm:$0xff] %v4743
        %4776 = vst [vmem:[%s361 + $0x70] sm:$0xff] %v4744
        %4777 = vst [vmem:[%s361 + $0x78] sm:$0xff] %v4745
        %4778 = vst [vmem:[%s361 + $0x80] sm:$0xff] %v4746
        %4779 = vst [vmem:[%s361 + $0x88] sm:$0xff] %v4747
        %4780 = vst [vmem:[%s361 + $0x90] sm:$0xff] %v4748
        %4781 = vst [vmem:[%s361 + $0x98] sm:$0xff] %v4749
        %4782 = vst [vmem:[%s361 + $0xa0] sm:$0xff] %v4750
        %4783 = vst [vmem:[%s361 + $0xa8] sm:$0xff] %v4751
        %4784 = vst [vmem:[%s361 + $0xb0] sm:$0xff] %v4752
        %4785 = vst [vmem:[%s361 + $0xb8] sm:$0xff] %v4753
        %4786 = vst [vmem:[%s361 + $0xc0] sm:$0xff] %v4754
        %4787 = vst [vmem:[%s361 + $0xc8] sm:$0xff] %v4755
        %4788 = vst [vmem:[%s361 + $0xd0] sm:$0xff] %v4756
        %4789 = vst [vmem:[%s361 + $0xd8] sm:$0xff] %v4757
        %4790 = vst [vmem:[%s361 + $0xe0] sm:$0xff] %v4758
        %4791 = vst [vmem:[%s361 + $0xe8] sm:$0xff] %v4759
        %4792 = vst [vmem:[%s361 + $0xf0] sm:$0xff] %v4760
        %4793 = vst [vmem:[%s361 + $0xf8] sm:$0xff] %v4761
        %s4794 = sand.u32 %s205, 1
        %s4795 = scalar_lea.sflag [#allocation5], %s4794
        %s4796 = sand.u32 %s205, 1
        %s4797 = smul.addr %s4796, 256
        %s4798 = scalar_lea.vmem [#allocation4], %s4797
        // Predicated region
        $region45: #{up_block_forward.5} parent=43 // pred_check
          %p4799 = pneg %p215
        $region46: #{up_block_forward.5} parent=43 // pred_check_branch
          %4801 = sbr.rel (%p4799) target = $region48
        $region47: #{up_block_forward.5} parent=43 // pred_region
          %s4802 = smul.u32 16, %s25
          %s4804 = ssub.s32 4096, 4096
          %4805 = vsyncadd %s4795, %s4804
          %s4806 = smul.addr %s4802, 2
          %s4807 = smul.addr %s24, 32
          %s4808 = sadd.s32 %s4806, %s4807
          %s4809 = smul.addr %s4808, 128
          %s4810 = scalar_lea.hbm %s6, %s4809
          %s4811 = sshll.u32 %s4798, 4
          %s4812 = int_to_ptr.vmem [resolvable:$true] %s4811
          %4817 = dma.vmem_to_hbm [thread:$0]  %s4812, 4096, %s4810, %s4795, 128, 128, 8
        $region48: #{up_block_forward.5} parent=43 // pred_fallthru
          _
      $region44: #{up_block_forward.5} parent=5 // pred_fallthru
        _
      %p4818 = scmp.le.s32.totalorder 2, %s15
      // Predicated region
      $region49: #{up_block_forward.5} parent=5 // pred_check
        %p4819 = pneg %p4818
      $region50: #{up_block_forward.5} parent=5 // pred_check_branch
        %4821 = sbr.rel (%p4819) target = $region52
      $region51: #{up_block_forward.5} parent=5 // pred_region
        %s4822 = ssub.s32 %s15, 2
        // Predicated region
        $region53: #{up_block_forward.5} parent=51 // pred_check
          %p4823 = pneg %p221
        $region54: #{up_block_forward.5} parent=51 // pred_check_branch
          %4825 = sbr.rel (%p4823) target = $region56
        $region55: #{up_block_forward.5} parent=51 // pred_region
          %s4826 = sand.u32 %s206, 1
          %s4827 = scalar_lea.sflag [#allocation5], %s4826
          %s4828 = sand.u32 %s206, 1
          %s4829 = smul.addr %s4828, 256
          %s4830 = scalar_lea.vmem [#allocation4], %s4829
          %4831 = dma.done %s4827, 4096
        $region56: #{up_block_forward.5} parent=51 // pred_fallthru
          _
      $region52: #{up_block_forward.5} parent=5 // pred_fallthru
        _
    $region6: #{up_block_forward.5} parent=1 // loop_footer
      %s19 = sadd.s32 1, %s15
    $region7: #{up_block_forward.5} parent=1 // loop_footer_branch
      %14 = sbr.rel target = $region3
    $region8: #{up_block_forward.5} parent=1 // loop_exit
      _
    %4832 = vsyncpa [#allocation5], 1
    %s4833 = scalar_lea.sflag [#allocation5], 1
    %4834 = vsyncpa %s4833, 1

// kernel: up_block_forward.4
$region0: #{up_block_forward.4}
  #allocation0 [shape = 'u32[]', space=smem, size = 0x4, offset = 0x4, fixed_abs, tag = 'smem constant byte address 0x4 - core index']
  #allocation1 [shape = 'u32[144,128]{1,0:T(1,128)}', space=vmem, size = 0x12000, scoped, tag = 'internal scratch']
  #allocation2 [shape = 'bf16[18,32,256]{2,1,0:T(16,128)(2,1)}', space=vmem, size = 0x48000, scoped, tag = 'scratch operand']
  #allocation3 [shape = 'f32[16,16,128]{2,1,0:T(8,128)}', space=vmem, size = 0x20000, scoped, tag = 'scratch operand']
  %s0 = inlined_call_operand.vmem [shape: bf16[2,16,16,128], index: 0, kind: input, shape index: {}, may-alias: {0,1,2}]
  %s1 = inlined_call_operand.vmem [shape: bf16[2,16,16,128], index: 1, kind: input, shape index: {}, may-alias: {0,1,2}]
  %s2 = inlined_call_operand.vmem [shape: bf16[2,16,16,128], index: 2, kind: input, shape index: {}, may-alias: {0,1,2}]
  %s3 = inlined_call_operand.vmem [shape: f32[2,16,16,128], index: 3, kind: input, shape index: {}, may-alias: {3,4,5}]
  %s4 = inlined_call_operand.vmem [shape: f32[2,16,16,128], index: 4, kind: input, shape index: {}, may-alias: {3,4,5}]
  %s5 = inlined_call_operand.vmem [shape: f32[2,16,16,128], index: 5, kind: input, shape index: {}, may-alias: {3,4,5}]
  %s6 = inlined_call_operand.vmem [shape: bf16[3,256,384], index: 6, kind: input, shape index: {}]
  %s7 = inlined_call_operand.vmem [shape: f32[1,128], index: 7, kind: input, shape index: {}]
  %s8 = inlined_call_operand.vmem [shape: f32[1,128], index: 8, kind: input, shape index: {}]
  %s9 = inlined_call_operand.vmem [shape: bf16[2,16,16,128], index: 9, kind: output, shape index: {}]
  %s10 = sld [smem:[#allocation0]]
  $region69: #{up_block_forward.4} parent=0
    _
  %s12 = ssub.s32 1, %s10
  %s13 = scalar_select 0, %s12, %s10
  loop: start=0, step=1, limit=4
  $region2: #{up_block_forward.4} parent=0 // loop_pre_header
    _
  $region3: #{up_block_forward.4} parent=0 // loop_header
    %s15 = sphi 0, %s19
    %p16 = scmp.ge.s32.totalorder %s15, 4
    %s22 = sphi 0, %s34
    %s23 = sphi 0, %s30
    %s24 = sphi 0, %s22
    %s25 = sphi 0, %s23
    %s26 = sphi 0, %s24
    %s27 = sphi 0, %s25
    %s39 = sphi 0, %s41
    %s42 = sphi 0, %s39
    %s43 = sphi 0, %s42
    %s59 = sphi 0, %s43
    %s75 = sphi 0, %s77
    %s78 = sphi 0, %s75
    %s79 = sphi 0, %s78
    %s95 = sphi 0, %s79
    %s111 = sphi 0, %s113
    %s114 = sphi 0, %s111
    %s115 = sphi 0, %s114
    %s131 = sphi 0, %s115
    %s139 = sphi 0, %s141
    %s142 = sphi 0, %s139
    %s143 = sphi 0, %s142
    %s159 = sphi 0, %s143
    %s175 = sphi 0, %s177
    %s178 = sphi 0, %s175
    %s179 = sphi 0, %s178
    %s195 = sphi 0, %s179
    %s211 = sphi 0, %s213
    %s214 = sphi 0, %s211
    %s215 = sphi 0, %s214
    %s231 = sphi 0, %s215
    %s235 = sphi 0, %s235
    %s237 = sphi 0, %s235
    %s238 = sphi 0, %s237
    %s252 = sphi 0, %s238
    %s256 = sphi 0, %s256
    %s258 = sphi 0, %s256
    %s259 = sphi 0, %s258
    %s273 = sphi 0, %s259
    %s277 = sphi 0, %s277
    %s279 = sphi 0, %s277
    %s280 = sphi 0, %s279
    %s294 = sphi 0, %s280
    %s302 = sphi 0, %s304
    %s305 = sphi 0, %s302
    %s306 = sphi 0, %s305
    %s322 = sphi 0, %s306
  $region4: #{up_block_forward.4} parent=0 // loop_header_branch
    %18 = sbr.rel (%p16) target = $region8
  $region5: #{up_block_forward.4} parent=0 // loop_body
    %s20 = ssub.s32 %s15, 1
    %s21 = ssub.s32 %s15, 2
    %s28 = sadd.s32 1, %s23
    %p29 = scmp.ge.s32.totalorder %s28, 1
    %s30 = scalar_select %p29, 0, %s28
    %s31 = sadd.s32 1, %s22
    %s32 = scalar_select %p29, %s31, %s22
    %p33 = scmp.ge.s32.totalorder %s32, 2
    %s34 = scalar_select %p33, 0, %s32
    %s35 = ssub.s32 %s22, %s34
    %s36 = ssub.s32 %s23, %s30
    %s37 = sor.u32 %s35, %s36
    %p38 = scmp.eq.s32.totalorder %s37, 0
    %s40 = sadd.s32 %s39, 1
    %s41 = scalar_select %p38, %s39, %s40
    %p44 = pneg %p38
    %p45 = scmp.eq.s32.totalorder %s15, 1
    %p46 = por %p44, %p45
    %p47 = scmp.ne.s32.totalorder %s39, %s42
    %p48 = scmp.eq.s32.totalorder %s15, 0
    %p49 = por %p47, %p48
    %p50 = scmp.ne.s32.totalorder %s39, %s42
    %p51 = scmp.eq.s32.totalorder %s20, 1
    %p52 = por %p50, %p51
    %p53 = scmp.ne.s32.totalorder %s42, %s43
    %p54 = scmp.eq.s32.totalorder %s20, 0
    %p55 = por %p53, %p54
    %p56 = scmp.ne.s32.totalorder %s42, %s43
    %p57 = scmp.eq.s32.totalorder %s21, 1
    %p58 = por %p56, %p57
    %p60 = scmp.ne.s32.totalorder %s43, %s59
    %p61 = scmp.eq.s32.totalorder %s21, 0
    %p62 = por %p60, %p61
    %s63 = smul.u32 %s23, 16
    %s64 = ssub.s32 %s63, 1
    %p65 = scmp.gt.s32.totalorder %s64, 0
    %s66 = scalar_select %p65, %s64, 0
    %s67 = smul.u32 %s30, 16
    %s68 = ssub.s32 %s67, 1
    %p69 = scmp.gt.s32.totalorder %s68, 0
    %s70 = scalar_select %p69, %s68, 0
    %s71 = ssub.s32 %s22, %s34
    %s72 = ssub.s32 %s66, %s70
    %s73 = sor.u32 %s71, %s72
    %p74 = scmp.eq.s32.totalorder %s73, 0
    %s76 = sadd.s32 %s75, 1
    %s77 = scalar_select %p74, %s75, %s76
    %p80 = pneg %p74
    %p81 = scmp.eq.s32.totalorder %s15, 1
    %p82 = por %p80, %p81
    %p83 = scmp.ne.s32.totalorder %s75, %s78
    %p84 = scmp.eq.s32.totalorder %s15, 0
    %p85 = por %p83, %p84
    %p86 = scmp.ne.s32.totalorder %s75, %s78
    %p87 = scmp.eq.s32.totalorder %s20, 1
    %p88 = por %p86, %p87
    %p89 = scmp.ne.s32.totalorder %s78, %s79
    %p90 = scmp.eq.s32.totalorder %s20, 0
    %p91 = por %p89, %p90
    %p92 = scmp.ne.s32.totalorder %s78, %s79
    %p93 = scmp.eq.s32.totalorder %s21, 1
    %p94 = por %p92, %p93
    %p96 = scmp.ne.s32.totalorder %s79, %s95
    %p97 = scmp.eq.s32.totalorder %s21, 0
    %p98 = por %p96, %p97
    %s99 = sadd.s32 %s23, 1
    %s100 = smul.u32 %s99, 16
    %p101 = scmp.lt.s32.totalorder %s100, 15
    %s102 = scalar_select %p101, %s100, 15
    %s103 = sadd.s32 %s30, 1
    %s104 = smul.u32 %s103, 16
    %p105 = scmp.lt.s32.totalorder %s104, 15
    %s106 = scalar_select %p105, %s104, 15
    %s107 = ssub.s32 %s22, %s34
    %s108 = ssub.s32 %s102, %s106
    %s109 = sor.u32 %s107, %s108
    %p110 = scmp.eq.s32.totalorder %s109, 0
    %s112 = sadd.s32 %s111, 1
    %s113 = scalar_select %p110, %s111, %s112
    %p116 = pneg %p110
    %p117 = scmp.eq.s32.totalorder %s15, 1
    %p118 = por %p116, %p117
    %p119 = scmp.ne.s32.totalorder %s111, %s114
    %p120 = scmp.eq.s32.totalorder %s15, 0
    %p121 = por %p119, %p120
    %p122 = scmp.ne.s32.totalorder %s111, %s114
    %p123 = scmp.eq.s32.totalorder %s20, 1
    %p124 = por %p122, %p123
    %p125 = scmp.ne.s32.totalorder %s114, %s115
    %p126 = scmp.eq.s32.totalorder %s20, 0
    %p127 = por %p125, %p126
    %p128 = scmp.ne.s32.totalorder %s114, %s115
    %p129 = scmp.eq.s32.totalorder %s21, 1
    %p130 = por %p128, %p129
    %p132 = scmp.ne.s32.totalorder %s115, %s131
    %p133 = scmp.eq.s32.totalorder %s21, 0
    %p134 = por %p132, %p133
    %s135 = ssub.s32 %s22, %s34
    %s136 = ssub.s32 %s23, %s30
    %s137 = sor.u32 %s135, %s136
    %p138 = scmp.eq.s32.totalorder %s137, 0
    %s140 = sadd.s32 %s139, 1
    %s141 = scalar_select %p138, %s139, %s140
    %p144 = pneg %p138
    %p145 = scmp.eq.s32.totalorder %s15, 1
    %p146 = por %p144, %p145
    %p147 = scmp.ne.s32.totalorder %s139, %s142
    %p148 = scmp.eq.s32.totalorder %s15, 0
    %p149 = por %p147, %p148
    %p150 = scmp.ne.s32.totalorder %s139, %s142
    %p151 = scmp.eq.s32.totalorder %s20, 1
    %p152 = por %p150, %p151
    %p153 = scmp.ne.s32.totalorder %s142, %s143
    %p154 = scmp.eq.s32.totalorder %s20, 0
    %p155 = por %p153, %p154
    %p156 = scmp.ne.s32.totalorder %s142, %s143
    %p157 = scmp.eq.s32.totalorder %s21, 1
    %p158 = por %p156, %p157
    %p160 = scmp.ne.s32.totalorder %s143, %s159
    %p161 = scmp.eq.s32.totalorder %s21, 0
    %p162 = por %p160, %p161
    %s163 = smul.u32 %s23, 16
    %s164 = ssub.s32 %s163, 1
    %p165 = scmp.gt.s32.totalorder %s164, 0
    %s166 = scalar_select %p165, %s164, 0
    %s167 = smul.u32 %s30, 16
    %s168 = ssub.s32 %s167, 1
    %p169 = scmp.gt.s32.totalorder %s168, 0
    %s170 = scalar_select %p169, %s168, 0
    %s171 = ssub.s32 %s22, %s34
    %s172 = ssub.s32 %s166, %s170
    %s173 = sor.u32 %s171, %s172
    %p174 = scmp.eq.s32.totalorder %s173, 0
    %s176 = sadd.s32 %s175, 1
    %s177 = scalar_select %p174, %s175, %s176
    %p180 = pneg %p174
    %p181 = scmp.eq.s32.totalorder %s15, 1
    %p182 = por %p180, %p181
    %p183 = scmp.ne.s32.totalorder %s175, %s178
    %p184 = scmp.eq.s32.totalorder %s15, 0
    %p185 = por %p183, %p184
    %p186 = scmp.ne.s32.totalorder %s175, %s178
    %p187 = scmp.eq.s32.totalorder %s20, 1
    %p188 = por %p186, %p187
    %p189 = scmp.ne.s32.totalorder %s178, %s179
    %p190 = scmp.eq.s32.totalorder %s20, 0
    %p191 = por %p189, %p190
    %p192 = scmp.ne.s32.totalorder %s178, %s179
    %p193 = scmp.eq.s32.totalorder %s21, 1
    %p194 = por %p192, %p193
    %p196 = scmp.ne.s32.totalorder %s179, %s195
    %p197 = scmp.eq.s32.totalorder %s21, 0
    %p198 = por %p196, %p197
    %s199 = sadd.s32 %s23, 1
    %s200 = smul.u32 %s199, 16
    %p201 = scmp.lt.s32.totalorder %s200, 15
    %s202 = scalar_select %p201, %s200, 15
    %s203 = sadd.s32 %s30, 1
    %s204 = smul.u32 %s203, 16
    %p205 = scmp.lt.s32.totalorder %s204, 15
    %s206 = scalar_select %p205, %s204, 15
    %s207 = ssub.s32 %s22, %s34
    %s208 = ssub.s32 %s202, %s206
    %s209 = sor.u32 %s207, %s208
    %p210 = scmp.eq.s32.totalorder %s209, 0
    %s212 = sadd.s32 %s211, 1
    %s213 = scalar_select %p210, %s211, %s212
    %p216 = pneg %p210
    %p217 = scmp.eq.s32.totalorder %s15, 1
    %p218 = por %p216, %p217
    %p219 = scmp.ne.s32.totalorder %s211, %s214
    %p220 = scmp.eq.s32.totalorder %s15, 0
    %p221 = por %p219, %p220
    %p222 = scmp.ne.s32.totalorder %s211, %s214
    %p223 = scmp.eq.s32.totalorder %s20, 1
    %p224 = por %p222, %p223
    %p225 = scmp.ne.s32.totalorder %s214, %s215
    %p226 = scmp.eq.s32.totalorder %s20, 0
    %p227 = por %p225, %p226
    %p228 = scmp.ne.s32.totalorder %s214, %s215
    %p229 = scmp.eq.s32.totalorder %s21, 1
    %p230 = por %p228, %p229
    %p232 = scmp.ne.s32.totalorder %s215, %s231
    %p233 = scmp.eq.s32.totalorder %s21, 0
    %p234 = por %p232, %p233
    %s236 = sadd.s32 %s235, 1
    %p239 = scmp.eq.s32.totalorder %s15, 1
    %p240 = scmp.ne.s32.totalorder %s235, %s237
    %p241 = scmp.eq.s32.totalorder %s15, 0
    %p242 = por %p240, %p241
    %p243 = scmp.ne.s32.totalorder %s235, %s237
    %p244 = scmp.eq.s32.totalorder %s20, 1
    %p245 = por %p243, %p244
    %p246 = scmp.ne.s32.totalorder %s237, %s238
    %p247 = scmp.eq.s32.totalorder %s20, 0
    %p248 = por %p246, %p247
    %p249 = scmp.ne.s32.totalorder %s237, %s238
    %p250 = scmp.eq.s32.totalorder %s21, 1
    %p251 = por %p249, %p250
    %p253 = scmp.ne.s32.totalorder %s238, %s252
    %p254 = scmp.eq.s32.totalorder %s21, 0
    %p255 = por %p253, %p254
    %s257 = sadd.s32 %s256, 1
    %p260 = scmp.eq.s32.totalorder %s15, 1
    %p261 = scmp.ne.s32.totalorder %s256, %s258
    %p262 = scmp.eq.s32.totalorder %s15, 0
    %p263 = por %p261, %p262
    %p264 = scmp.ne.s32.totalorder %s256, %s258
    %p265 = scmp.eq.s32.totalorder %s20, 1
    %p266 = por %p264, %p265
    %p267 = scmp.ne.s32.totalorder %s258, %s259
    %p268 = scmp.eq.s32.totalorder %s20, 0
    %p269 = por %p267, %p268
    %p270 = scmp.ne.s32.totalorder %s258, %s259
    %p271 = scmp.eq.s32.totalorder %s21, 1
    %p272 = por %p270, %p271
    %p274 = scmp.ne.s32.totalorder %s259, %s273
    %p275 = scmp.eq.s32.totalorder %s21, 0
    %p276 = por %p274, %p275
    %s278 = sadd.s32 %s277, 1
    %p281 = scmp.eq.s32.totalorder %s15, 1
    %p282 = scmp.ne.s32.totalorder %s277, %s279
    %p283 = scmp.eq.s32.totalorder %s15, 0
    %p284 = por %p282, %p283
    %p285 = scmp.ne.s32.totalorder %s277, %s279
    %p286 = scmp.eq.s32.totalorder %s20, 1
    %p287 = por %p285, %p286
    %p288 = scmp.ne.s32.totalorder %s279, %s280
    %p289 = scmp.eq.s32.totalorder %s20, 0
    %p290 = por %p288, %p289
    %p291 = scmp.ne.s32.totalorder %s279, %s280
    %p292 = scmp.eq.s32.totalorder %s21, 1
    %p293 = por %p291, %p292
    %p295 = scmp.ne.s32.totalorder %s280, %s294
    %p296 = scmp.eq.s32.totalorder %s21, 0
    %p297 = por %p295, %p296
    %s298 = ssub.s32 %s22, %s34
    %s299 = ssub.s32 %s23, %s30
    %s300 = sor.u32 %s298, %s299
    %p301 = scmp.eq.s32.totalorder %s300, 0
    %s303 = sadd.s32 %s302, 1
    %s304 = scalar_select %p301, %s302, %s303
    %p307 = pneg %p301
    %p308 = scmp.eq.s32.totalorder %s15, 1
    %p309 = por %p307, %p308
    %p310 = scmp.ne.s32.totalorder %s302, %s305
    %p311 = scmp.eq.s32.totalorder %s15, 0
    %p312 = por %p310, %p311
    %p313 = scmp.ne.s32.totalorder %s302, %s305
    %p314 = scmp.eq.s32.totalorder %s20, 1
    %p315 = por %p313, %p314
    %p316 = scmp.ne.s32.totalorder %s305, %s306
    %p317 = scmp.eq.s32.totalorder %s20, 0
    %p318 = por %p316, %p317
    %p319 = scmp.ne.s32.totalorder %s305, %s306
    %p320 = scmp.eq.s32.totalorder %s21, 1
    %p321 = por %p319, %p320
    %p323 = scmp.ne.s32.totalorder %s306, %s322
    %p324 = scmp.eq.s32.totalorder %s21, 0
    %p325 = por %p323, %p324
    %p326 = scmp.le.s32.totalorder 1, %s15
    %p327 = scmp.lt.s32.totalorder %s15, 3
    %p328 = pnand %p326, %p327
    %p329 = pneg %p328
    // Predicated region
    $region9: #{up_block_forward.4} parent=5 // pred_check
      _
    $region10: #{up_block_forward.4} parent=5 // pred_check_branch
      %331 = sbr.rel (%p328) target = $region12
    $region11: #{up_block_forward.4} parent=5 // pred_region
      %s332 = ssub.s32 %s15, 1
      // Predicated region
      $region13: #{up_block_forward.4} parent=11 // pred_check
        %p333 = pneg %p248
      $region14: #{up_block_forward.4} parent=11 // pred_check_branch
        %335 = sbr.rel (%p333) target = $region16
      $region15: #{up_block_forward.4} parent=11 // pred_region
        _
      $region16: #{up_block_forward.4} parent=11 // pred_fallthru
        _
      // Predicated region
      $region17: #{up_block_forward.4} parent=11 // pred_check
        %p336 = pneg %p269
      $region18: #{up_block_forward.4} parent=11 // pred_check_branch
        %338 = sbr.rel (%p336) target = $region20
      $region19: #{up_block_forward.4} parent=11 // pred_region
        _
      $region20: #{up_block_forward.4} parent=11 // pred_fallthru
        _
      // Predicated region
      $region21: #{up_block_forward.4} parent=11 // pred_check
        %p339 = pneg %p290
      $region22: #{up_block_forward.4} parent=11 // pred_check_branch
        %341 = sbr.rel (%p339) target = $region24
      $region23: #{up_block_forward.4} parent=11 // pred_region
        _
      $region24: #{up_block_forward.4} parent=11 // pred_fallthru
        _
    $region12: #{up_block_forward.4} parent=5 // pred_fallthru
      _
    %p342 = scmp.lt.s32.totalorder %s15, 2
    // Predicated region
    $region25: #{up_block_forward.4} parent=5 // pred_check
      %p343 = pneg %p342
    $region26: #{up_block_forward.4} parent=5 // pred_check_branch
      %345 = sbr.rel (%p343) target = $region28
    $region27: #{up_block_forward.4} parent=5 // pred_region
      // Predicated region
      $region29: #{up_block_forward.4} parent=27 // pred_check
        %p346 = pneg %p49
      $region30: #{up_block_forward.4} parent=27 // pred_check_branch
        %348 = sbr.rel (%p346) target = $region32
      $region31: #{up_block_forward.4} parent=27 // pred_region
        %s349 = smul.u32 16, %s23
        %p350 = scmp.lt.s32.totalorder %s22, 1
        %s351 = scalar_select %p350, %s22, 1
        %p352 = scmp.lt.s32.totalorder %s349, 15
        %s353 = scalar_select %p352, %s349, 15
        %s354 = smul.addr %s353, 2
        %s355 = smul.addr %s351, 32
        %s356 = sadd.s32 %s354, %s355
        %s357 = smul.addr %s356, 4
        %s358 = scalar_lea.vmem %s0, %s357
        %s359 = smul.u32 16, %s23
      $region32: #{up_block_forward.4} parent=27 // pred_fallthru
        _
      // Predicated region
      $region33: #{up_block_forward.4} parent=27 // pred_check
        %p360 = pneg %p85
      $region34: #{up_block_forward.4} parent=27 // pred_check_branch
        %362 = sbr.rel (%p360) target = $region36
      $region35: #{up_block_forward.4} parent=27 // pred_region
        %s363 = smul.u32 %s23, 16
        %s364 = ssub.s32 %s363, 1
        %p365 = scmp.gt.s32.totalorder %s364, 0
        %s366 = scalar_select %p365, %s364, 0
        %p367 = scmp.lt.s32.totalorder %s22, 1
        %s368 = scalar_select %p367, %s22, 1
        %p369 = scmp.lt.s32.totalorder %s366, 15
        %s370 = scalar_select %p369, %s366, 15
        %s371 = smul.addr %s370, 2
        %s372 = smul.addr %s368, 32
        %s373 = sadd.s32 %s371, %s372
        %s374 = smul.addr %s373, 4
        %s375 = scalar_lea.vmem %s1, %s374
        %s376 = smul.u32 %s23, 16
        %s377 = ssub.s32 %s376, 1
        %p378 = scmp.gt.s32.totalorder %s377, 0
        %s379 = scalar_select %p378, %s377, 0
      $region36: #{up_block_forward.4} parent=27 // pred_fallthru
        _
      // Predicated region
      $region37: #{up_block_forward.4} parent=27 // pred_check
        %p380 = pneg %p121
      $region38: #{up_block_forward.4} parent=27 // pred_check_branch
        %382 = sbr.rel (%p380) target = $region40
      $region39: #{up_block_forward.4} parent=27 // pred_region
        %s383 = sadd.s32 %s23, 1
        %s384 = smul.u32 %s383, 16
        %p385 = scmp.lt.s32.totalorder %s384, 15
        %s386 = scalar_select %p385, %s384, 15
        %p387 = scmp.lt.s32.totalorder %s22, 1
        %s388 = scalar_select %p387, %s22, 1
        %p389 = scmp.lt.s32.totalorder %s386, 15
        %s390 = scalar_select %p389, %s386, 15
        %s391 = smul.addr %s390, 2
        %s392 = smul.addr %s388, 32
        %s393 = sadd.s32 %s391, %s392
        %s394 = smul.addr %s393, 4
        %s395 = scalar_lea.vmem %s2, %s394
        %s396 = sadd.s32 %s23, 1
        %s397 = smul.u32 %s396, 16
        %p398 = scmp.lt.s32.totalorder %s397, 15
        %s399 = scalar_select %p398, %s397, 15
      $region40: #{up_block_forward.4} parent=27 // pred_fallthru
        _
      // Predicated region
      $region41: #{up_block_forward.4} parent=27 // pred_check
        %p400 = pneg %p149
      $region42: #{up_block_forward.4} parent=27 // pred_check_branch
        %402 = sbr.rel (%p400) target = $region44
      $region43: #{up_block_forward.4} parent=27 // pred_region
        %s403 = smul.u32 16, %s23
        %p404 = scmp.lt.s32.totalorder %s22, 1
        %s405 = scalar_select %p404, %s22, 1
        %p406 = scmp.lt.s32.totalorder %s403, 15
        %s407 = scalar_select %p406, %s403, 15
        %s408 = smul.addr %s407, 2
        %s409 = smul.addr %s405, 32
        %s410 = sadd.s32 %s408, %s409
        %s411 = smul.addr %s410, 8
        %s412 = scalar_lea.vmem %s3, %s411
        %s413 = smul.u32 16, %s23
      $region44: #{up_block_forward.4} parent=27 // pred_fallthru
        _
      // Predicated region
      $region45: #{up_block_forward.4} parent=27 // pred_check
        %p414 = pneg %p185
      $region46: #{up_block_forward.4} parent=27 // pred_check_branch
        %416 = sbr.rel (%p414) target = $region48
      $region47: #{up_block_forward.4} parent=27 // pred_region
        %s417 = smul.u32 %s23, 16
        %s418 = ssub.s32 %s417, 1
        %p419 = scmp.gt.s32.totalorder %s418, 0
        %s420 = scalar_select %p419, %s418, 0
        %p421 = scmp.lt.s32.totalorder %s22, 1
        %s422 = scalar_select %p421, %s22, 1
        %p423 = scmp.lt.s32.totalorder %s420, 15
        %s424 = scalar_select %p423, %s420, 15
        %s425 = smul.addr %s424, 2
        %s426 = smul.addr %s422, 32
        %s427 = sadd.s32 %s425, %s426
        %s428 = smul.addr %s427, 8
        %s429 = scalar_lea.vmem %s4, %s428
        %s430 = smul.u32 %s23, 16
        %s431 = ssub.s32 %s430, 1
        %p432 = scmp.gt.s32.totalorder %s431, 0
        %s433 = scalar_select %p432, %s431, 0
      $region48: #{up_block_forward.4} parent=27 // pred_fallthru
        _
      // Predicated region
      $region49: #{up_block_forward.4} parent=27 // pred_check
        %p434 = pneg %p221
      $region50: #{up_block_forward.4} parent=27 // pred_check_branch
        %436 = sbr.rel (%p434) target = $region52
      $region51: #{up_block_forward.4} parent=27 // pred_region
        %s437 = sadd.s32 %s23, 1
        %s438 = smul.u32 %s437, 16
        %p439 = scmp.lt.s32.totalorder %s438, 15
        %s440 = scalar_select %p439, %s438, 15
        %p441 = scmp.lt.s32.totalorder %s22, 1
        %s442 = scalar_select %p441, %s22, 1
        %p443 = scmp.lt.s32.totalorder %s440, 15
        %s444 = scalar_select %p443, %s440, 15
        %s445 = smul.addr %s444, 2
        %s446 = smul.addr %s442, 32
        %s447 = sadd.s32 %s445, %s446
        %s448 = smul.addr %s447, 8
        %s449 = scalar_lea.vmem %s5, %s448
        %s450 = sadd.s32 %s23, 1
        %s451 = smul.u32 %s450, 16
        %p452 = scmp.lt.s32.totalorder %s451, 15
        %s453 = scalar_select %p452, %s451, 15
      $region52: #{up_block_forward.4} parent=27 // pred_fallthru
        _
    $region28: #{up_block_forward.4} parent=5 // pred_fallthru
      _
    %p454 = scmp.le.s32.totalorder 1, %s15
    %p455 = scmp.lt.s32.totalorder %s15, 3
    %p456 = pnand %p454, %p455
    %p457 = pneg %p456
    // Predicated region
    $region53: #{up_block_forward.4} parent=5 // pred_check
      _
    $region54: #{up_block_forward.4} parent=5 // pred_check_branch
      %459 = sbr.rel (%p456) target = $region56
    $region55: #{up_block_forward.4} parent=5 // pred_region
      %s460 = ssub.s32 %s15, 1
      %s461 = smul.u32 16, %s25
      %p462 = scmp.lt.s32.totalorder %s24, 1
      %s463 = scalar_select %p462, %s24, 1
      %p464 = scmp.lt.s32.totalorder %s461, 15
      %s465 = scalar_select %p464, %s461, 15
      %s466 = smul.addr %s465, 2
      %s467 = smul.addr %s463, 32
      %s468 = sadd.s32 %s466, %s467
      %s469 = smul.addr %s468, 4
      %s470 = scalar_lea.vmem %s0, %s469
      %p471 = pneg %p55
      %p472 = pneg %p52
      %s473 = smul.u32 %s25, 16
      %s474 = ssub.s32 %s473, 1
      %p475 = scmp.gt.s32.totalorder %s474, 0
      %s476 = scalar_select %p475, %s474, 0
      %p477 = scmp.lt.s32.totalorder %s24, 1
      %s478 = scalar_select %p477, %s24, 1
      %p479 = scmp.lt.s32.totalorder %s476, 15
      %s480 = scalar_select %p479, %s476, 15
      %s481 = smul.addr %s480, 2
      %s482 = smul.addr %s478, 32
      %s483 = sadd.s32 %s481, %s482
      %s484 = smul.addr %s483, 4
      %s485 = scalar_lea.vmem %s1, %s484
      %p486 = pneg %p91
      %p487 = pneg %p88
      %s488 = sadd.s32 %s25, 1
      %s489 = smul.u32 %s488, 16
      %p490 = scmp.lt.s32.totalorder %s489, 15
      %s491 = scalar_select %p490, %s489, 15
      %p492 = scmp.lt.s32.totalorder %s24, 1
      %s493 = scalar_select %p492, %s24, 1
      %p494 = scmp.lt.s32.totalorder %s491, 15
      %s495 = scalar_select %p494, %s491, 15
      %s496 = smul.addr %s495, 2
      %s497 = smul.addr %s493, 32
      %s498 = sadd.s32 %s496, %s497
      %s499 = smul.addr %s498, 4
      %s500 = scalar_lea.vmem %s2, %s499
      %p501 = pneg %p127
      %p502 = pneg %p124
      %s503 = smul.u32 16, %s25
      %p504 = scmp.lt.s32.totalorder %s24, 1
      %s505 = scalar_select %p504, %s24, 1
      %p506 = scmp.lt.s32.totalorder %s503, 15
      %s507 = scalar_select %p506, %s503, 15
      %s508 = smul.addr %s507, 2
      %s509 = smul.addr %s505, 32
      %s510 = sadd.s32 %s508, %s509
      %s511 = smul.addr %s510, 8
      %s512 = scalar_lea.vmem %s3, %s511
      %p513 = pneg %p155
      %p514 = pneg %p152
      %s515 = smul.u32 %s25, 16
      %s516 = ssub.s32 %s515, 1
      %p517 = scmp.gt.s32.totalorder %s516, 0
      %s518 = scalar_select %p517, %s516, 0
      %p519 = scmp.lt.s32.totalorder %s24, 1
      %s520 = scalar_select %p519, %s24, 1
      %p521 = scmp.lt.s32.totalorder %s518, 15
      %s522 = scalar_select %p521, %s518, 15
      %s523 = smul.addr %s522, 2
      %s524 = smul.addr %s520, 32
      %s525 = sadd.s32 %s523, %s524
      %s526 = smul.addr %s525, 8
      %s527 = scalar_lea.vmem %s4, %s526
      %p528 = pneg %p191
      %p529 = pneg %p188
      %s530 = sadd.s32 %s25, 1
      %s531 = smul.u32 %s530, 16
      %p532 = scmp.lt.s32.totalorder %s531, 15
      %s533 = scalar_select %p532, %s531, 15
      %p534 = scmp.lt.s32.totalorder %s24, 1
      %s535 = scalar_select %p534, %s24, 1
      %p536 = scmp.lt.s32.totalorder %s533, 15
      %s537 = scalar_select %p536, %s533, 15
      %s538 = smul.addr %s537, 2
      %s539 = smul.addr %s535, 32
      %s540 = sadd.s32 %s538, %s539
      %s541 = smul.addr %s540, 8
      %s542 = scalar_lea.vmem %s5, %s541
      %p543 = pneg %p227
      %p544 = pneg %p224
      %p545 = pneg %p248
      %p546 = pneg %p245
      %p547 = pneg %p269
      %p548 = pneg %p266
      %p549 = pneg %p290
      %p550 = pneg %p287
      %p551 = pneg %p318
      %p552 = pneg %p315
      %s553 = smul.u32 16, %s25
      %p554 = scmp.lt.s32.totalorder %s24, 1
      %s555 = scalar_select %p554, %s24, 1
      %p556 = scmp.lt.s32.totalorder %s553, 15
      %s557 = scalar_select %p556, %s553, 15
      %s558 = smul.addr %s557, 2
      %s559 = smul.addr %s555, 32
      %s560 = sadd.s32 %s558, %s559
      %s561 = smul.addr %s560, 4
      %s562 = scalar_lea.vmem %s9, %s561
      %s563 = smul.u32 16, %s25
      %p564 = scmp.lt.s32.totalorder %s24, 1
      %s565 = scalar_select %p564, %s24, 1
      %p566 = scmp.lt.s32.totalorder %s563, 15
      %s567 = scalar_select %p566, %s563, 15
      %s568 = smul.addr %s567, 2
      %s569 = smul.addr %s565, 32
      %s570 = sadd.s32 %s568, %s569
      %s571 = smul.addr %s570, 4
      %s572 = scalar_lea.vmem %s0, %s571
      %s573 = smul.u32 16, %s25
      %s574 = smul.u32 %s25, 16
      %s575 = ssub.s32 %s574, 1
      %p576 = scmp.gt.s32.totalorder %s575, 0
      %s577 = scalar_select %p576, %s575, 0
      %p578 = scmp.lt.s32.totalorder %s24, 1
      %s579 = scalar_select %p578, %s24, 1
      %p580 = scmp.lt.s32.totalorder %s577, 15
      %s581 = scalar_select %p580, %s577, 15
      %s582 = smul.addr %s581, 2
      %s583 = smul.addr %s579, 32
      %s584 = sadd.s32 %s582, %s583
      %s585 = smul.addr %s584, 4
      %s586 = scalar_lea.vmem %s1, %s585
      %s587 = smul.u32 %s25, 16
      %s588 = ssub.s32 %s587, 1
      %p589 = scmp.gt.s32.totalorder %s588, 0
      %s590 = scalar_select %p589, %s588, 0
      %s591 = sadd.s32 %s25, 1
      %s592 = smul.u32 %s591, 16
      %p593 = scmp.lt.s32.totalorder %s592, 15
      %s594 = scalar_select %p593, %s592, 15
      %p595 = scmp.lt.s32.totalorder %s24, 1
      %s596 = scalar_select %p595, %s24, 1
      %p597 = scmp.lt.s32.totalorder %s594, 15
      %s598 = scalar_select %p597, %s594, 15
      %s599 = smul.addr %s598, 2
      %s600 = smul.addr %s596, 32
      %s601 = sadd.s32 %s599, %s600
      %s602 = smul.addr %s601, 4
      %s603 = scalar_lea.vmem %s2, %s602
      %s604 = sadd.s32 %s25, 1
      %s605 = smul.u32 %s604, 16
      %p606 = scmp.lt.s32.totalorder %s605, 15
      %s607 = scalar_select %p606, %s605, 15
      %s608 = smul.u32 16, %s25
      %p609 = scmp.lt.s32.totalorder %s24, 1
      %s610 = scalar_select %p609, %s24, 1
      %p611 = scmp.lt.s32.totalorder %s608, 15
      %s612 = scalar_select %p611, %s608, 15
      %s613 = smul.addr %s612, 2
      %s614 = smul.addr %s610, 32
      %s615 = sadd.s32 %s613, %s614
      %s616 = smul.addr %s615, 8
      %s617 = scalar_lea.vmem %s3, %s616
      %s618 = smul.u32 16, %s25
      %s619 = smul.u32 %s25, 16
      %s620 = ssub.s32 %s619, 1
      %p621 = scmp.gt.s32.totalorder %s620, 0
      %s622 = scalar_select %p621, %s620, 0
      %p623 = scmp.lt.s32.totalorder %s24, 1
      %s624 = scalar_select %p623, %s24, 1
      %p625 = scmp.lt.s32.totalorder %s622, 15
      %s626 = scalar_select %p625, %s622, 15
      %s627 = smul.addr %s626, 2
      %s628 = smul.addr %s624, 32
      %s629 = sadd.s32 %s627, %s628
      %s630 = smul.addr %s629, 8
      %s631 = scalar_lea.vmem %s4, %s630
      %s632 = smul.u32 %s25, 16
      %s633 = ssub.s32 %s632, 1
      %p634 = scmp.gt.s32.totalorder %s633, 0
      %s635 = scalar_select %p634, %s633, 0
      %s636 = sadd.s32 %s25, 1
      %s637 = smul.u32 %s636, 16
      %p638 = scmp.lt.s32.totalorder %s637, 15
      %s639 = scalar_select %p638, %s637, 15
      %p640 = scmp.lt.s32.totalorder %s24, 1
      %s641 = scalar_select %p640, %s24, 1
      %p642 = scmp.lt.s32.totalorder %s639, 15
      %s643 = scalar_select %p642, %s639, 15
      %s644 = smul.addr %s643, 2
      %s645 = smul.addr %s641, 32
      %s646 = sadd.s32 %s644, %s645
      %s647 = smul.addr %s646, 8
      %s648 = scalar_lea.vmem %s5, %s647
      %s649 = sadd.s32 %s25, 1
      %s650 = smul.u32 %s649, 16
      %p651 = scmp.lt.s32.totalorder %s650, 15
      %s652 = scalar_select %p651, %s650, 15
      %s653 = smul.u32 16, %s25
      %p654 = scmp.lt.s32.totalorder %s24, 1
      %s655 = scalar_select %p654, %s24, 1
      %p656 = scmp.lt.s32.totalorder %s653, 15
      %s657 = scalar_select %p656, %s653, 15
      %s658 = smul.addr %s657, 2
      %s659 = smul.addr %s655, 32
      %s660 = sadd.s32 %s658, %s659
      %s661 = smul.addr %s660, 4
      %s662 = scalar_lea.vmem %s9, %s661
      %s663 = smul.u32 16, %s25
      %p665 = scmp.eq.s32.totalorder %s25, 0
      %vm666 = vcmask 1040384
      %vm667 = vsmask.f32 256
      %vm668 = vmand %vm666, %vm667
      %v669 = vld [vmem:[#allocation2] sm:$0x1]
      %v670 = vsel %vm668, 0, %v669
      %671 = vst [vmem:[#allocation2] sm:$0x1] %v670
      %v672 = vld [vmem:[#allocation2 + $0x8] sm:$0x1]
      %v673 = vsel %vm668, 0, %v672
      %674 = vst [vmem:[#allocation2 + $0x8] sm:$0x1] %v673
      %v675 = vld [vmem:[#allocation2 + $0x20] sm:$0x1]
      %v676 = vsel %vm668, 0, %v675
      %677 = vst [vmem:[#allocation2 + $0x20] sm:$0x1] %v676
      %v678 = vld [vmem:[#allocation2 + $0x28] sm:$0x1]
      %v679 = vsel %vm668, 0, %v678
      %680 = vst [vmem:[#allocation2 + $0x28] sm:$0x1] %v679
      %v681 = vld [vmem:[#allocation2 + $0x40] sm:$0x1]
      %v682 = vsel %vm668, 0, %v681
      %683 = vst [vmem:[#allocation2 + $0x40] sm:$0x1] %v682
      %v684 = vld [vmem:[#allocation2 + $0x48] sm:$0x1]
      %v685 = vsel %vm668, 0, %v684
      %686 = vst [vmem:[#allocation2 + $0x48] sm:$0x1] %v685
      %v687 = vld [vmem:[#allocation2 + $0x60] sm:$0x1]
      %v688 = vsel %vm668, 0, %v687
      %689 = vst [vmem:[#allocation2 + $0x60] sm:$0x1] %v688
      %v690 = vld [vmem:[#allocation2 + $0x68] sm:$0x1]
      %v691 = vsel %vm668, 0, %v690
      %692 = vst [vmem:[#allocation2 + $0x68] sm:$0x1] %v691
      %v693 = vld [vmem:[#allocation2 + $0x80] sm:$0x1]
      %v694 = vsel %vm668, 0, %v693
      %695 = vst [vmem:[#allocation2 + $0x80] sm:$0x1] %v694
      %v696 = vld [vmem:[#allocation2 + $0x88] sm:$0x1]
      %v697 = vsel %vm668, 0, %v696
      %698 = vst [vmem:[#allocation2 + $0x88] sm:$0x1] %v697
      %v699 = vld [vmem:[#allocation2 + $0xa0] sm:$0x1]
      %v700 = vsel %vm668, 0, %v699
      %701 = vst [vmem:[#allocation2 + $0xa0] sm:$0x1] %v700
      %v702 = vld [vmem:[#allocation2 + $0xa8] sm:$0x1]
      %v703 = vsel %vm668, 0, %v702
      %704 = vst [vmem:[#allocation2 + $0xa8] sm:$0x1] %v703
      %v705 = vld [vmem:[#allocation2 + $0xc0] sm:$0x1]
      %v706 = vsel %vm668, 0, %v705
      %707 = vst [vmem:[#allocation2 + $0xc0] sm:$0x1] %v706
      %v708 = vld [vmem:[#allocation2 + $0xc8] sm:$0x1]
      %v709 = vsel %vm668, 0, %v708
      %710 = vst [vmem:[#allocation2 + $0xc8] sm:$0x1] %v709
      %v711 = vld [vmem:[#allocation2 + $0xe0] sm:$0x1]
      %v712 = vsel %vm668, 0, %v711
      %713 = vst [vmem:[#allocation2 + $0xe0] sm:$0x1] %v712
      %v714 = vld [vmem:[#allocation2 + $0xe8] sm:$0x1]
      %v715 = vsel %vm668, 0, %v714
      %716 = vst [vmem:[#allocation2 + $0xe8] sm:$0x1] %v715
      %v717 = vld [vmem:[#allocation2 + $0x100] sm:$0x1]
      %v718 = vsel %vm668, 0, %v717
      %719 = vst [vmem:[#allocation2 + $0x100] sm:$0x1] %v718
      %v720 = vld [vmem:[#allocation2 + $0x108] sm:$0x1]
      %v721 = vsel %vm668, 0, %v720
      %722 = vst [vmem:[#allocation2 + $0x108] sm:$0x1] %v721
      %v723 = vld [vmem:[#allocation2 + $0x120] sm:$0x1]
      %v724 = vsel %vm668, 0, %v723
      %725 = vst [vmem:[#allocation2 + $0x120] sm:$0x1] %v724
      %v726 = vld [vmem:[#allocation2 + $0x128] sm:$0x1]
      %v727 = vsel %vm668, 0, %v726
      %728 = vst [vmem:[#allocation2 + $0x128] sm:$0x1] %v727
      %v729 = vld [vmem:[#allocation2 + $0x140] sm:$0x1]
      %v730 = vsel %vm668, 0, %v729
      %731 = vst [vmem:[#allocation2 + $0x140] sm:$0x1] %v730
      %v732 = vld [vmem:[#allocation2 + $0x148] sm:$0x1]
      %v733 = vsel %vm668, 0, %v732
      %734 = vst [vmem:[#allocation2 + $0x148] sm:$0x1] %v733
      %v735 = vld [vmem:[#allocation2 + $0x160] sm:$0x1]
      %v736 = vsel %vm668, 0, %v735
      %737 = vst [vmem:[#allocation2 + $0x160] sm:$0x1] %v736
      %v738 = vld [vmem:[#allocation2 + $0x168] sm:$0x1]
      %v739 = vsel %vm668, 0, %v738
      %740 = vst [vmem:[#allocation2 + $0x168] sm:$0x1] %v739
      %v741 = vld [vmem:[#allocation2 + $0x180] sm:$0x1]
      %v742 = vsel %vm668, 0, %v741
      %743 = vst [vmem:[#allocation2 + $0x180] sm:$0x1] %v742
      %v744 = vld [vmem:[#allocation2 + $0x188] sm:$0x1]
      %v745 = vsel %vm668, 0, %v744
      %746 = vst [vmem:[#allocation2 + $0x188] sm:$0x1] %v745
      %v747 = vld [vmem:[#allocation2 + $0x1a0] sm:$0x1]
      %v748 = vsel %vm668, 0, %v747
      %749 = vst [vmem:[#allocation2 + $0x1a0] sm:$0x1] %v748
      %v750 = vld [vmem:[#allocation2 + $0x1a8] sm:$0x1]
      %v751 = vsel %vm668, 0, %v750
      %752 = vst [vmem:[#allocation2 + $0x1a8] sm:$0x1] %v751
      %v753 = vld [vmem:[#allocation2 + $0x1c0] sm:$0x1]
      %v754 = vsel %vm668, 0, %v753
      %755 = vst [vmem:[#allocation2 + $0x1c0] sm:$0x1] %v754
      %v756 = vld [vmem:[#allocation2 + $0x1c8] sm:$0x1]
      %v757 = vsel %vm668, 0, %v756
      %758 = vst [vmem:[#allocation2 + $0x1c8] sm:$0x1] %v757
      %v759 = vld [vmem:[#allocation2 + $0x1e0] sm:$0x1]
      %v760 = vsel %vm668, 0, %v759
      %761 = vst [vmem:[#allocation2 + $0x1e0] sm:$0x1] %v760
      %v762 = vld [vmem:[#allocation2 + $0x1e8] sm:$0x1]
      %v763 = vsel %vm668, 0, %v762
      %764 = vst [vmem:[#allocation2 + $0x1e8] sm:$0x1] %v763
      %v765 = vld [vmem:[#allocation2 + $0x200] sm:$0x1]
      %v766 = vsel %vm668, 0, %v765
      %767 = vst [vmem:[#allocation2 + $0x200] sm:$0x1] %v766
      %v768 = vld [vmem:[#allocation2 + $0x208] sm:$0x1]
      %v769 = vsel %vm668, 0, %v768
      %770 = vst [vmem:[#allocation2 + $0x208] sm:$0x1] %v769
      %v771 = vld [vmem:[#allocation2 + $0x220] sm:$0x1]
      %v772 = vsel %vm668, 0, %v771
      %773 = vst [vmem:[#allocation2 + $0x220] sm:$0x1] %v772
      %v774 = vld [vmem:[#allocation2 + $0x228] sm:$0x1]
      %v775 = vsel %vm668, 0, %v774
      %776 = vst [vmem:[#allocation2 + $0x228] sm:$0x1] %v775
      %vm777 = vcmask 1047552
      %vm778 = vsmask.f32 7938
      %vm779 = vmand %vm777, %vm778
      %v780 = vld [vmem:[#allocation2 + $0x10] sm:$0xff]
      %v781 = vsel %vm779, 0, %v780
      %782 = vst [vmem:[#allocation2 + $0x10] sm:$0xff] %v781
      %v783 = vld [vmem:[#allocation2 + $0x18] sm:$0xff]
      %v784 = vsel %vm779, 0, %v783
      %785 = vst [vmem:[#allocation2 + $0x18] sm:$0xff] %v784
      %v786 = vld [vmem:[#allocation2 + $0x30] sm:$0xff]
      %v787 = vsel %vm779, 0, %v786
      %788 = vst [vmem:[#allocation2 + $0x30] sm:$0xff] %v787
      %v789 = vld [vmem:[#allocation2 + $0x38] sm:$0xff]
      %v790 = vsel %vm779, 0, %v789
      %791 = vst [vmem:[#allocation2 + $0x38] sm:$0xff] %v790
      %v792 = vld [vmem:[#allocation2 + $0x50] sm:$0xff]
      %v793 = vsel %vm779, 0, %v792
      %794 = vst [vmem:[#allocation2 + $0x50] sm:$0xff] %v793
      %v795 = vld [vmem:[#allocation2 + $0x58] sm:$0xff]
      %v796 = vsel %vm779, 0, %v795
      %797 = vst [vmem:[#allocation2 + $0x58] sm:$0xff] %v796
      %v798 = vld [vmem:[#allocation2 + $0x70] sm:$0xff]
      %v799 = vsel %vm779, 0, %v798
      %800 = vst [vmem:[#allocation2 + $0x70] sm:$0xff] %v799
      %v801 = vld [vmem:[#allocation2 + $0x78] sm:$0xff]
      %v802 = vsel %vm779, 0, %v801
      %803 = vst [vmem:[#allocation2 + $0x78] sm:$0xff] %v802
      %v804 = vld [vmem:[#allocation2 + $0x90] sm:$0xff]
      %v805 = vsel %vm779, 0, %v804
      %806 = vst [vmem:[#allocation2 + $0x90] sm:$0xff] %v805
      %v807 = vld [vmem:[#allocation2 + $0x98] sm:$0xff]
      %v808 = vsel %vm779, 0, %v807
      %809 = vst [vmem:[#allocation2 + $0x98] sm:$0xff] %v808
      %v810 = vld [vmem:[#allocation2 + $0xb0] sm:$0xff]
      %v811 = vsel %vm779, 0, %v810
      %812 = vst [vmem:[#allocation2 + $0xb0] sm:$0xff] %v811
      %v813 = vld [vmem:[#allocation2 + $0xb8] sm:$0xff]
      %v814 = vsel %vm779, 0, %v813
      %815 = vst [vmem:[#allocation2 + $0xb8] sm:$0xff] %v814
      %v816 = vld [vmem:[#allocation2 + $0xd0] sm:$0xff]
      %v817 = vsel %vm779, 0, %v816
      %818 = vst [vmem:[#allocation2 + $0xd0] sm:$0xff] %v817
      %v819 = vld [vmem:[#allocation2 + $0xd8] sm:$0xff]
      %v820 = vsel %vm779, 0, %v819
      %821 = vst [vmem:[#allocation2 + $0xd8] sm:$0xff] %v820
      %v822 = vld [vmem:[#allocation2 + $0xf0] sm:$0xff]
      %v823 = vsel %vm779, 0, %v822
      %824 = vst [vmem:[#allocation2 + $0xf0] sm:$0xff] %v823
      %v825 = vld [vmem:[#allocation2 + $0xf8] sm:$0xff]
      %v826 = vsel %vm779, 0, %v825
      %827 = vst [vmem:[#allocation2 + $0xf8] sm:$0xff] %v826
      %v828 = vld [vmem:[#allocation2 + $0x110] sm:$0xff]
      %v829 = vsel %vm779, 0, %v828
      %830 = vst [vmem:[#allocation2 + $0x110] sm:$0xff] %v829
      %v831 = vld [vmem:[#allocation2 + $0x118] sm:$0xff]
      %v832 = vsel %vm779, 0, %v831
      %833 = vst [vmem:[#allocation2 + $0x118] sm:$0xff] %v832
      %v834 = vld [vmem:[#allocation2 + $0x130] sm:$0xff]
      %v835 = vsel %vm779, 0, %v834
      %836 = vst [vmem:[#allocation2 + $0x130] sm:$0xff] %v835
      %v837 = vld [vmem:[#allocation2 + $0x138] sm:$0xff]
      %v838 = vsel %vm779, 0, %v837
      %839 = vst [vmem:[#allocation2 + $0x138] sm:$0xff] %v838
      %v840 = vld [vmem:[#allocation2 + $0x150] sm:$0xff]
      %v841 = vsel %vm779, 0, %v840
      %842 = vst [vmem:[#allocation2 + $0x150] sm:$0xff] %v841
      %v843 = vld [vmem:[#allocation2 + $0x158] sm:$0xff]
      %v844 = vsel %vm779, 0, %v843
      %845 = vst [vmem:[#allocation2 + $0x158] sm:$0xff] %v844
      %v846 = vld [vmem:[#allocation2 + $0x170] sm:$0xff]
      %v847 = vsel %vm779, 0, %v846
      %848 = vst [vmem:[#allocation2 + $0x170] sm:$0xff] %v847
      %v849 = vld [vmem:[#allocation2 + $0x178] sm:$0xff]
      %v850 = vsel %vm779, 0, %v849
      %851 = vst [vmem:[#allocation2 + $0x178] sm:$0xff] %v850
      %v852 = vld [vmem:[#allocation2 + $0x190] sm:$0xff]
      %v853 = vsel %vm779, 0, %v852
      %854 = vst [vmem:[#allocation2 + $0x190] sm:$0xff] %v853
      %v855 = vld [vmem:[#allocation2 + $0x198] sm:$0xff]
      %v856 = vsel %vm779, 0, %v855
      %857 = vst [vmem:[#allocation2 + $0x198] sm:$0xff] %v856
      %v858 = vld [vmem:[#allocation2 + $0x1b0] sm:$0xff]
      %v859 = vsel %vm779, 0, %v858
      %860 = vst [vmem:[#allocation2 + $0x1b0] sm:$0xff] %v859
      %v861 = vld [vmem:[#allocation2 + $0x1b8] sm:$0xff]
      %v862 = vsel %vm779, 0, %v861
      %863 = vst [vmem:[#allocation2 + $0x1b8] sm:$0xff] %v862
      %v864 = vld [vmem:[#allocation2 + $0x1d0] sm:$0xff]
      %v865 = vsel %vm779, 0, %v864
      %866 = vst [vmem:[#allocation2 + $0x1d0] sm:$0xff] %v865
      %v867 = vld [vmem:[#allocation2 + $0x1d8] sm:$0xff]
      %v868 = vsel %vm779, 0, %v867
      %869 = vst [vmem:[#allocation2 + $0x1d8] sm:$0xff] %v868
      %v870 = vld [vmem:[#allocation2 + $0x1f0] sm:$0xff]
      %v871 = vsel %vm779, 0, %v870
      %872 = vst [vmem:[#allocation2 + $0x1f0] sm:$0xff] %v871
      %v873 = vld [vmem:[#allocation2 + $0x1f8] sm:$0xff]
      %v874 = vsel %vm779, 0, %v873
      %875 = vst [vmem:[#allocation2 + $0x1f8] sm:$0xff] %v874
      %v876 = vld [vmem:[#allocation2 + $0x210] sm:$0xff]
      %v877 = vsel %vm779, 0, %v876
      %878 = vst [vmem:[#allocation2 + $0x210] sm:$0xff] %v877
      %v879 = vld [vmem:[#allocation2 + $0x218] sm:$0xff]
      %v880 = vsel %vm779, 0, %v879
      %881 = vst [vmem:[#allocation2 + $0x218] sm:$0xff] %v880
      %v882 = vld [vmem:[#allocation2 + $0x230] sm:$0xff]
      %v883 = vsel %vm779, 0, %v882
      %884 = vst [vmem:[#allocation2 + $0x230] sm:$0xff] %v883
      %v885 = vld [vmem:[#allocation2 + $0x238] sm:$0xff]
      %v886 = vsel %vm779, 0, %v885
      %887 = vst [vmem:[#allocation2 + $0x238] sm:$0xff] %v886
      %v888 = vld [vmem:[%s572] sm:$0xf]
      %v889 = vld [vmem:[%s572 + $0x4] sm:$0xf]
      %v890 = vld [vmem:[%s572 + $0x8] sm:$0xf]
      %v891 = vld [vmem:[%s572 + $0xc] sm:$0xf]
      %v892 = vld [vmem:[%s572 + $0x10] sm:$0xf]
      %v893 = vld [vmem:[%s572 + $0x14] sm:$0xf]
      %v894 = vld [vmem:[%s572 + $0x18] sm:$0xf]
      %v895 = vld [vmem:[%s572 + $0x1c] sm:$0xf]
      %v896 = vld [vmem:[%s572 + $0x20] sm:$0xf]
      %v897 = vld [vmem:[%s572 + $0x24] sm:$0xf]
      %v898 = vld [vmem:[%s572 + $0x28] sm:$0xf]
      %v899 = vld [vmem:[%s572 + $0x2c] sm:$0xf]
      %v900 = vld [vmem:[%s572 + $0x30] sm:$0xf]
      %v901 = vld [vmem:[%s572 + $0x34] sm:$0xf]
      %v902 = vld [vmem:[%s572 + $0x38] sm:$0xf]
      %v903 = vld [vmem:[%s572 + $0x3c] sm:$0xf]
      %v904 = vld [vmem:[%s572 + $0x40] sm:$0xf]
      %v905 = vld [vmem:[%s572 + $0x44] sm:$0xf]
      %v906 = vld [vmem:[%s572 + $0x48] sm:$0xf]
      %v907 = vld [vmem:[%s572 + $0x4c] sm:$0xf]
      %v908 = vld [vmem:[%s572 + $0x50] sm:$0xf]
      %v909 = vld [vmem:[%s572 + $0x54] sm:$0xf]
      %v910 = vld [vmem:[%s572 + $0x58] sm:$0xf]
      %v911 = vld [vmem:[%s572 + $0x5c] sm:$0xf]
      %v912 = vld [vmem:[%s572 + $0x60] sm:$0xf]
      %v913 = vld [vmem:[%s572 + $0x64] sm:$0xf]
      %v914 = vld [vmem:[%s572 + $0x68] sm:$0xf]
      %v915 = vld [vmem:[%s572 + $0x6c] sm:$0xf]
      %v916 = vld [vmem:[%s572 + $0x70] sm:$0xf]
      %v917 = vld [vmem:[%s572 + $0x74] sm:$0xf]
      %v918 = vld [vmem:[%s572 + $0x78] sm:$0xf]
      %v919 = vld [vmem:[%s572 + $0x7c] sm:$0xf]
      %v952 = vunpack.c.l.b16 %v888
      %v953 = vunpack.c.l.b16 %v889
      %v954 = vunpack.c.l.b16 %v890
      %v955 = vunpack.c.l.b16 %v891
      %v956 = vunpack.c.l.b16 %v892
      %v957 = vunpack.c.l.b16 %v893
      %v958 = vunpack.c.l.b16 %v894
      %v959 = vunpack.c.l.b16 %v895
      %v960 = vunpack.c.l.b16 %v896
      %v961 = vunpack.c.l.b16 %v897
      %v962 = vunpack.c.l.b16 %v898
      %v963 = vunpack.c.l.b16 %v899
      %v964 = vunpack.c.l.b16 %v900
      %v965 = vunpack.c.l.b16 %v901
      %v966 = vunpack.c.l.b16 %v902
      %v967 = vunpack.c.l.b16 %v903
      %v968 = vunpack.c.l.b16 %v904
      %v969 = vunpack.c.l.b16 %v905
      %v970 = vunpack.c.l.b16 %v906
      %v971 = vunpack.c.l.b16 %v907
      %v972 = vunpack.c.l.b16 %v908
      %v973 = vunpack.c.l.b16 %v909
      %v974 = vunpack.c.l.b16 %v910
      %v975 = vunpack.c.l.b16 %v911
      %v976 = vunpack.c.l.b16 %v912
      %v977 = vunpack.c.l.b16 %v913
      %v978 = vunpack.c.l.b16 %v914
      %v979 = vunpack.c.l.b16 %v915
      %v980 = vunpack.c.l.b16 %v916
      %v981 = vunpack.c.l.b16 %v917
      %v982 = vunpack.c.l.b16 %v918
      %v983 = vunpack.c.l.b16 %v919
      %v984 = vpack.c.b16 %v953, %v952
      %v985 = vpack.c.b16 %v955, %v954
      %v986 = vpack.c.b16 %v957, %v956
      %v987 = vpack.c.b16 %v959, %v958
      %v988 = vpack.c.b16 %v961, %v960
      %v989 = vpack.c.b16 %v963, %v962
      %v990 = vpack.c.b16 %v965, %v964
      %v991 = vpack.c.b16 %v967, %v966
      %v992 = vpack.c.b16 %v969, %v968
      %v993 = vpack.c.b16 %v971, %v970
      %v994 = vpack.c.b16 %v973, %v972
      %v995 = vpack.c.b16 %v975, %v974
      %v996 = vpack.c.b16 %v977, %v976
      %v997 = vpack.c.b16 %v979, %v978
      %v998 = vpack.c.b16 %v981, %v980
      %v999 = vpack.c.b16 %v983, %v982
      %v1001 = vshrl.u32 %v984, 16
      %v1003 = vrot.slane %v1001, 7
      %v1004 = vshll.u32 %v984, 16
      %v1006 = vor.u32 %v1003, %v1004
      %v1008 = vshrl.u32 %v985, 16
      %v1010 = vrot.slane %v1008, 7
      %v1011 = vshll.u32 %v985, 16
      %v1013 = vor.u32 %v1010, %v1011
      %v1015 = vshrl.u32 %v986, 16
      %v1017 = vrot.slane %v1015, 7
      %v1018 = vshll.u32 %v986, 16
      %v1020 = vor.u32 %v1017, %v1018
      %v1022 = vshrl.u32 %v987, 16
      %v1024 = vrot.slane %v1022, 7
      %v1025 = vshll.u32 %v987, 16
      %v1027 = vor.u32 %v1024, %v1025
      %v1029 = vshrl.u32 %v988, 16
      %v1031 = vrot.slane %v1029, 7
      %v1032 = vshll.u32 %v988, 16
      %v1034 = vor.u32 %v1031, %v1032
      %v1036 = vshrl.u32 %v989, 16
      %v1038 = vrot.slane %v1036, 7
      %v1039 = vshll.u32 %v989, 16
      %v1041 = vor.u32 %v1038, %v1039
      %v1043 = vshrl.u32 %v990, 16
      %v1045 = vrot.slane %v1043, 7
      %v1046 = vshll.u32 %v990, 16
      %v1048 = vor.u32 %v1045, %v1046
      %v1050 = vshrl.u32 %v991, 16
      %v1052 = vrot.slane %v1050, 7
      %v1053 = vshll.u32 %v991, 16
      %v1055 = vor.u32 %v1052, %v1053
      %v1057 = vshrl.u32 %v992, 16
      %v1059 = vrot.slane %v1057, 7
      %v1060 = vshll.u32 %v992, 16
      %v1062 = vor.u32 %v1059, %v1060
      %v1064 = vshrl.u32 %v993, 16
      %v1066 = vrot.slane %v1064, 7
      %v1067 = vshll.u32 %v993, 16
      %v1069 = vor.u32 %v1066, %v1067
      %v1071 = vshrl.u32 %v994, 16
      %v1073 = vrot.slane %v1071, 7
      %v1074 = vshll.u32 %v994, 16
      %v1076 = vor.u32 %v1073, %v1074
      %v1078 = vshrl.u32 %v995, 16
      %v1080 = vrot.slane %v1078, 7
      %v1081 = vshll.u32 %v995, 16
      %v1083 = vor.u32 %v1080, %v1081
      %v1085 = vshrl.u32 %v996, 16
      %v1087 = vrot.slane %v1085, 7
      %v1088 = vshll.u32 %v996, 16
      %v1090 = vor.u32 %v1087, %v1088
      %v1092 = vshrl.u32 %v997, 16
      %v1094 = vrot.slane %v1092, 7
      %v1095 = vshll.u32 %v997, 16
      %v1097 = vor.u32 %v1094, %v1095
      %v1099 = vshrl.u32 %v998, 16
      %v1101 = vrot.slane %v1099, 7
      %v1102 = vshll.u32 %v998, 16
      %v1104 = vor.u32 %v1101, %v1102
      %v1106 = vshrl.u32 %v999, 16
      %v1108 = vrot.slane %v1106, 7
      %v1109 = vshll.u32 %v999, 16
      %v1111 = vor.u32 %v1108, %v1109
      %s1144 = scalar_lea.vmem [#allocation2], 32
      %v1145 = vld [vmem:[%s1144] sm:$0xff]
      %v1146 = vsel %vm779, %v1006, %v1145
      %1147 = vst [vmem:[%s1144] sm:$0xff] %v1146
      %v1148 = vld [vmem:[%s1144 + $0x10] sm:$0x1]
      %v1149 = vsel %vm668, %v1003, %v1148
      %1150 = vst [vmem:[%s1144 + $0x10] sm:$0x1] %v1149
      %v1151 = vld [vmem:[%s1144 + $0x20] sm:$0xff]
      %v1152 = vsel %vm779, %v1013, %v1151
      %1153 = vst [vmem:[%s1144 + $0x20] sm:$0xff] %v1152
      %v1154 = vld [vmem:[%s1144 + $0x30] sm:$0x1]
      %v1155 = vsel %vm668, %v1010, %v1154
      %1156 = vst [vmem:[%s1144 + $0x30] sm:$0x1] %v1155
      %v1157 = vld [vmem:[%s1144 + $0x40] sm:$0xff]
      %v1158 = vsel %vm779, %v1020, %v1157
      %1159 = vst [vmem:[%s1144 + $0x40] sm:$0xff] %v1158
      %v1160 = vld [vmem:[%s1144 + $0x50] sm:$0x1]
      %v1161 = vsel %vm668, %v1017, %v1160
      %1162 = vst [vmem:[%s1144 + $0x50] sm:$0x1] %v1161
      %v1163 = vld [vmem:[%s1144 + $0x60] sm:$0xff]
      %v1164 = vsel %vm779, %v1027, %v1163
      %1165 = vst [vmem:[%s1144 + $0x60] sm:$0xff] %v1164
      %v1166 = vld [vmem:[%s1144 + $0x70] sm:$0x1]
      %v1167 = vsel %vm668, %v1024, %v1166
      %1168 = vst [vmem:[%s1144 + $0x70] sm:$0x1] %v1167
      %v1169 = vld [vmem:[%s1144 + $0x80] sm:$0xff]
      %v1170 = vsel %vm779, %v1034, %v1169
      %1171 = vst [vmem:[%s1144 + $0x80] sm:$0xff] %v1170
      %v1172 = vld [vmem:[%s1144 + $0x90] sm:$0x1]
      %v1173 = vsel %vm668, %v1031, %v1172
      %1174 = vst [vmem:[%s1144 + $0x90] sm:$0x1] %v1173
      %v1175 = vld [vmem:[%s1144 + $0xa0] sm:$0xff]
      %v1176 = vsel %vm779, %v1041, %v1175
      %1177 = vst [vmem:[%s1144 + $0xa0] sm:$0xff] %v1176
      %v1178 = vld [vmem:[%s1144 + $0xb0] sm:$0x1]
      %v1179 = vsel %vm668, %v1038, %v1178
      %1180 = vst [vmem:[%s1144 + $0xb0] sm:$0x1] %v1179
      %v1181 = vld [vmem:[%s1144 + $0xc0] sm:$0xff]
      %v1182 = vsel %vm779, %v1048, %v1181
      %1183 = vst [vmem:[%s1144 + $0xc0] sm:$0xff] %v1182
      %v1184 = vld [vmem:[%s1144 + $0xd0] sm:$0x1]
      %v1185 = vsel %vm668, %v1045, %v1184
      %1186 = vst [vmem:[%s1144 + $0xd0] sm:$0x1] %v1185
      %v1187 = vld [vmem:[%s1144 + $0xe0] sm:$0xff]
      %v1188 = vsel %vm779, %v1055, %v1187
      %1189 = vst [vmem:[%s1144 + $0xe0] sm:$0xff] %v1188
      %v1190 = vld [vmem:[%s1144 + $0xf0] sm:$0x1]
      %v1191 = vsel %vm668, %v1052, %v1190
      %1192 = vst [vmem:[%s1144 + $0xf0] sm:$0x1] %v1191
      %v1193 = vld [vmem:[%s1144 + $0x100] sm:$0xff]
      %v1194 = vsel %vm779, %v1062, %v1193
      %1195 = vst [vmem:[%s1144 + $0x100] sm:$0xff] %v1194
      %v1196 = vld [vmem:[%s1144 + $0x110] sm:$0x1]
      %v1197 = vsel %vm668, %v1059, %v1196
      %1198 = vst [vmem:[%s1144 + $0x110] sm:$0x1] %v1197
      %v1199 = vld [vmem:[%s1144 + $0x120] sm:$0xff]
      %v1200 = vsel %vm779, %v1069, %v1199
      %1201 = vst [vmem:[%s1144 + $0x120] sm:$0xff] %v1200
      %v1202 = vld [vmem:[%s1144 + $0x130] sm:$0x1]
      %v1203 = vsel %vm668, %v1066, %v1202
      %1204 = vst [vmem:[%s1144 + $0x130] sm:$0x1] %v1203
      %v1205 = vld [vmem:[%s1144 + $0x140] sm:$0xff]
      %v1206 = vsel %vm779, %v1076, %v1205
      %1207 = vst [vmem:[%s1144 + $0x140] sm:$0xff] %v1206
      %v1208 = vld [vmem:[%s1144 + $0x150] sm:$0x1]
      %v1209 = vsel %vm668, %v1073, %v1208
      %1210 = vst [vmem:[%s1144 + $0x150] sm:$0x1] %v1209
      %v1211 = vld [vmem:[%s1144 + $0x160] sm:$0xff]
      %v1212 = vsel %vm779, %v1083, %v1211
      %1213 = vst [vmem:[%s1144 + $0x160] sm:$0xff] %v1212
      %v1214 = vld [vmem:[%s1144 + $0x170] sm:$0x1]
      %v1215 = vsel %vm668, %v1080, %v1214
      %1216 = vst [vmem:[%s1144 + $0x170] sm:$0x1] %v1215
      %v1217 = vld [vmem:[%s1144 + $0x180] sm:$0xff]
      %v1218 = vsel %vm779, %v1090, %v1217
      %1219 = vst [vmem:[%s1144 + $0x180] sm:$0xff] %v1218
      %v1220 = vld [vmem:[%s1144 + $0x190] sm:$0x1]
      %v1221 = vsel %vm668, %v1087, %v1220
      %1222 = vst [vmem:[%s1144 + $0x190] sm:$0x1] %v1221
      %v1223 = vld [vmem:[%s1144 + $0x1a0] sm:$0xff]
      %v1224 = vsel %vm779, %v1097, %v1223
      %1225 = vst [vmem:[%s1144 + $0x1a0] sm:$0xff] %v1224
      %v1226 = vld [vmem:[%s1144 + $0x1b0] sm:$0x1]
      %v1227 = vsel %vm668, %v1094, %v1226
      %1228 = vst [vmem:[%s1144 + $0x1b0] sm:$0x1] %v1227
      %v1229 = vld [vmem:[%s1144 + $0x1c0] sm:$0xff]
      %v1230 = vsel %vm779, %v1104, %v1229
      %1231 = vst [vmem:[%s1144 + $0x1c0] sm:$0xff] %v1230
      %v1232 = vld [vmem:[%s1144 + $0x1d0] sm:$0x1]
      %v1233 = vsel %vm668, %v1101, %v1232
      %1234 = vst [vmem:[%s1144 + $0x1d0] sm:$0x1] %v1233
      %v1235 = vld [vmem:[%s1144 + $0x1e0] sm:$0xff]
      %v1236 = vsel %vm779, %v1111, %v1235
      %1237 = vst [vmem:[%s1144 + $0x1e0] sm:$0xff] %v1236
      %v1238 = vld [vmem:[%s1144 + $0x1f0] sm:$0x1]
      %v1239 = vsel %vm668, %v1108, %v1238
      %1240 = vst [vmem:[%s1144 + $0x1f0] sm:$0x1] %v1239
      %v1241 = vld [vmem:[%s586] sm:$0xf]
      %v1242 = vld [vmem:[%s586 + $0x4] sm:$0xf]
      %v1243 = vld [vmem:[%s603] sm:$0xf]
      %v1244 = vld [vmem:[%s603 + $0x4] sm:$0xf]
      %s1245 = scalar_select %p665, 1, 0
      %v1246 = vstv %s1245
      %vm1247 = vcmp.eq.s32.totalorder %v1246, 1
      %v1248 = vsel %vm1247, 0, %v1241
      %v1249 = vsel %vm1247, 0, %v1242
      %v1252 = vunpack.c.l.b16 %v1248
      %v1253 = vunpack.c.l.b16 %v1249
      %v1254 = vpack.c.b16 %v1253, %v1252
      %v1256 = vshrl.u32 %v1254, 16
      %v1258 = vrot.slane %v1256, 7
      %v1259 = vshll.u32 %v1254, 16
      %v1261 = vor.u32 %v1258, %v1259
      %v1264 = vld [vmem:[#allocation2] sm:$0xff]
      %v1265 = vsel %vm779, %v1261, %v1264
      %1266 = vst [vmem:[#allocation2] sm:$0xff] %v1265
      %v1267 = vld [vmem:[#allocation2 + $0x10] sm:$0x1]
      %v1268 = vsel %vm668, %v1258, %v1267
      %1269 = vst [vmem:[#allocation2 + $0x10] sm:$0x1] %v1268
      %v1270 = vsel %vm1247, 0, %v1243
      %v1271 = vsel %vm1247, 0, %v1244
      %v1274 = vunpack.c.l.b16 %v1270
      %v1275 = vunpack.c.l.b16 %v1271
      %v1276 = vpack.c.b16 %v1275, %v1274
      %v1278 = vshrl.u32 %v1276, 16
      %v1280 = vrot.slane %v1278, 7
      %v1281 = vshll.u32 %v1276, 16
      %v1283 = vor.u32 %v1280, %v1281
      %s1286 = scalar_lea.vmem [#allocation2], 544
      %v1287 = vld [vmem:[%s1286] sm:$0xff]
      %v1288 = vsel %vm779, %v1283, %v1287
      %1289 = vst [vmem:[%s1286] sm:$0xff] %v1288
      %v1290 = vld [vmem:[%s1286 + $0x10] sm:$0x1]
      %v1291 = vsel %vm668, %v1280, %v1290
      %1292 = vst [vmem:[%s1286 + $0x10] sm:$0x1] %v1291
      %v1293 = vld [vmem:[%s617] sm:$0xff]
      %v1294 = vld [vmem:[%s617 + $0x8] sm:$0xff]
      %v1295 = vld [vmem:[%s617 + $0x10] sm:$0xff]
      %v1296 = vld [vmem:[%s617 + $0x18] sm:$0xff]
      %v1297 = vld [vmem:[%s617 + $0x20] sm:$0xff]
      %v1298 = vld [vmem:[%s617 + $0x28] sm:$0xff]
      %v1299 = vld [vmem:[%s617 + $0x30] sm:$0xff]
      %v1300 = vld [vmem:[%s617 + $0x38] sm:$0xff]
      %v1301 = vld [vmem:[%s617 + $0x40] sm:$0xff]
      %v1302 = vld [vmem:[%s617 + $0x48] sm:$0xff]
      %v1303 = vld [vmem:[%s617 + $0x50] sm:$0xff]
      %v1304 = vld [vmem:[%s617 + $0x58] sm:$0xff]
      %v1305 = vld [vmem:[%s617 + $0x60] sm:$0xff]
      %v1306 = vld [vmem:[%s617 + $0x68] sm:$0xff]
      %v1307 = vld [vmem:[%s617 + $0x70] sm:$0xff]
      %v1308 = vld [vmem:[%s617 + $0x78] sm:$0xff]
      %v1309 = vld [vmem:[%s617 + $0x80] sm:$0xff]
      %v1310 = vld [vmem:[%s617 + $0x88] sm:$0xff]
      %v1311 = vld [vmem:[%s617 + $0x90] sm:$0xff]
      %v1312 = vld [vmem:[%s617 + $0x98] sm:$0xff]
      %v1313 = vld [vmem:[%s617 + $0xa0] sm:$0xff]
      %v1314 = vld [vmem:[%s617 + $0xa8] sm:$0xff]
      %v1315 = vld [vmem:[%s617 + $0xb0] sm:$0xff]
      %v1316 = vld [vmem:[%s617 + $0xb8] sm:$0xff]
      %v1317 = vld [vmem:[%s617 + $0xc0] sm:$0xff]
      %v1318 = vld [vmem:[%s617 + $0xc8] sm:$0xff]
      %v1319 = vld [vmem:[%s617 + $0xd0] sm:$0xff]
      %v1320 = vld [vmem:[%s617 + $0xd8] sm:$0xff]
      %v1321 = vld [vmem:[%s617 + $0xe0] sm:$0xff]
      %v1322 = vld [vmem:[%s617 + $0xe8] sm:$0xff]
      %v1323 = vld [vmem:[%s617 + $0xf0] sm:$0xff]
      %v1324 = vld [vmem:[%s617 + $0xf8] sm:$0xff]
      %v1325 = vpack.c.bf16 %v1294, %v1293
      %v1326 = vpack.c.bf16 %v1296, %v1295
      %v1327 = vpack.c.bf16 %v1298, %v1297
      %v1328 = vpack.c.bf16 %v1300, %v1299
      %v1329 = vpack.c.bf16 %v1302, %v1301
      %v1330 = vpack.c.bf16 %v1304, %v1303
      %v1331 = vpack.c.bf16 %v1306, %v1305
      %v1332 = vpack.c.bf16 %v1308, %v1307
      %v1333 = vpack.c.bf16 %v1310, %v1309
      %v1334 = vpack.c.bf16 %v1312, %v1311
      %v1335 = vpack.c.bf16 %v1314, %v1313
      %v1336 = vpack.c.bf16 %v1316, %v1315
      %v1337 = vpack.c.bf16 %v1318, %v1317
      %v1338 = vpack.c.bf16 %v1320, %v1319
      %v1339 = vpack.c.bf16 %v1322, %v1321
      %v1340 = vpack.c.bf16 %v1324, %v1323
      %v1342 = vshrl.u32 %v1325, 16
      %v1344 = vrot.slane %v1342, 7
      %v1345 = vshll.u32 %v1325, 16
      %v1347 = vor.u32 %v1344, %v1345
      %v1349 = vshrl.u32 %v1326, 16
      %v1351 = vrot.slane %v1349, 7
      %v1352 = vshll.u32 %v1326, 16
      %v1354 = vor.u32 %v1351, %v1352
      %v1356 = vshrl.u32 %v1327, 16
      %v1358 = vrot.slane %v1356, 7
      %v1359 = vshll.u32 %v1327, 16
      %v1361 = vor.u32 %v1358, %v1359
      %v1363 = vshrl.u32 %v1328, 16
      %v1365 = vrot.slane %v1363, 7
      %v1366 = vshll.u32 %v1328, 16
      %v1368 = vor.u32 %v1365, %v1366
      %v1370 = vshrl.u32 %v1329, 16
      %v1372 = vrot.slane %v1370, 7
      %v1373 = vshll.u32 %v1329, 16
      %v1375 = vor.u32 %v1372, %v1373
      %v1377 = vshrl.u32 %v1330, 16
      %v1379 = vrot.slane %v1377, 7
      %v1380 = vshll.u32 %v1330, 16
      %v1382 = vor.u32 %v1379, %v1380
      %v1384 = vshrl.u32 %v1331, 16
      %v1386 = vrot.slane %v1384, 7
      %v1387 = vshll.u32 %v1331, 16
      %v1389 = vor.u32 %v1386, %v1387
      %v1391 = vshrl.u32 %v1332, 16
      %v1393 = vrot.slane %v1391, 7
      %v1394 = vshll.u32 %v1332, 16
      %v1396 = vor.u32 %v1393, %v1394
      %v1398 = vshrl.u32 %v1333, 16
      %v1400 = vrot.slane %v1398, 7
      %v1401 = vshll.u32 %v1333, 16
      %v1403 = vor.u32 %v1400, %v1401
      %v1405 = vshrl.u32 %v1334, 16
      %v1407 = vrot.slane %v1405, 7
      %v1408 = vshll.u32 %v1334, 16
      %v1410 = vor.u32 %v1407, %v1408
      %v1412 = vshrl.u32 %v1335, 16
      %v1414 = vrot.slane %v1412, 7
      %v1415 = vshll.u32 %v1335, 16
      %v1417 = vor.u32 %v1414, %v1415
      %v1419 = vshrl.u32 %v1336, 16
      %v1421 = vrot.slane %v1419, 7
      %v1422 = vshll.u32 %v1336, 16
      %v1424 = vor.u32 %v1421, %v1422
      %v1426 = vshrl.u32 %v1337, 16
      %v1428 = vrot.slane %v1426, 7
      %v1429 = vshll.u32 %v1337, 16
      %v1431 = vor.u32 %v1428, %v1429
      %v1433 = vshrl.u32 %v1338, 16
      %v1435 = vrot.slane %v1433, 7
      %v1436 = vshll.u32 %v1338, 16
      %v1438 = vor.u32 %v1435, %v1436
      %v1440 = vshrl.u32 %v1339, 16
      %v1442 = vrot.slane %v1440, 7
      %v1443 = vshll.u32 %v1339, 16
      %v1445 = vor.u32 %v1442, %v1443
      %v1447 = vshrl.u32 %v1340, 16
      %v1449 = vrot.slane %v1447, 7
      %v1450 = vshll.u32 %v1340, 16
      %v1452 = vor.u32 %v1449, %v1450
      %v1485 = vld [vmem:[%s1144 + $0x8] sm:$0xff]
      %v1486 = vsel %vm779, %v1347, %v1485
      %1487 = vst [vmem:[%s1144 + $0x8] sm:$0xff] %v1486
      %v1488 = vld [vmem:[%s1144 + $0x18] sm:$0x1]
      %v1489 = vsel %vm668, %v1344, %v1488
      %1490 = vst [vmem:[%s1144 + $0x18] sm:$0x1] %v1489
      %v1491 = vld [vmem:[%s1144 + $0x28] sm:$0xff]
      %v1492 = vsel %vm779, %v1354, %v1491
      %1493 = vst [vmem:[%s1144 + $0x28] sm:$0xff] %v1492
      %v1494 = vld [vmem:[%s1144 + $0x38] sm:$0x1]
      %v1495 = vsel %vm668, %v1351, %v1494
      %1496 = vst [vmem:[%s1144 + $0x38] sm:$0x1] %v1495
      %v1497 = vld [vmem:[%s1144 + $0x48] sm:$0xff]
      %v1498 = vsel %vm779, %v1361, %v1497
      %1499 = vst [vmem:[%s1144 + $0x48] sm:$0xff] %v1498
      %v1500 = vld [vmem:[%s1144 + $0x58] sm:$0x1]
      %v1501 = vsel %vm668, %v1358, %v1500
      %1502 = vst [vmem:[%s1144 + $0x58] sm:$0x1] %v1501
      %v1503 = vld [vmem:[%s1144 + $0x68] sm:$0xff]
      %v1504 = vsel %vm779, %v1368, %v1503
      %1505 = vst [vmem:[%s1144 + $0x68] sm:$0xff] %v1504
      %v1506 = vld [vmem:[%s1144 + $0x78] sm:$0x1]
      %v1507 = vsel %vm668, %v1365, %v1506
      %1508 = vst [vmem:[%s1144 + $0x78] sm:$0x1] %v1507
      %v1509 = vld [vmem:[%s1144 + $0x88] sm:$0xff]
      %v1510 = vsel %vm779, %v1375, %v1509
      %1511 = vst [vmem:[%s1144 + $0x88] sm:$0xff] %v1510
      %v1512 = vld [vmem:[%s1144 + $0x98] sm:$0x1]
      %v1513 = vsel %vm668, %v1372, %v1512
      %1514 = vst [vmem:[%s1144 + $0x98] sm:$0x1] %v1513
      %v1515 = vld [vmem:[%s1144 + $0xa8] sm:$0xff]
      %v1516 = vsel %vm779, %v1382, %v1515
      %1517 = vst [vmem:[%s1144 + $0xa8] sm:$0xff] %v1516
      %v1518 = vld [vmem:[%s1144 + $0xb8] sm:$0x1]
      %v1519 = vsel %vm668, %v1379, %v1518
      %1520 = vst [vmem:[%s1144 + $0xb8] sm:$0x1] %v1519
      %v1521 = vld [vmem:[%s1144 + $0xc8] sm:$0xff]
      %v1522 = vsel %vm779, %v1389, %v1521
      %1523 = vst [vmem:[%s1144 + $0xc8] sm:$0xff] %v1522
      %v1524 = vld [vmem:[%s1144 + $0xd8] sm:$0x1]
      %v1525 = vsel %vm668, %v1386, %v1524
      %1526 = vst [vmem:[%s1144 + $0xd8] sm:$0x1] %v1525
      %v1527 = vld [vmem:[%s1144 + $0xe8] sm:$0xff]
      %v1528 = vsel %vm779, %v1396, %v1527
      %1529 = vst [vmem:[%s1144 + $0xe8] sm:$0xff] %v1528
      %v1530 = vld [vmem:[%s1144 + $0xf8] sm:$0x1]
      %v1531 = vsel %vm668, %v1393, %v1530
      %1532 = vst [vmem:[%s1144 + $0xf8] sm:$0x1] %v1531
      %v1533 = vld [vmem:[%s1144 + $0x108] sm:$0xff]
      %v1534 = vsel %vm779, %v1403, %v1533
      %1535 = vst [vmem:[%s1144 + $0x108] sm:$0xff] %v1534
      %v1536 = vld [vmem:[%s1144 + $0x118] sm:$0x1]
      %v1537 = vsel %vm668, %v1400, %v1536
      %1538 = vst [vmem:[%s1144 + $0x118] sm:$0x1] %v1537
      %v1539 = vld [vmem:[%s1144 + $0x128] sm:$0xff]
      %v1540 = vsel %vm779, %v1410, %v1539
      %1541 = vst [vmem:[%s1144 + $0x128] sm:$0xff] %v1540
      %v1542 = vld [vmem:[%s1144 + $0x138] sm:$0x1]
      %v1543 = vsel %vm668, %v1407, %v1542
      %1544 = vst [vmem:[%s1144 + $0x138] sm:$0x1] %v1543
      %v1545 = vld [vmem:[%s1144 + $0x148] sm:$0xff]
      %v1546 = vsel %vm779, %v1417, %v1545
      %1547 = vst [vmem:[%s1144 + $0x148] sm:$0xff] %v1546
      %v1548 = vld [vmem:[%s1144 + $0x158] sm:$0x1]
      %v1549 = vsel %vm668, %v1414, %v1548
      %1550 = vst [vmem:[%s1144 + $0x158] sm:$0x1] %v1549
      %v1551 = vld [vmem:[%s1144 + $0x168] sm:$0xff]
      %v1552 = vsel %vm779, %v1424, %v1551
      %1553 = vst [vmem:[%s1144 + $0x168] sm:$0xff] %v1552
      %v1554 = vld [vmem:[%s1144 + $0x178] sm:$0x1]
      %v1555 = vsel %vm668, %v1421, %v1554
      %1556 = vst [vmem:[%s1144 + $0x178] sm:$0x1] %v1555
      %v1557 = vld [vmem:[%s1144 + $0x188] sm:$0xff]
      %v1558 = vsel %vm779, %v1431, %v1557
      %1559 = vst [vmem:[%s1144 + $0x188] sm:$0xff] %v1558
      %v1560 = vld [vmem:[%s1144 + $0x198] sm:$0x1]
      %v1561 = vsel %vm668, %v1428, %v1560
      %1562 = vst [vmem:[%s1144 + $0x198] sm:$0x1] %v1561
      %v1563 = vld [vmem:[%s1144 + $0x1a8] sm:$0xff]
      %v1564 = vsel %vm779, %v1438, %v1563
      %1565 = vst [vmem:[%s1144 + $0x1a8] sm:$0xff] %v1564
      %v1566 = vld [vmem:[%s1144 + $0x1b8] sm:$0x1]
      %v1567 = vsel %vm668, %v1435, %v1566
      %1568 = vst [vmem:[%s1144 + $0x1b8] sm:$0x1] %v1567
      %v1569 = vld [vmem:[%s1144 + $0x1c8] sm:$0xff]
      %v1570 = vsel %vm779, %v1445, %v1569
      %1571 = vst [vmem:[%s1144 + $0x1c8] sm:$0xff] %v1570
      %v1572 = vld [vmem:[%s1144 + $0x1d8] sm:$0x1]
      %v1573 = vsel %vm668, %v1442, %v1572
      %1574 = vst [vmem:[%s1144 + $0x1d8] sm:$0x1] %v1573
      %v1575 = vld [vmem:[%s1144 + $0x1e8] sm:$0xff]
      %v1576 = vsel %vm779, %v1452, %v1575
      %1577 = vst [vmem:[%s1144 + $0x1e8] sm:$0xff] %v1576
      %v1578 = vld [vmem:[%s1144 + $0x1f8] sm:$0x1]
      %v1579 = vsel %vm668, %v1449, %v1578
      %1580 = vst [vmem:[%s1144 + $0x1f8] sm:$0x1] %v1579
      %v1581 = vld [vmem:[%s631] sm:$0xff]
      %v1582 = vld [vmem:[%s631 + $0x8] sm:$0xff]
      %v1583 = vpack.c.bf16 %v1582, %v1581
      %v1584 = vld [vmem:[%s648] sm:$0xff]
      %v1585 = vld [vmem:[%s648 + $0x8] sm:$0xff]
      %v1586 = vpack.c.bf16 %v1585, %v1584
      %v1587 = vsel %vm1247, 0, %v1583
      %v1589 = vshrl.u32 %v1587, 16
      %v1591 = vrot.slane %v1589, 7
      %v1592 = vshll.u32 %v1587, 16
      %v1594 = vor.u32 %v1591, %v1592
      %v1597 = vld [vmem:[#allocation2 + $0x8] sm:$0xff]
      %v1598 = vsel %vm779, %v1594, %v1597
      %1599 = vst [vmem:[#allocation2 + $0x8] sm:$0xff] %v1598
      %v1600 = vld [vmem:[#allocation2 + $0x18] sm:$0x1]
      %v1601 = vsel %vm668, %v1591, %v1600
      %1602 = vst [vmem:[#allocation2 + $0x18] sm:$0x1] %v1601
      %v1603 = vsel %vm1247, 0, %v1586
      %v1605 = vshrl.u32 %v1603, 16
      %v1607 = vrot.slane %v1605, 7
      %v1608 = vshll.u32 %v1603, 16
      %v1610 = vor.u32 %v1607, %v1608
      %v1613 = vld [vmem:[%s1286 + $0x8] sm:$0xff]
      %v1614 = vsel %vm779, %v1610, %v1613
      %1615 = vst [vmem:[%s1286 + $0x8] sm:$0xff] %v1614
      %v1616 = vld [vmem:[%s1286 + $0x18] sm:$0x1]
      %v1617 = vsel %vm668, %v1607, %v1616
      %1618 = vst [vmem:[%s1286 + $0x18] sm:$0x1] %v1617
      %v1619 = vld [vmem:[#allocation2] sm:$0xff]
      %v1620 = vld [vmem:[#allocation2 + $0x8] sm:$0xff]
      %v1621 = vld [vmem:[#allocation2 + $0x10] sm:$0xff]
      %v1622 = vld [vmem:[#allocation2 + $0x18] sm:$0xff]
      %v1623 = vld [vmem:[#allocation2 + $0x20] sm:$0xff]
      %v1624 = vld [vmem:[#allocation2 + $0x28] sm:$0xff]
      %v1625 = vld [vmem:[#allocation2 + $0x30] sm:$0xff]
      %v1626 = vld [vmem:[#allocation2 + $0x38] sm:$0xff]
      %v1627 = vld [vmem:[#allocation2 + $0x40] sm:$0xff]
      %v1628 = vld [vmem:[#allocation2 + $0x48] sm:$0xff]
      %v1629 = vld [vmem:[#allocation2 + $0x50] sm:$0xff]
      %v1630 = vld [vmem:[#allocation2 + $0x58] sm:$0xff]
      %v1631 = vld [vmem:[#allocation2 + $0x60] sm:$0xff]
      %v1632 = vld [vmem:[#allocation2 + $0x68] sm:$0xff]
      %v1633 = vld [vmem:[#allocation2 + $0x70] sm:$0xff]
      %v1634 = vld [vmem:[#allocation2 + $0x78] sm:$0xff]
      %v1635 = vld [vmem:[#allocation2 + $0x80] sm:$0xff]
      %v1636 = vld [vmem:[#allocation2 + $0x88] sm:$0xff]
      %v1637 = vld [vmem:[#allocation2 + $0x90] sm:$0xff]
      %v1638 = vld [vmem:[#allocation2 + $0x98] sm:$0xff]
      %v1639 = vld [vmem:[#allocation2 + $0xa0] sm:$0xff]
      %v1640 = vld [vmem:[#allocation2 + $0xa8] sm:$0xff]
      %v1641 = vld [vmem:[#allocation2 + $0xb0] sm:$0xff]
      %v1642 = vld [vmem:[#allocation2 + $0xb8] sm:$0xff]
      %v1643 = vld [vmem:[#allocation2 + $0xc0] sm:$0xff]
      %v1644 = vld [vmem:[#allocation2 + $0xc8] sm:$0xff]
      %v1645 = vld [vmem:[#allocation2 + $0xd0] sm:$0xff]
      %v1646 = vld [vmem:[#allocation2 + $0xd8] sm:$0xff]
      %v1647 = vld [vmem:[#allocation2 + $0xe0] sm:$0xff]
      %v1648 = vld [vmem:[#allocation2 + $0xe8] sm:$0xff]
      %v1649 = vld [vmem:[#allocation2 + $0xf0] sm:$0xff]
      %v1650 = vld [vmem:[#allocation2 + $0xf8] sm:$0xff]
      %v1651 = vld [vmem:[#allocation2 + $0x100] sm:$0xff]
      %v1652 = vld [vmem:[#allocation2 + $0x108] sm:$0xff]
      %v1653 = vld [vmem:[#allocation2 + $0x110] sm:$0xff]
      %v1654 = vld [vmem:[#allocation2 + $0x118] sm:$0xff]
      %v1655 = vld [vmem:[#allocation2 + $0x120] sm:$0xff]
      %v1656 = vld [vmem:[#allocation2 + $0x128] sm:$0xff]
      %v1657 = vld [vmem:[#allocation2 + $0x130] sm:$0xff]
      %v1658 = vld [vmem:[#allocation2 + $0x138] sm:$0xff]
      %v1659 = vld [vmem:[#allocation2 + $0x140] sm:$0xff]
      %v1660 = vld [vmem:[#allocation2 + $0x148] sm:$0xff]
      %v1661 = vld [vmem:[#allocation2 + $0x150] sm:$0xff]
      %v1662 = vld [vmem:[#allocation2 + $0x158] sm:$0xff]
      %v1663 = vld [vmem:[#allocation2 + $0x160] sm:$0xff]
      %v1664 = vld [vmem:[#allocation2 + $0x168] sm:$0xff]
      %v1665 = vld [vmem:[#allocation2 + $0x170] sm:$0xff]
      %v1666 = vld [vmem:[#allocation2 + $0x178] sm:$0xff]
      %v1667 = vld [vmem:[#allocation2 + $0x180] sm:$0xff]
      %v1668 = vld [vmem:[#allocation2 + $0x188] sm:$0xff]
      %v1669 = vld [vmem:[#allocation2 + $0x190] sm:$0xff]
      %v1670 = vld [vmem:[#allocation2 + $0x198] sm:$0xff]
      %v1671 = vld [vmem:[#allocation2 + $0x1a0] sm:$0xff]
      %v1672 = vld [vmem:[#allocation2 + $0x1a8] sm:$0xff]
      %v1673 = vld [vmem:[#allocation2 + $0x1b0] sm:$0xff]
      %v1674 = vld [vmem:[#allocation2 + $0x1b8] sm:$0xff]
      %v1675 = vld [vmem:[#allocation2 + $0x1c0] sm:$0xff]
      %v1676 = vld [vmem:[#allocation2 + $0x1c8] sm:$0xff]
      %v1677 = vld [vmem:[#allocation2 + $0x1d0] sm:$0xff]
      %v1678 = vld [vmem:[#allocation2 + $0x1d8] sm:$0xff]
      %v1679 = vld [vmem:[#allocation2 + $0x1e0] sm:$0xff]
      %v1680 = vld [vmem:[#allocation2 + $0x1e8] sm:$0xff]
      %v1681 = vld [vmem:[#allocation2 + $0x1f0] sm:$0xff]
      %v1682 = vld [vmem:[#allocation2 + $0x1f8] sm:$0xff]
      %v1683 = vld [vmem:[%s6] sm:$0xff]
      %v1684 = vld [vmem:[%s6 + $0x8] sm:$0xf]
      %v1685 = vld [vmem:[%s6 + $0xc] sm:$0xff]
      %v1686 = vld [vmem:[%s6 + $0x14] sm:$0xf]
      %v1687 = vld [vmem:[%s6 + $0x18] sm:$0xff]
      %v1688 = vld [vmem:[%s6 + $0x20] sm:$0xf]
      %v1689 = vld [vmem:[%s6 + $0x24] sm:$0xff]
      %v1690 = vld [vmem:[%s6 + $0x2c] sm:$0xf]
      %v1691 = vld [vmem:[%s6 + $0x30] sm:$0xff]
      %v1692 = vld [vmem:[%s6 + $0x38] sm:$0xf]
      %v1693 = vld [vmem:[%s6 + $0x3c] sm:$0xff]
      %v1694 = vld [vmem:[%s6 + $0x44] sm:$0xf]
      %v1695 = vld [vmem:[%s6 + $0x48] sm:$0xff]
      %v1696 = vld [vmem:[%s6 + $0x50] sm:$0xf]
      %v1697 = vld [vmem:[%s6 + $0x54] sm:$0xff]
      %v1698 = vld [vmem:[%s6 + $0x5c] sm:$0xf]
      %v1699 = vld [vmem:[%s6 + $0x60] sm:$0xff]
      %v1700 = vld [vmem:[%s6 + $0x68] sm:$0xf]
      %v1701 = vld [vmem:[%s6 + $0x6c] sm:$0xff]
      %v1702 = vld [vmem:[%s6 + $0x74] sm:$0xf]
      %v1703 = vld [vmem:[%s6 + $0x78] sm:$0xff]
      %v1704 = vld [vmem:[%s6 + $0x80] sm:$0xf]
      %v1705 = vld [vmem:[%s6 + $0x84] sm:$0xff]
      %v1706 = vld [vmem:[%s6 + $0x8c] sm:$0xf]
      %v1707 = vld [vmem:[%s6 + $0x90] sm:$0xff]
      %v1708 = vld [vmem:[%s6 + $0x98] sm:$0xf]
      %v1709 = vld [vmem:[%s6 + $0x9c] sm:$0xff]
      %v1710 = vld [vmem:[%s6 + $0xa4] sm:$0xf]
      %v1711 = vld [vmem:[%s6 + $0xa8] sm:$0xff]
      %v1712 = vld [vmem:[%s6 + $0xb0] sm:$0xf]
      %v1713 = vld [vmem:[%s6 + $0xb4] sm:$0xff]
      %v1714 = vld [vmem:[%s6 + $0xbc] sm:$0xf]
      %v1715 = vld [vmem:[%s6 + $0xc0] sm:$0xff]
      %v1716 = vld [vmem:[%s6 + $0xc8] sm:$0xf]
      %v1717 = vld [vmem:[%s6 + $0xcc] sm:$0xff]
      %v1718 = vld [vmem:[%s6 + $0xd4] sm:$0xf]
      %v1719 = vld [vmem:[%s6 + $0xd8] sm:$0xff]
      %v1720 = vld [vmem:[%s6 + $0xe0] sm:$0xf]
      %v1721 = vld [vmem:[%s6 + $0xe4] sm:$0xff]
      %v1722 = vld [vmem:[%s6 + $0xec] sm:$0xf]
      %v1723 = vld [vmem:[%s6 + $0xf0] sm:$0xff]
      %v1724 = vld [vmem:[%s6 + $0xf8] sm:$0xf]
      %v1725 = vld [vmem:[%s6 + $0xfc] sm:$0xff]
      %v1726 = vld [vmem:[%s6 + $0x104] sm:$0xf]
      %v1727 = vld [vmem:[%s6 + $0x108] sm:$0xff]
      %v1728 = vld [vmem:[%s6 + $0x110] sm:$0xf]
      %v1729 = vld [vmem:[%s6 + $0x114] sm:$0xff]
      %v1730 = vld [vmem:[%s6 + $0x11c] sm:$0xf]
      %v1731 = vld [vmem:[%s6 + $0x120] sm:$0xff]
      %v1732 = vld [vmem:[%s6 + $0x128] sm:$0xf]
      %v1733 = vld [vmem:[%s6 + $0x12c] sm:$0xff]
      %v1734 = vld [vmem:[%s6 + $0x134] sm:$0xf]
      %v1735 = vld [vmem:[%s6 + $0x138] sm:$0xff]
      %v1736 = vld [vmem:[%s6 + $0x140] sm:$0xf]
      %v1737 = vld [vmem:[%s6 + $0x144] sm:$0xff]
      %v1738 = vld [vmem:[%s6 + $0x14c] sm:$0xf]
      %v1739 = vld [vmem:[%s6 + $0x150] sm:$0xff]
      %v1740 = vld [vmem:[%s6 + $0x158] sm:$0xf]
      %v1741 = vld [vmem:[%s6 + $0x15c] sm:$0xff]
      %v1742 = vld [vmem:[%s6 + $0x164] sm:$0xf]
      %v1743 = vld [vmem:[%s6 + $0x168] sm:$0xff]
      %v1744 = vld [vmem:[%s6 + $0x170] sm:$0xf]
      %v1745 = vld [vmem:[%s6 + $0x174] sm:$0xff]
      %v1746 = vld [vmem:[%s6 + $0x17c] sm:$0xf]
      %v1811 = vunpack.c.l.b16 %v1683
      %v1812 = vunpack.c.h.b16 %v1683
      %v1813 = vunpack.c.l.b16 %v1684
      %v1814 = vunpack.c.l.b16 %v1685
      %v1815 = vunpack.c.h.b16 %v1685
      %v1816 = vunpack.c.l.b16 %v1686
      %v1817 = vunpack.c.l.b16 %v1687
      %v1818 = vunpack.c.h.b16 %v1687
      %v1819 = vunpack.c.l.b16 %v1688
      %v1820 = vunpack.c.l.b16 %v1689
      %v1821 = vunpack.c.h.b16 %v1689
      %v1822 = vunpack.c.l.b16 %v1690
      %v1823 = vunpack.c.l.b16 %v1691
      %v1824 = vunpack.c.h.b16 %v1691
      %v1825 = vunpack.c.l.b16 %v1692
      %v1826 = vunpack.c.l.b16 %v1693
      %v1827 = vunpack.c.h.b16 %v1693
      %v1828 = vunpack.c.l.b16 %v1694
      %v1829 = vunpack.c.l.b16 %v1695
      %v1830 = vunpack.c.h.b16 %v1695
      %v1831 = vunpack.c.l.b16 %v1696
      %v1832 = vunpack.c.l.b16 %v1697
      %v1833 = vunpack.c.h.b16 %v1697
      %v1834 = vunpack.c.l.b16 %v1698
      %v1835 = vunpack.c.l.b16 %v1699
      %v1836 = vunpack.c.h.b16 %v1699
      %v1837 = vunpack.c.l.b16 %v1700
      %v1838 = vunpack.c.l.b16 %v1701
      %v1839 = vunpack.c.h.b16 %v1701
      %v1840 = vunpack.c.l.b16 %v1702
      %v1841 = vunpack.c.l.b16 %v1703
      %v1842 = vunpack.c.h.b16 %v1703
      %v1843 = vunpack.c.l.b16 %v1704
      %v1844 = vunpack.c.l.b16 %v1705
      %v1845 = vunpack.c.h.b16 %v1705
      %v1846 = vunpack.c.l.b16 %v1706
      %v1847 = vunpack.c.l.b16 %v1707
      %v1848 = vunpack.c.h.b16 %v1707
      %v1849 = vunpack.c.l.b16 %v1708
      %v1850 = vunpack.c.l.b16 %v1709
      %v1851 = vunpack.c.h.b16 %v1709
      %v1852 = vunpack.c.l.b16 %v1710
      %v1853 = vunpack.c.l.b16 %v1711
      %v1854 = vunpack.c.h.b16 %v1711
      %v1855 = vunpack.c.l.b16 %v1712
      %v1856 = vunpack.c.l.b16 %v1713
      %v1857 = vunpack.c.h.b16 %v1713
      %v1858 = vunpack.c.l.b16 %v1714
      %v1859 = vunpack.c.l.b16 %v1715
      %v1860 = vunpack.c.h.b16 %v1715
      %v1861 = vunpack.c.l.b16 %v1716
      %v1862 = vunpack.c.l.b16 %v1717
      %v1863 = vunpack.c.h.b16 %v1717
      %v1864 = vunpack.c.l.b16 %v1718
      %v1865 = vunpack.c.l.b16 %v1719
      %v1866 = vunpack.c.h.b16 %v1719
      %v1867 = vunpack.c.l.b16 %v1720
      %v1868 = vunpack.c.l.b16 %v1721
      %v1869 = vunpack.c.h.b16 %v1721
      %v1870 = vunpack.c.l.b16 %v1722
      %v1871 = vunpack.c.l.b16 %v1723
      %v1872 = vunpack.c.h.b16 %v1723
      %v1873 = vunpack.c.l.b16 %v1724
      %v1874 = vunpack.c.l.b16 %v1725
      %v1875 = vunpack.c.h.b16 %v1725
      %v1876 = vunpack.c.l.b16 %v1726
      %v1877 = vunpack.c.l.b16 %v1727
      %v1878 = vunpack.c.h.b16 %v1727
      %v1879 = vunpack.c.l.b16 %v1728
      %v1880 = vunpack.c.l.b16 %v1729
      %v1881 = vunpack.c.h.b16 %v1729
      %v1882 = vunpack.c.l.b16 %v1730
      %v1883 = vunpack.c.l.b16 %v1731
      %v1884 = vunpack.c.h.b16 %v1731
      %v1885 = vunpack.c.l.b16 %v1732
      %v1886 = vunpack.c.l.b16 %v1733
      %v1887 = vunpack.c.h.b16 %v1733
      %v1888 = vunpack.c.l.b16 %v1734
      %v1889 = vunpack.c.l.b16 %v1735
      %v1890 = vunpack.c.h.b16 %v1735
      %v1891 = vunpack.c.l.b16 %v1736
      %v1892 = vunpack.c.l.b16 %v1737
      %v1893 = vunpack.c.h.b16 %v1737
      %v1894 = vunpack.c.l.b16 %v1738
      %v1895 = vunpack.c.l.b16 %v1739
      %v1896 = vunpack.c.h.b16 %v1739
      %v1897 = vunpack.c.l.b16 %v1740
      %v1898 = vunpack.c.l.b16 %v1741
      %v1899 = vunpack.c.h.b16 %v1741
      %v1900 = vunpack.c.l.b16 %v1742
      %v1901 = vunpack.c.l.b16 %v1743
      %v1902 = vunpack.c.h.b16 %v1743
      %v1903 = vunpack.c.l.b16 %v1744
      %v1904 = vunpack.c.l.b16 %v1745
      %v1905 = vunpack.c.h.b16 %v1745
      %v1906 = vunpack.c.l.b16 %v1746
      %v1907 = vpack.c.b16 %v1814, %v1811
      %v1908 = vpack.c.b16 %v1815, %v1812
      %v1909 = vpack.c.b16 %v1816, %v1813
      %v1910 = vpack.c.b16 %v1820, %v1817
      %v1911 = vpack.c.b16 %v1821, %v1818
      %v1912 = vpack.c.b16 %v1822, %v1819
      %v1913 = vpack.c.b16 %v1826, %v1823
      %v1914 = vpack.c.b16 %v1827, %v1824
      %v1915 = vpack.c.b16 %v1828, %v1825
      %v1916 = vpack.c.b16 %v1832, %v1829
      %v1917 = vpack.c.b16 %v1833, %v1830
      %v1918 = vpack.c.b16 %v1834, %v1831
      %v1919 = vpack.c.b16 %v1838, %v1835
      %v1920 = vpack.c.b16 %v1839, %v1836
      %v1921 = vpack.c.b16 %v1840, %v1837
      %v1922 = vpack.c.b16 %v1844, %v1841
      %v1923 = vpack.c.b16 %v1845, %v1842
      %v1924 = vpack.c.b16 %v1846, %v1843
      %v1925 = vpack.c.b16 %v1850, %v1847
      %v1926 = vpack.c.b16 %v1851, %v1848
      %v1927 = vpack.c.b16 %v1852, %v1849
      %v1928 = vpack.c.b16 %v1856, %v1853
      %v1929 = vpack.c.b16 %v1857, %v1854
      %v1930 = vpack.c.b16 %v1858, %v1855
      %v1931 = vpack.c.b16 %v1862, %v1859
      %v1932 = vpack.c.b16 %v1863, %v1860
      %v1933 = vpack.c.b16 %v1864, %v1861
      %v1934 = vpack.c.b16 %v1868, %v1865
      %v1935 = vpack.c.b16 %v1869, %v1866
      %v1936 = vpack.c.b16 %v1870, %v1867
      %v1937 = vpack.c.b16 %v1874, %v1871
      %v1938 = vpack.c.b16 %v1875, %v1872
      %v1939 = vpack.c.b16 %v1876, %v1873
      %v1940 = vpack.c.b16 %v1880, %v1877
      %v1941 = vpack.c.b16 %v1881, %v1878
      %v1942 = vpack.c.b16 %v1882, %v1879
      %v1943 = vpack.c.b16 %v1886, %v1883
      %v1944 = vpack.c.b16 %v1887, %v1884
      %v1945 = vpack.c.b16 %v1888, %v1885
      %v1946 = vpack.c.b16 %v1892, %v1889
      %v1947 = vpack.c.b16 %v1893, %v1890
      %v1948 = vpack.c.b16 %v1894, %v1891
      %v1949 = vpack.c.b16 %v1898, %v1895
      %v1950 = vpack.c.b16 %v1899, %v1896
      %v1951 = vpack.c.b16 %v1900, %v1897
      %v1952 = vpack.c.b16 %v1904, %v1901
      %v1953 = vpack.c.b16 %v1905, %v1902
      %v1954 = vpack.c.b16 %v1906, %v1903
      %2003 = vmatprep.subr.bf16.mxu0 %v1908
      %2004 = vmatpush1.bf16.msra.mxu0 %v1907
      %2005 = vmatprep.subr.bf16.mxu0 %v1911
      %2006 = vmatpush1.bf16.msra.mxu0 %v1910
      %2007 = vmatprep.subr.bf16.mxu0 %v1914
      %2008 = vmatpush1.bf16.msra.mxu0 %v1913
      %2009 = vmatprep.subr.bf16.mxu0 %v1917
      %2010 = vmatpush1.bf16.msra.mxu0 %v1916
      %2011 = vmatprep.subr.bf16.mxu0 %v1920
      %2012 = vmatpush1.bf16.msra.mxu0 %v1919
      %2013 = vmatprep.subr.bf16.mxu0 %v1923
      %2014 = vmatpush1.bf16.msra.mxu0 %v1922
      %2015 = vmatprep.subr.bf16.mxu0 %v1926
      %2016 = vmatpush1.bf16.msra.mxu0 %v1925
      %2017 = vmatprep.subr.bf16.mxu0 %v1929
      %2018 = vmatpush1.bf16.msra.mxu0 %v1928
      %2019 = vmatprep.subr.bf16.mxu0 %v1932
      %2020 = vmatpush1.bf16.msra.mxu0 %v1931
      %2021 = vmatprep.subr.bf16.mxu0 %v1935
      %2022 = vmatpush1.bf16.msra.mxu0 %v1934
      %2023 = vmatprep.subr.bf16.mxu0 %v1938
      %2024 = vmatpush1.bf16.msra.mxu0 %v1937
      %2025 = vmatprep.subr.bf16.mxu0 %v1941
      %2026 = vmatpush1.bf16.msra.mxu0 %v1940
      %2027 = vmatprep.subr.bf16.mxu0 %v1944
      %2028 = vmatpush1.bf16.msra.mxu0 %v1943
      %2029 = vmatprep.subr.bf16.mxu0 %v1947
      %2030 = vmatpush1.bf16.msra.mxu0 %v1946
      %2031 = vmatprep.subr.bf16.mxu0 %v1950
      %2032 = vmatpush1.bf16.msra.mxu0 %v1949
      %2033 = vmatprep.subr.bf16.mxu0 %v1953
      %2034 = vmatpush1.bf16.msra.mxu0 %v1952
      %2035 = vmatprep.mubr.bf16.mxu0 %v1620
      %2036 = vmatmul.mubr.bf16.gmra.mrb[0].mxu0 %v1619
      %v2037 = vpop.f32.mrb[0].mxu0
      %v2038 = vadd.f32 0.0, %v2037
      %v2039 = vpop.f32.mrb[0].mxu0
      %v2040 = vadd.f32 0.0, %v2039
      %v2041 = vpop.f32.mrb[0].mxu0
      %v2042 = vadd.f32 0.0, %v2041
      %v2043 = vpop.f32.mrb[0].mxu0
      %v2044 = vadd.f32 0.0, %v2043
      %2045 = vmatprep.mubr.bf16.mxu0 %v1622
      %2046 = vmatmul.mubr.bf16.gmra.mrb[0].mxu0 %v1621
      %v2047 = vpop.f32.mrb[0].mxu0
      %v2048 = vpop.f32.mrb[0].mxu0
      %v2049 = vadd.f32 0.0, %v2048
      %v2050 = vpop.f32.mrb[0].mxu0
      %v2051 = vpop.f32.mrb[0].mxu0
      %2052 = vmatprep.mubr.bf16.mxu0 %v1624
      %2053 = vmatmul.mubr.bf16.gmra.mrb[0].mxu0 %v1623
      %v2054 = vpop.f32.mrb[0].mxu0
      %v2055 = vadd.f32 0.0, %v2054
      %v2056 = vpop.f32.mrb[0].mxu0
      %v2057 = vadd.f32 0.0, %v2056
      %v2058 = vpop.f32.mrb[0].mxu0
      %v2059 = vadd.f32 0.0, %v2058
      %v2060 = vpop.f32.mrb[0].mxu0
      %v2061 = vadd.f32 0.0, %v2060
      %2062 = vmatprep.mubr.bf16.mxu0 %v1626
      %2063 = vmatmul.mubr.bf16.gmra.mrb[0].mxu0 %v1625
      %v2064 = vpop.f32.mrb[0].mxu0
      %v2065 = vpop.f32.mrb[0].mxu0
      %v2066 = vadd.f32 0.0, %v2065
      %v2067 = vpop.f32.mrb[0].mxu0
      %v2068 = vpop.f32.mrb[0].mxu0
      %2069 = vmatprep.mubr.bf16.mxu0 %v1628
      %2070 = vmatmul.mubr.bf16.gmra.mrb[0].mxu0 %v1627
      %v2071 = vpop.f32.mrb[0].mxu0
      %v2072 = vadd.f32 0.0, %v2071
      %v2073 = vpop.f32.mrb[0].mxu0
      %v2074 = vadd.f32 0.0, %v2073
      %v2075 = vpop.f32.mrb[0].mxu0
      %v2076 = vadd.f32 0.0, %v2075
      %v2077 = vpop.f32.mrb[0].mxu0
      %v2078 = vadd.f32 0.0, %v2077
      %2079 = vmatprep.mubr.bf16.mxu0 %v1630
      %2080 = vmatmul.mubr.bf16.gmra.mrb[0].mxu0 %v1629
      %v2081 = vpop.f32.mrb[0].mxu0
      %v2082 = vpop.f32.mrb[0].mxu0
      %v2083 = vadd.f32 0.0, %v2082
      %v2084 = vpop.f32.mrb[0].mxu0
      %v2085 = vpop.f32.mrb[0].mxu0
      %2086 = vmatprep.mubr.bf16.mxu0 %v1632
      %2087 = vmatmul.mubr.bf16.gmra.mrb[0].mxu0 %v1631
      %v2088 = vpop.f32.mrb[0].mxu0
      %v2089 = vadd.f32 0.0, %v2088
      %v2090 = vpop.f32.mrb[0].mxu0
      %v2091 = vadd.f32 0.0, %v2090
      %v2092 = vpop.f32.mrb[0].mxu0
      %v2093 = vadd.f32 0.0, %v2092
      %v2094 = vpop.f32.mrb[0].mxu0
      %v2095 = vadd.f32 0.0, %v2094
      %2096 = vmatprep.mubr.bf16.mxu0 %v1634
      %2097 = vmatmul.mubr.bf16.gmra.mrb[0].mxu0 %v1633
      %v2098 = vpop.f32.mrb[0].mxu0
      %v2099 = vpop.f32.mrb[0].mxu0
      %v2100 = vadd.f32 0.0, %v2099
      %v2101 = vpop.f32.mrb[0].mxu0
      %v2102 = vpop.f32.mrb[0].mxu0
      %2103 = vmatprep.mubr.bf16.mxu0 %v1636
      %2104 = vmatmul.mubr.bf16.gmra.mrb[0].mxu0 %v1635
      %v2105 = vpop.f32.mrb[0].mxu0
      %v2106 = vadd.f32 0.0, %v2105
      %v2107 = vpop.f32.mrb[0].mxu0
      %v2108 = vadd.f32 0.0, %v2107
      %v2109 = vpop.f32.mrb[0].mxu0
      %v2110 = vadd.f32 0.0, %v2109
      %v2111 = vpop.f32.mrb[0].mxu0
      %v2112 = vadd.f32 0.0, %v2111
      %2113 = vmatprep.mubr.bf16.mxu0 %v1638
      %2114 = vmatmul.mubr.bf16.gmra.mrb[0].mxu0 %v1637
      %v2115 = vpop.f32.mrb[0].mxu0
      %v2116 = vpop.f32.mrb[0].mxu0
      %v2117 = vadd.f32 0.0, %v2116
      %v2118 = vpop.f32.mrb[0].mxu0
      %v2119 = vpop.f32.mrb[0].mxu0
      %2120 = vmatprep.mubr.bf16.mxu0 %v1640
      %2121 = vmatmul.mubr.bf16.gmra.mrb[0].mxu0 %v1639
      %v2122 = vpop.f32.mrb[0].mxu0
      %v2123 = vadd.f32 0.0, %v2122
      %v2124 = vpop.f32.mrb[0].mxu0
      %v2125 = vadd.f32 0.0, %v2124
      %v2126 = vpop.f32.mrb[0].mxu0
      %v2127 = vadd.f32 0.0, %v2126
      %v2128 = vpop.f32.mrb[0].mxu0
      %v2129 = vadd.f32 0.0, %v2128
      %2130 = vmatprep.mubr.bf16.mxu0 %v1642
      %2131 = vmatmul.mubr.bf16.gmra.mrb[0].mxu0 %v1641
      %v2132 = vpop.f32.mrb[0].mxu0
      %v2133 = vpop.f32.mrb[0].mxu0
      %v2134 = vadd.f32 0.0, %v2133
      %v2135 = vpop.f32.mrb[0].mxu0
      %v2136 = vpop.f32.mrb[0].mxu0
      %2137 = vmatprep.mubr.bf16.mxu0 %v1644
      %2138 = vmatmul.mubr.bf16.gmra.mrb[0].mxu0 %v1643
      %v2139 = vpop.f32.mrb[0].mxu0
      %v2140 = vadd.f32 0.0, %v2139
      %v2141 = vpop.f32.mrb[0].mxu0
      %v2142 = vadd.f32 0.0, %v2141
      %v2143 = vpop.f32.mrb[0].mxu0
      %v2144 = vadd.f32 0.0, %v2143
      %v2145 = vpop.f32.mrb[0].mxu0
      %v2146 = vadd.f32 0.0, %v2145
      %2147 = vmatprep.mubr.bf16.mxu0 %v1646
      %2148 = vmatmul.mubr.bf16.gmra.mrb[0].mxu0 %v1645
      %v2149 = vpop.f32.mrb[0].mxu0
      %v2150 = vpop.f32.mrb[0].mxu0
      %v2151 = vadd.f32 0.0, %v2150
      %v2152 = vpop.f32.mrb[0].mxu0
      %v2153 = vpop.f32.mrb[0].mxu0
      %2154 = vmatprep.mubr.bf16.mxu0 %v1648
      %2155 = vmatmul.mubr.bf16.gmra.mrb[0].mxu0 %v1647
      %v2156 = vpop.f32.mrb[0].mxu0
      %v2157 = vadd.f32 0.0, %v2156
      %v2158 = vpop.f32.mrb[0].mxu0
      %v2159 = vadd.f32 0.0, %v2158
      %v2160 = vpop.f32.mrb[0].mxu0
      %v2161 = vadd.f32 0.0, %v2160
      %v2162 = vpop.f32.mrb[0].mxu0
      %v2163 = vadd.f32 0.0, %v2162
      %2164 = vmatprep.mubr.bf16.mxu0 %v1650
      %2165 = vmatmul.mubr.bf16.gmra.mrb[0].mxu0 %v1649
      %v2166 = vpop.f32.mrb[0].mxu0
      %v2167 = vpop.f32.mrb[0].mxu0
      %v2168 = vadd.f32 0.0, %v2167
      %v2169 = vpop.f32.mrb[0].mxu0
      %v2170 = vpop.f32.mrb[0].mxu0
      %2171 = vmatprep.mubr.bf16.mxu0 %v1652
      %2172 = vmatmul.mubr.bf16.gmra.mrb[0].mxu0 %v1651
      %v2173 = vpop.f32.mrb[0].mxu0
      %v2174 = vadd.f32 0.0, %v2173
      %v2175 = vpop.f32.mrb[0].mxu0
      %v2176 = vadd.f32 0.0, %v2175
      %v2177 = vpop.f32.mrb[0].mxu0
      %v2178 = vadd.f32 0.0, %v2177
      %v2179 = vpop.f32.mrb[0].mxu0
      %v2180 = vadd.f32 0.0, %v2179
      %2181 = vmatprep.mubr.bf16.mxu0 %v1654
      %2182 = vmatmul.mubr.bf16.gmra.mrb[0].mxu0 %v1653
      %v2183 = vpop.f32.mrb[0].mxu0
      %v2184 = vpop.f32.mrb[0].mxu0
      %v2185 = vadd.f32 0.0, %v2184
      %v2186 = vpop.f32.mrb[0].mxu0
      %v2187 = vpop.f32.mrb[0].mxu0
      %2188 = vmatprep.mubr.bf16.mxu0 %v1656
      %2189 = vmatmul.mubr.bf16.gmra.mrb[0].mxu0 %v1655
      %v2190 = vpop.f32.mrb[0].mxu0
      %v2191 = vadd.f32 0.0, %v2190
      %v2192 = vpop.f32.mrb[0].mxu0
      %v2193 = vadd.f32 0.0, %v2192
      %v2194 = vpop.f32.mrb[0].mxu0
      %v2195 = vadd.f32 0.0, %v2194
      %v2196 = vpop.f32.mrb[0].mxu0
      %v2197 = vadd.f32 0.0, %v2196
      %2198 = vmatprep.mubr.bf16.mxu0 %v1658
      %2199 = vmatmul.mubr.bf16.gmra.mrb[0].mxu0 %v1657
      %v2200 = vpop.f32.mrb[0].mxu0
      %v2201 = vpop.f32.mrb[0].mxu0
      %v2202 = vadd.f32 0.0, %v2201
      %v2203 = vpop.f32.mrb[0].mxu0
      %v2204 = vpop.f32.mrb[0].mxu0
      %2205 = vmatprep.mubr.bf16.mxu0 %v1660
      %2206 = vmatmul.mubr.bf16.gmra.mrb[0].mxu0 %v1659
      %v2207 = vpop.f32.mrb[0].mxu0
      %v2208 = vadd.f32 0.0, %v2207
      %v2209 = vpop.f32.mrb[0].mxu0
      %v2210 = vadd.f32 0.0, %v2209
      %v2211 = vpop.f32.mrb[0].mxu0
      %v2212 = vadd.f32 0.0, %v2211
      %v2213 = vpop.f32.mrb[0].mxu0
      %v2214 = vadd.f32 0.0, %v2213
      %2215 = vmatprep.mubr.bf16.mxu0 %v1662
      %2216 = vmatmul.mubr.bf16.gmra.mrb[0].mxu0 %v1661
      %v2217 = vpop.f32.mrb[0].mxu0
      %v2218 = vpop.f32.mrb[0].mxu0
      %v2219 = vadd.f32 0.0, %v2218
      %v2220 = vpop.f32.mrb[0].mxu0
      %v2221 = vpop.f32.mrb[0].mxu0
      %2222 = vmatprep.mubr.bf16.mxu0 %v1664
      %2223 = vmatmul.mubr.bf16.gmra.mrb[0].mxu0 %v1663
      %v2224 = vpop.f32.mrb[0].mxu0
      %v2225 = vadd.f32 0.0, %v2224
      %v2226 = vpop.f32.mrb[0].mxu0
      %v2227 = vadd.f32 0.0, %v2226
      %v2228 = vpop.f32.mrb[0].mxu0
      %v2229 = vadd.f32 0.0, %v2228
      %v2230 = vpop.f32.mrb[0].mxu0
      %v2231 = vadd.f32 0.0, %v2230
      %2232 = vmatprep.mubr.bf16.mxu0 %v1666
      %2233 = vmatmul.mubr.bf16.gmra.mrb[0].mxu0 %v1665
      %v2234 = vpop.f32.mrb[0].mxu0
      %v2235 = vpop.f32.mrb[0].mxu0
      %v2236 = vadd.f32 0.0, %v2235
      %v2237 = vpop.f32.mrb[0].mxu0
      %v2238 = vpop.f32.mrb[0].mxu0
      %2239 = vmatprep.mubr.bf16.mxu0 %v1668
      %2240 = vmatmul.mubr.bf16.gmra.mrb[0].mxu0 %v1667
      %v2241 = vpop.f32.mrb[0].mxu0
      %v2242 = vadd.f32 0.0, %v2241
      %v2243 = vpop.f32.mrb[0].mxu0
      %v2244 = vadd.f32 0.0, %v2243
      %v2245 = vpop.f32.mrb[0].mxu0
      %v2246 = vadd.f32 0.0, %v2245
      %v2247 = vpop.f32.mrb[0].mxu0
      %v2248 = vadd.f32 0.0, %v2247
      %2249 = vmatprep.mubr.bf16.mxu0 %v1670
      %2250 = vmatmul.mubr.bf16.gmra.mrb[0].mxu0 %v1669
      %v2251 = vpop.f32.mrb[0].mxu0
      %v2252 = vpop.f32.mrb[0].mxu0
      %v2253 = vadd.f32 0.0, %v2252
      %v2254 = vpop.f32.mrb[0].mxu0
      %v2255 = vpop.f32.mrb[0].mxu0
      %2256 = vmatprep.mubr.bf16.mxu0 %v1672
      %2257 = vmatmul.mubr.bf16.gmra.mrb[0].mxu0 %v1671
      %v2258 = vpop.f32.mrb[0].mxu0
      %v2259 = vadd.f32 0.0, %v2258
      %v2260 = vpop.f32.mrb[0].mxu0
      %v2261 = vadd.f32 0.0, %v2260
      %v2262 = vpop.f32.mrb[0].mxu0
      %v2263 = vadd.f32 0.0, %v2262
      %v2264 = vpop.f32.mrb[0].mxu0
      %v2265 = vadd.f32 0.0, %v2264
      %2266 = vmatprep.mubr.bf16.mxu0 %v1674
      %2267 = vmatmul.mubr.bf16.gmra.mrb[0].mxu0 %v1673
      %v2268 = vpop.f32.mrb[0].mxu0
      %v2269 = vpop.f32.mrb[0].mxu0
      %v2270 = vadd.f32 0.0, %v2269
      %v2271 = vpop.f32.mrb[0].mxu0
      %v2272 = vpop.f32.mrb[0].mxu0
      %2273 = vmatprep.mubr.bf16.mxu0 %v1676
      %2274 = vmatmul.mubr.bf16.gmra.mrb[0].mxu0 %v1675
      %v2275 = vpop.f32.mrb[0].mxu0
      %v2276 = vadd.f32 0.0, %v2275
      %v2277 = vpop.f32.mrb[0].mxu0
      %v2278 = vadd.f32 0.0, %v2277
      %v2279 = vpop.f32.mrb[0].mxu0
      %v2280 = vadd.f32 0.0, %v2279
      %v2281 = vpop.f32.mrb[0].mxu0
      %v2282 = vadd.f32 0.0, %v2281
      %2283 = vmatprep.mubr.bf16.mxu0 %v1678
      %2284 = vmatmul.mubr.bf16.gmra.mrb[0].mxu0 %v1677
      %v2285 = vpop.f32.mrb[0].mxu0
      %v2286 = vpop.f32.mrb[0].mxu0
      %v2287 = vadd.f32 0.0, %v2286
      %v2288 = vpop.f32.mrb[0].mxu0
      %v2289 = vpop.f32.mrb[0].mxu0
      %2290 = vmatprep.mubr.bf16.mxu0 %v1680
      %2291 = vmatmul.mubr.bf16.gmra.mrb[0].mxu0 %v1679
      %v2292 = vpop.f32.mrb[0].mxu0
      %v2293 = vadd.f32 0.0, %v2292
      %v2294 = vpop.f32.mrb[0].mxu0
      %v2295 = vadd.f32 0.0, %v2294
      %v2296 = vpop.f32.mrb[0].mxu0
      %v2297 = vadd.f32 0.0, %v2296
      %v2298 = vpop.f32.mrb[0].mxu0
      %v2299 = vadd.f32 0.0, %v2298
      %2300 = vmatprep.mubr.bf16.mxu0 %v1682
      %2301 = vmatmul.mubr.bf16.gmra.mrb[0].mxu0 %v1681
      %v2302 = vpop.f32.mrb[0].mxu0
      %v2303 = vpop.f32.mrb[0].mxu0
      %v2304 = vadd.f32 0.0, %v2303
      %v2305 = vpop.f32.mrb[0].mxu0
      %v2306 = vpop.f32.mrb[0].mxu0
      %2307 = vdwg.mxu0
      %2308 = vmatprep.subr.bf16.mxu0 0
      %2309 = vmatpush1.bf16.msra.mxu0 %v1909
      %2310 = vmatprep.subr.bf16.mxu0 0
      %2311 = vmatpush1.bf16.msra.mxu0 %v1912
      %2312 = vmatprep.subr.bf16.mxu0 0
      %2313 = vmatpush1.bf16.msra.mxu0 %v1915
      %2314 = vmatprep.subr.bf16.mxu0 0
      %2315 = vmatpush1.bf16.msra.mxu0 %v1918
      %2316 = vmatprep.subr.bf16.mxu0 0
      %2317 = vmatpush1.bf16.msra.mxu0 %v1921
      %2318 = vmatprep.subr.bf16.mxu0 0
      %2319 = vmatpush1.bf16.msra.mxu0 %v1924
      %2320 = vmatprep.subr.bf16.mxu0 0
      %2321 = vmatpush1.bf16.msra.mxu0 %v1927
      %2322 = vmatprep.subr.bf16.mxu0 0
      %2323 = vmatpush1.bf16.msra.mxu0 %v1930
      %2324 = vmatprep.subr.bf16.mxu0 0
      %2325 = vmatpush1.bf16.msra.mxu0 %v1933
      %2326 = vmatprep.subr.bf16.mxu0 0
      %2327 = vmatpush1.bf16.msra.mxu0 %v1936
      %2328 = vmatprep.subr.bf16.mxu0 0
      %2329 = vmatpush1.bf16.msra.mxu0 %v1939
      %2330 = vmatprep.subr.bf16.mxu0 0
      %2331 = vmatpush1.bf16.msra.mxu0 %v1942
      %2332 = vmatprep.subr.bf16.mxu0 0
      %2333 = vmatpush1.bf16.msra.mxu0 %v1945
      %2334 = vmatprep.subr.bf16.mxu0 0
      %2335 = vmatpush1.bf16.msra.mxu0 %v1948
      %2336 = vmatprep.subr.bf16.mxu0 0
      %2337 = vmatpush1.bf16.msra.mxu0 %v1951
      %2338 = vmatprep.subr.bf16.mxu0 0
      %2339 = vmatpush1.bf16.msra.mxu0 %v1954
      %2340 = vmatprep.mubr.bf16.mxu0 %v1620
      %2341 = vmatmul.mubr.bf16.gmra.mrb[0].mxu0 %v1619
      %v2342 = vpop.f32.mrb[0].mxu0
      %v2343 = vadd.f32 0.0, %v2342
      %v2344 = vpop.f32.mrb[0].mxu0
      %v2345 = vpop.f32.mrb[0].mxu0
      %v2346 = vadd.f32 0.0, %v2345
      %v2347 = vpop.f32.mrb[0].mxu0
      %2348 = vmatprep.mubr.bf16.mxu0 %v1622
      %2349 = vmatmul.mubr.bf16.gmra.mrb[0].mxu0 %v1621
      %v2350 = vpop.f32.mrb[0].mxu0
      %v2351 = vadd.f32 0.0, %v2350
      %v2352 = vpop.f32.mrb[0].mxu0
      %v2353 = vpop.f32.mrb[0].mxu0
      %v2354 = vpop.f32.mrb[0].mxu0
      %2355 = vmatprep.mubr.bf16.mxu0 %v1624
      %2356 = vmatmul.mubr.bf16.gmra.mrb[0].mxu0 %v1623
      %v2357 = vpop.f32.mrb[0].mxu0
      %v2358 = vadd.f32 0.0, %v2357
      %v2359 = vpop.f32.mrb[0].mxu0
      %v2360 = vpop.f32.mrb[0].mxu0
      %v2361 = vadd.f32 0.0, %v2360
      %v2362 = vpop.f32.mrb[0].mxu0
      %2363 = vmatprep.mubr.bf16.mxu0 %v1626
      %2364 = vmatmul.mubr.bf16.gmra.mrb[0].mxu0 %v1625
      %v2365 = vpop.f32.mrb[0].mxu0
      %v2366 = vadd.f32 0.0, %v2365
      %v2367 = vpop.f32.mrb[0].mxu0
      %v2368 = vpop.f32.mrb[0].mxu0
      %v2369 = vpop.f32.mrb[0].mxu0
      %2370 = vmatprep.mubr.bf16.mxu0 %v1628
      %2371 = vmatmul.mubr.bf16.gmra.mrb[0].mxu0 %v1627
      %v2372 = vpop.f32.mrb[0].mxu0
      %v2373 = vadd.f32 0.0, %v2372
      %v2374 = vpop.f32.mrb[0].mxu0
      %v2375 = vpop.f32.mrb[0].mxu0
      %v2376 = vadd.f32 0.0, %v2375
      %v2377 = vpop.f32.mrb[0].mxu0
      %2378 = vmatprep.mubr.bf16.mxu0 %v1630
      %2379 = vmatmul.mubr.bf16.gmra.mrb[0].mxu0 %v1629
      %v2380 = vpop.f32.mrb[0].mxu0
      %v2381 = vadd.f32 0.0, %v2380
      %v2382 = vpop.f32.mrb[0].mxu0
      %v2383 = vpop.f32.mrb[0].mxu0
      %v2384 = vpop.f32.mrb[0].mxu0
      %2385 = vmatprep.mubr.bf16.mxu0 %v1632
      %2386 = vmatmul.mubr.bf16.gmra.mrb[0].mxu0 %v1631
      %v2387 = vpop.f32.mrb[0].mxu0
      %v2388 = vadd.f32 0.0, %v2387
      %v2389 = vpop.f32.mrb[0].mxu0
      %v2390 = vpop.f32.mrb[0].mxu0
      %v2391 = vadd.f32 0.0, %v2390
      %v2392 = vpop.f32.mrb[0].mxu0
      %2393 = vmatprep.mubr.bf16.mxu0 %v1634
      %2394 = vmatmul.mubr.bf16.gmra.mrb[0].mxu0 %v1633
      %v2395 = vpop.f32.mrb[0].mxu0
      %v2396 = vadd.f32 0.0, %v2395
      %v2397 = vpop.f32.mrb[0].mxu0
      %v2398 = vpop.f32.mrb[0].mxu0
      %v2399 = vpop.f32.mrb[0].mxu0
      %2400 = vmatprep.mubr.bf16.mxu0 %v1636
      %2401 = vmatmul.mubr.bf16.gmra.mrb[0].mxu0 %v1635
      %v2402 = vpop.f32.mrb[0].mxu0
      %v2403 = vadd.f32 0.0, %v2402
      %v2404 = vpop.f32.mrb[0].mxu0
      %v2405 = vpop.f32.mrb[0].mxu0
      %v2406 = vadd.f32 0.0, %v2405
      %v2407 = vpop.f32.mrb[0].mxu0
      %2408 = vmatprep.mubr.bf16.mxu0 %v1638
      %2409 = vmatmul.mubr.bf16.gmra.mrb[0].mxu0 %v1637
      %v2410 = vpop.f32.mrb[0].mxu0
      %v2411 = vadd.f32 0.0, %v2410
      %v2412 = vpop.f32.mrb[0].mxu0
      %v2413 = vpop.f32.mrb[0].mxu0
      %v2414 = vpop.f32.mrb[0].mxu0
      %2415 = vmatprep.mubr.bf16.mxu0 %v1640
      %2416 = vmatmul.mubr.bf16.gmra.mrb[0].mxu0 %v1639
      %v2417 = vpop.f32.mrb[0].mxu0
      %v2418 = vadd.f32 0.0, %v2417
      %v2419 = vpop.f32.mrb[0].mxu0
      %v2420 = vpop.f32.mrb[0].mxu0
      %v2421 = vadd.f32 0.0, %v2420
      %v2422 = vpop.f32.mrb[0].mxu0
      %2423 = vmatprep.mubr.bf16.mxu0 %v1642
      %2424 = vmatmul.mubr.bf16.gmra.mrb[0].mxu0 %v1641
      %v2425 = vpop.f32.mrb[0].mxu0
      %v2426 = vadd.f32 0.0, %v2425
      %v2427 = vpop.f32.mrb[0].mxu0
      %v2428 = vpop.f32.mrb[0].mxu0
      %v2429 = vpop.f32.mrb[0].mxu0
      %2430 = vmatprep.mubr.bf16.mxu0 %v1644
      %2431 = vmatmul.mubr.bf16.gmra.mrb[0].mxu0 %v1643
      %v2432 = vpop.f32.mrb[0].mxu0
      %v2433 = vadd.f32 0.0, %v2432
      %v2434 = vpop.f32.mrb[0].mxu0
      %v2435 = vpop.f32.mrb[0].mxu0
      %v2436 = vadd.f32 0.0, %v2435
      %v2437 = vpop.f32.mrb[0].mxu0
      %2438 = vmatprep.mubr.bf16.mxu0 %v1646
      %2439 = vmatmul.mubr.bf16.gmra.mrb[0].mxu0 %v1645
      %v2440 = vpop.f32.mrb[0].mxu0
      %v2441 = vadd.f32 0.0, %v2440
      %v2442 = vpop.f32.mrb[0].mxu0
      %v2443 = vpop.f32.mrb[0].mxu0
      %v2444 = vpop.f32.mrb[0].mxu0
      %2445 = vmatprep.mubr.bf16.mxu0 %v1648
      %2446 = vmatmul.mubr.bf16.gmra.mrb[0].mxu0 %v1647
      %v2447 = vpop.f32.mrb[0].mxu0
      %v2448 = vadd.f32 0.0, %v2447
      %v2449 = vpop.f32.mrb[0].mxu0
      %v2450 = vpop.f32.mrb[0].mxu0
      %v2451 = vadd.f32 0.0, %v2450
      %v2452 = vpop.f32.mrb[0].mxu0
      %2453 = vmatprep.mubr.bf16.mxu0 %v1650
      %2454 = vmatmul.mubr.bf16.gmra.mrb[0].mxu0 %v1649
      %v2455 = vpop.f32.mrb[0].mxu0
      %v2456 = vadd.f32 0.0, %v2455
      %v2457 = vpop.f32.mrb[0].mxu0
      %v2458 = vpop.f32.mrb[0].mxu0
      %v2459 = vpop.f32.mrb[0].mxu0
      %2460 = vmatprep.mubr.bf16.mxu0 %v1652
      %2461 = vmatmul.mubr.bf16.gmra.mrb[0].mxu0 %v1651
      %v2462 = vpop.f32.mrb[0].mxu0
      %v2463 = vadd.f32 0.0, %v2462
      %v2464 = vpop.f32.mrb[0].mxu0
      %v2465 = vpop.f32.mrb[0].mxu0
      %v2466 = vadd.f32 0.0, %v2465
      %v2467 = vpop.f32.mrb[0].mxu0
      %2468 = vmatprep.mubr.bf16.mxu0 %v1654
      %2469 = vmatmul.mubr.bf16.gmra.mrb[0].mxu0 %v1653
      %v2470 = vpop.f32.mrb[0].mxu0
      %v2471 = vadd.f32 0.0, %v2470
      %v2472 = vpop.f32.mrb[0].mxu0
      %v2473 = vpop.f32.mrb[0].mxu0
      %v2474 = vpop.f32.mrb[0].mxu0
      %2475 = vmatprep.mubr.bf16.mxu0 %v1656
      %2476 = vmatmul.mubr.bf16.gmra.mrb[0].mxu0 %v1655
      %v2477 = vpop.f32.mrb[0].mxu0
      %v2478 = vadd.f32 0.0, %v2477
      %v2479 = vpop.f32.mrb[0].mxu0
      %v2480 = vpop.f32.mrb[0].mxu0
      %v2481 = vadd.f32 0.0, %v2480
      %v2482 = vpop.f32.mrb[0].mxu0
      %2483 = vmatprep.mubr.bf16.mxu0 %v1658
      %2484 = vmatmul.mubr.bf16.gmra.mrb[0].mxu0 %v1657
      %v2485 = vpop.f32.mrb[0].mxu0
      %v2486 = vadd.f32 0.0, %v2485
      %v2487 = vpop.f32.mrb[0].mxu0
      %v2488 = vpop.f32.mrb[0].mxu0
      %v2489 = vpop.f32.mrb[0].mxu0
      %2490 = vmatprep.mubr.bf16.mxu0 %v1660
      %2491 = vmatmul.mubr.bf16.gmra.mrb[0].mxu0 %v1659
      %v2492 = vpop.f32.mrb[0].mxu0
      %v2493 = vadd.f32 0.0, %v2492
      %v2494 = vpop.f32.mrb[0].mxu0
      %v2495 = vpop.f32.mrb[0].mxu0
      %v2496 = vadd.f32 0.0, %v2495
      %v2497 = vpop.f32.mrb[0].mxu0
      %2498 = vmatprep.mubr.bf16.mxu0 %v1662
      %2499 = vmatmul.mubr.bf16.gmra.mrb[0].mxu0 %v1661
      %v2500 = vpop.f32.mrb[0].mxu0
      %v2501 = vadd.f32 0.0, %v2500
      %v2502 = vpop.f32.mrb[0].mxu0
      %v2503 = vpop.f32.mrb[0].mxu0
      %v2504 = vpop.f32.mrb[0].mxu0
      %2505 = vmatprep.mubr.bf16.mxu0 %v1664
      %2506 = vmatmul.mubr.bf16.gmra.mrb[0].mxu0 %v1663
      %v2507 = vpop.f32.mrb[0].mxu0
      %v2508 = vadd.f32 0.0, %v2507
      %v2509 = vpop.f32.mrb[0].mxu0
      %v2510 = vpop.f32.mrb[0].mxu0
      %v2511 = vadd.f32 0.0, %v2510
      %v2512 = vpop.f32.mrb[0].mxu0
      %2513 = vmatprep.mubr.bf16.mxu0 %v1666
      %2514 = vmatmul.mubr.bf16.gmra.mrb[0].mxu0 %v1665
      %v2515 = vpop.f32.mrb[0].mxu0
      %v2516 = vadd.f32 0.0, %v2515
      %v2517 = vpop.f32.mrb[0].mxu0
      %v2518 = vpop.f32.mrb[0].mxu0
      %v2519 = vpop.f32.mrb[0].mxu0
      %2520 = vmatprep.mubr.bf16.mxu0 %v1668
      %2521 = vmatmul.mubr.bf16.gmra.mrb[0].mxu0 %v1667
      %v2522 = vpop.f32.mrb[0].mxu0
      %v2523 = vadd.f32 0.0, %v2522
      %v2524 = vpop.f32.mrb[0].mxu0
      %v2525 = vpop.f32.mrb[0].mxu0
      %v2526 = vadd.f32 0.0, %v2525
      %v2527 = vpop.f32.mrb[0].mxu0
      %2528 = vmatprep.mubr.bf16.mxu0 %v1670
      %2529 = vmatmul.mubr.bf16.gmra.mrb[0].mxu0 %v1669
      %v2530 = vpop.f32.mrb[0].mxu0
      %v2531 = vadd.f32 0.0, %v2530
      %v2532 = vpop.f32.mrb[0].mxu0
      %v2533 = vpop.f32.mrb[0].mxu0
      %v2534 = vpop.f32.mrb[0].mxu0
      %2535 = vmatprep.mubr.bf16.mxu0 %v1672
      %2536 = vmatmul.mubr.bf16.gmra.mrb[0].mxu0 %v1671
      %v2537 = vpop.f32.mrb[0].mxu0
      %v2538 = vadd.f32 0.0, %v2537
      %v2539 = vpop.f32.mrb[0].mxu0
      %v2540 = vpop.f32.mrb[0].mxu0
      %v2541 = vadd.f32 0.0, %v2540
      %v2542 = vpop.f32.mrb[0].mxu0
      %2543 = vmatprep.mubr.bf16.mxu0 %v1674
      %2544 = vmatmul.mubr.bf16.gmra.mrb[0].mxu0 %v1673
      %v2545 = vpop.f32.mrb[0].mxu0
      %v2546 = vadd.f32 0.0, %v2545
      %v2547 = vpop.f32.mrb[0].mxu0
      %v2548 = vpop.f32.mrb[0].mxu0
      %v2549 = vpop.f32.mrb[0].mxu0
      %2550 = vmatprep.mubr.bf16.mxu0 %v1676
      %2551 = vmatmul.mubr.bf16.gmra.mrb[0].mxu0 %v1675
      %v2552 = vpop.f32.mrb[0].mxu0
      %v2553 = vadd.f32 0.0, %v2552
      %v2554 = vpop.f32.mrb[0].mxu0
      %v2555 = vpop.f32.mrb[0].mxu0
      %v2556 = vadd.f32 0.0, %v2555
      %v2557 = vpop.f32.mrb[0].mxu0
      %2558 = vmatprep.mubr.bf16.mxu0 %v1678
      %2559 = vmatmul.mubr.bf16.gmra.mrb[0].mxu0 %v1677
      %v2560 = vpop.f32.mrb[0].mxu0
      %v2561 = vadd.f32 0.0, %v2560
      %v2562 = vpop.f32.mrb[0].mxu0
      %v2563 = vpop.f32.mrb[0].mxu0
      %v2564 = vpop.f32.mrb[0].mxu0
      %2565 = vmatprep.mubr.bf16.mxu0 %v1680
      %2566 = vmatmul.mubr.bf16.gmra.mrb[0].mxu0 %v1679
      %v2567 = vpop.f32.mrb[0].mxu0
      %v2568 = vadd.f32 0.0, %v2567
      %v2569 = vpop.f32.mrb[0].mxu0
      %v2570 = vpop.f32.mrb[0].mxu0
      %v2571 = vadd.f32 0.0, %v2570
      %v2572 = vpop.f32.mrb[0].mxu0
      %2573 = vmatprep.mubr.bf16.mxu0 %v1682
      %2574 = vmatmul.mubr.bf16.gmra.mrb[0].mxu0 %v1681
      %v2575 = vpop.f32.mrb[0].mxu0
      %v2576 = vadd.f32 0.0, %v2575
      %v2577 = vpop.f32.mrb[0].mxu0
      %v2578 = vpop.f32.mrb[0].mxu0
      %v2579 = vpop.f32.mrb[0].mxu0
      %2580 = vdwg.mxu0
      %vm2629 = vcmask 1046528
      %v2630 = vrot.slane %v2040, 1
      %v2631 = vrot.slane %v2044, 1
      %v2632 = vsel %vm2629, %v2630, %v2631
      %v2633 = vrot.slane %v2049, 1
      %v2634 = vsel %vm2629, %v2631, %v2633
      %v2635 = vrot.slane %v2057, 1
      %v2636 = vrot.slane %v2061, 1
      %v2637 = vsel %vm2629, %v2635, %v2636
      %v2638 = vrot.slane %v2066, 1
      %v2639 = vsel %vm2629, %v2636, %v2638
      %v2640 = vrot.slane %v2074, 1
      %v2641 = vrot.slane %v2078, 1
      %v2642 = vsel %vm2629, %v2640, %v2641
      %v2643 = vrot.slane %v2083, 1
      %v2644 = vsel %vm2629, %v2641, %v2643
      %v2645 = vrot.slane %v2091, 1
      %v2646 = vrot.slane %v2095, 1
      %v2647 = vsel %vm2629, %v2645, %v2646
      %v2648 = vrot.slane %v2100, 1
      %v2649 = vsel %vm2629, %v2646, %v2648
      %v2650 = vrot.slane %v2108, 1
      %v2651 = vrot.slane %v2112, 1
      %v2652 = vsel %vm2629, %v2650, %v2651
      %v2653 = vrot.slane %v2117, 1
      %v2654 = vsel %vm2629, %v2651, %v2653
      %v2655 = vrot.slane %v2125, 1
      %v2656 = vrot.slane %v2129, 1
      %v2657 = vsel %vm2629, %v2655, %v2656
      %v2658 = vrot.slane %v2134, 1
      %v2659 = vsel %vm2629, %v2656, %v2658
      %v2660 = vrot.slane %v2142, 1
      %v2661 = vrot.slane %v2146, 1
      %v2662 = vsel %vm2629, %v2660, %v2661
      %v2663 = vrot.slane %v2151, 1
      %v2664 = vsel %vm2629, %v2661, %v2663
      %v2665 = vrot.slane %v2159, 1
      %v2666 = vrot.slane %v2163, 1
      %v2667 = vsel %vm2629, %v2665, %v2666
      %v2668 = vrot.slane %v2168, 1
      %v2669 = vsel %vm2629, %v2666, %v2668
      %v2670 = vrot.slane %v2176, 1
      %v2671 = vrot.slane %v2180, 1
      %v2672 = vsel %vm2629, %v2670, %v2671
      %v2673 = vrot.slane %v2185, 1
      %v2674 = vsel %vm2629, %v2671, %v2673
      %v2675 = vrot.slane %v2193, 1
      %v2676 = vrot.slane %v2197, 1
      %v2677 = vsel %vm2629, %v2675, %v2676
      %v2678 = vrot.slane %v2202, 1
      %v2679 = vsel %vm2629, %v2676, %v2678
      %v2680 = vrot.slane %v2210, 1
      %v2681 = vrot.slane %v2214, 1
      %v2682 = vsel %vm2629, %v2680, %v2681
      %v2683 = vrot.slane %v2219, 1
      %v2684 = vsel %vm2629, %v2681, %v2683
      %v2685 = vrot.slane %v2227, 1
      %v2686 = vrot.slane %v2231, 1
      %v2687 = vsel %vm2629, %v2685, %v2686
      %v2688 = vrot.slane %v2236, 1
      %v2689 = vsel %vm2629, %v2686, %v2688
      %v2690 = vrot.slane %v2244, 1
      %v2691 = vrot.slane %v2248, 1
      %v2692 = vsel %vm2629, %v2690, %v2691
      %v2693 = vrot.slane %v2253, 1
      %v2694 = vsel %vm2629, %v2691, %v2693
      %v2695 = vrot.slane %v2261, 1
      %v2696 = vrot.slane %v2265, 1
      %v2697 = vsel %vm2629, %v2695, %v2696
      %v2698 = vrot.slane %v2270, 1
      %v2699 = vsel %vm2629, %v2696, %v2698
      %v2700 = vrot.slane %v2278, 1
      %v2701 = vrot.slane %v2282, 1
      %v2702 = vsel %vm2629, %v2700, %v2701
      %v2703 = vrot.slane %v2287, 1
      %v2704 = vsel %vm2629, %v2701, %v2703
      %v2705 = vrot.slane %v2295, 1
      %v2706 = vrot.slane %v2299, 1
      %v2707 = vsel %vm2629, %v2705, %v2706
      %v2708 = vrot.slane %v2304, 1
      %v2709 = vsel %vm2629, %v2706, %v2708
      %v2742 = vadd.f32 %v2038, %v2632
      %v2743 = vadd.f32 %v2042, %v2634
      %v2744 = vadd.f32 %v2055, %v2637
      %v2745 = vadd.f32 %v2059, %v2639
      %v2746 = vadd.f32 %v2072, %v2642
      %v2747 = vadd.f32 %v2076, %v2644
      %v2748 = vadd.f32 %v2089, %v2647
      %v2749 = vadd.f32 %v2093, %v2649
      %v2750 = vadd.f32 %v2106, %v2652
      %v2751 = vadd.f32 %v2110, %v2654
      %v2752 = vadd.f32 %v2123, %v2657
      %v2753 = vadd.f32 %v2127, %v2659
      %v2754 = vadd.f32 %v2140, %v2662
      %v2755 = vadd.f32 %v2144, %v2664
      %v2756 = vadd.f32 %v2157, %v2667
      %v2757 = vadd.f32 %v2161, %v2669
      %v2758 = vadd.f32 %v2174, %v2672
      %v2759 = vadd.f32 %v2178, %v2674
      %v2760 = vadd.f32 %v2191, %v2677
      %v2761 = vadd.f32 %v2195, %v2679
      %v2762 = vadd.f32 %v2208, %v2682
      %v2763 = vadd.f32 %v2212, %v2684
      %v2764 = vadd.f32 %v2225, %v2687
      %v2765 = vadd.f32 %v2229, %v2689
      %v2766 = vadd.f32 %v2242, %v2692
      %v2767 = vadd.f32 %v2246, %v2694
      %v2768 = vadd.f32 %v2259, %v2697
      %v2769 = vadd.f32 %v2263, %v2699
      %v2770 = vadd.f32 %v2276, %v2702
      %v2771 = vadd.f32 %v2280, %v2704
      %v2772 = vadd.f32 %v2293, %v2707
      %v2773 = vadd.f32 %v2297, %v2709
      %vm2822 = vcmask 1045504
      %v2823 = vrot.slane %v2343, 2
      %v2824 = vrot.slane %v2346, 2
      %v2825 = vsel %vm2822, %v2823, %v2824
      %v2826 = vrot.slane %v2351, 2
      %v2827 = vsel %vm2822, %v2824, %v2826
      %v2828 = vrot.slane %v2358, 2
      %v2829 = vrot.slane %v2361, 2
      %v2830 = vsel %vm2822, %v2828, %v2829
      %v2831 = vrot.slane %v2366, 2
      %v2832 = vsel %vm2822, %v2829, %v2831
      %v2833 = vrot.slane %v2373, 2
      %v2834 = vrot.slane %v2376, 2
      %v2835 = vsel %vm2822, %v2833, %v2834
      %v2836 = vrot.slane %v2381, 2
      %v2837 = vsel %vm2822, %v2834, %v2836
      %v2838 = vrot.slane %v2388, 2
      %v2839 = vrot.slane %v2391, 2
      %v2840 = vsel %vm2822, %v2838, %v2839
      %v2841 = vrot.slane %v2396, 2
      %v2842 = vsel %vm2822, %v2839, %v2841
      %v2843 = vrot.slane %v2403, 2
      %v2844 = vrot.slane %v2406, 2
      %v2845 = vsel %vm2822, %v2843, %v2844
      %v2846 = vrot.slane %v2411, 2
      %v2847 = vsel %vm2822, %v2844, %v2846
      %v2848 = vrot.slane %v2418, 2
      %v2849 = vrot.slane %v2421, 2
      %v2850 = vsel %vm2822, %v2848, %v2849
      %v2851 = vrot.slane %v2426, 2
      %v2852 = vsel %vm2822, %v2849, %v2851
      %v2853 = vrot.slane %v2433, 2
      %v2854 = vrot.slane %v2436, 2
      %v2855 = vsel %vm2822, %v2853, %v2854
      %v2856 = vrot.slane %v2441, 2
      %v2857 = vsel %vm2822, %v2854, %v2856
      %v2858 = vrot.slane %v2448, 2
      %v2859 = vrot.slane %v2451, 2
      %v2860 = vsel %vm2822, %v2858, %v2859
      %v2861 = vrot.slane %v2456, 2
      %v2862 = vsel %vm2822, %v2859, %v2861
      %v2863 = vrot.slane %v2463, 2
      %v2864 = vrot.slane %v2466, 2
      %v2865 = vsel %vm2822, %v2863, %v2864
      %v2866 = vrot.slane %v2471, 2
      %v2867 = vsel %vm2822, %v2864, %v2866
      %v2868 = vrot.slane %v2478, 2
      %v2869 = vrot.slane %v2481, 2
      %v2870 = vsel %vm2822, %v2868, %v2869
      %v2871 = vrot.slane %v2486, 2
      %v2872 = vsel %vm2822, %v2869, %v2871
      %v2873 = vrot.slane %v2493, 2
      %v2874 = vrot.slane %v2496, 2
      %v2875 = vsel %vm2822, %v2873, %v2874
      %v2876 = vrot.slane %v2501, 2
      %v2877 = vsel %vm2822, %v2874, %v2876
      %v2878 = vrot.slane %v2508, 2
      %v2879 = vrot.slane %v2511, 2
      %v2880 = vsel %vm2822, %v2878, %v2879
      %v2881 = vrot.slane %v2516, 2
      %v2882 = vsel %vm2822, %v2879, %v2881
      %v2883 = vrot.slane %v2523, 2
      %v2884 = vrot.slane %v2526, 2
      %v2885 = vsel %vm2822, %v2883, %v2884
      %v2886 = vrot.slane %v2531, 2
      %v2887 = vsel %vm2822, %v2884, %v2886
      %v2888 = vrot.slane %v2538, 2
      %v2889 = vrot.slane %v2541, 2
      %v2890 = vsel %vm2822, %v2888, %v2889
      %v2891 = vrot.slane %v2546, 2
      %v2892 = vsel %vm2822, %v2889, %v2891
      %v2893 = vrot.slane %v2553, 2
      %v2894 = vrot.slane %v2556, 2
      %v2895 = vsel %vm2822, %v2893, %v2894
      %v2896 = vrot.slane %v2561, 2
      %v2897 = vsel %vm2822, %v2894, %v2896
      %v2898 = vrot.slane %v2568, 2
      %v2899 = vrot.slane %v2571, 2
      %v2900 = vsel %vm2822, %v2898, %v2899
      %v2901 = vrot.slane %v2576, 2
      %v2902 = vsel %vm2822, %v2899, %v2901
      %v2935 = vadd.f32 %v2742, %v2825
      %v2936 = vadd.f32 %v2743, %v2827
      %v2937 = vadd.f32 %v2744, %v2830
      %v2938 = vadd.f32 %v2745, %v2832
      %v2939 = vadd.f32 %v2746, %v2835
      %v2940 = vadd.f32 %v2747, %v2837
      %v2941 = vadd.f32 %v2748, %v2840
      %v2942 = vadd.f32 %v2749, %v2842
      %v2943 = vadd.f32 %v2750, %v2845
      %v2944 = vadd.f32 %v2751, %v2847
      %v2945 = vadd.f32 %v2752, %v2850
      %v2946 = vadd.f32 %v2753, %v2852
      %v2947 = vadd.f32 %v2754, %v2855
      %v2948 = vadd.f32 %v2755, %v2857
      %v2949 = vadd.f32 %v2756, %v2860
      %v2950 = vadd.f32 %v2757, %v2862
      %v2951 = vadd.f32 %v2758, %v2865
      %v2952 = vadd.f32 %v2759, %v2867
      %v2953 = vadd.f32 %v2760, %v2870
      %v2954 = vadd.f32 %v2761, %v2872
      %v2955 = vadd.f32 %v2762, %v2875
      %v2956 = vadd.f32 %v2763, %v2877
      %v2957 = vadd.f32 %v2764, %v2880
      %v2958 = vadd.f32 %v2765, %v2882
      %v2959 = vadd.f32 %v2766, %v2885
      %v2960 = vadd.f32 %v2767, %v2887
      %v2961 = vadd.f32 %v2768, %v2890
      %v2962 = vadd.f32 %v2769, %v2892
      %v2963 = vadd.f32 %v2770, %v2895
      %v2964 = vadd.f32 %v2771, %v2897
      %v2965 = vadd.f32 %v2772, %v2900
      %v2966 = vadd.f32 %v2773, %v2902
      %2967 = vst [vmem:[#allocation3] sm:$0xff] %v2935
      %2968 = vst [vmem:[#allocation3 + $0x8] sm:$0xff] %v2936
      %2969 = vst [vmem:[#allocation3 + $0x10] sm:$0xff] %v2937
      %2970 = vst [vmem:[#allocation3 + $0x18] sm:$0xff] %v2938
      %2971 = vst [vmem:[#allocation3 + $0x20] sm:$0xff] %v2939
      %2972 = vst [vmem:[#allocation3 + $0x28] sm:$0xff] %v2940
      %2973 = vst [vmem:[#allocation3 + $0x30] sm:$0xff] %v2941
      %2974 = vst [vmem:[#allocation3 + $0x38] sm:$0xff] %v2942
      %2975 = vst [vmem:[#allocation3 + $0x40] sm:$0xff] %v2943
      %2976 = vst [vmem:[#allocation3 + $0x48] sm:$0xff] %v2944
      %2977 = vst [vmem:[#allocation3 + $0x50] sm:$0xff] %v2945
      %2978 = vst [vmem:[#allocation3 + $0x58] sm:$0xff] %v2946
      %2979 = vst [vmem:[#allocation3 + $0x60] sm:$0xff] %v2947
      %2980 = vst [vmem:[#allocation3 + $0x68] sm:$0xff] %v2948
      %2981 = vst [vmem:[#allocation3 + $0x70] sm:$0xff] %v2949
      %2982 = vst [vmem:[#allocation3 + $0x78] sm:$0xff] %v2950
      %2983 = vst [vmem:[#allocation3 + $0x80] sm:$0xff] %v2951
      %2984 = vst [vmem:[#allocation3 + $0x88] sm:$0xff] %v2952
      %2985 = vst [vmem:[#allocation3 + $0x90] sm:$0xff] %v2953
      %2986 = vst [vmem:[#allocation3 + $0x98] sm:$0xff] %v2954
      %2987 = vst [vmem:[#allocation3 + $0xa0] sm:$0xff] %v2955
      %2988 = vst [vmem:[#allocation3 + $0xa8] sm:$0xff] %v2956
      %2989 = vst [vmem:[#allocation3 + $0xb0] sm:$0xff] %v2957
      %2990 = vst [vmem:[#allocation3 + $0xb8] sm:$0xff] %v2958
      %2991 = vst [vmem:[#allocation3 + $0xc0] sm:$0xff] %v2959
      %2992 = vst [vmem:[#allocation3 + $0xc8] sm:$0xff] %v2960
      %2993 = vst [vmem:[#allocation3 + $0xd0] sm:$0xff] %v2961
      %2994 = vst [vmem:[#allocation3 + $0xd8] sm:$0xff] %v2962
      %2995 = vst [vmem:[#allocation3 + $0xe0] sm:$0xff] %v2963
      %2996 = vst [vmem:[#allocation3 + $0xe8] sm:$0xff] %v2964
      %2997 = vst [vmem:[#allocation3 + $0xf0] sm:$0xff] %v2965
      %2998 = vst [vmem:[#allocation3 + $0xf8] sm:$0xff] %v2966
      %v2999 = vld [vmem:[%s1144] sm:$0xff]
      %v3000 = vld [vmem:[%s1144 + $0x8] sm:$0xff]
      %v3001 = vld [vmem:[%s1144 + $0x10] sm:$0xff]
      %v3002 = vld [vmem:[%s1144 + $0x18] sm:$0xff]
      %v3003 = vld [vmem:[%s1144 + $0x20] sm:$0xff]
      %v3004 = vld [vmem:[%s1144 + $0x28] sm:$0xff]
      %v3005 = vld [vmem:[%s1144 + $0x30] sm:$0xff]
      %v3006 = vld [vmem:[%s1144 + $0x38] sm:$0xff]
      %v3007 = vld [vmem:[%s1144 + $0x40] sm:$0xff]
      %v3008 = vld [vmem:[%s1144 + $0x48] sm:$0xff]
      %v3009 = vld [vmem:[%s1144 + $0x50] sm:$0xff]
      %v3010 = vld [vmem:[%s1144 + $0x58] sm:$0xff]
      %v3011 = vld [vmem:[%s1144 + $0x60] sm:$0xff]
      %v3012 = vld [vmem:[%s1144 + $0x68] sm:$0xff]
      %v3013 = vld [vmem:[%s1144 + $0x70] sm:$0xff]
      %v3014 = vld [vmem:[%s1144 + $0x78] sm:$0xff]
      %v3015 = vld [vmem:[%s1144 + $0x80] sm:$0xff]
      %v3016 = vld [vmem:[%s1144 + $0x88] sm:$0xff]
      %v3017 = vld [vmem:[%s1144 + $0x90] sm:$0xff]
      %v3018 = vld [vmem:[%s1144 + $0x98] sm:$0xff]
      %v3019 = vld [vmem:[%s1144 + $0xa0] sm:$0xff]
      %v3020 = vld [vmem:[%s1144 + $0xa8] sm:$0xff]
      %v3021 = vld [vmem:[%s1144 + $0xb0] sm:$0xff]
      %v3022 = vld [vmem:[%s1144 + $0xb8] sm:$0xff]
      %v3023 = vld [vmem:[%s1144 + $0xc0] sm:$0xff]
      %v3024 = vld [vmem:[%s1144 + $0xc8] sm:$0xff]
      %v3025 = vld [vmem:[%s1144 + $0xd0] sm:$0xff]
      %v3026 = vld [vmem:[%s1144 + $0xd8] sm:$0xff]
      %v3027 = vld [vmem:[%s1144 + $0xe0] sm:$0xff]
      %v3028 = vld [vmem:[%s1144 + $0xe8] sm:$0xff]
      %v3029 = vld [vmem:[%s1144 + $0xf0] sm:$0xff]
      %v3030 = vld [vmem:[%s1144 + $0xf8] sm:$0xff]
      %v3031 = vld [vmem:[%s1144 + $0x100] sm:$0xff]
      %v3032 = vld [vmem:[%s1144 + $0x108] sm:$0xff]
      %v3033 = vld [vmem:[%s1144 + $0x110] sm:$0xff]
      %v3034 = vld [vmem:[%s1144 + $0x118] sm:$0xff]
      %v3035 = vld [vmem:[%s1144 + $0x120] sm:$0xff]
      %v3036 = vld [vmem:[%s1144 + $0x128] sm:$0xff]
      %v3037 = vld [vmem:[%s1144 + $0x130] sm:$0xff]
      %v3038 = vld [vmem:[%s1144 + $0x138] sm:$0xff]
      %v3039 = vld [vmem:[%s1144 + $0x140] sm:$0xff]
      %v3040 = vld [vmem:[%s1144 + $0x148] sm:$0xff]
      %v3041 = vld [vmem:[%s1144 + $0x150] sm:$0xff]
      %v3042 = vld [vmem:[%s1144 + $0x158] sm:$0xff]
      %v3043 = vld [vmem:[%s1144 + $0x160] sm:$0xff]
      %v3044 = vld [vmem:[%s1144 + $0x168] sm:$0xff]
      %v3045 = vld [vmem:[%s1144 + $0x170] sm:$0xff]
      %v3046 = vld [vmem:[%s1144 + $0x178] sm:$0xff]
      %v3047 = vld [vmem:[%s1144 + $0x180] sm:$0xff]
      %v3048 = vld [vmem:[%s1144 + $0x188] sm:$0xff]
      %v3049 = vld [vmem:[%s1144 + $0x190] sm:$0xff]
      %v3050 = vld [vmem:[%s1144 + $0x198] sm:$0xff]
      %v3051 = vld [vmem:[%s1144 + $0x1a0] sm:$0xff]
      %v3052 = vld [vmem:[%s1144 + $0x1a8] sm:$0xff]
      %v3053 = vld [vmem:[%s1144 + $0x1b0] sm:$0xff]
      %v3054 = vld [vmem:[%s1144 + $0x1b8] sm:$0xff]
      %v3055 = vld [vmem:[%s1144 + $0x1c0] sm:$0xff]
      %v3056 = vld [vmem:[%s1144 + $0x1c8] sm:$0xff]
      %v3057 = vld [vmem:[%s1144 + $0x1d0] sm:$0xff]
      %v3058 = vld [vmem:[%s1144 + $0x1d8] sm:$0xff]
      %v3059 = vld [vmem:[%s1144 + $0x1e0] sm:$0xff]
      %v3060 = vld [vmem:[%s1144 + $0x1e8] sm:$0xff]
      %v3061 = vld [vmem:[%s1144 + $0x1f0] sm:$0xff]
      %v3062 = vld [vmem:[%s1144 + $0x1f8] sm:$0xff]
      %s3063 = scalar_lea.vmem %s6, 384
      %v3064 = vld [vmem:[%s3063] sm:$0xff]
      %v3065 = vld [vmem:[%s3063 + $0x8] sm:$0xf]
      %v3066 = vld [vmem:[%s3063 + $0xc] sm:$0xff]
      %v3067 = vld [vmem:[%s3063 + $0x14] sm:$0xf]
      %v3068 = vld [vmem:[%s3063 + $0x18] sm:$0xff]
      %v3069 = vld [vmem:[%s3063 + $0x20] sm:$0xf]
      %v3070 = vld [vmem:[%s3063 + $0x24] sm:$0xff]
      %v3071 = vld [vmem:[%s3063 + $0x2c] sm:$0xf]
      %v3072 = vld [vmem:[%s3063 + $0x30] sm:$0xff]
      %v3073 = vld [vmem:[%s3063 + $0x38] sm:$0xf]
      %v3074 = vld [vmem:[%s3063 + $0x3c] sm:$0xff]
      %v3075 = vld [vmem:[%s3063 + $0x44] sm:$0xf]
      %v3076 = vld [vmem:[%s3063 + $0x48] sm:$0xff]
      %v3077 = vld [vmem:[%s3063 + $0x50] sm:$0xf]
      %v3078 = vld [vmem:[%s3063 + $0x54] sm:$0xff]
      %v3079 = vld [vmem:[%s3063 + $0x5c] sm:$0xf]
      %v3080 = vld [vmem:[%s3063 + $0x60] sm:$0xff]
      %v3081 = vld [vmem:[%s3063 + $0x68] sm:$0xf]
      %v3082 = vld [vmem:[%s3063 + $0x6c] sm:$0xff]
      %v3083 = vld [vmem:[%s3063 + $0x74] sm:$0xf]
      %v3084 = vld [vmem:[%s3063 + $0x78] sm:$0xff]
      %v3085 = vld [vmem:[%s3063 + $0x80] sm:$0xf]
      %v3086 = vld [vmem:[%s3063 + $0x84] sm:$0xff]
      %v3087 = vld [vmem:[%s3063 + $0x8c] sm:$0xf]
      %v3088 = vld [vmem:[%s3063 + $0x90] sm:$0xff]
      %v3089 = vld [vmem:[%s3063 + $0x98] sm:$0xf]
      %v3090 = vld [vmem:[%s3063 + $0x9c] sm:$0xff]
      %v3091 = vld [vmem:[%s3063 + $0xa4] sm:$0xf]
      %v3092 = vld [vmem:[%s3063 + $0xa8] sm:$0xff]
      %v3093 = vld [vmem:[%s3063 + $0xb0] sm:$0xf]
      %v3094 = vld [vmem:[%s3063 + $0xb4] sm:$0xff]
      %v3095 = vld [vmem:[%s3063 + $0xbc] sm:$0xf]
      %v3096 = vld [vmem:[%s3063 + $0xc0] sm:$0xff]
      %v3097 = vld [vmem:[%s3063 + $0xc8] sm:$0xf]
      %v3098 = vld [vmem:[%s3063 + $0xcc] sm:$0xff]
      %v3099 = vld [vmem:[%s3063 + $0xd4] sm:$0xf]
      %v3100 = vld [vmem:[%s3063 + $0xd8] sm:$0xff]
      %v3101 = vld [vmem:[%s3063 + $0xe0] sm:$0xf]
      %v3102 = vld [vmem:[%s3063 + $0xe4] sm:$0xff]
      %v3103 = vld [vmem:[%s3063 + $0xec] sm:$0xf]
      %v3104 = vld [vmem:[%s3063 + $0xf0] sm:$0xff]
      %v3105 = vld [vmem:[%s3063 + $0xf8] sm:$0xf]
      %v3106 = vld [vmem:[%s3063 + $0xfc] sm:$0xff]
      %v3107 = vld [vmem:[%s3063 + $0x104] sm:$0xf]
      %v3108 = vld [vmem:[%s3063 + $0x108] sm:$0xff]
      %v3109 = vld [vmem:[%s3063 + $0x110] sm:$0xf]
      %v3110 = vld [vmem:[%s3063 + $0x114] sm:$0xff]
      %v3111 = vld [vmem:[%s3063 + $0x11c] sm:$0xf]
      %v3112 = vld [vmem:[%s3063 + $0x120] sm:$0xff]
      %v3113 = vld [vmem:[%s3063 + $0x128] sm:$0xf]
      %v3114 = vld [vmem:[%s3063 + $0x12c] sm:$0xff]
      %v3115 = vld [vmem:[%s3063 + $0x134] sm:$0xf]
      %v3116 = vld [vmem:[%s3063 + $0x138] sm:$0xff]
      %v3117 = vld [vmem:[%s3063 + $0x140] sm:$0xf]
      %v3118 = vld [vmem:[%s3063 + $0x144] sm:$0xff]
      %v3119 = vld [vmem:[%s3063 + $0x14c] sm:$0xf]
      %v3120 = vld [vmem:[%s3063 + $0x150] sm:$0xff]
      %v3121 = vld [vmem:[%s3063 + $0x158] sm:$0xf]
      %v3122 = vld [vmem:[%s3063 + $0x15c] sm:$0xff]
      %v3123 = vld [vmem:[%s3063 + $0x164] sm:$0xf]
      %v3124 = vld [vmem:[%s3063 + $0x168] sm:$0xff]
      %v3125 = vld [vmem:[%s3063 + $0x170] sm:$0xf]
      %v3126 = vld [vmem:[%s3063 + $0x174] sm:$0xff]
      %v3127 = vld [vmem:[%s3063 + $0x17c] sm:$0xf]
      %v3192 = vunpack.c.l.b16 %v3064
      %v3193 = vunpack.c.h.b16 %v3064
      %v3194 = vunpack.c.l.b16 %v3065
      %v3195 = vunpack.c.l.b16 %v3066
      %v3196 = vunpack.c.h.b16 %v3066
      %v3197 = vunpack.c.l.b16 %v3067
      %v3198 = vunpack.c.l.b16 %v3068
      %v3199 = vunpack.c.h.b16 %v3068
      %v3200 = vunpack.c.l.b16 %v3069
      %v3201 = vunpack.c.l.b16 %v3070
      %v3202 = vunpack.c.h.b16 %v3070
      %v3203 = vunpack.c.l.b16 %v3071
      %v3204 = vunpack.c.l.b16 %v3072
      %v3205 = vunpack.c.h.b16 %v3072
      %v3206 = vunpack.c.l.b16 %v3073
      %v3207 = vunpack.c.l.b16 %v3074
      %v3208 = vunpack.c.h.b16 %v3074
      %v3209 = vunpack.c.l.b16 %v3075
      %v3210 = vunpack.c.l.b16 %v3076
      %v3211 = vunpack.c.h.b16 %v3076
      %v3212 = vunpack.c.l.b16 %v3077
      %v3213 = vunpack.c.l.b16 %v3078
      %v3214 = vunpack.c.h.b16 %v3078
      %v3215 = vunpack.c.l.b16 %v3079
      %v3216 = vunpack.c.l.b16 %v3080
      %v3217 = vunpack.c.h.b16 %v3080
      %v3218 = vunpack.c.l.b16 %v3081
      %v3219 = vunpack.c.l.b16 %v3082
      %v3220 = vunpack.c.h.b16 %v3082
      %v3221 = vunpack.c.l.b16 %v3083
      %v3222 = vunpack.c.l.b16 %v3084
      %v3223 = vunpack.c.h.b16 %v3084
      %v3224 = vunpack.c.l.b16 %v3085
      %v3225 = vunpack.c.l.b16 %v3086
      %v3226 = vunpack.c.h.b16 %v3086
      %v3227 = vunpack.c.l.b16 %v3087
      %v3228 = vunpack.c.l.b16 %v3088
      %v3229 = vunpack.c.h.b16 %v3088
      %v3230 = vunpack.c.l.b16 %v3089
      %v3231 = vunpack.c.l.b16 %v3090
      %v3232 = vunpack.c.h.b16 %v3090
      %v3233 = vunpack.c.l.b16 %v3091
      %v3234 = vunpack.c.l.b16 %v3092
      %v3235 = vunpack.c.h.b16 %v3092
      %v3236 = vunpack.c.l.b16 %v3093
      %v3237 = vunpack.c.l.b16 %v3094
      %v3238 = vunpack.c.h.b16 %v3094
      %v3239 = vunpack.c.l.b16 %v3095
      %v3240 = vunpack.c.l.b16 %v3096
      %v3241 = vunpack.c.h.b16 %v3096
      %v3242 = vunpack.c.l.b16 %v3097
      %v3243 = vunpack.c.l.b16 %v3098
      %v3244 = vunpack.c.h.b16 %v3098
      %v3245 = vunpack.c.l.b16 %v3099
      %v3246 = vunpack.c.l.b16 %v3100
      %v3247 = vunpack.c.h.b16 %v3100
      %v3248 = vunpack.c.l.b16 %v3101
      %v3249 = vunpack.c.l.b16 %v3102
      %v3250 = vunpack.c.h.b16 %v3102
      %v3251 = vunpack.c.l.b16 %v3103
      %v3252 = vunpack.c.l.b16 %v3104
      %v3253 = vunpack.c.h.b16 %v3104
      %v3254 = vunpack.c.l.b16 %v3105
      %v3255 = vunpack.c.l.b16 %v3106
      %v3256 = vunpack.c.h.b16 %v3106
      %v3257 = vunpack.c.l.b16 %v3107
      %v3258 = vunpack.c.l.b16 %v3108
      %v3259 = vunpack.c.h.b16 %v3108
      %v3260 = vunpack.c.l.b16 %v3109
      %v3261 = vunpack.c.l.b16 %v3110
      %v3262 = vunpack.c.h.b16 %v3110
      %v3263 = vunpack.c.l.b16 %v3111
      %v3264 = vunpack.c.l.b16 %v3112
      %v3265 = vunpack.c.h.b16 %v3112
      %v3266 = vunpack.c.l.b16 %v3113
      %v3267 = vunpack.c.l.b16 %v3114
      %v3268 = vunpack.c.h.b16 %v3114
      %v3269 = vunpack.c.l.b16 %v3115
      %v3270 = vunpack.c.l.b16 %v3116
      %v3271 = vunpack.c.h.b16 %v3116
      %v3272 = vunpack.c.l.b16 %v3117
      %v3273 = vunpack.c.l.b16 %v3118
      %v3274 = vunpack.c.h.b16 %v3118
      %v3275 = vunpack.c.l.b16 %v3119
      %v3276 = vunpack.c.l.b16 %v3120
      %v3277 = vunpack.c.h.b16 %v3120
      %v3278 = vunpack.c.l.b16 %v3121
      %v3279 = vunpack.c.l.b16 %v3122
      %v3280 = vunpack.c.h.b16 %v3122
      %v3281 = vunpack.c.l.b16 %v3123
      %v3282 = vunpack.c.l.b16 %v3124
      %v3283 = vunpack.c.h.b16 %v3124
      %v3284 = vunpack.c.l.b16 %v3125
      %v3285 = vunpack.c.l.b16 %v3126
      %v3286 = vunpack.c.h.b16 %v3126
      %v3287 = vunpack.c.l.b16 %v3127
      %v3288 = vpack.c.b16 %v3195, %v3192
      %v3289 = vpack.c.b16 %v3196, %v3193
      %v3290 = vpack.c.b16 %v3197, %v3194
      %v3291 = vpack.c.b16 %v3201, %v3198
      %v3292 = vpack.c.b16 %v3202, %v3199
      %v3293 = vpack.c.b16 %v3203, %v3200
      %v3294 = vpack.c.b16 %v3207, %v3204
      %v3295 = vpack.c.b16 %v3208, %v3205
      %v3296 = vpack.c.b16 %v3209, %v3206
      %v3297 = vpack.c.b16 %v3213, %v3210
      %v3298 = vpack.c.b16 %v3214, %v3211
      %v3299 = vpack.c.b16 %v3215, %v3212
      %v3300 = vpack.c.b16 %v3219, %v3216
      %v3301 = vpack.c.b16 %v3220, %v3217
      %v3302 = vpack.c.b16 %v3221, %v3218
      %v3303 = vpack.c.b16 %v3225, %v3222
      %v3304 = vpack.c.b16 %v3226, %v3223
      %v3305 = vpack.c.b16 %v3227, %v3224
      %v3306 = vpack.c.b16 %v3231, %v3228
      %v3307 = vpack.c.b16 %v3232, %v3229
      %v3308 = vpack.c.b16 %v3233, %v3230
      %v3309 = vpack.c.b16 %v3237, %v3234
      %v3310 = vpack.c.b16 %v3238, %v3235
      %v3311 = vpack.c.b16 %v3239, %v3236
      %v3312 = vpack.c.b16 %v3243, %v3240
      %v3313 = vpack.c.b16 %v3244, %v3241
      %v3314 = vpack.c.b16 %v3245, %v3242
      %v3315 = vpack.c.b16 %v3249, %v3246
      %v3316 = vpack.c.b16 %v3250, %v3247
      %v3317 = vpack.c.b16 %v3251, %v3248
      %v3318 = vpack.c.b16 %v3255, %v3252
      %v3319 = vpack.c.b16 %v3256, %v3253
      %v3320 = vpack.c.b16 %v3257, %v3254
      %v3321 = vpack.c.b16 %v3261, %v3258
      %v3322 = vpack.c.b16 %v3262, %v3259
      %v3323 = vpack.c.b16 %v3263, %v3260
      %v3324 = vpack.c.b16 %v3267, %v3264
      %v3325 = vpack.c.b16 %v3268, %v3265
      %v3326 = vpack.c.b16 %v3269, %v3266
      %v3327 = vpack.c.b16 %v3273, %v3270
      %v3328 = vpack.c.b16 %v3274, %v3271
      %v3329 = vpack.c.b16 %v3275, %v3272
      %v3330 = vpack.c.b16 %v3279, %v3276
      %v3331 = vpack.c.b16 %v3280, %v3277
      %v3332 = vpack.c.b16 %v3281, %v3278
      %v3333 = vpack.c.b16 %v3285, %v3282
      %v3334 = vpack.c.b16 %v3286, %v3283
      %v3335 = vpack.c.b16 %v3287, %v3284
      %3384 = vmatprep.subr.bf16.mxu0 %v3289
      %3385 = vmatpush1.bf16.msra.mxu0 %v3288
      %3386 = vmatprep.subr.bf16.mxu0 %v3292
      %3387 = vmatpush1.bf16.msra.mxu0 %v3291
      %3388 = vmatprep.subr.bf16.mxu0 %v3295
      %3389 = vmatpush1.bf16.msra.mxu0 %v3294
      %3390 = vmatprep.subr.bf16.mxu0 %v3298
      %3391 = vmatpush1.bf16.msra.mxu0 %v3297
      %3392 = vmatprep.subr.bf16.mxu0 %v3301
      %3393 = vmatpush1.bf16.msra.mxu0 %v3300
      %3394 = vmatprep.subr.bf16.mxu0 %v3304
      %3395 = vmatpush1.bf16.msra.mxu0 %v3303
      %3396 = vmatprep.subr.bf16.mxu0 %v3307
      %3397 = vmatpush1.bf16.msra.mxu0 %v3306
      %3398 = vmatprep.subr.bf16.mxu0 %v3310
      %3399 = vmatpush1.bf16.msra.mxu0 %v3309
      %3400 = vmatprep.subr.bf16.mxu0 %v3313
      %3401 = vmatpush1.bf16.msra.mxu0 %v3312
      %3402 = vmatprep.subr.bf16.mxu0 %v3316
      %3403 = vmatpush1.bf16.msra.mxu0 %v3315
      %3404 = vmatprep.subr.bf16.mxu0 %v3319
      %3405 = vmatpush1.bf16.msra.mxu0 %v3318
      %3406 = vmatprep.subr.bf16.mxu0 %v3322
      %3407 = vmatpush1.bf16.msra.mxu0 %v3321
      %3408 = vmatprep.subr.bf16.mxu0 %v3325
      %3409 = vmatpush1.bf16.msra.mxu0 %v3324
      %3410 = vmatprep.subr.bf16.mxu0 %v3328
      %3411 = vmatpush1.bf16.msra.mxu0 %v3327
      %3412 = vmatprep.subr.bf16.mxu0 %v3331
      %3413 = vmatpush1.bf16.msra.mxu0 %v3330
      %3414 = vmatprep.subr.bf16.mxu0 %v3334
      %3415 = vmatpush1.bf16.msra.mxu0 %v3333
      %3416 = vmatprep.mubr.bf16.mxu0 %v3000
      %3417 = vmatmul.mubr.bf16.gmra.mrb[0].mxu0 %v2999
      %v3418 = vpop.f32.mrb[0].mxu0
      %v3419 = vadd.f32 0.0, %v3418
      %v3420 = vpop.f32.mrb[0].mxu0
      %v3421 = vadd.f32 0.0, %v3420
      %v3422 = vpop.f32.mrb[0].mxu0
      %v3423 = vadd.f32 0.0, %v3422
      %v3424 = vpop.f32.mrb[0].mxu0
      %v3425 = vadd.f32 0.0, %v3424
      %3426 = vmatprep.mubr.bf16.mxu0 %v3002
      %3427 = vmatmul.mubr.bf16.gmra.mrb[0].mxu0 %v3001
      %v3428 = vpop.f32.mrb[0].mxu0
      %v3429 = vpop.f32.mrb[0].mxu0
      %v3430 = vadd.f32 0.0, %v3429
      %v3431 = vpop.f32.mrb[0].mxu0
      %v3432 = vpop.f32.mrb[0].mxu0
      %3433 = vmatprep.mubr.bf16.mxu0 %v3004
      %3434 = vmatmul.mubr.bf16.gmra.mrb[0].mxu0 %v3003
      %v3435 = vpop.f32.mrb[0].mxu0
      %v3436 = vadd.f32 0.0, %v3435
      %v3437 = vpop.f32.mrb[0].mxu0
      %v3438 = vadd.f32 0.0, %v3437
      %v3439 = vpop.f32.mrb[0].mxu0
      %v3440 = vadd.f32 0.0, %v3439
      %v3441 = vpop.f32.mrb[0].mxu0
      %v3442 = vadd.f32 0.0, %v3441
      %3443 = vmatprep.mubr.bf16.mxu0 %v3006
      %3444 = vmatmul.mubr.bf16.gmra.mrb[0].mxu0 %v3005
      %v3445 = vpop.f32.mrb[0].mxu0
      %v3446 = vpop.f32.mrb[0].mxu0
      %v3447 = vadd.f32 0.0, %v3446
      %v3448 = vpop.f32.mrb[0].mxu0
      %v3449 = vpop.f32.mrb[0].mxu0
      %3450 = vmatprep.mubr.bf16.mxu0 %v3008
      %3451 = vmatmul.mubr.bf16.gmra.mrb[0].mxu0 %v3007
      %v3452 = vpop.f32.mrb[0].mxu0
      %v3453 = vadd.f32 0.0, %v3452
      %v3454 = vpop.f32.mrb[0].mxu0
      %v3455 = vadd.f32 0.0, %v3454
      %v3456 = vpop.f32.mrb[0].mxu0
      %v3457 = vadd.f32 0.0, %v3456
      %v3458 = vpop.f32.mrb[0].mxu0
      %v3459 = vadd.f32 0.0, %v3458
      %3460 = vmatprep.mubr.bf16.mxu0 %v3010
      %3461 = vmatmul.mubr.bf16.gmra.mrb[0].mxu0 %v3009
      %v3462 = vpop.f32.mrb[0].mxu0
      %v3463 = vpop.f32.mrb[0].mxu0
      %v3464 = vadd.f32 0.0, %v3463
      %v3465 = vpop.f32.mrb[0].mxu0
      %v3466 = vpop.f32.mrb[0].mxu0
      %3467 = vmatprep.mubr.bf16.mxu0 %v3012
      %3468 = vmatmul.mubr.bf16.gmra.mrb[0].mxu0 %v3011
      %v3469 = vpop.f32.mrb[0].mxu0
      %v3470 = vadd.f32 0.0, %v3469
      %v3471 = vpop.f32.mrb[0].mxu0
      %v3472 = vadd.f32 0.0, %v3471
      %v3473 = vpop.f32.mrb[0].mxu0
      %v3474 = vadd.f32 0.0, %v3473
      %v3475 = vpop.f32.mrb[0].mxu0
      %v3476 = vadd.f32 0.0, %v3475
      %3477 = vmatprep.mubr.bf16.mxu0 %v3014
      %3478 = vmatmul.mubr.bf16.gmra.mrb[0].mxu0 %v3013
      %v3479 = vpop.f32.mrb[0].mxu0
      %v3480 = vpop.f32.mrb[0].mxu0
      %v3481 = vadd.f32 0.0, %v3480
      %v3482 = vpop.f32.mrb[0].mxu0
      %v3483 = vpop.f32.mrb[0].mxu0
      %3484 = vmatprep.mubr.bf16.mxu0 %v3016
      %3485 = vmatmul.mubr.bf16.gmra.mrb[0].mxu0 %v3015
      %v3486 = vpop.f32.mrb[0].mxu0
      %v3487 = vadd.f32 0.0, %v3486
      %v3488 = vpop.f32.mrb[0].mxu0
      %v3489 = vadd.f32 0.0, %v3488
      %v3490 = vpop.f32.mrb[0].mxu0
      %v3491 = vadd.f32 0.0, %v3490
      %v3492 = vpop.f32.mrb[0].mxu0
      %v3493 = vadd.f32 0.0, %v3492
      %3494 = vmatprep.mubr.bf16.mxu0 %v3018
      %3495 = vmatmul.mubr.bf16.gmra.mrb[0].mxu0 %v3017
      %v3496 = vpop.f32.mrb[0].mxu0
      %v3497 = vpop.f32.mrb[0].mxu0
      %v3498 = vadd.f32 0.0, %v3497
      %v3499 = vpop.f32.mrb[0].mxu0
      %v3500 = vpop.f32.mrb[0].mxu0
      %3501 = vmatprep.mubr.bf16.mxu0 %v3020
      %3502 = vmatmul.mubr.bf16.gmra.mrb[0].mxu0 %v3019
      %v3503 = vpop.f32.mrb[0].mxu0
      %v3504 = vadd.f32 0.0, %v3503
      %v3505 = vpop.f32.mrb[0].mxu0
      %v3506 = vadd.f32 0.0, %v3505
      %v3507 = vpop.f32.mrb[0].mxu0
      %v3508 = vadd.f32 0.0, %v3507
      %v3509 = vpop.f32.mrb[0].mxu0
      %v3510 = vadd.f32 0.0, %v3509
      %3511 = vmatprep.mubr.bf16.mxu0 %v3022
      %3512 = vmatmul.mubr.bf16.gmra.mrb[0].mxu0 %v3021
      %v3513 = vpop.f32.mrb[0].mxu0
      %v3514 = vpop.f32.mrb[0].mxu0
      %v3515 = vadd.f32 0.0, %v3514
      %v3516 = vpop.f32.mrb[0].mxu0
      %v3517 = vpop.f32.mrb[0].mxu0
      %3518 = vmatprep.mubr.bf16.mxu0 %v3024
      %3519 = vmatmul.mubr.bf16.gmra.mrb[0].mxu0 %v3023
      %v3520 = vpop.f32.mrb[0].mxu0
      %v3521 = vadd.f32 0.0, %v3520
      %v3522 = vpop.f32.mrb[0].mxu0
      %v3523 = vadd.f32 0.0, %v3522
      %v3524 = vpop.f32.mrb[0].mxu0
      %v3525 = vadd.f32 0.0, %v3524
      %v3526 = vpop.f32.mrb[0].mxu0
      %v3527 = vadd.f32 0.0, %v3526
      %3528 = vmatprep.mubr.bf16.mxu0 %v3026
      %3529 = vmatmul.mubr.bf16.gmra.mrb[0].mxu0 %v3025
      %v3530 = vpop.f32.mrb[0].mxu0
      %v3531 = vpop.f32.mrb[0].mxu0
      %v3532 = vadd.f32 0.0, %v3531
      %v3533 = vpop.f32.mrb[0].mxu0
      %v3534 = vpop.f32.mrb[0].mxu0
      %3535 = vmatprep.mubr.bf16.mxu0 %v3028
      %3536 = vmatmul.mubr.bf16.gmra.mrb[0].mxu0 %v3027
      %v3537 = vpop.f32.mrb[0].mxu0
      %v3538 = vadd.f32 0.0, %v3537
      %v3539 = vpop.f32.mrb[0].mxu0
      %v3540 = vadd.f32 0.0, %v3539
      %v3541 = vpop.f32.mrb[0].mxu0
      %v3542 = vadd.f32 0.0, %v3541
      %v3543 = vpop.f32.mrb[0].mxu0
      %v3544 = vadd.f32 0.0, %v3543
      %3545 = vmatprep.mubr.bf16.mxu0 %v3030
      %3546 = vmatmul.mubr.bf16.gmra.mrb[0].mxu0 %v3029
      %v3547 = vpop.f32.mrb[0].mxu0
      %v3548 = vpop.f32.mrb[0].mxu0
      %v3549 = vadd.f32 0.0, %v3548
      %v3550 = vpop.f32.mrb[0].mxu0
      %v3551 = vpop.f32.mrb[0].mxu0
      %3552 = vmatprep.mubr.bf16.mxu0 %v3032
      %3553 = vmatmul.mubr.bf16.gmra.mrb[0].mxu0 %v3031
      %v3554 = vpop.f32.mrb[0].mxu0
      %v3555 = vadd.f32 0.0, %v3554
      %v3556 = vpop.f32.mrb[0].mxu0
      %v3557 = vadd.f32 0.0, %v3556
      %v3558 = vpop.f32.mrb[0].mxu0
      %v3559 = vadd.f32 0.0, %v3558
      %v3560 = vpop.f32.mrb[0].mxu0
      %v3561 = vadd.f32 0.0, %v3560
      %3562 = vmatprep.mubr.bf16.mxu0 %v3034
      %3563 = vmatmul.mubr.bf16.gmra.mrb[0].mxu0 %v3033
      %v3564 = vpop.f32.mrb[0].mxu0
      %v3565 = vpop.f32.mrb[0].mxu0
      %v3566 = vadd.f32 0.0, %v3565
      %v3567 = vpop.f32.mrb[0].mxu0
      %v3568 = vpop.f32.mrb[0].mxu0
      %3569 = vmatprep.mubr.bf16.mxu0 %v3036
      %3570 = vmatmul.mubr.bf16.gmra.mrb[0].mxu0 %v3035
      %v3571 = vpop.f32.mrb[0].mxu0
      %v3572 = vadd.f32 0.0, %v3571
      %v3573 = vpop.f32.mrb[0].mxu0
      %v3574 = vadd.f32 0.0, %v3573
      %v3575 = vpop.f32.mrb[0].mxu0
      %v3576 = vadd.f32 0.0, %v3575
      %v3577 = vpop.f32.mrb[0].mxu0
      %v3578 = vadd.f32 0.0, %v3577
      %3579 = vmatprep.mubr.bf16.mxu0 %v3038
      %3580 = vmatmul.mubr.bf16.gmra.mrb[0].mxu0 %v3037
      %v3581 = vpop.f32.mrb[0].mxu0
      %v3582 = vpop.f32.mrb[0].mxu0
      %v3583 = vadd.f32 0.0, %v3582
      %v3584 = vpop.f32.mrb[0].mxu0
      %v3585 = vpop.f32.mrb[0].mxu0
      %3586 = vmatprep.mubr.bf16.mxu0 %v3040
      %3587 = vmatmul.mubr.bf16.gmra.mrb[0].mxu0 %v3039
      %v3588 = vpop.f32.mrb[0].mxu0
      %v3589 = vadd.f32 0.0, %v3588
      %v3590 = vpop.f32.mrb[0].mxu0
      %v3591 = vadd.f32 0.0, %v3590
      %v3592 = vpop.f32.mrb[0].mxu0
      %v3593 = vadd.f32 0.0, %v3592
      %v3594 = vpop.f32.mrb[0].mxu0
      %v3595 = vadd.f32 0.0, %v3594
      %3596 = vmatprep.mubr.bf16.mxu0 %v3042
      %3597 = vmatmul.mubr.bf16.gmra.mrb[0].mxu0 %v3041
      %v3598 = vpop.f32.mrb[0].mxu0
      %v3599 = vpop.f32.mrb[0].mxu0
      %v3600 = vadd.f32 0.0, %v3599
      %v3601 = vpop.f32.mrb[0].mxu0
      %v3602 = vpop.f32.mrb[0].mxu0
      %3603 = vmatprep.mubr.bf16.mxu0 %v3044
      %3604 = vmatmul.mubr.bf16.gmra.mrb[0].mxu0 %v3043
      %v3605 = vpop.f32.mrb[0].mxu0
      %v3606 = vadd.f32 0.0, %v3605
      %v3607 = vpop.f32.mrb[0].mxu0
      %v3608 = vadd.f32 0.0, %v3607
      %v3609 = vpop.f32.mrb[0].mxu0
      %v3610 = vadd.f32 0.0, %v3609
      %v3611 = vpop.f32.mrb[0].mxu0
      %v3612 = vadd.f32 0.0, %v3611
      %3613 = vmatprep.mubr.bf16.mxu0 %v3046
      %3614 = vmatmul.mubr.bf16.gmra.mrb[0].mxu0 %v3045
      %v3615 = vpop.f32.mrb[0].mxu0
      %v3616 = vpop.f32.mrb[0].mxu0
      %v3617 = vadd.f32 0.0, %v3616
      %v3618 = vpop.f32.mrb[0].mxu0
      %v3619 = vpop.f32.mrb[0].mxu0
      %3620 = vmatprep.mubr.bf16.mxu0 %v3048
      %3621 = vmatmul.mubr.bf16.gmra.mrb[0].mxu0 %v3047
      %v3622 = vpop.f32.mrb[0].mxu0
      %v3623 = vadd.f32 0.0, %v3622
      %v3624 = vpop.f32.mrb[0].mxu0
      %v3625 = vadd.f32 0.0, %v3624
      %v3626 = vpop.f32.mrb[0].mxu0
      %v3627 = vadd.f32 0.0, %v3626
      %v3628 = vpop.f32.mrb[0].mxu0
      %v3629 = vadd.f32 0.0, %v3628
      %3630 = vmatprep.mubr.bf16.mxu0 %v3050
      %3631 = vmatmul.mubr.bf16.gmra.mrb[0].mxu0 %v3049
      %v3632 = vpop.f32.mrb[0].mxu0
      %v3633 = vpop.f32.mrb[0].mxu0
      %v3634 = vadd.f32 0.0, %v3633
      %v3635 = vpop.f32.mrb[0].mxu0
      %v3636 = vpop.f32.mrb[0].mxu0
      %3637 = vmatprep.mubr.bf16.mxu0 %v3052
      %3638 = vmatmul.mubr.bf16.gmra.mrb[0].mxu0 %v3051
      %v3639 = vpop.f32.mrb[0].mxu0
      %v3640 = vadd.f32 0.0, %v3639
      %v3641 = vpop.f32.mrb[0].mxu0
      %v3642 = vadd.f32 0.0, %v3641
      %v3643 = vpop.f32.mrb[0].mxu0
      %v3644 = vadd.f32 0.0, %v3643
      %v3645 = vpop.f32.mrb[0].mxu0
      %v3646 = vadd.f32 0.0, %v3645
      %3647 = vmatprep.mubr.bf16.mxu0 %v3054
      %3648 = vmatmul.mubr.bf16.gmra.mrb[0].mxu0 %v3053
      %v3649 = vpop.f32.mrb[0].mxu0
      %v3650 = vpop.f32.mrb[0].mxu0
      %v3651 = vadd.f32 0.0, %v3650
      %v3652 = vpop.f32.mrb[0].mxu0
      %v3653 = vpop.f32.mrb[0].mxu0
      %3654 = vmatprep.mubr.bf16.mxu0 %v3056
      %3655 = vmatmul.mubr.bf16.gmra.mrb[0].mxu0 %v3055
      %v3656 = vpop.f32.mrb[0].mxu0
      %v3657 = vadd.f32 0.0, %v3656
      %v3658 = vpop.f32.mrb[0].mxu0
      %v3659 = vadd.f32 0.0, %v3658
      %v3660 = vpop.f32.mrb[0].mxu0
      %v3661 = vadd.f32 0.0, %v3660
      %v3662 = vpop.f32.mrb[0].mxu0
      %v3663 = vadd.f32 0.0, %v3662
      %3664 = vmatprep.mubr.bf16.mxu0 %v3058
      %3665 = vmatmul.mubr.bf16.gmra.mrb[0].mxu0 %v3057
      %v3666 = vpop.f32.mrb[0].mxu0
      %v3667 = vpop.f32.mrb[0].mxu0
      %v3668 = vadd.f32 0.0, %v3667
      %v3669 = vpop.f32.mrb[0].mxu0
      %v3670 = vpop.f32.mrb[0].mxu0
      %3671 = vmatprep.mubr.bf16.mxu0 %v3060
      %3672 = vmatmul.mubr.bf16.gmra.mrb[0].mxu0 %v3059
      %v3673 = vpop.f32.mrb[0].mxu0
      %v3674 = vadd.f32 0.0, %v3673
      %v3675 = vpop.f32.mrb[0].mxu0
      %v3676 = vadd.f32 0.0, %v3675
      %v3677 = vpop.f32.mrb[0].mxu0
      %v3678 = vadd.f32 0.0, %v3677
      %v3679 = vpop.f32.mrb[0].mxu0
      %v3680 = vadd.f32 0.0, %v3679
      %3681 = vmatprep.mubr.bf16.mxu0 %v3062
      %3682 = vmatmul.mubr.bf16.gmra.mrb[0].mxu0 %v3061
      %v3683 = vpop.f32.mrb[0].mxu0
      %v3684 = vpop.f32.mrb[0].mxu0
      %v3685 = vadd.f32 0.0, %v3684
      %v3686 = vpop.f32.mrb[0].mxu0
      %v3687 = vpop.f32.mrb[0].mxu0
      %3688 = vdwg.mxu0
      %3689 = vmatprep.subr.bf16.mxu0 0
      %3690 = vmatpush1.bf16.msra.mxu0 %v3290
      %3691 = vmatprep.subr.bf16.mxu0 0
      %3692 = vmatpush1.bf16.msra.mxu0 %v3293
      %3693 = vmatprep.subr.bf16.mxu0 0
      %3694 = vmatpush1.bf16.msra.mxu0 %v3296
      %3695 = vmatprep.subr.bf16.mxu0 0
      %3696 = vmatpush1.bf16.msra.mxu0 %v3299
      %3697 = vmatprep.subr.bf16.mxu0 0
      %3698 = vmatpush1.bf16.msra.mxu0 %v3302
      %3699 = vmatprep.subr.bf16.mxu0 0
      %3700 = vmatpush1.bf16.msra.mxu0 %v3305
      %3701 = vmatprep.subr.bf16.mxu0 0
      %3702 = vmatpush1.bf16.msra.mxu0 %v3308
      %3703 = vmatprep.subr.bf16.mxu0 0
      %3704 = vmatpush1.bf16.msra.mxu0 %v3311
      %3705 = vmatprep.subr.bf16.mxu0 0
      %3706 = vmatpush1.bf16.msra.mxu0 %v3314
      %3707 = vmatprep.subr.bf16.mxu0 0
      %3708 = vmatpush1.bf16.msra.mxu0 %v3317
      %3709 = vmatprep.subr.bf16.mxu0 0
      %3710 = vmatpush1.bf16.msra.mxu0 %v3320
      %3711 = vmatprep.subr.bf16.mxu0 0
      %3712 = vmatpush1.bf16.msra.mxu0 %v3323
      %3713 = vmatprep.subr.bf16.mxu0 0
      %3714 = vmatpush1.bf16.msra.mxu0 %v3326
      %3715 = vmatprep.subr.bf16.mxu0 0
      %3716 = vmatpush1.bf16.msra.mxu0 %v3329
      %3717 = vmatprep.subr.bf16.mxu0 0
      %3718 = vmatpush1.bf16.msra.mxu0 %v3332
      %3719 = vmatprep.subr.bf16.mxu0 0
      %3720 = vmatpush1.bf16.msra.mxu0 %v3335
      %3721 = vmatprep.mubr.bf16.mxu0 %v3000
      %3722 = vmatmul.mubr.bf16.gmra.mrb[0].mxu0 %v2999
      %v3723 = vpop.f32.mrb[0].mxu0
      %v3724 = vadd.f32 0.0, %v3723
      %v3725 = vpop.f32.mrb[0].mxu0
      %v3726 = vpop.f32.mrb[0].mxu0
      %v3727 = vadd.f32 0.0, %v3726
      %v3728 = vpop.f32.mrb[0].mxu0
      %3729 = vmatprep.mubr.bf16.mxu0 %v3002
      %3730 = vmatmul.mubr.bf16.gmra.mrb[0].mxu0 %v3001
      %v3731 = vpop.f32.mrb[0].mxu0
      %v3732 = vadd.f32 0.0, %v3731
      %v3733 = vpop.f32.mrb[0].mxu0
      %v3734 = vpop.f32.mrb[0].mxu0
      %v3735 = vpop.f32.mrb[0].mxu0
      %3736 = vmatprep.mubr.bf16.mxu0 %v3004
      %3737 = vmatmul.mubr.bf16.gmra.mrb[0].mxu0 %v3003
      %v3738 = vpop.f32.mrb[0].mxu0
      %v3739 = vadd.f32 0.0, %v3738
      %v3740 = vpop.f32.mrb[0].mxu0
      %v3741 = vpop.f32.mrb[0].mxu0
      %v3742 = vadd.f32 0.0, %v3741
      %v3743 = vpop.f32.mrb[0].mxu0
      %3744 = vmatprep.mubr.bf16.mxu0 %v3006
      %3745 = vmatmul.mubr.bf16.gmra.mrb[0].mxu0 %v3005
      %v3746 = vpop.f32.mrb[0].mxu0
      %v3747 = vadd.f32 0.0, %v3746
      %v3748 = vpop.f32.mrb[0].mxu0
      %v3749 = vpop.f32.mrb[0].mxu0
      %v3750 = vpop.f32.mrb[0].mxu0
      %3751 = vmatprep.mubr.bf16.mxu0 %v3008
      %3752 = vmatmul.mubr.bf16.gmra.mrb[0].mxu0 %v3007
      %v3753 = vpop.f32.mrb[0].mxu0
      %v3754 = vadd.f32 0.0, %v3753
      %v3755 = vpop.f32.mrb[0].mxu0
      %v3756 = vpop.f32.mrb[0].mxu0
      %v3757 = vadd.f32 0.0, %v3756
      %v3758 = vpop.f32.mrb[0].mxu0
      %3759 = vmatprep.mubr.bf16.mxu0 %v3010
      %3760 = vmatmul.mubr.bf16.gmra.mrb[0].mxu0 %v3009
      %v3761 = vpop.f32.mrb[0].mxu0
      %v3762 = vadd.f32 0.0, %v3761
      %v3763 = vpop.f32.mrb[0].mxu0
      %v3764 = vpop.f32.mrb[0].mxu0
      %v3765 = vpop.f32.mrb[0].mxu0
      %3766 = vmatprep.mubr.bf16.mxu0 %v3012
      %3767 = vmatmul.mubr.bf16.gmra.mrb[0].mxu0 %v3011
      %v3768 = vpop.f32.mrb[0].mxu0
      %v3769 = vadd.f32 0.0, %v3768
      %v3770 = vpop.f32.mrb[0].mxu0
      %v3771 = vpop.f32.mrb[0].mxu0
      %v3772 = vadd.f32 0.0, %v3771
      %v3773 = vpop.f32.mrb[0].mxu0
      %3774 = vmatprep.mubr.bf16.mxu0 %v3014
      %3775 = vmatmul.mubr.bf16.gmra.mrb[0].mxu0 %v3013
      %v3776 = vpop.f32.mrb[0].mxu0
      %v3777 = vadd.f32 0.0, %v3776
      %v3778 = vpop.f32.mrb[0].mxu0
      %v3779 = vpop.f32.mrb[0].mxu0
      %v3780 = vpop.f32.mrb[0].mxu0
      %3781 = vmatprep.mubr.bf16.mxu0 %v3016
      %3782 = vmatmul.mubr.bf16.gmra.mrb[0].mxu0 %v3015
      %v3783 = vpop.f32.mrb[0].mxu0
      %v3784 = vadd.f32 0.0, %v3783
      %v3785 = vpop.f32.mrb[0].mxu0
      %v3786 = vpop.f32.mrb[0].mxu0
      %v3787 = vadd.f32 0.0, %v3786
      %v3788 = vpop.f32.mrb[0].mxu0
      %3789 = vmatprep.mubr.bf16.mxu0 %v3018
      %3790 = vmatmul.mubr.bf16.gmra.mrb[0].mxu0 %v3017
      %v3791 = vpop.f32.mrb[0].mxu0
      %v3792 = vadd.f32 0.0, %v3791
      %v3793 = vpop.f32.mrb[0].mxu0
      %v3794 = vpop.f32.mrb[0].mxu0
      %v3795 = vpop.f32.mrb[0].mxu0
      %3796 = vmatprep.mubr.bf16.mxu0 %v3020
      %3797 = vmatmul.mubr.bf16.gmra.mrb[0].mxu0 %v3019
      %v3798 = vpop.f32.mrb[0].mxu0
      %v3799 = vadd.f32 0.0, %v3798
      %v3800 = vpop.f32.mrb[0].mxu0
      %v3801 = vpop.f32.mrb[0].mxu0
      %v3802 = vadd.f32 0.0, %v3801
      %v3803 = vpop.f32.mrb[0].mxu0
      %3804 = vmatprep.mubr.bf16.mxu0 %v3022
      %3805 = vmatmul.mubr.bf16.gmra.mrb[0].mxu0 %v3021
      %v3806 = vpop.f32.mrb[0].mxu0
      %v3807 = vadd.f32 0.0, %v3806
      %v3808 = vpop.f32.mrb[0].mxu0
      %v3809 = vpop.f32.mrb[0].mxu0
      %v3810 = vpop.f32.mrb[0].mxu0
      %3811 = vmatprep.mubr.bf16.mxu0 %v3024
      %3812 = vmatmul.mubr.bf16.gmra.mrb[0].mxu0 %v3023
      %v3813 = vpop.f32.mrb[0].mxu0
      %v3814 = vadd.f32 0.0, %v3813
      %v3815 = vpop.f32.mrb[0].mxu0
      %v3816 = vpop.f32.mrb[0].mxu0
      %v3817 = vadd.f32 0.0, %v3816
      %v3818 = vpop.f32.mrb[0].mxu0
      %3819 = vmatprep.mubr.bf16.mxu0 %v3026
      %3820 = vmatmul.mubr.bf16.gmra.mrb[0].mxu0 %v3025
      %v3821 = vpop.f32.mrb[0].mxu0
      %v3822 = vadd.f32 0.0, %v3821
      %v3823 = vpop.f32.mrb[0].mxu0
      %v3824 = vpop.f32.mrb[0].mxu0
      %v3825 = vpop.f32.mrb[0].mxu0
      %3826 = vmatprep.mubr.bf16.mxu0 %v3028
      %3827 = vmatmul.mubr.bf16.gmra.mrb[0].mxu0 %v3027
      %v3828 = vpop.f32.mrb[0].mxu0
      %v3829 = vadd.f32 0.0, %v3828
      %v3830 = vpop.f32.mrb[0].mxu0
      %v3831 = vpop.f32.mrb[0].mxu0
      %v3832 = vadd.f32 0.0, %v3831
      %v3833 = vpop.f32.mrb[0].mxu0
      %3834 = vmatprep.mubr.bf16.mxu0 %v3030
      %3835 = vmatmul.mubr.bf16.gmra.mrb[0].mxu0 %v3029
      %v3836 = vpop.f32.mrb[0].mxu0
      %v3837 = vadd.f32 0.0, %v3836
      %v3838 = vpop.f32.mrb[0].mxu0
      %v3839 = vpop.f32.mrb[0].mxu0
      %v3840 = vpop.f32.mrb[0].mxu0
      %3841 = vmatprep.mubr.bf16.mxu0 %v3032
      %3842 = vmatmul.mubr.bf16.gmra.mrb[0].mxu0 %v3031
      %v3843 = vpop.f32.mrb[0].mxu0
      %v3844 = vadd.f32 0.0, %v3843
      %v3845 = vpop.f32.mrb[0].mxu0
      %v3846 = vpop.f32.mrb[0].mxu0
      %v3847 = vadd.f32 0.0, %v3846
      %v3848 = vpop.f32.mrb[0].mxu0
      %3849 = vmatprep.mubr.bf16.mxu0 %v3034
      %3850 = vmatmul.mubr.bf16.gmra.mrb[0].mxu0 %v3033
      %v3851 = vpop.f32.mrb[0].mxu0
      %v3852 = vadd.f32 0.0, %v3851
      %v3853 = vpop.f32.mrb[0].mxu0
      %v3854 = vpop.f32.mrb[0].mxu0
      %v3855 = vpop.f32.mrb[0].mxu0
      %3856 = vmatprep.mubr.bf16.mxu0 %v3036
      %3857 = vmatmul.mubr.bf16.gmra.mrb[0].mxu0 %v3035
      %v3858 = vpop.f32.mrb[0].mxu0
      %v3859 = vadd.f32 0.0, %v3858
      %v3860 = vpop.f32.mrb[0].mxu0
      %v3861 = vpop.f32.mrb[0].mxu0
      %v3862 = vadd.f32 0.0, %v3861
      %v3863 = vpop.f32.mrb[0].mxu0
      %3864 = vmatprep.mubr.bf16.mxu0 %v3038
      %3865 = vmatmul.mubr.bf16.gmra.mrb[0].mxu0 %v3037
      %v3866 = vpop.f32.mrb[0].mxu0
      %v3867 = vadd.f32 0.0, %v3866
      %v3868 = vpop.f32.mrb[0].mxu0
      %v3869 = vpop.f32.mrb[0].mxu0
      %v3870 = vpop.f32.mrb[0].mxu0
      %3871 = vmatprep.mubr.bf16.mxu0 %v3040
      %3872 = vmatmul.mubr.bf16.gmra.mrb[0].mxu0 %v3039
      %v3873 = vpop.f32.mrb[0].mxu0
      %v3874 = vadd.f32 0.0, %v3873
      %v3875 = vpop.f32.mrb[0].mxu0
      %v3876 = vpop.f32.mrb[0].mxu0
      %v3877 = vadd.f32 0.0, %v3876
      %v3878 = vpop.f32.mrb[0].mxu0
      %3879 = vmatprep.mubr.bf16.mxu0 %v3042
      %3880 = vmatmul.mubr.bf16.gmra.mrb[0].mxu0 %v3041
      %v3881 = vpop.f32.mrb[0].mxu0
      %v3882 = vadd.f32 0.0, %v3881
      %v3883 = vpop.f32.mrb[0].mxu0
      %v3884 = vpop.f32.mrb[0].mxu0
      %v3885 = vpop.f32.mrb[0].mxu0
      %3886 = vmatprep.mubr.bf16.mxu0 %v3044
      %3887 = vmatmul.mubr.bf16.gmra.mrb[0].mxu0 %v3043
      %v3888 = vpop.f32.mrb[0].mxu0
      %v3889 = vadd.f32 0.0, %v3888
      %v3890 = vpop.f32.mrb[0].mxu0
      %v3891 = vpop.f32.mrb[0].mxu0
      %v3892 = vadd.f32 0.0, %v3891
      %v3893 = vpop.f32.mrb[0].mxu0
      %3894 = vmatprep.mubr.bf16.mxu0 %v3046
      %3895 = vmatmul.mubr.bf16.gmra.mrb[0].mxu0 %v3045
      %v3896 = vpop.f32.mrb[0].mxu0
      %v3897 = vadd.f32 0.0, %v3896
      %v3898 = vpop.f32.mrb[0].mxu0
      %v3899 = vpop.f32.mrb[0].mxu0
      %v3900 = vpop.f32.mrb[0].mxu0
      %3901 = vmatprep.mubr.bf16.mxu0 %v3048
      %3902 = vmatmul.mubr.bf16.gmra.mrb[0].mxu0 %v3047
      %v3903 = vpop.f32.mrb[0].mxu0
      %v3904 = vadd.f32 0.0, %v3903
      %v3905 = vpop.f32.mrb[0].mxu0
      %v3906 = vpop.f32.mrb[0].mxu0
      %v3907 = vadd.f32 0.0, %v3906
      %v3908 = vpop.f32.mrb[0].mxu0
      %3909 = vmatprep.mubr.bf16.mxu0 %v3050
      %3910 = vmatmul.mubr.bf16.gmra.mrb[0].mxu0 %v3049
      %v3911 = vpop.f32.mrb[0].mxu0
      %v3912 = vadd.f32 0.0, %v3911
      %v3913 = vpop.f32.mrb[0].mxu0
      %v3914 = vpop.f32.mrb[0].mxu0
      %v3915 = vpop.f32.mrb[0].mxu0
      %3916 = vmatprep.mubr.bf16.mxu0 %v3052
      %3917 = vmatmul.mubr.bf16.gmra.mrb[0].mxu0 %v3051
      %v3918 = vpop.f32.mrb[0].mxu0
      %v3919 = vadd.f32 0.0, %v3918
      %v3920 = vpop.f32.mrb[0].mxu0
      %v3921 = vpop.f32.mrb[0].mxu0
      %v3922 = vadd.f32 0.0, %v3921
      %v3923 = vpop.f32.mrb[0].mxu0
      %3924 = vmatprep.mubr.bf16.mxu0 %v3054
      %3925 = vmatmul.mubr.bf16.gmra.mrb[0].mxu0 %v3053
      %v3926 = vpop.f32.mrb[0].mxu0
      %v3927 = vadd.f32 0.0, %v3926
      %v3928 = vpop.f32.mrb[0].mxu0
      %v3929 = vpop.f32.mrb[0].mxu0
      %v3930 = vpop.f32.mrb[0].mxu0
      %3931 = vmatprep.mubr.bf16.mxu0 %v3056
      %3932 = vmatmul.mubr.bf16.gmra.mrb[0].mxu0 %v3055
      %v3933 = vpop.f32.mrb[0].mxu0
      %v3934 = vadd.f32 0.0, %v3933
      %v3935 = vpop.f32.mrb[0].mxu0
      %v3936 = vpop.f32.mrb[0].mxu0
      %v3937 = vadd.f32 0.0, %v3936
      %v3938 = vpop.f32.mrb[0].mxu0
      %3939 = vmatprep.mubr.bf16.mxu0 %v3058
      %3940 = vmatmul.mubr.bf16.gmra.mrb[0].mxu0 %v3057
      %v3941 = vpop.f32.mrb[0].mxu0
      %v3942 = vadd.f32 0.0, %v3941
      %v3943 = vpop.f32.mrb[0].mxu0
      %v3944 = vpop.f32.mrb[0].mxu0
      %v3945 = vpop.f32.mrb[0].mxu0
      %3946 = vmatprep.mubr.bf16.mxu0 %v3060
      %3947 = vmatmul.mubr.bf16.gmra.mrb[0].mxu0 %v3059
      %v3948 = vpop.f32.mrb[0].mxu0
      %v3949 = vadd.f32 0.0, %v3948
      %v3950 = vpop.f32.mrb[0].mxu0
      %v3951 = vpop.f32.mrb[0].mxu0
      %v3952 = vadd.f32 0.0, %v3951
      %v3953 = vpop.f32.mrb[0].mxu0
      %3954 = vmatprep.mubr.bf16.mxu0 %v3062
      %3955 = vmatmul.mubr.bf16.gmra.mrb[0].mxu0 %v3061
      %v3956 = vpop.f32.mrb[0].mxu0
      %v3957 = vadd.f32 0.0, %v3956
      %v3958 = vpop.f32.mrb[0].mxu0
      %v3959 = vpop.f32.mrb[0].mxu0
      %v3960 = vpop.f32.mrb[0].mxu0
      %3961 = vdwg.mxu0
      %v4010 = vrot.slane %v3421, 1
      %v4011 = vrot.slane %v3425, 1
      %v4012 = vsel %vm2629, %v4010, %v4011
      %v4013 = vrot.slane %v3430, 1
      %v4014 = vsel %vm2629, %v4011, %v4013
      %v4015 = vrot.slane %v3438, 1
      %v4016 = vrot.slane %v3442, 1
      %v4017 = vsel %vm2629, %v4015, %v4016
      %v4018 = vrot.slane %v3447, 1
      %v4019 = vsel %vm2629, %v4016, %v4018
      %v4020 = vrot.slane %v3455, 1
      %v4021 = vrot.slane %v3459, 1
      %v4022 = vsel %vm2629, %v4020, %v4021
      %v4023 = vrot.slane %v3464, 1
      %v4024 = vsel %vm2629, %v4021, %v4023
      %v4025 = vrot.slane %v3472, 1
      %v4026 = vrot.slane %v3476, 1
      %v4027 = vsel %vm2629, %v4025, %v4026
      %v4028 = vrot.slane %v3481, 1
      %v4029 = vsel %vm2629, %v4026, %v4028
      %v4030 = vrot.slane %v3489, 1
      %v4031 = vrot.slane %v3493, 1
      %v4032 = vsel %vm2629, %v4030, %v4031
      %v4033 = vrot.slane %v3498, 1
      %v4034 = vsel %vm2629, %v4031, %v4033
      %v4035 = vrot.slane %v3506, 1
      %v4036 = vrot.slane %v3510, 1
      %v4037 = vsel %vm2629, %v4035, %v4036
      %v4038 = vrot.slane %v3515, 1
      %v4039 = vsel %vm2629, %v4036, %v4038
      %v4040 = vrot.slane %v3523, 1
      %v4041 = vrot.slane %v3527, 1
      %v4042 = vsel %vm2629, %v4040, %v4041
      %v4043 = vrot.slane %v3532, 1
      %v4044 = vsel %vm2629, %v4041, %v4043
      %v4045 = vrot.slane %v3540, 1
      %v4046 = vrot.slane %v3544, 1
      %v4047 = vsel %vm2629, %v4045, %v4046
      %v4048 = vrot.slane %v3549, 1
      %v4049 = vsel %vm2629, %v4046, %v4048
      %v4050 = vrot.slane %v3557, 1
      %v4051 = vrot.slane %v3561, 1
      %v4052 = vsel %vm2629, %v4050, %v4051
      %v4053 = vrot.slane %v3566, 1
      %v4054 = vsel %vm2629, %v4051, %v4053
      %v4055 = vrot.slane %v3574, 1
      %v4056 = vrot.slane %v3578, 1
      %v4057 = vsel %vm2629, %v4055, %v4056
      %v4058 = vrot.slane %v3583, 1
      %v4059 = vsel %vm2629, %v4056, %v4058
      %v4060 = vrot.slane %v3591, 1
      %v4061 = vrot.slane %v3595, 1
      %v4062 = vsel %vm2629, %v4060, %v4061
      %v4063 = vrot.slane %v3600, 1
      %v4064 = vsel %vm2629, %v4061, %v4063
      %v4065 = vrot.slane %v3608, 1
      %v4066 = vrot.slane %v3612, 1
      %v4067 = vsel %vm2629, %v4065, %v4066
      %v4068 = vrot.slane %v3617, 1
      %v4069 = vsel %vm2629, %v4066, %v4068
      %v4070 = vrot.slane %v3625, 1
      %v4071 = vrot.slane %v3629, 1
      %v4072 = vsel %vm2629, %v4070, %v4071
      %v4073 = vrot.slane %v3634, 1
      %v4074 = vsel %vm2629, %v4071, %v4073
      %v4075 = vrot.slane %v3642, 1
      %v4076 = vrot.slane %v3646, 1
      %v4077 = vsel %vm2629, %v4075, %v4076
      %v4078 = vrot.slane %v3651, 1
      %v4079 = vsel %vm2629, %v4076, %v4078
      %v4080 = vrot.slane %v3659, 1
      %v4081 = vrot.slane %v3663, 1
      %v4082 = vsel %vm2629, %v4080, %v4081
      %v4083 = vrot.slane %v3668, 1
      %v4084 = vsel %vm2629, %v4081, %v4083
      %v4085 = vrot.slane %v3676, 1
      %v4086 = vrot.slane %v3680, 1
      %v4087 = vsel %vm2629, %v4085, %v4086
      %v4088 = vrot.slane %v3685, 1
      %v4089 = vsel %vm2629, %v4086, %v4088
      %v4122 = vadd.f32 %v3419, %v4012
      %v4123 = vadd.f32 %v3423, %v4014
      %v4124 = vadd.f32 %v3436, %v4017
      %v4125 = vadd.f32 %v3440, %v4019
      %v4126 = vadd.f32 %v3453, %v4022
      %v4127 = vadd.f32 %v3457, %v4024
      %v4128 = vadd.f32 %v3470, %v4027
      %v4129 = vadd.f32 %v3474, %v4029
      %v4130 = vadd.f32 %v3487, %v4032
      %v4131 = vadd.f32 %v3491, %v4034
      %v4132 = vadd.f32 %v3504, %v4037
      %v4133 = vadd.f32 %v3508, %v4039
      %v4134 = vadd.f32 %v3521, %v4042
      %v4135 = vadd.f32 %v3525, %v4044
      %v4136 = vadd.f32 %v3538, %v4047
      %v4137 = vadd.f32 %v3542, %v4049
      %v4138 = vadd.f32 %v3555, %v4052
      %v4139 = vadd.f32 %v3559, %v4054
      %v4140 = vadd.f32 %v3572, %v4057
      %v4141 = vadd.f32 %v3576, %v4059
      %v4142 = vadd.f32 %v3589, %v4062
      %v4143 = vadd.f32 %v3593, %v4064
      %v4144 = vadd.f32 %v3606, %v4067
      %v4145 = vadd.f32 %v3610, %v4069
      %v4146 = vadd.f32 %v3623, %v4072
      %v4147 = vadd.f32 %v3627, %v4074
      %v4148 = vadd.f32 %v3640, %v4077
      %v4149 = vadd.f32 %v3644, %v4079
      %v4150 = vadd.f32 %v3657, %v4082
      %v4151 = vadd.f32 %v3661, %v4084
      %v4152 = vadd.f32 %v3674, %v4087
      %v4153 = vadd.f32 %v3678, %v4089
      %v4202 = vrot.slane %v3724, 2
      %v4203 = vrot.slane %v3727, 2
      %v4204 = vsel %vm2822, %v4202, %v4203
      %v4205 = vrot.slane %v3732, 2
      %v4206 = vsel %vm2822, %v4203, %v4205
      %v4207 = vrot.slane %v3739, 2
      %v4208 = vrot.slane %v3742, 2
      %v4209 = vsel %vm2822, %v4207, %v4208
      %v4210 = vrot.slane %v3747, 2
      %v4211 = vsel %vm2822, %v4208, %v4210
      %v4212 = vrot.slane %v3754, 2
      %v4213 = vrot.slane %v3757, 2
      %v4214 = vsel %vm2822, %v4212, %v4213
      %v4215 = vrot.slane %v3762, 2
      %v4216 = vsel %vm2822, %v4213, %v4215
      %v4217 = vrot.slane %v3769, 2
      %v4218 = vrot.slane %v3772, 2
      %v4219 = vsel %vm2822, %v4217, %v4218
      %v4220 = vrot.slane %v3777, 2
      %v4221 = vsel %vm2822, %v4218, %v4220
      %v4222 = vrot.slane %v3784, 2
      %v4223 = vrot.slane %v3787, 2
      %v4224 = vsel %vm2822, %v4222, %v4223
      %v4225 = vrot.slane %v3792, 2
      %v4226 = vsel %vm2822, %v4223, %v4225
      %v4227 = vrot.slane %v3799, 2
      %v4228 = vrot.slane %v3802, 2
      %v4229 = vsel %vm2822, %v4227, %v4228
      %v4230 = vrot.slane %v3807, 2
      %v4231 = vsel %vm2822, %v4228, %v4230
      %v4232 = vrot.slane %v3814, 2
      %v4233 = vrot.slane %v3817, 2
      %v4234 = vsel %vm2822, %v4232, %v4233
      %v4235 = vrot.slane %v3822, 2
      %v4236 = vsel %vm2822, %v4233, %v4235
      %v4237 = vrot.slane %v3829, 2
      %v4238 = vrot.slane %v3832, 2
      %v4239 = vsel %vm2822, %v4237, %v4238
      %v4240 = vrot.slane %v3837, 2
      %v4241 = vsel %vm2822, %v4238, %v4240
      %v4242 = vrot.slane %v3844, 2
      %v4243 = vrot.slane %v3847, 2
      %v4244 = vsel %vm2822, %v4242, %v4243
      %v4245 = vrot.slane %v3852, 2
      %v4246 = vsel %vm2822, %v4243, %v4245
      %v4247 = vrot.slane %v3859, 2
      %v4248 = vrot.slane %v3862, 2
      %v4249 = vsel %vm2822, %v4247, %v4248
      %v4250 = vrot.slane %v3867, 2
      %v4251 = vsel %vm2822, %v4248, %v4250
      %v4252 = vrot.slane %v3874, 2
      %v4253 = vrot.slane %v3877, 2
      %v4254 = vsel %vm2822, %v4252, %v4253
      %v4255 = vrot.slane %v3882, 2
      %v4256 = vsel %vm2822, %v4253, %v4255
      %v4257 = vrot.slane %v3889, 2
      %v4258 = vrot.slane %v3892, 2
      %v4259 = vsel %vm2822, %v4257, %v4258
      %v4260 = vrot.slane %v3897, 2
      %v4261 = vsel %vm2822, %v4258, %v4260
      %v4262 = vrot.slane %v3904, 2
      %v4263 = vrot.slane %v3907, 2
      %v4264 = vsel %vm2822, %v4262, %v4263
      %v4265 = vrot.slane %v3912, 2
      %v4266 = vsel %vm2822, %v4263, %v4265
      %v4267 = vrot.slane %v3919, 2
      %v4268 = vrot.slane %v3922, 2
      %v4269 = vsel %vm2822, %v4267, %v4268
      %v4270 = vrot.slane %v3927, 2
      %v4271 = vsel %vm2822, %v4268, %v4270
      %v4272 = vrot.slane %v3934, 2
      %v4273 = vrot.slane %v3937, 2
      %v4274 = vsel %vm2822, %v4272, %v4273
      %v4275 = vrot.slane %v3942, 2
      %v4276 = vsel %vm2822, %v4273, %v4275
      %v4277 = vrot.slane %v3949, 2
      %v4278 = vrot.slane %v3952, 2
      %v4279 = vsel %vm2822, %v4277, %v4278
      %v4280 = vrot.slane %v3957, 2
      %v4281 = vsel %vm2822, %v4278, %v4280
      %v4314 = vadd.f32 %v4122, %v4204
      %v4315 = vadd.f32 %v4123, %v4206
      %v4316 = vadd.f32 %v4124, %v4209
      %v4317 = vadd.f32 %v4125, %v4211
      %v4318 = vadd.f32 %v4126, %v4214
      %v4319 = vadd.f32 %v4127, %v4216
      %v4320 = vadd.f32 %v4128, %v4219
      %v4321 = vadd.f32 %v4129, %v4221
      %v4322 = vadd.f32 %v4130, %v4224
      %v4323 = vadd.f32 %v4131, %v4226
      %v4324 = vadd.f32 %v4132, %v4229
      %v4325 = vadd.f32 %v4133, %v4231
      %v4326 = vadd.f32 %v4134, %v4234
      %v4327 = vadd.f32 %v4135, %v4236
      %v4328 = vadd.f32 %v4136, %v4239
      %v4329 = vadd.f32 %v4137, %v4241
      %v4330 = vadd.f32 %v4138, %v4244
      %v4331 = vadd.f32 %v4139, %v4246
      %v4332 = vadd.f32 %v4140, %v4249
      %v4333 = vadd.f32 %v4141, %v4251
      %v4334 = vadd.f32 %v4142, %v4254
      %v4335 = vadd.f32 %v4143, %v4256
      %v4336 = vadd.f32 %v4144, %v4259
      %v4337 = vadd.f32 %v4145, %v4261
      %v4338 = vadd.f32 %v4146, %v4264
      %v4339 = vadd.f32 %v4147, %v4266
      %v4340 = vadd.f32 %v4148, %v4269
      %v4341 = vadd.f32 %v4149, %v4271
      %v4342 = vadd.f32 %v4150, %v4274
      %v4343 = vadd.f32 %v4151, %v4276
      %v4344 = vadd.f32 %v4152, %v4279
      %v4345 = vadd.f32 %v4153, %v4281
      %v4346 = vld [vmem:[#allocation3] sm:$0xff]
      %v4347 = vld [vmem:[#allocation3 + $0x8] sm:$0xff]
      %v4348 = vld [vmem:[#allocation3 + $0x10] sm:$0xff]
      %v4349 = vld [vmem:[#allocation3 + $0x18] sm:$0xff]
      %v4350 = vld [vmem:[#allocation3 + $0x20] sm:$0xff]
      %v4351 = vld [vmem:[#allocation3 + $0x28] sm:$0xff]
      %v4352 = vld [vmem:[#allocation3 + $0x30] sm:$0xff]
      %v4353 = vld [vmem:[#allocation3 + $0x38] sm:$0xff]
      %v4354 = vld [vmem:[#allocation3 + $0x40] sm:$0xff]
      %v4355 = vld [vmem:[#allocation3 + $0x48] sm:$0xff]
      %v4356 = vld [vmem:[#allocation3 + $0x50] sm:$0xff]
      %v4357 = vld [vmem:[#allocation3 + $0x58] sm:$0xff]
      %v4358 = vld [vmem:[#allocation3 + $0x60] sm:$0xff]
      %v4359 = vld [vmem:[#allocation3 + $0x68] sm:$0xff]
      %v4360 = vld [vmem:[#allocation3 + $0x70] sm:$0xff]
      %v4361 = vld [vmem:[#allocation3 + $0x78] sm:$0xff]
      %v4362 = vld [vmem:[#allocation3 + $0x80] sm:$0xff]
      %v4363 = vld [vmem:[#allocation3 + $0x88] sm:$0xff]
      %v4364 = vld [vmem:[#allocation3 + $0x90] sm:$0xff]
      %v4365 = vld [vmem:[#allocation3 + $0x98] sm:$0xff]
      %v4366 = vld [vmem:[#allocation3 + $0xa0] sm:$0xff]
      %v4367 = vld [vmem:[#allocation3 + $0xa8] sm:$0xff]
      %v4368 = vld [vmem:[#allocation3 + $0xb0] sm:$0xff]
      %v4369 = vld [vmem:[#allocation3 + $0xb8] sm:$0xff]
      %v4370 = vld [vmem:[#allocation3 + $0xc0] sm:$0xff]
      %v4371 = vld [vmem:[#allocation3 + $0xc8] sm:$0xff]
      %v4372 = vld [vmem:[#allocation3 + $0xd0] sm:$0xff]
      %v4373 = vld [vmem:[#allocation3 + $0xd8] sm:$0xff]
      %v4374 = vld [vmem:[#allocation3 + $0xe0] sm:$0xff]
      %v4375 = vld [vmem:[#allocation3 + $0xe8] sm:$0xff]
      %v4376 = vld [vmem:[#allocation3 + $0xf0] sm:$0xff]
      %v4377 = vld [vmem:[#allocation3 + $0xf8] sm:$0xff]
      %v4378 = vadd.f32 %v4346, %v4314
      %v4379 = vadd.f32 %v4347, %v4315
      %v4380 = vadd.f32 %v4348, %v4316
      %v4381 = vadd.f32 %v4349, %v4317
      %v4382 = vadd.f32 %v4350, %v4318
      %v4383 = vadd.f32 %v4351, %v4319
      %v4384 = vadd.f32 %v4352, %v4320
      %v4385 = vadd.f32 %v4353, %v4321
      %v4386 = vadd.f32 %v4354, %v4322
      %v4387 = vadd.f32 %v4355, %v4323
      %v4388 = vadd.f32 %v4356, %v4324
      %v4389 = vadd.f32 %v4357, %v4325
      %v4390 = vadd.f32 %v4358, %v4326
      %v4391 = vadd.f32 %v4359, %v4327
      %v4392 = vadd.f32 %v4360, %v4328
      %v4393 = vadd.f32 %v4361, %v4329
      %v4394 = vadd.f32 %v4362, %v4330
      %v4395 = vadd.f32 %v4363, %v4331
      %v4396 = vadd.f32 %v4364, %v4332
      %v4397 = vadd.f32 %v4365, %v4333
      %v4398 = vadd.f32 %v4366, %v4334
      %v4399 = vadd.f32 %v4367, %v4335
      %v4400 = vadd.f32 %v4368, %v4336
      %v4401 = vadd.f32 %v4369, %v4337
      %v4402 = vadd.f32 %v4370, %v4338
      %v4403 = vadd.f32 %v4371, %v4339
      %v4404 = vadd.f32 %v4372, %v4340
      %v4405 = vadd.f32 %v4373, %v4341
      %v4406 = vadd.f32 %v4374, %v4342
      %v4407 = vadd.f32 %v4375, %v4343
      %v4408 = vadd.f32 %v4376, %v4344
      %v4409 = vadd.f32 %v4377, %v4345
      %4410 = vst [vmem:[#allocation3] sm:$0xff] %v4378
      %4411 = vst [vmem:[#allocation3 + $0x8] sm:$0xff] %v4379
      %4412 = vst [vmem:[#allocation3 + $0x10] sm:$0xff] %v4380
      %4413 = vst [vmem:[#allocation3 + $0x18] sm:$0xff] %v4381
      %4414 = vst [vmem:[#allocation3 + $0x20] sm:$0xff] %v4382
      %4415 = vst [vmem:[#allocation3 + $0x28] sm:$0xff] %v4383
      %4416 = vst [vmem:[#allocation3 + $0x30] sm:$0xff] %v4384
      %4417 = vst [vmem:[#allocation3 + $0x38] sm:$0xff] %v4385
      %4418 = vst [vmem:[#allocation3 + $0x40] sm:$0xff] %v4386
      %4419 = vst [vmem:[#allocation3 + $0x48] sm:$0xff] %v4387
      %4420 = vst [vmem:[#allocation3 + $0x50] sm:$0xff] %v4388
      %4421 = vst [vmem:[#allocation3 + $0x58] sm:$0xff] %v4389
      %4422 = vst [vmem:[#allocation3 + $0x60] sm:$0xff] %v4390
      %4423 = vst [vmem:[#allocation3 + $0x68] sm:$0xff] %v4391
      %4424 = vst [vmem:[#allocation3 + $0x70] sm:$0xff] %v4392
      %4425 = vst [vmem:[#allocation3 + $0x78] sm:$0xff] %v4393
      %4426 = vst [vmem:[#allocation3 + $0x80] sm:$0xff] %v4394
      %4427 = vst [vmem:[#allocation3 + $0x88] sm:$0xff] %v4395
      %4428 = vst [vmem:[#allocation3 + $0x90] sm:$0xff] %v4396
      %4429 = vst [vmem:[#allocation3 + $0x98] sm:$0xff] %v4397
      %4430 = vst [vmem:[#allocation3 + $0xa0] sm:$0xff] %v4398
      %4431 = vst [vmem:[#allocation3 + $0xa8] sm:$0xff] %v4399
      %4432 = vst [vmem:[#allocation3 + $0xb0] sm:$0xff] %v4400
      %4433 = vst [vmem:[#allocation3 + $0xb8] sm:$0xff] %v4401
      %4434 = vst [vmem:[#allocation3 + $0xc0] sm:$0xff] %v4402
      %4435 = vst [vmem:[#allocation3 + $0xc8] sm:$0xff] %v4403
      %4436 = vst [vmem:[#allocation3 + $0xd0] sm:$0xff] %v4404
      %4437 = vst [vmem:[#allocation3 + $0xd8] sm:$0xff] %v4405
      %4438 = vst [vmem:[#allocation3 + $0xe0] sm:$0xff] %v4406
      %4439 = vst [vmem:[#allocation3 + $0xe8] sm:$0xff] %v4407
      %4440 = vst [vmem:[#allocation3 + $0xf0] sm:$0xff] %v4408
      %4441 = vst [vmem:[#allocation3 + $0xf8] sm:$0xff] %v4409
      %s4442 = scalar_lea.vmem [#allocation2], 64
      %v4443 = vld [vmem:[%s4442] sm:$0xff]
      %v4444 = vld [vmem:[%s4442 + $0x8] sm:$0xff]
      %v4445 = vld [vmem:[%s4442 + $0x10] sm:$0xff]
      %v4446 = vld [vmem:[%s4442 + $0x18] sm:$0xff]
      %v4447 = vld [vmem:[%s4442 + $0x20] sm:$0xff]
      %v4448 = vld [vmem:[%s4442 + $0x28] sm:$0xff]
      %v4449 = vld [vmem:[%s4442 + $0x30] sm:$0xff]
      %v4450 = vld [vmem:[%s4442 + $0x38] sm:$0xff]
      %v4451 = vld [vmem:[%s4442 + $0x40] sm:$0xff]
      %v4452 = vld [vmem:[%s4442 + $0x48] sm:$0xff]
      %v4453 = vld [vmem:[%s4442 + $0x50] sm:$0xff]
      %v4454 = vld [vmem:[%s4442 + $0x58] sm:$0xff]
      %v4455 = vld [vmem:[%s4442 + $0x60] sm:$0xff]
      %v4456 = vld [vmem:[%s4442 + $0x68] sm:$0xff]
      %v4457 = vld [vmem:[%s4442 + $0x70] sm:$0xff]
      %v4458 = vld [vmem:[%s4442 + $0x78] sm:$0xff]
      %v4459 = vld [vmem:[%s4442 + $0x80] sm:$0xff]
      %v4460 = vld [vmem:[%s4442 + $0x88] sm:$0xff]
      %v4461 = vld [vmem:[%s4442 + $0x90] sm:$0xff]
      %v4462 = vld [vmem:[%s4442 + $0x98] sm:$0xff]
      %v4463 = vld [vmem:[%s4442 + $0xa0] sm:$0xff]
      %v4464 = vld [vmem:[%s4442 + $0xa8] sm:$0xff]
      %v4465 = vld [vmem:[%s4442 + $0xb0] sm:$0xff]
      %v4466 = vld [vmem:[%s4442 + $0xb8] sm:$0xff]
      %v4467 = vld [vmem:[%s4442 + $0xc0] sm:$0xff]
      %v4468 = vld [vmem:[%s4442 + $0xc8] sm:$0xff]
      %v4469 = vld [vmem:[%s4442 + $0xd0] sm:$0xff]
      %v4470 = vld [vmem:[%s4442 + $0xd8] sm:$0xff]
      %v4471 = vld [vmem:[%s4442 + $0xe0] sm:$0xff]
      %v4472 = vld [vmem:[%s4442 + $0xe8] sm:$0xff]
      %v4473 = vld [vmem:[%s4442 + $0xf0] sm:$0xff]
      %v4474 = vld [vmem:[%s4442 + $0xf8] sm:$0xff]
      %v4475 = vld [vmem:[%s4442 + $0x100] sm:$0xff]
      %v4476 = vld [vmem:[%s4442 + $0x108] sm:$0xff]
      %v4477 = vld [vmem:[%s4442 + $0x110] sm:$0xff]
      %v4478 = vld [vmem:[%s4442 + $0x118] sm:$0xff]
      %v4479 = vld [vmem:[%s4442 + $0x120] sm:$0xff]
      %v4480 = vld [vmem:[%s4442 + $0x128] sm:$0xff]
      %v4481 = vld [vmem:[%s4442 + $0x130] sm:$0xff]
      %v4482 = vld [vmem:[%s4442 + $0x138] sm:$0xff]
      %v4483 = vld [vmem:[%s4442 + $0x140] sm:$0xff]
      %v4484 = vld [vmem:[%s4442 + $0x148] sm:$0xff]
      %v4485 = vld [vmem:[%s4442 + $0x150] sm:$0xff]
      %v4486 = vld [vmem:[%s4442 + $0x158] sm:$0xff]
      %v4487 = vld [vmem:[%s4442 + $0x160] sm:$0xff]
      %v4488 = vld [vmem:[%s4442 + $0x168] sm:$0xff]
      %v4489 = vld [vmem:[%s4442 + $0x170] sm:$0xff]
      %v4490 = vld [vmem:[%s4442 + $0x178] sm:$0xff]
      %v4491 = vld [vmem:[%s4442 + $0x180] sm:$0xff]
      %v4492 = vld [vmem:[%s4442 + $0x188] sm:$0xff]
      %v4493 = vld [vmem:[%s4442 + $0x190] sm:$0xff]
      %v4494 = vld [vmem:[%s4442 + $0x198] sm:$0xff]
      %v4495 = vld [vmem:[%s4442 + $0x1a0] sm:$0xff]
      %v4496 = vld [vmem:[%s4442 + $0x1a8] sm:$0xff]
      %v4497 = vld [vmem:[%s4442 + $0x1b0] sm:$0xff]
      %v4498 = vld [vmem:[%s4442 + $0x1b8] sm:$0xff]
      %v4499 = vld [vmem:[%s4442 + $0x1c0] sm:$0xff]
      %v4500 = vld [vmem:[%s4442 + $0x1c8] sm:$0xff]
      %v4501 = vld [vmem:[%s4442 + $0x1d0] sm:$0xff]
      %v4502 = vld [vmem:[%s4442 + $0x1d8] sm:$0xff]
      %v4503 = vld [vmem:[%s4442 + $0x1e0] sm:$0xff]
      %v4504 = vld [vmem:[%s4442 + $0x1e8] sm:$0xff]
      %v4505 = vld [vmem:[%s4442 + $0x1f0] sm:$0xff]
      %v4506 = vld [vmem:[%s4442 + $0x1f8] sm:$0xff]
      %s4507 = scalar_lea.vmem %s6, 768
      %v4508 = vld [vmem:[%s4507] sm:$0xff]
      %v4509 = vld [vmem:[%s4507 + $0x8] sm:$0xf]
      %v4510 = vld [vmem:[%s4507 + $0xc] sm:$0xff]
      %v4511 = vld [vmem:[%s4507 + $0x14] sm:$0xf]
      %v4512 = vld [vmem:[%s4507 + $0x18] sm:$0xff]
      %v4513 = vld [vmem:[%s4507 + $0x20] sm:$0xf]
      %v4514 = vld [vmem:[%s4507 + $0x24] sm:$0xff]
      %v4515 = vld [vmem:[%s4507 + $0x2c] sm:$0xf]
      %v4516 = vld [vmem:[%s4507 + $0x30] sm:$0xff]
      %v4517 = vld [vmem:[%s4507 + $0x38] sm:$0xf]
      %v4518 = vld [vmem:[%s4507 + $0x3c] sm:$0xff]
      %v4519 = vld [vmem:[%s4507 + $0x44] sm:$0xf]
      %v4520 = vld [vmem:[%s4507 + $0x48] sm:$0xff]
      %v4521 = vld [vmem:[%s4507 + $0x50] sm:$0xf]
      %v4522 = vld [vmem:[%s4507 + $0x54] sm:$0xff]
      %v4523 = vld [vmem:[%s4507 + $0x5c] sm:$0xf]
      %v4524 = vld [vmem:[%s4507 + $0x60] sm:$0xff]
      %v4525 = vld [vmem:[%s4507 + $0x68] sm:$0xf]
      %v4526 = vld [vmem:[%s4507 + $0x6c] sm:$0xff]
      %v4527 = vld [vmem:[%s4507 + $0x74] sm:$0xf]
      %v4528 = vld [vmem:[%s4507 + $0x78] sm:$0xff]
      %v4529 = vld [vmem:[%s4507 + $0x80] sm:$0xf]
      %v4530 = vld [vmem:[%s4507 + $0x84] sm:$0xff]
      %v4531 = vld [vmem:[%s4507 + $0x8c] sm:$0xf]
      %v4532 = vld [vmem:[%s4507 + $0x90] sm:$0xff]
      %v4533 = vld [vmem:[%s4507 + $0x98] sm:$0xf]
      %v4534 = vld [vmem:[%s4507 + $0x9c] sm:$0xff]
      %v4535 = vld [vmem:[%s4507 + $0xa4] sm:$0xf]
      %v4536 = vld [vmem:[%s4507 + $0xa8] sm:$0xff]
      %v4537 = vld [vmem:[%s4507 + $0xb0] sm:$0xf]
      %v4538 = vld [vmem:[%s4507 + $0xb4] sm:$0xff]
      %v4539 = vld [vmem:[%s4507 + $0xbc] sm:$0xf]
      %v4540 = vld [vmem:[%s4507 + $0xc0] sm:$0xff]
      %v4541 = vld [vmem:[%s4507 + $0xc8] sm:$0xf]
      %v4542 = vld [vmem:[%s4507 + $0xcc] sm:$0xff]
      %v4543 = vld [vmem:[%s4507 + $0xd4] sm:$0xf]
      %v4544 = vld [vmem:[%s4507 + $0xd8] sm:$0xff]
      %v4545 = vld [vmem:[%s4507 + $0xe0] sm:$0xf]
      %v4546 = vld [vmem:[%s4507 + $0xe4] sm:$0xff]
      %v4547 = vld [vmem:[%s4507 + $0xec] sm:$0xf]
      %v4548 = vld [vmem:[%s4507 + $0xf0] sm:$0xff]
      %v4549 = vld [vmem:[%s4507 + $0xf8] sm:$0xf]
      %v4550 = vld [vmem:[%s4507 + $0xfc] sm:$0xff]
      %v4551 = vld [vmem:[%s4507 + $0x104] sm:$0xf]
      %v4552 = vld [vmem:[%s4507 + $0x108] sm:$0xff]
      %v4553 = vld [vmem:[%s4507 + $0x110] sm:$0xf]
      %v4554 = vld [vmem:[%s4507 + $0x114] sm:$0xff]
      %v4555 = vld [vmem:[%s4507 + $0x11c] sm:$0xf]
      %v4556 = vld [vmem:[%s4507 + $0x120] sm:$0xff]
      %v4557 = vld [vmem:[%s4507 + $0x128] sm:$0xf]
      %v4558 = vld [vmem:[%s4507 + $0x12c] sm:$0xff]
      %v4559 = vld [vmem:[%s4507 + $0x134] sm:$0xf]
      %v4560 = vld [vmem:[%s4507 + $0x138] sm:$0xff]
      %v4561 = vld [vmem:[%s4507 + $0x140] sm:$0xf]
      %v4562 = vld [vmem:[%s4507 + $0x144] sm:$0xff]
      %v4563 = vld [vmem:[%s4507 + $0x14c] sm:$0xf]
      %v4564 = vld [vmem:[%s4507 + $0x150] sm:$0xff]
      %v4565 = vld [vmem:[%s4507 + $0x158] sm:$0xf]
      %v4566 = vld [vmem:[%s4507 + $0x15c] sm:$0xff]
      %v4567 = vld [vmem:[%s4507 + $0x164] sm:$0xf]
      %v4568 = vld [vmem:[%s4507 + $0x168] sm:$0xff]
      %v4569 = vld [vmem:[%s4507 + $0x170] sm:$0xf]
      %v4570 = vld [vmem:[%s4507 + $0x174] sm:$0xff]
      %v4571 = vld [vmem:[%s4507 + $0x17c] sm:$0xf]
      %v4636 = vunpack.c.l.b16 %v4508
      %v4637 = vunpack.c.h.b16 %v4508
      %v4638 = vunpack.c.l.b16 %v4509
      %v4639 = vunpack.c.l.b16 %v4510
      %v4640 = vunpack.c.h.b16 %v4510
      %v4641 = vunpack.c.l.b16 %v4511
      %v4642 = vunpack.c.l.b16 %v4512
      %v4643 = vunpack.c.h.b16 %v4512
      %v4644 = vunpack.c.l.b16 %v4513
      %v4645 = vunpack.c.l.b16 %v4514
      %v4646 = vunpack.c.h.b16 %v4514
      %v4647 = vunpack.c.l.b16 %v4515
      %v4648 = vunpack.c.l.b16 %v4516
      %v4649 = vunpack.c.h.b16 %v4516
      %v4650 = vunpack.c.l.b16 %v4517
      %v4651 = vunpack.c.l.b16 %v4518
      %v4652 = vunpack.c.h.b16 %v4518
      %v4653 = vunpack.c.l.b16 %v4519
      %v4654 = vunpack.c.l.b16 %v4520
      %v4655 = vunpack.c.h.b16 %v4520
      %v4656 = vunpack.c.l.b16 %v4521
      %v4657 = vunpack.c.l.b16 %v4522
      %v4658 = vunpack.c.h.b16 %v4522
      %v4659 = vunpack.c.l.b16 %v4523
      %v4660 = vunpack.c.l.b16 %v4524
      %v4661 = vunpack.c.h.b16 %v4524
      %v4662 = vunpack.c.l.b16 %v4525
      %v4663 = vunpack.c.l.b16 %v4526
      %v4664 = vunpack.c.h.b16 %v4526
      %v4665 = vunpack.c.l.b16 %v4527
      %v4666 = vunpack.c.l.b16 %v4528
      %v4667 = vunpack.c.h.b16 %v4528
      %v4668 = vunpack.c.l.b16 %v4529
      %v4669 = vunpack.c.l.b16 %v4530
      %v4670 = vunpack.c.h.b16 %v4530
      %v4671 = vunpack.c.l.b16 %v4531
      %v4672 = vunpack.c.l.b16 %v4532
      %v4673 = vunpack.c.h.b16 %v4532
      %v4674 = vunpack.c.l.b16 %v4533
      %v4675 = vunpack.c.l.b16 %v4534
      %v4676 = vunpack.c.h.b16 %v4534
      %v4677 = vunpack.c.l.b16 %v4535
      %v4678 = vunpack.c.l.b16 %v4536
      %v4679 = vunpack.c.h.b16 %v4536
      %v4680 = vunpack.c.l.b16 %v4537
      %v4681 = vunpack.c.l.b16 %v4538
      %v4682 = vunpack.c.h.b16 %v4538
      %v4683 = vunpack.c.l.b16 %v4539
      %v4684 = vunpack.c.l.b16 %v4540
      %v4685 = vunpack.c.h.b16 %v4540
      %v4686 = vunpack.c.l.b16 %v4541
      %v4687 = vunpack.c.l.b16 %v4542
      %v4688 = vunpack.c.h.b16 %v4542
      %v4689 = vunpack.c.l.b16 %v4543
      %v4690 = vunpack.c.l.b16 %v4544
      %v4691 = vunpack.c.h.b16 %v4544
      %v4692 = vunpack.c.l.b16 %v4545
      %v4693 = vunpack.c.l.b16 %v4546
      %v4694 = vunpack.c.h.b16 %v4546
      %v4695 = vunpack.c.l.b16 %v4547
      %v4696 = vunpack.c.l.b16 %v4548
      %v4697 = vunpack.c.h.b16 %v4548
      %v4698 = vunpack.c.l.b16 %v4549
      %v4699 = vunpack.c.l.b16 %v4550
      %v4700 = vunpack.c.h.b16 %v4550
      %v4701 = vunpack.c.l.b16 %v4551
      %v4702 = vunpack.c.l.b16 %v4552
      %v4703 = vunpack.c.h.b16 %v4552
      %v4704 = vunpack.c.l.b16 %v4553
      %v4705 = vunpack.c.l.b16 %v4554
      %v4706 = vunpack.c.h.b16 %v4554
      %v4707 = vunpack.c.l.b16 %v4555
      %v4708 = vunpack.c.l.b16 %v4556
      %v4709 = vunpack.c.h.b16 %v4556
      %v4710 = vunpack.c.l.b16 %v4557
      %v4711 = vunpack.c.l.b16 %v4558
      %v4712 = vunpack.c.h.b16 %v4558
      %v4713 = vunpack.c.l.b16 %v4559
      %v4714 = vunpack.c.l.b16 %v4560
      %v4715 = vunpack.c.h.b16 %v4560
      %v4716 = vunpack.c.l.b16 %v4561
      %v4717 = vunpack.c.l.b16 %v4562
      %v4718 = vunpack.c.h.b16 %v4562
      %v4719 = vunpack.c.l.b16 %v4563
      %v4720 = vunpack.c.l.b16 %v4564
      %v4721 = vunpack.c.h.b16 %v4564
      %v4722 = vunpack.c.l.b16 %v4565
      %v4723 = vunpack.c.l.b16 %v4566
      %v4724 = vunpack.c.h.b16 %v4566
      %v4725 = vunpack.c.l.b16 %v4567
      %v4726 = vunpack.c.l.b16 %v4568
      %v4727 = vunpack.c.h.b16 %v4568
      %v4728 = vunpack.c.l.b16 %v4569
      %v4729 = vunpack.c.l.b16 %v4570
      %v4730 = vunpack.c.h.b16 %v4570
      %v4731 = vunpack.c.l.b16 %v4571
      %v4732 = vpack.c.b16 %v4639, %v4636
      %v4733 = vpack.c.b16 %v4640, %v4637
      %v4734 = vpack.c.b16 %v4641, %v4638
      %v4735 = vpack.c.b16 %v4645, %v4642
      %v4736 = vpack.c.b16 %v4646, %v4643
      %v4737 = vpack.c.b16 %v4647, %v4644
      %v4738 = vpack.c.b16 %v4651, %v4648
      %v4739 = vpack.c.b16 %v4652, %v4649
      %v4740 = vpack.c.b16 %v4653, %v4650
      %v4741 = vpack.c.b16 %v4657, %v4654
      %v4742 = vpack.c.b16 %v4658, %v4655
      %v4743 = vpack.c.b16 %v4659, %v4656
      %v4744 = vpack.c.b16 %v4663, %v4660
      %v4745 = vpack.c.b16 %v4664, %v4661
      %v4746 = vpack.c.b16 %v4665, %v4662
      %v4747 = vpack.c.b16 %v4669, %v4666
      %v4748 = vpack.c.b16 %v4670, %v4667
      %v4749 = vpack.c.b16 %v4671, %v4668
      %v4750 = vpack.c.b16 %v4675, %v4672
      %v4751 = vpack.c.b16 %v4676, %v4673
      %v4752 = vpack.c.b16 %v4677, %v4674
      %v4753 = vpack.c.b16 %v4681, %v4678
      %v4754 = vpack.c.b16 %v4682, %v4679
      %v4755 = vpack.c.b16 %v4683, %v4680
      %v4756 = vpack.c.b16 %v4687, %v4684
      %v4757 = vpack.c.b16 %v4688, %v4685
      %v4758 = vpack.c.b16 %v4689, %v4686
      %v4759 = vpack.c.b16 %v4693, %v4690
      %v4760 = vpack.c.b16 %v4694, %v4691
      %v4761 = vpack.c.b16 %v4695, %v4692
      %v4762 = vpack.c.b16 %v4699, %v4696
      %v4763 = vpack.c.b16 %v4700, %v4697
      %v4764 = vpack.c.b16 %v4701, %v4698
      %v4765 = vpack.c.b16 %v4705, %v4702
      %v4766 = vpack.c.b16 %v4706, %v4703
      %v4767 = vpack.c.b16 %v4707, %v4704
      %v4768 = vpack.c.b16 %v4711, %v4708
      %v4769 = vpack.c.b16 %v4712, %v4709
      %v4770 = vpack.c.b16 %v4713, %v4710
      %v4771 = vpack.c.b16 %v4717, %v4714
      %v4772 = vpack.c.b16 %v4718, %v4715
      %v4773 = vpack.c.b16 %v4719, %v4716
      %v4774 = vpack.c.b16 %v4723, %v4720
      %v4775 = vpack.c.b16 %v4724, %v4721
      %v4776 = vpack.c.b16 %v4725, %v4722
      %v4777 = vpack.c.b16 %v4729, %v4726
      %v4778 = vpack.c.b16 %v4730, %v4727
      %v4779 = vpack.c.b16 %v4731, %v4728
      %4828 = vmatprep.subr.bf16.mxu0 %v4733
      %4829 = vmatpush1.bf16.msra.mxu0 %v4732
      %4830 = vmatprep.subr.bf16.mxu0 %v4736
      %4831 = vmatpush1.bf16.msra.mxu0 %v4735
      %4832 = vmatprep.subr.bf16.mxu0 %v4739
      %4833 = vmatpush1.bf16.msra.mxu0 %v4738
      %4834 = vmatprep.subr.bf16.mxu0 %v4742
      %4835 = vmatpush1.bf16.msra.mxu0 %v4741
      %4836 = vmatprep.subr.bf16.mxu0 %v4745
      %4837 = vmatpush1.bf16.msra.mxu0 %v4744
      %4838 = vmatprep.subr.bf16.mxu0 %v4748
      %4839 = vmatpush1.bf16.msra.mxu0 %v4747
      %4840 = vmatprep.subr.bf16.mxu0 %v4751
      %4841 = vmatpush1.bf16.msra.mxu0 %v4750
      %4842 = vmatprep.subr.bf16.mxu0 %v4754
      %4843 = vmatpush1.bf16.msra.mxu0 %v4753
      %4844 = vmatprep.subr.bf16.mxu0 %v4757
      %4845 = vmatpush1.bf16.msra.mxu0 %v4756
      %4846 = vmatprep.subr.bf16.mxu0 %v4760
      %4847 = vmatpush1.bf16.msra.mxu0 %v4759
      %4848 = vmatprep.subr.bf16.mxu0 %v4763
      %4849 = vmatpush1.bf16.msra.mxu0 %v4762
      %4850 = vmatprep.subr.bf16.mxu0 %v4766
      %4851 = vmatpush1.bf16.msra.mxu0 %v4765
      %4852 = vmatprep.subr.bf16.mxu0 %v4769
      %4853 = vmatpush1.bf16.msra.mxu0 %v4768
      %4854 = vmatprep.subr.bf16.mxu0 %v4772
      %4855 = vmatpush1.bf16.msra.mxu0 %v4771
      %4856 = vmatprep.subr.bf16.mxu0 %v4775
      %4857 = vmatpush1.bf16.msra.mxu0 %v4774
      %4858 = vmatprep.subr.bf16.mxu0 %v4778
      %4859 = vmatpush1.bf16.msra.mxu0 %v4777
      %4860 = vmatprep.mubr.bf16.mxu0 %v4444
      %4861 = vmatmul.mubr.bf16.gmra.mrb[0].mxu0 %v4443
      %v4862 = vpop.f32.mrb[0].mxu0
      %v4863 = vadd.f32 0.0, %v4862
      %v4864 = vpop.f32.mrb[0].mxu0
      %v4865 = vadd.f32 0.0, %v4864
      %v4866 = vpop.f32.mrb[0].mxu0
      %v4867 = vadd.f32 0.0, %v4866
      %v4868 = vpop.f32.mrb[0].mxu0
      %v4869 = vadd.f32 0.0, %v4868
      %4870 = vmatprep.mubr.bf16.mxu0 %v4446
      %4871 = vmatmul.mubr.bf16.gmra.mrb[0].mxu0 %v4445
      %v4872 = vpop.f32.mrb[0].mxu0
      %v4873 = vpop.f32.mrb[0].mxu0
      %v4874 = vadd.f32 0.0, %v4873
      %v4875 = vpop.f32.mrb[0].mxu0
      %v4876 = vpop.f32.mrb[0].mxu0
      %4877 = vmatprep.mubr.bf16.mxu0 %v4448
      %4878 = vmatmul.mubr.bf16.gmra.mrb[0].mxu0 %v4447
      %v4879 = vpop.f32.mrb[0].mxu0
      %v4880 = vadd.f32 0.0, %v4879
      %v4881 = vpop.f32.mrb[0].mxu0
      %v4882 = vadd.f32 0.0, %v4881
      %v4883 = vpop.f32.mrb[0].mxu0
      %v4884 = vadd.f32 0.0, %v4883
      %v4885 = vpop.f32.mrb[0].mxu0
      %v4886 = vadd.f32 0.0, %v4885
      %4887 = vmatprep.mubr.bf16.mxu0 %v4450
      %4888 = vmatmul.mubr.bf16.gmra.mrb[0].mxu0 %v4449
      %v4889 = vpop.f32.mrb[0].mxu0
      %v4890 = vpop.f32.mrb[0].mxu0
      %v4891 = vadd.f32 0.0, %v4890
      %v4892 = vpop.f32.mrb[0].mxu0
      %v4893 = vpop.f32.mrb[0].mxu0
      %4894 = vmatprep.mubr.bf16.mxu0 %v4452
      %4895 = vmatmul.mubr.bf16.gmra.mrb[0].mxu0 %v4451
      %v4896 = vpop.f32.mrb[0].mxu0
      %v4897 = vadd.f32 0.0, %v4896
      %v4898 = vpop.f32.mrb[0].mxu0
      %v4899 = vadd.f32 0.0, %v4898
      %v4900 = vpop.f32.mrb[0].mxu0
      %v4901 = vadd.f32 0.0, %v4900
      %v4902 = vpop.f32.mrb[0].mxu0
      %v4903 = vadd.f32 0.0, %v4902
      %4904 = vmatprep.mubr.bf16.mxu0 %v4454
      %4905 = vmatmul.mubr.bf16.gmra.mrb[0].mxu0 %v4453
      %v4906 = vpop.f32.mrb[0].mxu0
      %v4907 = vpop.f32.mrb[0].mxu0
      %v4908 = vadd.f32 0.0, %v4907
      %v4909 = vpop.f32.mrb[0].mxu0
      %v4910 = vpop.f32.mrb[0].mxu0
      %4911 = vmatprep.mubr.bf16.mxu0 %v4456
      %4912 = vmatmul.mubr.bf16.gmra.mrb[0].mxu0 %v4455
      %v4913 = vpop.f32.mrb[0].mxu0
      %v4914 = vadd.f32 0.0, %v4913
      %v4915 = vpop.f32.mrb[0].mxu0
      %v4916 = vadd.f32 0.0, %v4915
      %v4917 = vpop.f32.mrb[0].mxu0
      %v4918 = vadd.f32 0.0, %v4917
      %v4919 = vpop.f32.mrb[0].mxu0
      %v4920 = vadd.f32 0.0, %v4919
      %4921 = vmatprep.mubr.bf16.mxu0 %v4458
      %4922 = vmatmul.mubr.bf16.gmra.mrb[0].mxu0 %v4457
      %v4923 = vpop.f32.mrb[0].mxu0
      %v4924 = vpop.f32.mrb[0].mxu0
      %v4925 = vadd.f32 0.0, %v4924
      %v4926 = vpop.f32.mrb[0].mxu0
      %v4927 = vpop.f32.mrb[0].mxu0
      %4928 = vmatprep.mubr.bf16.mxu0 %v4460
      %4929 = vmatmul.mubr.bf16.gmra.mrb[0].mxu0 %v4459
      %v4930 = vpop.f32.mrb[0].mxu0
      %v4931 = vadd.f32 0.0, %v4930
      %v4932 = vpop.f32.mrb[0].mxu0
      %v4933 = vadd.f32 0.0, %v4932
      %v4934 = vpop.f32.mrb[0].mxu0
      %v4935 = vadd.f32 0.0, %v4934
      %v4936 = vpop.f32.mrb[0].mxu0
      %v4937 = vadd.f32 0.0, %v4936
      %4938 = vmatprep.mubr.bf16.mxu0 %v4462
      %4939 = vmatmul.mubr.bf16.gmra.mrb[0].mxu0 %v4461
      %v4940 = vpop.f32.mrb[0].mxu0
      %v4941 = vpop.f32.mrb[0].mxu0
      %v4942 = vadd.f32 0.0, %v4941
      %v4943 = vpop.f32.mrb[0].mxu0
      %v4944 = vpop.f32.mrb[0].mxu0
      %4945 = vmatprep.mubr.bf16.mxu0 %v4464
      %4946 = vmatmul.mubr.bf16.gmra.mrb[0].mxu0 %v4463
      %v4947 = vpop.f32.mrb[0].mxu0
      %v4948 = vadd.f32 0.0, %v4947
      %v4949 = vpop.f32.mrb[0].mxu0
      %v4950 = vadd.f32 0.0, %v4949
      %v4951 = vpop.f32.mrb[0].mxu0
      %v4952 = vadd.f32 0.0, %v4951
      %v4953 = vpop.f32.mrb[0].mxu0
      %v4954 = vadd.f32 0.0, %v4953
      %4955 = vmatprep.mubr.bf16.mxu0 %v4466
      %4956 = vmatmul.mubr.bf16.gmra.mrb[0].mxu0 %v4465
      %v4957 = vpop.f32.mrb[0].mxu0
      %v4958 = vpop.f32.mrb[0].mxu0
      %v4959 = vadd.f32 0.0, %v4958
      %v4960 = vpop.f32.mrb[0].mxu0
      %v4961 = vpop.f32.mrb[0].mxu0
      %4962 = vmatprep.mubr.bf16.mxu0 %v4468
      %4963 = vmatmul.mubr.bf16.gmra.mrb[0].mxu0 %v4467
      %v4964 = vpop.f32.mrb[0].mxu0
      %v4965 = vadd.f32 0.0, %v4964
      %v4966 = vpop.f32.mrb[0].mxu0
      %v4967 = vadd.f32 0.0, %v4966
      %v4968 = vpop.f32.mrb[0].mxu0
      %v4969 = vadd.f32 0.0, %v4968
      %v4970 = vpop.f32.mrb[0].mxu0
      %v4971 = vadd.f32 0.0, %v4970
      %4972 = vmatprep.mubr.bf16.mxu0 %v4470
      %4973 = vmatmul.mubr.bf16.gmra.mrb[0].mxu0 %v4469
      %v4974 = vpop.f32.mrb[0].mxu0
      %v4975 = vpop.f32.mrb[0].mxu0
      %v4976 = vadd.f32 0.0, %v4975
      %v4977 = vpop.f32.mrb[0].mxu0
      %v4978 = vpop.f32.mrb[0].mxu0
      %4979 = vmatprep.mubr.bf16.mxu0 %v4472
      %4980 = vmatmul.mubr.bf16.gmra.mrb[0].mxu0 %v4471
      %v4981 = vpop.f32.mrb[0].mxu0
      %v4982 = vadd.f32 0.0, %v4981
      %v4983 = vpop.f32.mrb[0].mxu0
      %v4984 = vadd.f32 0.0, %v4983
      %v4985 = vpop.f32.mrb[0].mxu0
      %v4986 = vadd.f32 0.0, %v4985
      %v4987 = vpop.f32.mrb[0].mxu0
      %v4988 = vadd.f32 0.0, %v4987
      %4989 = vmatprep.mubr.bf16.mxu0 %v4474
      %4990 = vmatmul.mubr.bf16.gmra.mrb[0].mxu0 %v4473
      %v4991 = vpop.f32.mrb[0].mxu0
      %v4992 = vpop.f32.mrb[0].mxu0
      %v4993 = vadd.f32 0.0, %v4992
      %v4994 = vpop.f32.mrb[0].mxu0
      %v4995 = vpop.f32.mrb[0].mxu0
      %4996 = vmatprep.mubr.bf16.mxu0 %v4476
      %4997 = vmatmul.mubr.bf16.gmra.mrb[0].mxu0 %v4475
      %v4998 = vpop.f32.mrb[0].mxu0
      %v4999 = vadd.f32 0.0, %v4998
      %v5000 = vpop.f32.mrb[0].mxu0
      %v5001 = vadd.f32 0.0, %v5000
      %v5002 = vpop.f32.mrb[0].mxu0
      %v5003 = vadd.f32 0.0, %v5002
      %v5004 = vpop.f32.mrb[0].mxu0
      %v5005 = vadd.f32 0.0, %v5004
      %5006 = vmatprep.mubr.bf16.mxu0 %v4478
      %5007 = vmatmul.mubr.bf16.gmra.mrb[0].mxu0 %v4477
      %v5008 = vpop.f32.mrb[0].mxu0
      %v5009 = vpop.f32.mrb[0].mxu0
      %v5010 = vadd.f32 0.0, %v5009
      %v5011 = vpop.f32.mrb[0].mxu0
      %v5012 = vpop.f32.mrb[0].mxu0
      %5013 = vmatprep.mubr.bf16.mxu0 %v4480
      %5014 = vmatmul.mubr.bf16.gmra.mrb[0].mxu0 %v4479
      %v5015 = vpop.f32.mrb[0].mxu0
      %v5016 = vadd.f32 0.0, %v5015
      %v5017 = vpop.f32.mrb[0].mxu0
      %v5018 = vadd.f32 0.0, %v5017
      %v5019 = vpop.f32.mrb[0].mxu0
      %v5020 = vadd.f32 0.0, %v5019
      %v5021 = vpop.f32.mrb[0].mxu0
      %v5022 = vadd.f32 0.0, %v5021
      %5023 = vmatprep.mubr.bf16.mxu0 %v4482
      %5024 = vmatmul.mubr.bf16.gmra.mrb[0].mxu0 %v4481
      %v5025 = vpop.f32.mrb[0].mxu0
      %v5026 = vpop.f32.mrb[0].mxu0
      %v5027 = vadd.f32 0.0, %v5026
      %v5028 = vpop.f32.mrb[0].mxu0
      %v5029 = vpop.f32.mrb[0].mxu0
      %5030 = vmatprep.mubr.bf16.mxu0 %v4484
      %5031 = vmatmul.mubr.bf16.gmra.mrb[0].mxu0 %v4483
      %v5032 = vpop.f32.mrb[0].mxu0
      %v5033 = vadd.f32 0.0, %v5032
      %v5034 = vpop.f32.mrb[0].mxu0
      %v5035 = vadd.f32 0.0, %v5034
      %v5036 = vpop.f32.mrb[0].mxu0
      %v5037 = vadd.f32 0.0, %v5036
      %v5038 = vpop.f32.mrb[0].mxu0
      %v5039 = vadd.f32 0.0, %v5038
      %5040 = vmatprep.mubr.bf16.mxu0 %v4486
      %5041 = vmatmul.mubr.bf16.gmra.mrb[0].mxu0 %v4485
      %v5042 = vpop.f32.mrb[0].mxu0
      %v5043 = vpop.f32.mrb[0].mxu0
      %v5044 = vadd.f32 0.0, %v5043
      %v5045 = vpop.f32.mrb[0].mxu0
      %v5046 = vpop.f32.mrb[0].mxu0
      %5047 = vmatprep.mubr.bf16.mxu0 %v4488
      %5048 = vmatmul.mubr.bf16.gmra.mrb[0].mxu0 %v4487
      %v5049 = vpop.f32.mrb[0].mxu0
      %v5050 = vadd.f32 0.0, %v5049
      %v5051 = vpop.f32.mrb[0].mxu0
      %v5052 = vadd.f32 0.0, %v5051
      %v5053 = vpop.f32.mrb[0].mxu0
      %v5054 = vadd.f32 0.0, %v5053
      %v5055 = vpop.f32.mrb[0].mxu0
      %v5056 = vadd.f32 0.0, %v5055
      %5057 = vmatprep.mubr.bf16.mxu0 %v4490
      %5058 = vmatmul.mubr.bf16.gmra.mrb[0].mxu0 %v4489
      %v5059 = vpop.f32.mrb[0].mxu0
      %v5060 = vpop.f32.mrb[0].mxu0
      %v5061 = vadd.f32 0.0, %v5060
      %v5062 = vpop.f32.mrb[0].mxu0
      %v5063 = vpop.f32.mrb[0].mxu0
      %5064 = vmatprep.mubr.bf16.mxu0 %v4492
      %5065 = vmatmul.mubr.bf16.gmra.mrb[0].mxu0 %v4491
      %v5066 = vpop.f32.mrb[0].mxu0
      %v5067 = vadd.f32 0.0, %v5066
      %v5068 = vpop.f32.mrb[0].mxu0
      %v5069 = vadd.f32 0.0, %v5068
      %v5070 = vpop.f32.mrb[0].mxu0
      %v5071 = vadd.f32 0.0, %v5070
      %v5072 = vpop.f32.mrb[0].mxu0
      %v5073 = vadd.f32 0.0, %v5072
      %5074 = vmatprep.mubr.bf16.mxu0 %v4494
      %5075 = vmatmul.mubr.bf16.gmra.mrb[0].mxu0 %v4493
      %v5076 = vpop.f32.mrb[0].mxu0
      %v5077 = vpop.f32.mrb[0].mxu0
      %v5078 = vadd.f32 0.0, %v5077
      %v5079 = vpop.f32.mrb[0].mxu0
      %v5080 = vpop.f32.mrb[0].mxu0
      %5081 = vmatprep.mubr.bf16.mxu0 %v4496
      %5082 = vmatmul.mubr.bf16.gmra.mrb[0].mxu0 %v4495
      %v5083 = vpop.f32.mrb[0].mxu0
      %v5084 = vadd.f32 0.0, %v5083
      %v5085 = vpop.f32.mrb[0].mxu0
      %v5086 = vadd.f32 0.0, %v5085
      %v5087 = vpop.f32.mrb[0].mxu0
      %v5088 = vadd.f32 0.0, %v5087
      %v5089 = vpop.f32.mrb[0].mxu0
      %v5090 = vadd.f32 0.0, %v5089
      %5091 = vmatprep.mubr.bf16.mxu0 %v4498
      %5092 = vmatmul.mubr.bf16.gmra.mrb[0].mxu0 %v4497
      %v5093 = vpop.f32.mrb[0].mxu0
      %v5094 = vpop.f32.mrb[0].mxu0
      %v5095 = vadd.f32 0.0, %v5094
      %v5096 = vpop.f32.mrb[0].mxu0
      %v5097 = vpop.f32.mrb[0].mxu0
      %5098 = vmatprep.mubr.bf16.mxu0 %v4500
      %5099 = vmatmul.mubr.bf16.gmra.mrb[0].mxu0 %v4499
      %v5100 = vpop.f32.mrb[0].mxu0
      %v5101 = vadd.f32 0.0, %v5100
      %v5102 = vpop.f32.mrb[0].mxu0
      %v5103 = vadd.f32 0.0, %v5102
      %v5104 = vpop.f32.mrb[0].mxu0
      %v5105 = vadd.f32 0.0, %v5104
      %v5106 = vpop.f32.mrb[0].mxu0
      %v5107 = vadd.f32 0.0, %v5106
      %5108 = vmatprep.mubr.bf16.mxu0 %v4502
      %5109 = vmatmul.mubr.bf16.gmra.mrb[0].mxu0 %v4501
      %v5110 = vpop.f32.mrb[0].mxu0
      %v5111 = vpop.f32.mrb[0].mxu0
      %v5112 = vadd.f32 0.0, %v5111
      %v5113 = vpop.f32.mrb[0].mxu0
      %v5114 = vpop.f32.mrb[0].mxu0
      %5115 = vmatprep.mubr.bf16.mxu0 %v4504
      %5116 = vmatmul.mubr.bf16.gmra.mrb[0].mxu0 %v4503
      %v5117 = vpop.f32.mrb[0].mxu0
      %v5118 = vadd.f32 0.0, %v5117
      %v5119 = vpop.f32.mrb[0].mxu0
      %v5120 = vadd.f32 0.0, %v5119
      %v5121 = vpop.f32.mrb[0].mxu0
      %v5122 = vadd.f32 0.0, %v5121
      %v5123 = vpop.f32.mrb[0].mxu0
      %v5124 = vadd.f32 0.0, %v5123
      %5125 = vmatprep.mubr.bf16.mxu0 %v4506
      %5126 = vmatmul.mubr.bf16.gmra.mrb[0].mxu0 %v4505
      %v5127 = vpop.f32.mrb[0].mxu0
      %v5128 = vpop.f32.mrb[0].mxu0
      %v5129 = vadd.f32 0.0, %v5128
      %v5130 = vpop.f32.mrb[0].mxu0
      %v5131 = vpop.f32.mrb[0].mxu0
      %5132 = vdwg.mxu0
      %5133 = vmatprep.subr.bf16.mxu0 0
      %5134 = vmatpush1.bf16.msra.mxu0 %v4734
      %5135 = vmatprep.subr.bf16.mxu0 0
      %5136 = vmatpush1.bf16.msra.mxu0 %v4737
      %5137 = vmatprep.subr.bf16.mxu0 0
      %5138 = vmatpush1.bf16.msra.mxu0 %v4740
      %5139 = vmatprep.subr.bf16.mxu0 0
      %5140 = vmatpush1.bf16.msra.mxu0 %v4743
      %5141 = vmatprep.subr.bf16.mxu0 0
      %5142 = vmatpush1.bf16.msra.mxu0 %v4746
      %5143 = vmatprep.subr.bf16.mxu0 0
      %5144 = vmatpush1.bf16.msra.mxu0 %v4749
      %5145 = vmatprep.subr.bf16.mxu0 0
      %5146 = vmatpush1.bf16.msra.mxu0 %v4752
      %5147 = vmatprep.subr.bf16.mxu0 0
      %5148 = vmatpush1.bf16.msra.mxu0 %v4755
      %5149 = vmatprep.subr.bf16.mxu0 0
      %5150 = vmatpush1.bf16.msra.mxu0 %v4758
      %5151 = vmatprep.subr.bf16.mxu0 0
      %5152 = vmatpush1.bf16.msra.mxu0 %v4761
      %5153 = vmatprep.subr.bf16.mxu0 0
      %5154 = vmatpush1.bf16.msra.mxu0 %v4764
      %5155 = vmatprep.subr.bf16.mxu0 0
      %5156 = vmatpush1.bf16.msra.mxu0 %v4767
      %5157 = vmatprep.subr.bf16.mxu0 0
      %5158 = vmatpush1.bf16.msra.mxu0 %v4770
      %5159 = vmatprep.subr.bf16.mxu0 0
      %5160 = vmatpush1.bf16.msra.mxu0 %v4773
      %5161 = vmatprep.subr.bf16.mxu0 0
      %5162 = vmatpush1.bf16.msra.mxu0 %v4776
      %5163 = vmatprep.subr.bf16.mxu0 0
      %5164 = vmatpush1.bf16.msra.mxu0 %v4779
      %5165 = vmatprep.mubr.bf16.mxu0 %v4444
      %5166 = vmatmul.mubr.bf16.gmra.mrb[0].mxu0 %v4443
      %v5167 = vpop.f32.mrb[0].mxu0
      %v5168 = vadd.f32 0.0, %v5167
      %v5169 = vpop.f32.mrb[0].mxu0
      %v5170 = vpop.f32.mrb[0].mxu0
      %v5171 = vadd.f32 0.0, %v5170
      %v5172 = vpop.f32.mrb[0].mxu0
      %5173 = vmatprep.mubr.bf16.mxu0 %v4446
      %5174 = vmatmul.mubr.bf16.gmra.mrb[0].mxu0 %v4445
      %v5175 = vpop.f32.mrb[0].mxu0
      %v5176 = vadd.f32 0.0, %v5175
      %v5177 = vpop.f32.mrb[0].mxu0
      %v5178 = vpop.f32.mrb[0].mxu0
      %v5179 = vpop.f32.mrb[0].mxu0
      %5180 = vmatprep.mubr.bf16.mxu0 %v4448
      %5181 = vmatmul.mubr.bf16.gmra.mrb[0].mxu0 %v4447
      %v5182 = vpop.f32.mrb[0].mxu0
      %v5183 = vadd.f32 0.0, %v5182
      %v5184 = vpop.f32.mrb[0].mxu0
      %v5185 = vpop.f32.mrb[0].mxu0
      %v5186 = vadd.f32 0.0, %v5185
      %v5187 = vpop.f32.mrb[0].mxu0
      %5188 = vmatprep.mubr.bf16.mxu0 %v4450
      %5189 = vmatmul.mubr.bf16.gmra.mrb[0].mxu0 %v4449
      %v5190 = vpop.f32.mrb[0].mxu0
      %v5191 = vadd.f32 0.0, %v5190
      %v5192 = vpop.f32.mrb[0].mxu0
      %v5193 = vpop.f32.mrb[0].mxu0
      %v5194 = vpop.f32.mrb[0].mxu0
      %5195 = vmatprep.mubr.bf16.mxu0 %v4452
      %5196 = vmatmul.mubr.bf16.gmra.mrb[0].mxu0 %v4451
      %v5197 = vpop.f32.mrb[0].mxu0
      %v5198 = vadd.f32 0.0, %v5197
      %v5199 = vpop.f32.mrb[0].mxu0
      %v5200 = vpop.f32.mrb[0].mxu0
      %v5201 = vadd.f32 0.0, %v5200
      %v5202 = vpop.f32.mrb[0].mxu0
      %5203 = vmatprep.mubr.bf16.mxu0 %v4454
      %5204 = vmatmul.mubr.bf16.gmra.mrb[0].mxu0 %v4453
      %v5205 = vpop.f32.mrb[0].mxu0
      %v5206 = vadd.f32 0.0, %v5205
      %v5207 = vpop.f32.mrb[0].mxu0
      %v5208 = vpop.f32.mrb[0].mxu0
      %v5209 = vpop.f32.mrb[0].mxu0
      %5210 = vmatprep.mubr.bf16.mxu0 %v4456
      %5211 = vmatmul.mubr.bf16.gmra.mrb[0].mxu0 %v4455
      %v5212 = vpop.f32.mrb[0].mxu0
      %v5213 = vadd.f32 0.0, %v5212
      %v5214 = vpop.f32.mrb[0].mxu0
      %v5215 = vpop.f32.mrb[0].mxu0
      %v5216 = vadd.f32 0.0, %v5215
      %v5217 = vpop.f32.mrb[0].mxu0
      %5218 = vmatprep.mubr.bf16.mxu0 %v4458
      %5219 = vmatmul.mubr.bf16.gmra.mrb[0].mxu0 %v4457
      %v5220 = vpop.f32.mrb[0].mxu0
      %v5221 = vadd.f32 0.0, %v5220
      %v5222 = vpop.f32.mrb[0].mxu0
      %v5223 = vpop.f32.mrb[0].mxu0
      %v5224 = vpop.f32.mrb[0].mxu0
      %5225 = vmatprep.mubr.bf16.mxu0 %v4460
      %5226 = vmatmul.mubr.bf16.gmra.mrb[0].mxu0 %v4459
      %v5227 = vpop.f32.mrb[0].mxu0
      %v5228 = vadd.f32 0.0, %v5227
      %v5229 = vpop.f32.mrb[0].mxu0
      %v5230 = vpop.f32.mrb[0].mxu0
      %v5231 = vadd.f32 0.0, %v5230
      %v5232 = vpop.f32.mrb[0].mxu0
      %5233 = vmatprep.mubr.bf16.mxu0 %v4462
      %5234 = vmatmul.mubr.bf16.gmra.mrb[0].mxu0 %v4461
      %v5235 = vpop.f32.mrb[0].mxu0
      %v5236 = vadd.f32 0.0, %v5235
      %v5237 = vpop.f32.mrb[0].mxu0
      %v5238 = vpop.f32.mrb[0].mxu0
      %v5239 = vpop.f32.mrb[0].mxu0
      %5240 = vmatprep.mubr.bf16.mxu0 %v4464
      %5241 = vmatmul.mubr.bf16.gmra.mrb[0].mxu0 %v4463
      %v5242 = vpop.f32.mrb[0].mxu0
      %v5243 = vadd.f32 0.0, %v5242
      %v5244 = vpop.f32.mrb[0].mxu0
      %v5245 = vpop.f32.mrb[0].mxu0
      %v5246 = vadd.f32 0.0, %v5245
      %v5247 = vpop.f32.mrb[0].mxu0
      %5248 = vmatprep.mubr.bf16.mxu0 %v4466
      %5249 = vmatmul.mubr.bf16.gmra.mrb[0].mxu0 %v4465
      %v5250 = vpop.f32.mrb[0].mxu0
      %v5251 = vadd.f32 0.0, %v5250
      %v5252 = vpop.f32.mrb[0].mxu0
      %v5253 = vpop.f32.mrb[0].mxu0
      %v5254 = vpop.f32.mrb[0].mxu0
      %5255 = vmatprep.mubr.bf16.mxu0 %v4468
      %5256 = vmatmul.mubr.bf16.gmra.mrb[0].mxu0 %v4467
      %v5257 = vpop.f32.mrb[0].mxu0
      %v5258 = vadd.f32 0.0, %v5257
      %v5259 = vpop.f32.mrb[0].mxu0
      %v5260 = vpop.f32.mrb[0].mxu0
      %v5261 = vadd.f32 0.0, %v5260
      %v5262 = vpop.f32.mrb[0].mxu0
      %5263 = vmatprep.mubr.bf16.mxu0 %v4470
      %5264 = vmatmul.mubr.bf16.gmra.mrb[0].mxu0 %v4469
      %v5265 = vpop.f32.mrb[0].mxu0
      %v5266 = vadd.f32 0.0, %v5265
      %v5267 = vpop.f32.mrb[0].mxu0
      %v5268 = vpop.f32.mrb[0].mxu0
      %v5269 = vpop.f32.mrb[0].mxu0
      %5270 = vmatprep.mubr.bf16.mxu0 %v4472
      %5271 = vmatmul.mubr.bf16.gmra.mrb[0].mxu0 %v4471
      %v5272 = vpop.f32.mrb[0].mxu0
      %v5273 = vadd.f32 0.0, %v5272
      %v5274 = vpop.f32.mrb[0].mxu0
      %v5275 = vpop.f32.mrb[0].mxu0
      %v5276 = vadd.f32 0.0, %v5275
      %v5277 = vpop.f32.mrb[0].mxu0
      %5278 = vmatprep.mubr.bf16.mxu0 %v4474
      %5279 = vmatmul.mubr.bf16.gmra.mrb[0].mxu0 %v4473
      %v5280 = vpop.f32.mrb[0].mxu0
      %v5281 = vadd.f32 0.0, %v5280
      %v5282 = vpop.f32.mrb[0].mxu0
      %v5283 = vpop.f32.mrb[0].mxu0
      %v5284 = vpop.f32.mrb[0].mxu0
      %5285 = vmatprep.mubr.bf16.mxu0 %v4476
      %5286 = vmatmul.mubr.bf16.gmra.mrb[0].mxu0 %v4475
      %v5287 = vpop.f32.mrb[0].mxu0
      %v5288 = vadd.f32 0.0, %v5287
      %v5289 = vpop.f32.mrb[0].mxu0
      %v5290 = vpop.f32.mrb[0].mxu0
      %v5291 = vadd.f32 0.0, %v5290
      %v5292 = vpop.f32.mrb[0].mxu0
      %5293 = vmatprep.mubr.bf16.mxu0 %v4478
      %5294 = vmatmul.mubr.bf16.gmra.mrb[0].mxu0 %v4477
      %v5295 = vpop.f32.mrb[0].mxu0
      %v5296 = vadd.f32 0.0, %v5295
      %v5297 = vpop.f32.mrb[0].mxu0
      %v5298 = vpop.f32.mrb[0].mxu0
      %v5299 = vpop.f32.mrb[0].mxu0
      %5300 = vmatprep.mubr.bf16.mxu0 %v4480
      %5301 = vmatmul.mubr.bf16.gmra.mrb[0].mxu0 %v4479
      %v5302 = vpop.f32.mrb[0].mxu0
      %v5303 = vadd.f32 0.0, %v5302
      %v5304 = vpop.f32.mrb[0].mxu0
      %v5305 = vpop.f32.mrb[0].mxu0
      %v5306 = vadd.f32 0.0, %v5305
      %v5307 = vpop.f32.mrb[0].mxu0
      %5308 = vmatprep.mubr.bf16.mxu0 %v4482
      %5309 = vmatmul.mubr.bf16.gmra.mrb[0].mxu0 %v4481
      %v5310 = vpop.f32.mrb[0].mxu0
      %v5311 = vadd.f32 0.0, %v5310
      %v5312 = vpop.f32.mrb[0].mxu0
      %v5313 = vpop.f32.mrb[0].mxu0
      %v5314 = vpop.f32.mrb[0].mxu0
      %5315 = vmatprep.mubr.bf16.mxu0 %v4484
      %5316 = vmatmul.mubr.bf16.gmra.mrb[0].mxu0 %v4483
      %v5317 = vpop.f32.mrb[0].mxu0
      %v5318 = vadd.f32 0.0, %v5317
      %v5319 = vpop.f32.mrb[0].mxu0
      %v5320 = vpop.f32.mrb[0].mxu0
      %v5321 = vadd.f32 0.0, %v5320
      %v5322 = vpop.f32.mrb[0].mxu0
      %5323 = vmatprep.mubr.bf16.mxu0 %v4486
      %5324 = vmatmul.mubr.bf16.gmra.mrb[0].mxu0 %v4485
      %v5325 = vpop.f32.mrb[0].mxu0
      %v5326 = vadd.f32 0.0, %v5325
      %v5327 = vpop.f32.mrb[0].mxu0
      %v5328 = vpop.f32.mrb[0].mxu0
      %v5329 = vpop.f32.mrb[0].mxu0
      %5330 = vmatprep.mubr.bf16.mxu0 %v4488
      %5331 = vmatmul.mubr.bf16.gmra.mrb[0].mxu0 %v4487
      %v5332 = vpop.f32.mrb[0].mxu0
      %v5333 = vadd.f32 0.0, %v5332
      %v5334 = vpop.f32.mrb[0].mxu0
      %v5335 = vpop.f32.mrb[0].mxu0
      %v5336 = vadd.f32 0.0, %v5335
      %v5337 = vpop.f32.mrb[0].mxu0
      %5338 = vmatprep.mubr.bf16.mxu0 %v4490
      %5339 = vmatmul.mubr.bf16.gmra.mrb[0].mxu0 %v4489
      %v5340 = vpop.f32.mrb[0].mxu0
      %v5341 = vadd.f32 0.0, %v5340
      %v5342 = vpop.f32.mrb[0].mxu0
      %v5343 = vpop.f32.mrb[0].mxu0
      %v5344 = vpop.f32.mrb[0].mxu0
      %5345 = vmatprep.mubr.bf16.mxu0 %v4492
      %5346 = vmatmul.mubr.bf16.gmra.mrb[0].mxu0 %v4491
      %v5347 = vpop.f32.mrb[0].mxu0
      %v5348 = vadd.f32 0.0, %v5347
      %v5349 = vpop.f32.mrb[0].mxu0
      %v5350 = vpop.f32.mrb[0].mxu0
      %v5351 = vadd.f32 0.0, %v5350
      %v5352 = vpop.f32.mrb[0].mxu0
      %5353 = vmatprep.mubr.bf16.mxu0 %v4494
      %5354 = vmatmul.mubr.bf16.gmra.mrb[0].mxu0 %v4493
      %v5355 = vpop.f32.mrb[0].mxu0
      %v5356 = vadd.f32 0.0, %v5355
      %v5357 = vpop.f32.mrb[0].mxu0
      %v5358 = vpop.f32.mrb[0].mxu0
      %v5359 = vpop.f32.mrb[0].mxu0
      %5360 = vmatprep.mubr.bf16.mxu0 %v4496
      %5361 = vmatmul.mubr.bf16.gmra.mrb[0].mxu0 %v4495
      %v5362 = vpop.f32.mrb[0].mxu0
      %v5363 = vadd.f32 0.0, %v5362
      %v5364 = vpop.f32.mrb[0].mxu0
      %v5365 = vpop.f32.mrb[0].mxu0
      %v5366 = vadd.f32 0.0, %v5365
      %v5367 = vpop.f32.mrb[0].mxu0
      %5368 = vmatprep.mubr.bf16.mxu0 %v4498
      %5369 = vmatmul.mubr.bf16.gmra.mrb[0].mxu0 %v4497
      %v5370 = vpop.f32.mrb[0].mxu0
      %v5371 = vadd.f32 0.0, %v5370
      %v5372 = vpop.f32.mrb[0].mxu0
      %v5373 = vpop.f32.mrb[0].mxu0
      %v5374 = vpop.f32.mrb[0].mxu0
      %5375 = vmatprep.mubr.bf16.mxu0 %v4500
      %5376 = vmatmul.mubr.bf16.gmra.mrb[0].mxu0 %v4499
      %v5377 = vpop.f32.mrb[0].mxu0
      %v5378 = vadd.f32 0.0, %v5377
      %v5379 = vpop.f32.mrb[0].mxu0
      %v5380 = vpop.f32.mrb[0].mxu0
      %v5381 = vadd.f32 0.0, %v5380
      %v5382 = vpop.f32.mrb[0].mxu0
      %5383 = vmatprep.mubr.bf16.mxu0 %v4502
      %5384 = vmatmul.mubr.bf16.gmra.mrb[0].mxu0 %v4501
      %v5385 = vpop.f32.mrb[0].mxu0
      %v5386 = vadd.f32 0.0, %v5385
      %v5387 = vpop.f32.mrb[0].mxu0
      %v5388 = vpop.f32.mrb[0].mxu0
      %v5389 = vpop.f32.mrb[0].mxu0
      %5390 = vmatprep.mubr.bf16.mxu0 %v4504
      %5391 = vmatmul.mubr.bf16.gmra.mrb[0].mxu0 %v4503
      %v5392 = vpop.f32.mrb[0].mxu0
      %v5393 = vadd.f32 0.0, %v5392
      %v5394 = vpop.f32.mrb[0].mxu0
      %v5395 = vpop.f32.mrb[0].mxu0
      %v5396 = vadd.f32 0.0, %v5395
      %v5397 = vpop.f32.mrb[0].mxu0
      %5398 = vmatprep.mubr.bf16.mxu0 %v4506
      %5399 = vmatmul.mubr.bf16.gmra.mrb[0].mxu0 %v4505
      %v5400 = vpop.f32.mrb[0].mxu0
      %v5401 = vadd.f32 0.0, %v5400
      %v5402 = vpop.f32.mrb[0].mxu0
      %v5403 = vpop.f32.mrb[0].mxu0
      %v5404 = vpop.f32.mrb[0].mxu0
      %5405 = vdwg.mxu0
      %v5454 = vrot.slane %v4865, 1
      %v5455 = vrot.slane %v4869, 1
      %v5456 = vsel %vm2629, %v5454, %v5455
      %v5457 = vrot.slane %v4874, 1
      %v5458 = vsel %vm2629, %v5455, %v5457
      %v5459 = vrot.slane %v4882, 1
      %v5460 = vrot.slane %v4886, 1
      %v5461 = vsel %vm2629, %v5459, %v5460
      %v5462 = vrot.slane %v4891, 1
      %v5463 = vsel %vm2629, %v5460, %v5462
      %v5464 = vrot.slane %v4899, 1
      %v5465 = vrot.slane %v4903, 1
      %v5466 = vsel %vm2629, %v5464, %v5465
      %v5467 = vrot.slane %v4908, 1
      %v5468 = vsel %vm2629, %v5465, %v5467
      %v5469 = vrot.slane %v4916, 1
      %v5470 = vrot.slane %v4920, 1
      %v5471 = vsel %vm2629, %v5469, %v5470
      %v5472 = vrot.slane %v4925, 1
      %v5473 = vsel %vm2629, %v5470, %v5472
      %v5474 = vrot.slane %v4933, 1
      %v5475 = vrot.slane %v4937, 1
      %v5476 = vsel %vm2629, %v5474, %v5475
      %v5477 = vrot.slane %v4942, 1
      %v5478 = vsel %vm2629, %v5475, %v5477
      %v5479 = vrot.slane %v4950, 1
      %v5480 = vrot.slane %v4954, 1
      %v5481 = vsel %vm2629, %v5479, %v5480
      %v5482 = vrot.slane %v4959, 1
      %v5483 = vsel %vm2629, %v5480, %v5482
      %v5484 = vrot.slane %v4967, 1
      %v5485 = vrot.slane %v4971, 1
      %v5486 = vsel %vm2629, %v5484, %v5485
      %v5487 = vrot.slane %v4976, 1
      %v5488 = vsel %vm2629, %v5485, %v5487
      %v5489 = vrot.slane %v4984, 1
      %v5490 = vrot.slane %v4988, 1
      %v5491 = vsel %vm2629, %v5489, %v5490
      %v5492 = vrot.slane %v4993, 1
      %v5493 = vsel %vm2629, %v5490, %v5492
      %v5494 = vrot.slane %v5001, 1
      %v5495 = vrot.slane %v5005, 1
      %v5496 = vsel %vm2629, %v5494, %v5495
      %v5497 = vrot.slane %v5010, 1
      %v5498 = vsel %vm2629, %v5495, %v5497
      %v5499 = vrot.slane %v5018, 1
      %v5500 = vrot.slane %v5022, 1
      %v5501 = vsel %vm2629, %v5499, %v5500
      %v5502 = vrot.slane %v5027, 1
      %v5503 = vsel %vm2629, %v5500, %v5502
      %v5504 = vrot.slane %v5035, 1
      %v5505 = vrot.slane %v5039, 1
      %v5506 = vsel %vm2629, %v5504, %v5505
      %v5507 = vrot.slane %v5044, 1
      %v5508 = vsel %vm2629, %v5505, %v5507
      %v5509 = vrot.slane %v5052, 1
      %v5510 = vrot.slane %v5056, 1
      %v5511 = vsel %vm2629, %v5509, %v5510
      %v5512 = vrot.slane %v5061, 1
      %v5513 = vsel %vm2629, %v5510, %v5512
      %v5514 = vrot.slane %v5069, 1
      %v5515 = vrot.slane %v5073, 1
      %v5516 = vsel %vm2629, %v5514, %v5515
      %v5517 = vrot.slane %v5078, 1
      %v5518 = vsel %vm2629, %v5515, %v5517
      %v5519 = vrot.slane %v5086, 1
      %v5520 = vrot.slane %v5090, 1
      %v5521 = vsel %vm2629, %v5519, %v5520
      %v5522 = vrot.slane %v5095, 1
      %v5523 = vsel %vm2629, %v5520, %v5522
      %v5524 = vrot.slane %v5103, 1
      %v5525 = vrot.slane %v5107, 1
      %v5526 = vsel %vm2629, %v5524, %v5525
      %v5527 = vrot.slane %v5112, 1
      %v5528 = vsel %vm2629, %v5525, %v5527
      %v5529 = vrot.slane %v5120, 1
      %v5530 = vrot.slane %v5124, 1
      %v5531 = vsel %vm2629, %v5529, %v5530
      %v5532 = vrot.slane %v5129, 1
      %v5533 = vsel %vm2629, %v5530, %v5532
      %v5566 = vadd.f32 %v4863, %v5456
      %v5567 = vadd.f32 %v4867, %v5458
      %v5568 = vadd.f32 %v4880, %v5461
      %v5569 = vadd.f32 %v4884, %v5463
      %v5570 = vadd.f32 %v4897, %v5466
      %v5571 = vadd.f32 %v4901, %v5468
      %v5572 = vadd.f32 %v4914, %v5471
      %v5573 = vadd.f32 %v4918, %v5473
      %v5574 = vadd.f32 %v4931, %v5476
      %v5575 = vadd.f32 %v4935, %v5478
      %v5576 = vadd.f32 %v4948, %v5481
      %v5577 = vadd.f32 %v4952, %v5483
      %v5578 = vadd.f32 %v4965, %v5486
      %v5579 = vadd.f32 %v4969, %v5488
      %v5580 = vadd.f32 %v4982, %v5491
      %v5581 = vadd.f32 %v4986, %v5493
      %v5582 = vadd.f32 %v4999, %v5496
      %v5583 = vadd.f32 %v5003, %v5498
      %v5584 = vadd.f32 %v5016, %v5501
      %v5585 = vadd.f32 %v5020, %v5503
      %v5586 = vadd.f32 %v5033, %v5506
      %v5587 = vadd.f32 %v5037, %v5508
      %v5588 = vadd.f32 %v5050, %v5511
      %v5589 = vadd.f32 %v5054, %v5513
      %v5590 = vadd.f32 %v5067, %v5516
      %v5591 = vadd.f32 %v5071, %v5518
      %v5592 = vadd.f32 %v5084, %v5521
      %v5593 = vadd.f32 %v5088, %v5523
      %v5594 = vadd.f32 %v5101, %v5526
      %v5595 = vadd.f32 %v5105, %v5528
      %v5596 = vadd.f32 %v5118, %v5531
      %v5597 = vadd.f32 %v5122, %v5533
      %v5646 = vrot.slane %v5168, 2
      %v5647 = vrot.slane %v5171, 2
      %v5648 = vsel %vm2822, %v5646, %v5647
      %v5649 = vrot.slane %v5176, 2
      %v5650 = vsel %vm2822, %v5647, %v5649
      %v5651 = vrot.slane %v5183, 2
      %v5652 = vrot.slane %v5186, 2
      %v5653 = vsel %vm2822, %v5651, %v5652
      %v5654 = vrot.slane %v5191, 2
      %v5655 = vsel %vm2822, %v5652, %v5654
      %v5656 = vrot.slane %v5198, 2
      %v5657 = vrot.slane %v5201, 2
      %v5658 = vsel %vm2822, %v5656, %v5657
      %v5659 = vrot.slane %v5206, 2
      %v5660 = vsel %vm2822, %v5657, %v5659
      %v5661 = vrot.slane %v5213, 2
      %v5662 = vrot.slane %v5216, 2
      %v5663 = vsel %vm2822, %v5661, %v5662
      %v5664 = vrot.slane %v5221, 2
      %v5665 = vsel %vm2822, %v5662, %v5664
      %v5666 = vrot.slane %v5228, 2
      %v5667 = vrot.slane %v5231, 2
      %v5668 = vsel %vm2822, %v5666, %v5667
      %v5669 = vrot.slane %v5236, 2
      %v5670 = vsel %vm2822, %v5667, %v5669
      %v5671 = vrot.slane %v5243, 2
      %v5672 = vrot.slane %v5246, 2
      %v5673 = vsel %vm2822, %v5671, %v5672
      %v5674 = vrot.slane %v5251, 2
      %v5675 = vsel %vm2822, %v5672, %v5674
      %v5676 = vrot.slane %v5258, 2
      %v5677 = vrot.slane %v5261, 2
      %v5678 = vsel %vm2822, %v5676, %v5677
      %v5679 = vrot.slane %v5266, 2
      %v5680 = vsel %vm2822, %v5677, %v5679
      %v5681 = vrot.slane %v5273, 2
      %v5682 = vrot.slane %v5276, 2
      %v5683 = vsel %vm2822, %v5681, %v5682
      %v5684 = vrot.slane %v5281, 2
      %v5685 = vsel %vm2822, %v5682, %v5684
      %v5686 = vrot.slane %v5288, 2
      %v5687 = vrot.slane %v5291, 2
      %v5688 = vsel %vm2822, %v5686, %v5687
      %v5689 = vrot.slane %v5296, 2
      %v5690 = vsel %vm2822, %v5687, %v5689
      %v5691 = vrot.slane %v5303, 2
      %v5692 = vrot.slane %v5306, 2
      %v5693 = vsel %vm2822, %v5691, %v5692
      %v5694 = vrot.slane %v5311, 2
      %v5695 = vsel %vm2822, %v5692, %v5694
      %v5696 = vrot.slane %v5318, 2
      %v5697 = vrot.slane %v5321, 2
      %v5698 = vsel %vm2822, %v5696, %v5697
      %v5699 = vrot.slane %v5326, 2
      %v5700 = vsel %vm2822, %v5697, %v5699
      %v5701 = vrot.slane %v5333, 2
      %v5702 = vrot.slane %v5336, 2
      %v5703 = vsel %vm2822, %v5701, %v5702
      %v5704 = vrot.slane %v5341, 2
      %v5705 = vsel %vm2822, %v5702, %v5704
      %v5706 = vrot.slane %v5348, 2
      %v5707 = vrot.slane %v5351, 2
      %v5708 = vsel %vm2822, %v5706, %v5707
      %v5709 = vrot.slane %v5356, 2
      %v5710 = vsel %vm2822, %v5707, %v5709
      %v5711 = vrot.slane %v5363, 2
      %v5712 = vrot.slane %v5366, 2
      %v5713 = vsel %vm2822, %v5711, %v5712
      %v5714 = vrot.slane %v5371, 2
      %v5715 = vsel %vm2822, %v5712, %v5714
      %v5716 = vrot.slane %v5378, 2
      %v5717 = vrot.slane %v5381, 2
      %v5718 = vsel %vm2822, %v5716, %v5717
      %v5719 = vrot.slane %v5386, 2
      %v5720 = vsel %vm2822, %v5717, %v5719
      %v5721 = vrot.slane %v5393, 2
      %v5722 = vrot.slane %v5396, 2
      %v5723 = vsel %vm2822, %v5721, %v5722
      %v5724 = vrot.slane %v5401, 2
      %v5725 = vsel %vm2822, %v5722, %v5724
      %v5758 = vadd.f32 %v5566, %v5648
      %v5759 = vadd.f32 %v5567, %v5650
      %v5760 = vadd.f32 %v5568, %v5653
      %v5761 = vadd.f32 %v5569, %v5655
      %v5762 = vadd.f32 %v5570, %v5658
      %v5763 = vadd.f32 %v5571, %v5660
      %v5764 = vadd.f32 %v5572, %v5663
      %v5765 = vadd.f32 %v5573, %v5665
      %v5766 = vadd.f32 %v5574, %v5668
      %v5767 = vadd.f32 %v5575, %v5670
      %v5768 = vadd.f32 %v5576, %v5673
      %v5769 = vadd.f32 %v5577, %v5675
      %v5770 = vadd.f32 %v5578, %v5678
      %v5771 = vadd.f32 %v5579, %v5680
      %v5772 = vadd.f32 %v5580, %v5683
      %v5773 = vadd.f32 %v5581, %v5685
      %v5774 = vadd.f32 %v5582, %v5688
      %v5775 = vadd.f32 %v5583, %v5690
      %v5776 = vadd.f32 %v5584, %v5693
      %v5777 = vadd.f32 %v5585, %v5695
      %v5778 = vadd.f32 %v5586, %v5698
      %v5779 = vadd.f32 %v5587, %v5700
      %v5780 = vadd.f32 %v5588, %v5703
      %v5781 = vadd.f32 %v5589, %v5705
      %v5782 = vadd.f32 %v5590, %v5708
      %v5783 = vadd.f32 %v5591, %v5710
      %v5784 = vadd.f32 %v5592, %v5713
      %v5785 = vadd.f32 %v5593, %v5715
      %v5786 = vadd.f32 %v5594, %v5718
      %v5787 = vadd.f32 %v5595, %v5720
      %v5788 = vadd.f32 %v5596, %v5723
      %v5789 = vadd.f32 %v5597, %v5725
      %v5790 = vld [vmem:[#allocation3] sm:$0xff]
      %v5791 = vld [vmem:[#allocation3 + $0x8] sm:$0xff]
      %v5792 = vld [vmem:[#allocation3 + $0x10] sm:$0xff]
      %v5793 = vld [vmem:[#allocation3 + $0x18] sm:$0xff]
      %v5794 = vld [vmem:[#allocation3 + $0x20] sm:$0xff]
      %v5795 = vld [vmem:[#allocation3 + $0x28] sm:$0xff]
      %v5796 = vld [vmem:[#allocation3 + $0x30] sm:$0xff]
      %v5797 = vld [vmem:[#allocation3 + $0x38] sm:$0xff]
      %v5798 = vld [vmem:[#allocation3 + $0x40] sm:$0xff]
      %v5799 = vld [vmem:[#allocation3 + $0x48] sm:$0xff]
      %v5800 = vld [vmem:[#allocation3 + $0x50] sm:$0xff]
      %v5801 = vld [vmem:[#allocation3 + $0x58] sm:$0xff]
      %v5802 = vld [vmem:[#allocation3 + $0x60] sm:$0xff]
      %v5803 = vld [vmem:[#allocation3 + $0x68] sm:$0xff]
      %v5804 = vld [vmem:[#allocation3 + $0x70] sm:$0xff]
      %v5805 = vld [vmem:[#allocation3 + $0x78] sm:$0xff]
      %v5806 = vld [vmem:[#allocation3 + $0x80] sm:$0xff]
      %v5807 = vld [vmem:[#allocation3 + $0x88] sm:$0xff]
      %v5808 = vld [vmem:[#allocation3 + $0x90] sm:$0xff]
      %v5809 = vld [vmem:[#allocation3 + $0x98] sm:$0xff]
      %v5810 = vld [vmem:[#allocation3 + $0xa0] sm:$0xff]
      %v5811 = vld [vmem:[#allocation3 + $0xa8] sm:$0xff]
      %v5812 = vld [vmem:[#allocation3 + $0xb0] sm:$0xff]
      %v5813 = vld [vmem:[#allocation3 + $0xb8] sm:$0xff]
      %v5814 = vld [vmem:[#allocation3 + $0xc0] sm:$0xff]
      %v5815 = vld [vmem:[#allocation3 + $0xc8] sm:$0xff]
      %v5816 = vld [vmem:[#allocation3 + $0xd0] sm:$0xff]
      %v5817 = vld [vmem:[#allocation3 + $0xd8] sm:$0xff]
      %v5818 = vld [vmem:[#allocation3 + $0xe0] sm:$0xff]
      %v5819 = vld [vmem:[#allocation3 + $0xe8] sm:$0xff]
      %v5820 = vld [vmem:[#allocation3 + $0xf0] sm:$0xff]
      %v5821 = vld [vmem:[#allocation3 + $0xf8] sm:$0xff]
      %v5822 = vadd.f32 %v5790, %v5758
      %v5823 = vadd.f32 %v5791, %v5759
      %v5824 = vadd.f32 %v5792, %v5760
      %v5825 = vadd.f32 %v5793, %v5761
      %v5826 = vadd.f32 %v5794, %v5762
      %v5827 = vadd.f32 %v5795, %v5763
      %v5828 = vadd.f32 %v5796, %v5764
      %v5829 = vadd.f32 %v5797, %v5765
      %v5830 = vadd.f32 %v5798, %v5766
      %v5831 = vadd.f32 %v5799, %v5767
      %v5832 = vadd.f32 %v5800, %v5768
      %v5833 = vadd.f32 %v5801, %v5769
      %v5834 = vadd.f32 %v5802, %v5770
      %v5835 = vadd.f32 %v5803, %v5771
      %v5836 = vadd.f32 %v5804, %v5772
      %v5837 = vadd.f32 %v5805, %v5773
      %v5838 = vadd.f32 %v5806, %v5774
      %v5839 = vadd.f32 %v5807, %v5775
      %v5840 = vadd.f32 %v5808, %v5776
      %v5841 = vadd.f32 %v5809, %v5777
      %v5842 = vadd.f32 %v5810, %v5778
      %v5843 = vadd.f32 %v5811, %v5779
      %v5844 = vadd.f32 %v5812, %v5780
      %v5845 = vadd.f32 %v5813, %v5781
      %v5846 = vadd.f32 %v5814, %v5782
      %v5847 = vadd.f32 %v5815, %v5783
      %v5848 = vadd.f32 %v5816, %v5784
      %v5849 = vadd.f32 %v5817, %v5785
      %v5850 = vadd.f32 %v5818, %v5786
      %v5851 = vadd.f32 %v5819, %v5787
      %v5852 = vadd.f32 %v5820, %v5788
      %v5853 = vadd.f32 %v5821, %v5789
      %5854 = vst [vmem:[#allocation3] sm:$0xff] %v5822
      %5855 = vst [vmem:[#allocation3 + $0x8] sm:$0xff] %v5823
      %5856 = vst [vmem:[#allocation3 + $0x10] sm:$0xff] %v5824
      %5857 = vst [vmem:[#allocation3 + $0x18] sm:$0xff] %v5825
      %5858 = vst [vmem:[#allocation3 + $0x20] sm:$0xff] %v5826
      %5859 = vst [vmem:[#allocation3 + $0x28] sm:$0xff] %v5827
      %5860 = vst [vmem:[#allocation3 + $0x30] sm:$0xff] %v5828
      %5861 = vst [vmem:[#allocation3 + $0x38] sm:$0xff] %v5829
      %5862 = vst [vmem:[#allocation3 + $0x40] sm:$0xff] %v5830
      %5863 = vst [vmem:[#allocation3 + $0x48] sm:$0xff] %v5831
      %5864 = vst [vmem:[#allocation3 + $0x50] sm:$0xff] %v5832
      %5865 = vst [vmem:[#allocation3 + $0x58] sm:$0xff] %v5833
      %5866 = vst [vmem:[#allocation3 + $0x60] sm:$0xff] %v5834
      %5867 = vst [vmem:[#allocation3 + $0x68] sm:$0xff] %v5835
      %5868 = vst [vmem:[#allocation3 + $0x70] sm:$0xff] %v5836
      %5869 = vst [vmem:[#allocation3 + $0x78] sm:$0xff] %v5837
      %5870 = vst [vmem:[#allocation3 + $0x80] sm:$0xff] %v5838
      %5871 = vst [vmem:[#allocation3 + $0x88] sm:$0xff] %v5839
      %5872 = vst [vmem:[#allocation3 + $0x90] sm:$0xff] %v5840
      %5873 = vst [vmem:[#allocation3 + $0x98] sm:$0xff] %v5841
      %5874 = vst [vmem:[#allocation3 + $0xa0] sm:$0xff] %v5842
      %5875 = vst [vmem:[#allocation3 + $0xa8] sm:$0xff] %v5843
      %5876 = vst [vmem:[#allocation3 + $0xb0] sm:$0xff] %v5844
      %5877 = vst [vmem:[#allocation3 + $0xb8] sm:$0xff] %v5845
      %5878 = vst [vmem:[#allocation3 + $0xc0] sm:$0xff] %v5846
      %5879 = vst [vmem:[#allocation3 + $0xc8] sm:$0xff] %v5847
      %5880 = vst [vmem:[#allocation3 + $0xd0] sm:$0xff] %v5848
      %5881 = vst [vmem:[#allocation3 + $0xd8] sm:$0xff] %v5849
      %5882 = vst [vmem:[#allocation3 + $0xe0] sm:$0xff] %v5850
      %5883 = vst [vmem:[#allocation3 + $0xe8] sm:$0xff] %v5851
      %5884 = vst [vmem:[#allocation3 + $0xf0] sm:$0xff] %v5852
      %5885 = vst [vmem:[#allocation3 + $0xf8] sm:$0xff] %v5853
      %v5886 = vld [vmem:[#allocation3] sm:$0xff]
      %v5887 = vld [vmem:[#allocation3 + $0x8] sm:$0xff]
      %v5888 = vld [vmem:[#allocation3 + $0x10] sm:$0xff]
      %v5889 = vld [vmem:[#allocation3 + $0x18] sm:$0xff]
      %v5890 = vld [vmem:[#allocation3 + $0x20] sm:$0xff]
      %v5891 = vld [vmem:[#allocation3 + $0x28] sm:$0xff]
      %v5892 = vld [vmem:[#allocation3 + $0x30] sm:$0xff]
      %v5893 = vld [vmem:[#allocation3 + $0x38] sm:$0xff]
      %v5894 = vld [vmem:[#allocation3 + $0x40] sm:$0xff]
      %v5895 = vld [vmem:[#allocation3 + $0x48] sm:$0xff]
      %v5896 = vld [vmem:[#allocation3 + $0x50] sm:$0xff]
      %v5897 = vld [vmem:[#allocation3 + $0x58] sm:$0xff]
      %v5898 = vld [vmem:[#allocation3 + $0x60] sm:$0xff]
      %v5899 = vld [vmem:[#allocation3 + $0x68] sm:$0xff]
      %v5900 = vld [vmem:[#allocation3 + $0x70] sm:$0xff]
      %v5901 = vld [vmem:[#allocation3 + $0x78] sm:$0xff]
      %v5902 = vld [vmem:[#allocation3 + $0x80] sm:$0xff]
      %v5903 = vld [vmem:[#allocation3 + $0x88] sm:$0xff]
      %v5904 = vld [vmem:[#allocation3 + $0x90] sm:$0xff]
      %v5905 = vld [vmem:[#allocation3 + $0x98] sm:$0xff]
      %v5906 = vld [vmem:[#allocation3 + $0xa0] sm:$0xff]
      %v5907 = vld [vmem:[#allocation3 + $0xa8] sm:$0xff]
      %v5908 = vld [vmem:[#allocation3 + $0xb0] sm:$0xff]
      %v5909 = vld [vmem:[#allocation3 + $0xb8] sm:$0xff]
      %v5910 = vld [vmem:[#allocation3 + $0xc0] sm:$0xff]
      %v5911 = vld [vmem:[#allocation3 + $0xc8] sm:$0xff]
      %v5912 = vld [vmem:[#allocation3 + $0xd0] sm:$0xff]
      %v5913 = vld [vmem:[#allocation3 + $0xd8] sm:$0xff]
      %v5914 = vld [vmem:[#allocation3 + $0xe0] sm:$0xff]
      %v5915 = vld [vmem:[#allocation3 + $0xe8] sm:$0xff]
      %v5916 = vld [vmem:[#allocation3 + $0xf0] sm:$0xff]
      %v5917 = vld [vmem:[#allocation3 + $0xf8] sm:$0xff]
      %v5918 = vld [vmem:[%s7] sm:$0x1]
      %v5920 = vlaneseq
      %v5921 = vshrl.u32 %v5920, 7
      %v5922 = vsub.s32 0, %v5921
      %v5923 = vrot.slane %v5918, %v5922
      %v5925 = vmul.f32 %v5886, %v5923
      %v5926 = vmul.f32 %v5887, %v5923
      %v5927 = vmul.f32 %v5888, %v5923
      %v5928 = vmul.f32 %v5889, %v5923
      %v5929 = vmul.f32 %v5890, %v5923
      %v5930 = vmul.f32 %v5891, %v5923
      %v5931 = vmul.f32 %v5892, %v5923
      %v5932 = vmul.f32 %v5893, %v5923
      %v5933 = vmul.f32 %v5894, %v5923
      %v5934 = vmul.f32 %v5895, %v5923
      %v5935 = vmul.f32 %v5896, %v5923
      %v5936 = vmul.f32 %v5897, %v5923
      %v5937 = vmul.f32 %v5898, %v5923
      %v5938 = vmul.f32 %v5899, %v5923
      %v5939 = vmul.f32 %v5900, %v5923
      %v5940 = vmul.f32 %v5901, %v5923
      %v5941 = vmul.f32 %v5902, %v5923
      %v5942 = vmul.f32 %v5903, %v5923
      %v5943 = vmul.f32 %v5904, %v5923
      %v5944 = vmul.f32 %v5905, %v5923
      %v5945 = vmul.f32 %v5906, %v5923
      %v5946 = vmul.f32 %v5907, %v5923
      %v5947 = vmul.f32 %v5908, %v5923
      %v5948 = vmul.f32 %v5909, %v5923
      %v5949 = vmul.f32 %v5910, %v5923
      %v5950 = vmul.f32 %v5911, %v5923
      %v5951 = vmul.f32 %v5912, %v5923
      %v5952 = vmul.f32 %v5913, %v5923
      %v5953 = vmul.f32 %v5914, %v5923
      %v5954 = vmul.f32 %v5915, %v5923
      %v5955 = vmul.f32 %v5916, %v5923
      %v5956 = vmul.f32 %v5917, %v5923
      %v5957 = vld [vmem:[%s8] sm:$0x1]
      %v5959 = vlaneseq
      %v5960 = vshrl.u32 %v5959, 7
      %v5961 = vsub.s32 0, %v5960
      %v5962 = vrot.slane %v5957, %v5961
      %v5964 = vadd.f32 %v5925, %v5962
      %v5965 = vadd.f32 %v5926, %v5962
      %v5966 = vadd.f32 %v5927, %v5962
      %v5967 = vadd.f32 %v5928, %v5962
      %v5968 = vadd.f32 %v5929, %v5962
      %v5969 = vadd.f32 %v5930, %v5962
      %v5970 = vadd.f32 %v5931, %v5962
      %v5971 = vadd.f32 %v5932, %v5962
      %v5972 = vadd.f32 %v5933, %v5962
      %v5973 = vadd.f32 %v5934, %v5962
      %v5974 = vadd.f32 %v5935, %v5962
      %v5975 = vadd.f32 %v5936, %v5962
      %v5976 = vadd.f32 %v5937, %v5962
      %v5977 = vadd.f32 %v5938, %v5962
      %v5978 = vadd.f32 %v5939, %v5962
      %v5979 = vadd.f32 %v5940, %v5962
      %v5980 = vadd.f32 %v5941, %v5962
      %v5981 = vadd.f32 %v5942, %v5962
      %v5982 = vadd.f32 %v5943, %v5962
      %v5983 = vadd.f32 %v5944, %v5962
      %v5984 = vadd.f32 %v5945, %v5962
      %v5985 = vadd.f32 %v5946, %v5962
      %v5986 = vadd.f32 %v5947, %v5962
      %v5987 = vadd.f32 %v5948, %v5962
      %v5988 = vadd.f32 %v5949, %v5962
      %v5989 = vadd.f32 %v5950, %v5962
      %v5990 = vadd.f32 %v5951, %v5962
      %v5991 = vadd.f32 %v5952, %v5962
      %v5992 = vadd.f32 %v5953, %v5962
      %v5993 = vadd.f32 %v5954, %v5962
      %v5994 = vadd.f32 %v5955, %v5962
      %v5995 = vadd.f32 %v5956, %v5962
      %v5996 = vmax.f32 %v5964, 0.0
      %v5997 = vmax.f32 %v5965, 0.0
      %v5998 = vmax.f32 %v5966, 0.0
      %v5999 = vmax.f32 %v5967, 0.0
      %v6000 = vmax.f32 %v5968, 0.0
      %v6001 = vmax.f32 %v5969, 0.0
      %v6002 = vmax.f32 %v5970, 0.0
      %v6003 = vmax.f32 %v5971, 0.0
      %v6004 = vmax.f32 %v5972, 0.0
      %v6005 = vmax.f32 %v5973, 0.0
      %v6006 = vmax.f32 %v5974, 0.0
      %v6007 = vmax.f32 %v5975, 0.0
      %v6008 = vmax.f32 %v5976, 0.0
      %v6009 = vmax.f32 %v5977, 0.0
      %v6010 = vmax.f32 %v5978, 0.0
      %v6011 = vmax.f32 %v5979, 0.0
      %v6012 = vmax.f32 %v5980, 0.0
      %v6013 = vmax.f32 %v5981, 0.0
      %v6014 = vmax.f32 %v5982, 0.0
      %v6015 = vmax.f32 %v5983, 0.0
      %v6016 = vmax.f32 %v5984, 0.0
      %v6017 = vmax.f32 %v5985, 0.0
      %v6018 = vmax.f32 %v5986, 0.0
      %v6019 = vmax.f32 %v5987, 0.0
      %v6020 = vmax.f32 %v5988, 0.0
      %v6021 = vmax.f32 %v5989, 0.0
      %v6022 = vmax.f32 %v5990, 0.0
      %v6023 = vmax.f32 %v5991, 0.0
      %v6024 = vmax.f32 %v5992, 0.0
      %v6025 = vmax.f32 %v5993, 0.0
      %v6026 = vmax.f32 %v5994, 0.0
      %v6027 = vmax.f32 %v5995, 0.0
      %v6028 = vpack.c.bf16 %v5997, %v5996
      %v6029 = vpack.c.bf16 %v5999, %v5998
      %v6030 = vpack.c.bf16 %v6001, %v6000
      %v6031 = vpack.c.bf16 %v6003, %v6002
      %v6032 = vpack.c.bf16 %v6005, %v6004
      %v6033 = vpack.c.bf16 %v6007, %v6006
      %v6034 = vpack.c.bf16 %v6009, %v6008
      %v6035 = vpack.c.bf16 %v6011, %v6010
      %v6036 = vpack.c.bf16 %v6013, %v6012
      %v6037 = vpack.c.bf16 %v6015, %v6014
      %v6038 = vpack.c.bf16 %v6017, %v6016
      %v6039 = vpack.c.bf16 %v6019, %v6018
      %v6040 = vpack.c.bf16 %v6021, %v6020
      %v6041 = vpack.c.bf16 %v6023, %v6022
      %v6042 = vpack.c.bf16 %v6025, %v6024
      %v6043 = vpack.c.bf16 %v6027, %v6026
      %v6060 = vunpack.c.l.b16 %v6028
      %v6061 = vunpack.c.h.b16 %v6028
      %v6062 = vunpack.c.l.b16 %v6029
      %v6063 = vunpack.c.h.b16 %v6029
      %v6064 = vunpack.c.l.b16 %v6030
      %v6065 = vunpack.c.h.b16 %v6030
      %v6066 = vunpack.c.l.b16 %v6031
      %v6067 = vunpack.c.h.b16 %v6031
      %v6068 = vunpack.c.l.b16 %v6032
      %v6069 = vunpack.c.h.b16 %v6032
      %v6070 = vunpack.c.l.b16 %v6033
      %v6071 = vunpack.c.h.b16 %v6033
      %v6072 = vunpack.c.l.b16 %v6034
      %v6073 = vunpack.c.h.b16 %v6034
      %v6074 = vunpack.c.l.b16 %v6035
      %v6075 = vunpack.c.h.b16 %v6035
      %v6076 = vunpack.c.l.b16 %v6036
      %v6077 = vunpack.c.h.b16 %v6036
      %v6078 = vunpack.c.l.b16 %v6037
      %v6079 = vunpack.c.h.b16 %v6037
      %v6080 = vunpack.c.l.b16 %v6038
      %v6081 = vunpack.c.h.b16 %v6038
      %v6082 = vunpack.c.l.b16 %v6039
      %v6083 = vunpack.c.h.b16 %v6039
      %v6084 = vunpack.c.l.b16 %v6040
      %v6085 = vunpack.c.h.b16 %v6040
      %v6086 = vunpack.c.l.b16 %v6041
      %v6087 = vunpack.c.h.b16 %v6041
      %v6088 = vunpack.c.l.b16 %v6042
      %v6089 = vunpack.c.h.b16 %v6042
      %v6090 = vunpack.c.l.b16 %v6043
      %v6091 = vunpack.c.h.b16 %v6043
      %v6092 = vpack.c.b16 %v6060, %v6060
      %v6093 = vpack.c.b16 %v6061, %v6061
      %v6094 = vpack.c.b16 %v6062, %v6062
      %v6095 = vpack.c.b16 %v6063, %v6063
      %v6096 = vpack.c.b16 %v6064, %v6064
      %v6097 = vpack.c.b16 %v6065, %v6065
      %v6098 = vpack.c.b16 %v6066, %v6066
      %v6099 = vpack.c.b16 %v6067, %v6067
      %v6100 = vpack.c.b16 %v6068, %v6068
      %v6101 = vpack.c.b16 %v6069, %v6069
      %v6102 = vpack.c.b16 %v6070, %v6070
      %v6103 = vpack.c.b16 %v6071, %v6071
      %v6104 = vpack.c.b16 %v6072, %v6072
      %v6105 = vpack.c.b16 %v6073, %v6073
      %v6106 = vpack.c.b16 %v6074, %v6074
      %v6107 = vpack.c.b16 %v6075, %v6075
      %v6108 = vpack.c.b16 %v6076, %v6076
      %v6109 = vpack.c.b16 %v6077, %v6077
      %v6110 = vpack.c.b16 %v6078, %v6078
      %v6111 = vpack.c.b16 %v6079, %v6079
      %v6112 = vpack.c.b16 %v6080, %v6080
      %v6113 = vpack.c.b16 %v6081, %v6081
      %v6114 = vpack.c.b16 %v6082, %v6082
      %v6115 = vpack.c.b16 %v6083, %v6083
      %v6116 = vpack.c.b16 %v6084, %v6084
      %v6117 = vpack.c.b16 %v6085, %v6085
      %v6118 = vpack.c.b16 %v6086, %v6086
      %v6119 = vpack.c.b16 %v6087, %v6087
      %v6120 = vpack.c.b16 %v6088, %v6088
      %v6121 = vpack.c.b16 %v6089, %v6089
      %v6122 = vpack.c.b16 %v6090, %v6090
      %v6123 = vpack.c.b16 %v6091, %v6091
      %6156 = vst [vmem:[%s662] sm:$0xf] %v6092
      %6157 = vst [vmem:[%s662 + $0x4] sm:$0xf] %v6093
      %6158 = vst [vmem:[%s662 + $0x8] sm:$0xf] %v6094
      %6159 = vst [vmem:[%s662 + $0xc] sm:$0xf] %v6095
      %6160 = vst [vmem:[%s662 + $0x10] sm:$0xf] %v6096
      %6161 = vst [vmem:[%s662 + $0x14] sm:$0xf] %v6097
      %6162 = vst [vmem:[%s662 + $0x18] sm:$0xf] %v6098
      %6163 = vst [vmem:[%s662 + $0x1c] sm:$0xf] %v6099
      %6164 = vst [vmem:[%s662 + $0x20] sm:$0xf] %v6100
      %6165 = vst [vmem:[%s662 + $0x24] sm:$0xf] %v6101
      %6166 = vst [vmem:[%s662 + $0x28] sm:$0xf] %v6102
      %6167 = vst [vmem:[%s662 + $0x2c] sm:$0xf] %v6103
      %6168 = vst [vmem:[%s662 + $0x30] sm:$0xf] %v6104
      %6169 = vst [vmem:[%s662 + $0x34] sm:$0xf] %v6105
      %6170 = vst [vmem:[%s662 + $0x38] sm:$0xf] %v6106
      %6171 = vst [vmem:[%s662 + $0x3c] sm:$0xf] %v6107
      %6172 = vst [vmem:[%s662 + $0x40] sm:$0xf] %v6108
      %6173 = vst [vmem:[%s662 + $0x44] sm:$0xf] %v6109
      %6174 = vst [vmem:[%s662 + $0x48] sm:$0xf] %v6110
      %6175 = vst [vmem:[%s662 + $0x4c] sm:$0xf] %v6111
      %6176 = vst [vmem:[%s662 + $0x50] sm:$0xf] %v6112
      %6177 = vst [vmem:[%s662 + $0x54] sm:$0xf] %v6113
      %6178 = vst [vmem:[%s662 + $0x58] sm:$0xf] %v6114
      %6179 = vst [vmem:[%s662 + $0x5c] sm:$0xf] %v6115
      %6180 = vst [vmem:[%s662 + $0x60] sm:$0xf] %v6116
      %6181 = vst [vmem:[%s662 + $0x64] sm:$0xf] %v6117
      %6182 = vst [vmem:[%s662 + $0x68] sm:$0xf] %v6118
      %6183 = vst [vmem:[%s662 + $0x6c] sm:$0xf] %v6119
      %6184 = vst [vmem:[%s662 + $0x70] sm:$0xf] %v6120
      %6185 = vst [vmem:[%s662 + $0x74] sm:$0xf] %v6121
      %6186 = vst [vmem:[%s662 + $0x78] sm:$0xf] %v6122
      %6187 = vst [vmem:[%s662 + $0x7c] sm:$0xf] %v6123
      %s6188 = smul.u32 16, %s25
      %p6189 = scmp.lt.s32.totalorder %s24, 1
      %s6190 = scalar_select %p6189, %s24, 1
      %p6191 = scmp.lt.s32.totalorder %s6188, 15
      %s6192 = scalar_select %p6191, %s6188, 15
      %s6193 = smul.addr %s6192, 2
      %s6194 = smul.addr %s6190, 32
      %s6195 = sadd.s32 %s6193, %s6194
      %s6196 = smul.addr %s6195, 4
      %s6197 = scalar_lea.vmem %s9, %s6196
      // Predicated region
      $region57: #{up_block_forward.4} parent=55 // pred_check
        %p6198 = pneg %p315
      $region58: #{up_block_forward.4} parent=55 // pred_check_branch
        %6200 = sbr.rel (%p6198) target = $region60
      $region59: #{up_block_forward.4} parent=55 // pred_region
        %s6201 = smul.u32 16, %s25
      $region60: #{up_block_forward.4} parent=55 // pred_fallthru
        _
    $region56: #{up_block_forward.4} parent=5 // pred_fallthru
      _
    %p6202 = scmp.le.s32.totalorder 2, %s15
    // Predicated region
    $region61: #{up_block_forward.4} parent=5 // pred_check
      %p6203 = pneg %p6202
    $region62: #{up_block_forward.4} parent=5 // pred_check_branch
      %6205 = sbr.rel (%p6203) target = $region64
    $region63: #{up_block_forward.4} parent=5 // pred_region
      %s6206 = ssub.s32 %s15, 2
      // Predicated region
      $region65: #{up_block_forward.4} parent=63 // pred_check
        %p6207 = pneg %p321
      $region66: #{up_block_forward.4} parent=63 // pred_check_branch
        %6209 = sbr.rel (%p6207) target = $region68
      $region67: #{up_block_forward.4} parent=63 // pred_region
        %s6210 = smul.u32 16, %s27
        %p6211 = scmp.lt.s32.totalorder %s26, 1
        %s6212 = scalar_select %p6211, %s26, 1
        %p6213 = scmp.lt.s32.totalorder %s6210, 15
        %s6214 = scalar_select %p6213, %s6210, 15
        %s6215 = smul.addr %s6214, 2
        %s6216 = smul.addr %s6212, 32
        %s6217 = sadd.s32 %s6215, %s6216
        %s6218 = smul.addr %s6217, 4
        %s6219 = scalar_lea.vmem %s9, %s6218
      $region68: #{up_block_forward.4} parent=63 // pred_fallthru
        _
    $region64: #{up_block_forward.4} parent=5 // pred_fallthru
      _
  $region6: #{up_block_forward.4} parent=0 // loop_footer
    %s19 = sadd.s32 1, %s15
  $region7: #{up_block_forward.4} parent=0 // loop_footer_branch
    %14 = sbr.rel target = $region3
  $region8: #{up_block_forward.4} parent=0 // loop_exit
    _

</llo_original>
